<compile_context>
chip_gen: v6e
topology: v6e:2x2x1
jax: 0.10.0
libtpu: 0.0.40
codegen_flags: <defaults>
</compile_context>

<pallas_src>
import functools
import math

import jax
import jax.numpy as jnp
import numpy as np
from jax import lax
from jax.experimental import pallas as pl
from jax.experimental.pallas import tpu as pltpu

NUM_NODES = 25     # hardcoded in the PyTorch module (Theta1 is 25x25, BatchNorm1d(25))
BN_EPS = 1e-5
_VMEM_ROW_BYTES = 128 * 4          # (rows, 25) f32 in VMEM pads the lane dim to 128


def _round_up(x, m):
    return ((x + m - 1) // m) * m


def _stgcn_kernel(x_ref, w_ref, gamma_ref, beta_ref, o_ref,
                  sum_ref, sq_ref, scale_ref, shift_ref, t2_ref,
                  *, n_rows, tile, resident):
    phase = pl.program_id(0)
    i = pl.program_id(1)

    @pl.when((phase == 0) & (i == 0))
    def _init():
        sum_ref[...] = jnp.zeros_like(sum_ref)
        sq_ref[...] = jnp.zeros_like(sq_ref)

    @pl.when(phase == 0)
    def _stats():
        # t2 = relu(X @ W) for this batch tile (batch on sublanes, 25 features on lanes).
        t2 = jnp.maximum(
            jnp.dot(x_ref[...], w_ref[...], preferred_element_type=jnp.float32), 0.0)
        # Rows past the true batch size read unspecified padding -> mask before stats.
        rows = i * tile + lax.broadcasted_iota(jnp.int32, (tile, 1), 0)
        t2_valid = jnp.where(rows < n_rows, t2, 0.0)
        # TODO(synk): f32 sum / sum-of-squares can lose precision for very large
        # batches (relu outputs are non-negative); a Welford-style per-tile
        # combine would be more robust if that regime matters.
        sum_ref[...] += jnp.sum(t2_valid, axis=0, keepdims=True)
        sq_ref[...] += jnp.sum(t2_valid * t2_valid, axis=0, keepdims=True)
        if resident:
            start = pl.multiple_of(i * tile, tile)
            t2_ref[pl.ds(start, tile), :] = t2

    @pl.when((phase == 1) & (i == 0))
    def _fold_bn():
        # Training-mode BatchNorm1d: biased variance; fold gamma/beta into one
        # per-feature scale/shift so phase 1 is a single fused mul-add.
        inv_n = 1.0 / n_rows
        mean = sum_ref[...] * inv_n
        var = jnp.maximum(sq_ref[...] * inv_n - mean * mean, 0.0)
        inv_std = lax.rsqrt(var + BN_EPS)
        scale = inv_std * gamma_ref[...]
        scale_ref[...] = scale
        shift_ref[...] = beta_ref[...] - mean * scale

    @pl.when(phase == 1)
    def _normalize():
        if resident:
            start = pl.multiple_of(i * tile, tile)
            t2 = t2_ref[pl.ds(start, tile), :]
        else:
            # streaming fallback: X is re-fetched for this tile, recompute t2
            t2 = jnp.maximum(
                jnp.dot(x_ref[...], w_ref[...], preferred_element_type=jnp.float32), 0.0)
        o_ref[...] = t2 * scale_ref[...] + shift_ref[...]


def stgcn_block_forward(x, a_hat, theta1, gamma, beta, *,
                        tile_n=2048, max_resident_bytes=12 << 20):
    """x: (N, 25), a_hat/theta1: (25, 25), gamma/beta: (25,). Returns (N, 25) f32."""
    n = int(x.shape[0])
    assert x.shape[1] == NUM_NODES

    tile_n = max(8, _round_up(tile_n, 8))
    tile = n if n <= tile_n else tile_n            # full batch, or a multiple of 8
    num_tiles = (n + tile - 1) // tile
    n_pad = num_tiles * tile

    # Resident-t2 decision in real (lane-padded) VMEM bytes.
    slab_bytes = n_pad * _VMEM_ROW_BYTES
    resident = slab_bytes <= max_resident_bytes
    t2_rows = n_pad if resident else 8             # dummy scratch when streaming

    # Fused graph-conv weight: out = relu(X @ A_hat.T @ Theta1) -> W = A_hat.T @ Theta1.
    w = a_hat.astype(jnp.float32).T @ theta1.astype(jnp.float32)        # (25, 25)
    gamma2 = gamma.astype(jnp.float32).reshape(1, NUM_NODES)
    beta2 = beta.astype(jnp.float32).reshape(1, NUM_NODES)
    x = x.astype(jnp.float32)

    if resident:
        # Phase 1 reads t2 from VMEM; pin the X index map to block 0 so only a
        # single (negligible) tile re-fetch happens at the phase boundary.
        x_map = lambda p, i: (i * (1 - p), 0)
    else:
        x_map = lambda p, i: (i, 0)                # phase 1 re-streams X
    out_map = lambda p, i: (i * p, 0)              # no output writeback during phase 0

    kernel = functools.partial(_stgcn_kernel, n_rows=n, tile=tile, resident=resident)

    vmem_need = (t2_rows * _VMEM_ROW_BYTES            # resident t2 slab
                 + 4 * tile * _VMEM_ROW_BYTES         # double-buffered X + out blocks
                 + 64 * 1024)                         # weights / stats scratch, padded
    compiler_params = pltpu.CompilerParams(
        dimension_semantics=("arbitrary", "arbitrary"),   # sequential carry via scratch
        vmem_limit_bytes=int(max(vmem_need + (4 << 20), 16 << 20)),
    )

    grid_spec = pltpu.PrefetchScalarGridSpec(
        num_scalar_prefetch=0,
        grid=(2, num_tiles),
        in_specs=[
            pl.BlockSpec((tile, NUM_NODES), x_map),
            pl.BlockSpec((NUM_NODES, NUM_NODES), lambda p, i: (0, 0)),
            pl.BlockSpec((1, NUM_NODES), lambda p, i: (0, 0)),
            pl.BlockSpec((1, NUM_NODES), lambda p, i: (0, 0)),
        ],
        out_specs=pl.BlockSpec((tile, NUM_NODES), out_map),
        scratch_shapes=[
            pltpu.VMEM((1, NUM_NODES), jnp.float32),         # per-feature sum
            pltpu.VMEM((1, NUM_NODES), jnp.float32),         # per-feature sum of squares
            pltpu.VMEM((1, NUM_NODES), jnp.float32),         # folded BN scale
            pltpu.VMEM((1, NUM_NODES), jnp.float32),         # folded BN shift
            pltpu.VMEM((t2_rows, NUM_NODES), jnp.float32),   # resident t2 slab (or dummy)
        ],
    )

    return pl.pallas_call(
        kernel,
        out_shape=jax.ShapeDtypeStruct((n, NUM_NODES), jnp.float32),
        grid_spec=grid_spec,
        compiler_params=compiler_params,
    )(x, w, gamma2, beta2)


def _reference(x, a_hat, theta1, gamma, beta):
    lfs = x @ a_hat.T
    t2 = jnp.maximum(lfs @ theta1, 0.0)
    mean = jnp.mean(t2, axis=0, keepdims=True)
    var = jnp.mean((t2 - mean) ** 2, axis=0, keepdims=True)
    return (t2 - mean) / jnp.sqrt(var + BN_EPS) * gamma[None, :] + beta[None, :]


if __name__ == "__main__":
    key = jax.random.PRNGKey(0)
    k_x, k_a, k_th, k_g, k_b = jax.random.split(key, 5)

    # Batch spans multiple 2048-row tiles and is not a multiple of the tile,
    # exercising the stats accumulator + partial-tile row mask.
    batch = 2600
    x = jax.random.normal(k_x, (batch, NUM_NODES), dtype=jnp.float32)
    a_raw = jnp.abs(jax.random.normal(k_a, (NUM_NODES, NUM_NODES), dtype=jnp.float32))
    a_hat = a_raw / jnp.sum(a_raw, axis=1, keepdims=True)   # row-normalized adjacency

    # Parameters mirroring the PyTorch __init__ shapes:
    stdv = 1.0 / math.sqrt(NUM_NODES)
    theta1 = jax.random.uniform(k_th, (NUM_NODES, NUM_NODES),
                                minval=-stdv, maxval=stdv, dtype=jnp.float32)
    gamma = jax.random.uniform(k_g, (NUM_NODES,), minval=0.5, maxval=1.5,
                               dtype=jnp.float32)
    beta = 0.1 * jax.random.normal(k_b, (NUM_NODES,), dtype=jnp.float32)
    # TODO(synk): temporal1/temporal2 (TimeBlock conv weights) are unused by
    # STGCNBlock.forward, so no parameters are created or applied for them.

    ref = _reference(x, a_hat, theta1, gamma, beta)

    # 1) default path: VMEM-resident t2 (single HBM read of X, single write of out)
    out = jax.block_until_ready(stgcn_block_forward(x, a_hat, theta1, gamma, beta))
    np.testing.assert_allclose(np.asarray(out), np.asarray(ref), rtol=2e-4, atol=2e-4)

    # 2) streaming fallback path (forced): phase 1 re-reads X and recomputes t2
    out2 = jax.block_until_ready(
        stgcn_block_forward(x, a_hat, theta1, gamma, beta, max_resident_bytes=0))
    np.testing.assert_allclose(np.asarray(out2), np.asarray(ref), rtol=2e-4, atol=2e-4)

    print("KERNEL_OK")
</pallas_src>

<mosaic_0001>
module attributes {stable_mosaic.version = 11 : i64} {
  func.func @_stgcn_kernel(%arg0: i32, %arg1: i32, %arg2: memref<2048x25xf32, #tpu.memory_space<vmem>>, %arg3: memref<25x25xf32, #tpu.memory_space<vmem>>, %arg4: memref<1x25xf32, #tpu.memory_space<vmem>>, %arg5: memref<1x25xf32, #tpu.memory_space<vmem>>, %arg6: memref<2048x25xf32, #tpu.memory_space<vmem>>, %arg7: memref<1x25xf32, #tpu.memory_space<vmem>>, %arg8: memref<1x25xf32, #tpu.memory_space<vmem>>, %arg9: memref<1x25xf32, #tpu.memory_space<vmem>>, %arg10: memref<1x25xf32, #tpu.memory_space<vmem>>, %arg11: memref<4096x25xf32, #tpu.memory_space<vmem>>) attributes {dimension_semantics = [#tpu.dimension_semantics<arbitrary>, #tpu.dimension_semantics<arbitrary>], iteration_bounds = array<i64: 2, 2>, scalar_prefetch = 0 : i64, scratch_operands = 5 : i64, tpu.core_type = #tpu.core_type<tc>, window_params = [{transform_indices = @transform_0, window_bounds = array<i64: 2048, 25>}, {pipeline_mode = #tpu.pipeline_mode<synchronous>, transform_indices = @transform_1, window_bounds = array<i64: 25, 25>}, {pipeline_mode = #tpu.pipeline_mode<synchronous>, transform_indices = @transform_2, window_bounds = array<i64: 1, 25>}, {pipeline_mode = #tpu.pipeline_mode<synchronous>, transform_indices = @transform_3, window_bounds = array<i64: 1, 25>}, {transform_indices = @transform_4, window_bounds = array<i64: 2048, 25>}]} {
    %c0_i32 = arith.constant 0 : i32
    %0 = arith.cmpi eq, %arg0, %c0_i32 : i32
    %c0_i32_0 = arith.constant 0 : i32
    %1 = arith.cmpi eq, %arg1, %c0_i32_0 : i32
    %2 = arith.andi %0, %1 : i1
    %3 = arith.extui %2 : i1 to i32
    %c0_i32_1 = arith.constant 0 : i32
    %4 = arith.cmpi ne, %3, %c0_i32_1 : i32
    scf.if %4 {
      %cst = arith.constant 0.000000e+00 : f32
      %16 = vector.broadcast %cst : f32 to vector<1x25xf32>
      %c0 = arith.constant 0 : index
      %c0_8 = arith.constant 0 : index
      %17 = vector.load %arg7[%c0, %c0_8] : memref<1x25xf32, #tpu.memory_space<vmem>>, vector<1x25xf32>
      tpu.vector_store %arg7[%c0, %c0_8], %16 {strides = array<i32>} : memref<1x25xf32, #tpu.memory_space<vmem>>, vector<1x25xf32>,
      %cst_9 = arith.constant 0.000000e+00 : f32
      %18 = vector.broadcast %cst_9 : f32 to vector<1x25xf32>
      %c0_10 = arith.constant 0 : index
      %c0_11 = arith.constant 0 : index
      %19 = vector.load %arg8[%c0_10, %c0_11] : memref<1x25xf32, #tpu.memory_space<vmem>>, vector<1x25xf32>
      tpu.vector_store %arg8[%c0_10, %c0_11], %18 {strides = array<i32>} : memref<1x25xf32, #tpu.memory_space<vmem>>, vector<1x25xf32>,
    } else {
    }
    %c0_i32_2 = arith.constant 0 : i32
    %5 = arith.cmpi eq, %arg0, %c0_i32_2 : i32
    %6 = arith.extui %5 : i1 to i32
    %c0_i32_3 = arith.constant 0 : i32
    %7 = arith.cmpi ne, %6, %c0_i32_3 : i32
    scf.if %7 {
      %c0 = arith.constant 0 : index
      %c0_8 = arith.constant 0 : index
      %16 = vector.load %arg2[%c0, %c0_8] : memref<2048x25xf32, #tpu.memory_space<vmem>>, vector<2048x25xf32>
      %c0_9 = arith.constant 0 : index
      %c0_10 = arith.constant 0 : index
      %17 = vector.load %arg3[%c0_9, %c0_10] : memref<25x25xf32, #tpu.memory_space<vmem>>, vector<25x25xf32>
      %cst = arith.constant dense<0.000000e+00> : vector<2048x25xf32>
      %18 = tpu.matmul %16, %17, %cst {dimension_numbers = #tpu.dot_dimension_numbers<[1], [0], [0], [1], [0, 0, 1, 1], [], []>} : vector<2048x25xf32>, vector<25x25xf32>, vector<2048x25xf32> -> vector<2048x25xf32>
      %cst_11 = arith.constant 0.000000e+00 : f32
      %19 = vector.broadcast %cst_11 : f32 to vector<2048x25xf32>
      %20 = arith.maximumf %18, %19 : vector<2048x25xf32>
      %c2048_i32 = arith.constant 2048 : i32
      %21 = arith.muli %arg1, %c2048_i32 : i32
      %22 = tpu.iota {dimensions = array<i32: 0>} : vector<2048x1xi32>
      %23 = vector.broadcast %21 : i32 to vector<2048x1xi32>
      %24 = arith.addi %23, %22 : vector<2048x1xi32>
      %c2600_i32 = arith.constant 2600 : i32
      %25 = vector.broadcast %c2600_i32 : i32 to vector<2048x1xi32>
      %26 = arith.cmpi slt, %24, %25 : vector<2048x1xi32>
      %cst_12 = arith.constant 0.000000e+00 : f32
      %27 = vector.shape_cast %26 : vector<2048x1xi1> to vector<2048x1xi1>
      %28 = vector.broadcast %27 : vector<2048x1xi1> to vector<2048x25xi1>
      %29 = vector.broadcast %cst_12 : f32 to vector<2048x25xf32>
      %30 = arith.select %28, %20, %29 : vector<2048x25xi1>, vector<2048x25xf32>
      %c0_13 = arith.constant 0 : index
      %c0_14 = arith.constant 0 : index
      %31 = vector.load %arg7[%c0_13, %c0_14] : memref<1x25xf32, #tpu.memory_space<vmem>>, vector<1x25xf32>
      %cst_15 = arith.constant dense<0.000000e+00> : vector<25xf32>
      %32 = vector.multi_reduction <add>, %30, %cst_15 [0] : vector<2048x25xf32> to vector<25xf32>
      %33 = vector.shape_cast %32 : vector<25xf32> to vector<1x25xf32>
      %34 = arith.addf %31, %33 : vector<1x25xf32>
      %c0_16 = arith.constant 0 : index
      %c0_17 = arith.constant 0 : index
      %35 = vector.load %arg7[%c0_16, %c0_17] : memref<1x25xf32, #tpu.memory_space<vmem>>, vector<1x25xf32>
      tpu.vector_store %arg7[%c0_16, %c0_17], %34 {strides = array<i32>} : memref<1x25xf32, #tpu.memory_space<vmem>>, vector<1x25xf32>,
      %c0_18 = arith.constant 0 : index
      %c0_19 = arith.constant 0 : index
      %36 = vector.load %arg8[%c0_18, %c0_19] : memref<1x25xf32, #tpu.memory_space<vmem>>, vector<1x25xf32>
      %37 = arith.mulf %30, %30 : vector<2048x25xf32>
      %cst_20 = arith.constant dense<0.000000e+00> : vector<25xf32>
      %38 = vector.multi_reduction <add>, %37, %cst_20 [0] : vector<2048x25xf32> to vector<25xf32>
      %39 = vector.shape_cast %38 : vector<25xf32> to vector<1x25xf32>
      %40 = arith.addf %36, %39 : vector<1x25xf32>
      %c0_21 = arith.constant 0 : index
      %c0_22 = arith.constant 0 : index
      %41 = vector.load %arg8[%c0_21, %c0_22] : memref<1x25xf32, #tpu.memory_space<vmem>>, vector<1x25xf32>
      tpu.vector_store %arg8[%c0_21, %c0_22], %40 {strides = array<i32>} : memref<1x25xf32, #tpu.memory_space<vmem>>, vector<1x25xf32>,
      %c2048_i32_23 = arith.constant 2048 : i32
      %42 = arith.muli %arg1, %c2048_i32_23 : i32
      %43 = tpu.assume_multiple %42, 2048 : i32
      %44 = arith.index_cast %43 : i32 to index
      %c0_24 = arith.constant 0 : index
      %45 = vector.load %arg11[%44, %c0_24] : memref<4096x25xf32, #tpu.memory_space<vmem>>, vector<2048x25xf32>
      tpu.vector_store %arg11[%44, %c0_24], %20 {strides = array<i32>} : memref<4096x25xf32, #tpu.memory_space<vmem>>, vector<2048x25xf32>,
    } else {
    }
    %c1_i32 = arith.constant 1 : i32
    %8 = arith.cmpi eq, %arg0, %c1_i32 : i32
    %c0_i32_4 = arith.constant 0 : i32
    %9 = arith.cmpi eq, %arg1, %c0_i32_4 : i32
    %10 = arith.andi %8, %9 : i1
    %11 = arith.extui %10 : i1 to i32
    %c0_i32_5 = arith.constant 0 : i32
    %12 = arith.cmpi ne, %11, %c0_i32_5 : i32
    scf.if %12 {
      %c0 = arith.constant 0 : index
      %c0_8 = arith.constant 0 : index
      %16 = vector.load %arg7[%c0, %c0_8] : memref<1x25xf32, #tpu.memory_space<vmem>>, vector<1x25xf32>
      %cst = arith.constant 3.84615385E-4 : f32
      %17 = vector.broadcast %cst : f32 to vector<1x25xf32>
      %18 = arith.mulf %16, %17 : vector<1x25xf32>
      %c0_9 = arith.constant 0 : index
      %c0_10 = arith.constant 0 : index
      %19 = vector.load %arg8[%c0_9, %c0_10] : memref<1x25xf32, #tpu.memory_space<vmem>>, vector<1x25xf32>
      %cst_11 = arith.constant 3.84615385E-4 : f32
      %20 = vector.broadcast %cst_11 : f32 to vector<1x25xf32>
      %21 = arith.mulf %19, %20 : vector<1x25xf32>
      %22 = arith.mulf %18, %18 : vector<1x25xf32>
      %23 = arith.subf %21, %22 : vector<1x25xf32>
      %cst_12 = arith.constant 0.000000e+00 : f32
      %24 = vector.broadcast %cst_12 : f32 to vector<1x25xf32>
      %25 = arith.maximumf %23, %24 : vector<1x25xf32>
      %cst_13 = arith.constant 9.99999974E-6 : f32
      %26 = vector.broadcast %cst_13 : f32 to vector<1x25xf32>
      %27 = arith.addf %25, %26 : vector<1x25xf32>
      %28 = math.rsqrt %27 : vector<1x25xf32>
      %c0_14 = arith.constant 0 : index
      %c0_15 = arith.constant 0 : index
      %29 = vector.load %arg4[%c0_14, %c0_15] : memref<1x25xf32, #tpu.memory_space<vmem>>, vector<1x25xf32>
      %30 = arith.mulf %28, %29 : vector<1x25xf32>
      %c0_16 = arith.constant 0 : index
      %c0_17 = arith.constant 0 : index
      %31 = vector.load %arg9[%c0_16, %c0_17] : memref<1x25xf32, #tpu.memory_space<vmem>>, vector<1x25xf32>
      tpu.vector_store %arg9[%c0_16, %c0_17], %30 {strides = array<i32>} : memref<1x25xf32, #tpu.memory_space<vmem>>, vector<1x25xf32>,
      %c0_18 = arith.constant 0 : index
      %c0_19 = arith.constant 0 : index
      %32 = vector.load %arg5[%c0_18, %c0_19] : memref<1x25xf32, #tpu.memory_space<vmem>>, vector<1x25xf32>
      %33 = arith.mulf %18, %30 : vector<1x25xf32>
      %34 = arith.subf %32, %33 : vector<1x25xf32>
      %c0_20 = arith.constant 0 : index
      %c0_21 = arith.constant 0 : index
      %35 = vector.load %arg10[%c0_20, %c0_21] : memref<1x25xf32, #tpu.memory_space<vmem>>, vector<1x25xf32>
      tpu.vector_store %arg10[%c0_20, %c0_21], %34 {strides = array<i32>} : memref<1x25xf32, #tpu.memory_space<vmem>>, vector<1x25xf32>,
    } else {
    }
    %c1_i32_6 = arith.constant 1 : i32
    %13 = arith.cmpi eq, %arg0, %c1_i32_6 : i32
    %14 = arith.extui %13 : i1 to i32
    %c0_i32_7 = arith.constant 0 : i32
    %15 = arith.cmpi ne, %14, %c0_i32_7 : i32
    scf.if %15 {
      %c2048_i32 = arith.constant 2048 : i32
      %16 = arith.muli %arg1, %c2048_i32 : i32
      %17 = tpu.assume_multiple %16, 2048 : i32
      %18 = arith.index_cast %17 : i32 to index
      %c0 = arith.constant 0 : index
      %19 = vector.load %arg11[%18, %c0] : memref<4096x25xf32, #tpu.memory_space<vmem>>, vector<2048x25xf32>
      %c0_8 = arith.constant 0 : index
      %c0_9 = arith.constant 0 : index
      %20 = vector.load %arg9[%c0_8, %c0_9] : memref<1x25xf32, #tpu.memory_space<vmem>>, vector<1x25xf32>
      %21 = vector.broadcast %20 : vector<1x25xf32> to vector<2048x25xf32>
      %22 = arith.mulf %19, %21 : vector<2048x25xf32>
      %c0_10 = arith.constant 0 : index
      %c0_11 = arith.constant 0 : index
      %23 = vector.load %arg10[%c0_10, %c0_11] : memref<1x25xf32, #tpu.memory_space<vmem>>, vector<1x25xf32>
      %24 = vector.broadcast %23 : vector<1x25xf32> to vector<2048x25xf32>
      %25 = arith.addf %22, %24 : vector<2048x25xf32>
      %c0_12 = arith.constant 0 : index
      %c0_13 = arith.constant 0 : index
      %26 = vector.load %arg6[%c0_12, %c0_13] : memref<2048x25xf32, #tpu.memory_space<vmem>>, vector<2048x25xf32>
      tpu.vector_store %arg6[%c0_12, %c0_13], %25 {strides = array<i32>} : memref<2048x25xf32, #tpu.memory_space<vmem>>, vector<2048x25xf32>,
    } else {
    }
    return
  }
  func.func @transform_0(%arg0: i32, %arg1: i32) -> (i32, i32) {
    %c1_i32 = arith.constant 1 : i32
    %0 = arith.subi %c1_i32, %arg0 : i32
    %1 = arith.muli %arg1, %0 : i32
    %c0_i32 = arith.constant 0 : i32
    %c0_i32_0 = arith.constant 0 : i32
    return %1, %c0_i32 : i32, i32
  }
  func.func @transform_1(%arg0: i32, %arg1: i32) -> (i32, i32) {
    %c0_i32 = arith.constant 0 : i32
    %c0_i32_0 = arith.constant 0 : i32
    %c0_i32_1 = arith.constant 0 : i32
    return %c0_i32, %c0_i32_0 : i32, i32
  }
  func.func @transform_2(%arg0: i32, %arg1: i32) -> (i32, i32) {
    %c0_i32 = arith.constant 0 : i32
    %c0_i32_0 = arith.constant 0 : i32
    %c0_i32_1 = arith.constant 0 : i32
    return %c0_i32, %c0_i32_0 : i32, i32
  }
  func.func @transform_3(%arg0: i32, %arg1: i32) -> (i32, i32) {
    %c0_i32 = arith.constant 0 : i32
    %c0_i32_0 = arith.constant 0 : i32
    %c0_i32_1 = arith.constant 0 : i32
    return %c0_i32, %c0_i32_0 : i32, i32
  }
  func.func @transform_4(%arg0: i32, %arg1: i32) -> (i32, i32) {
    %0 = arith.muli %arg1, %arg0 : i32
    %c0_i32 = arith.constant 0 : i32
    %c0_i32_0 = arith.constant 0 : i32
    return %0, %c0_i32 : i32, i32
  }
}

</mosaic_0001>

<llo_original>
// kernel: tpu_custom_call.1
$region0: #{tpu_custom_call.1}
  #allocation0 [shape = 'u32[]', space=smem, size = 0x4, offset = 0x4, fixed_abs, tag = 'smem constant byte address 0x4 - core index']
  #allocation1 [shape = 'u32[144,128]{1,0:T(1,128)}', space=vmem, size = 0x12000, scoped, tag = 'internal scratch']
  #allocation2 [shape = 'f32[1,25]{1,0:T(1,128)}', space=vmem, size = 0x200, scoped, tag = 'scratch operand']
  #allocation3 [shape = 'f32[1,25]{1,0:T(1,128)}', space=vmem, size = 0x200, scoped, tag = 'scratch operand']
  #allocation4 [shape = 'f32[1,25]{1,0:T(1,128)}', space=vmem, size = 0x200, scoped, tag = 'scratch operand']
  #allocation5 [shape = 'f32[1,25]{1,0:T(1,128)}', space=vmem, size = 0x200, scoped, tag = 'scratch operand']
  #allocation6 [shape = 'f32[4096,25]{1,0:T(8,128)}', space=vmem, size = 0x200000, scoped, tag = 'scratch operand']
  %s0 = inlined_call_operand.vmem [shape: f32[2600,25], index: 0, kind: input, shape index: {}]
  %s1 = inlined_call_operand.vmem [shape: f32[25,25], index: 1, kind: input, shape index: {}]
  %s2 = inlined_call_operand.vmem [shape: f32[1,25], index: 2, kind: input, shape index: {}]
  %s3 = inlined_call_operand.vmem [shape: f32[1,25], index: 3, kind: input, shape index: {}]
  %s4 = inlined_call_operand.vmem [shape: f32[2600,25], index: 4, kind: output, shape index: {}]
  %s5 = sld [smem:[#allocation0]]
  $region113: #{tpu_custom_call.1} parent=0
    _
  %s7 = ssub.s32 1, %s5
  %s8 = scalar_select 0, %s7, %s5
  $region1: #{tpu_custom_call.1} parent=0
    #allocation7 [shape = 'u8[2097152]{0}', space=vmem, size = 0x200000, scoped, tag = 'output window, operand 0']
    loop: start=0, step=1, limit=6
    $region2: #{tpu_custom_call.1} parent=1 // loop_pre_header
      _
    $region3: #{tpu_custom_call.1} parent=1 // loop_header
      %s10 = sphi 0, %s14
      %p11 = scmp.ge.s32.totalorder %s10, 6
      %s17 = sphi 0, %s29
      %s18 = sphi 0, %s25
      %s19 = sphi 0, %s17
      %s20 = sphi 0, %s18
      %s21 = sphi 0, %s19
      %s22 = sphi 0, %s20
      %s36 = sphi 0, %s38
      %s39 = sphi 0, %s36
      %s40 = sphi 0, %s39
      %s56 = sphi 0, %s40
      %s60 = sphi 0, %s60
      %s62 = sphi 0, %s60
      %s63 = sphi 0, %s62
      %s77 = sphi 0, %s63
      %s81 = sphi 0, %s81
      %s83 = sphi 0, %s81
      %s84 = sphi 0, %s83
      %s98 = sphi 0, %s84
      %s102 = sphi 0, %s102
      %s104 = sphi 0, %s102
      %s105 = sphi 0, %s104
      %s119 = sphi 0, %s105
      %s127 = sphi 0, %s129
      %s130 = sphi 0, %s127
      %s131 = sphi 0, %s130
      %s147 = sphi 0, %s131
    $region4: #{tpu_custom_call.1} parent=1 // loop_header_branch
      %13 = sbr.rel (%p11) target = $region8
    $region5: #{tpu_custom_call.1} parent=1 // loop_body
      %s15 = ssub.s32 %s10, 1
      %s16 = ssub.s32 %s10, 2
      %s23 = sadd.s32 1, %s18
      %p24 = scmp.ge.s32.totalorder %s23, 2
      %s25 = scalar_select %p24, 0, %s23
      %s26 = sadd.s32 1, %s17
      %s27 = scalar_select %p24, %s26, %s17
      %p28 = scmp.ge.s32.totalorder %s27, 2
      %s29 = scalar_select %p28, 0, %s27
      %s30 = ssub.s32 1, %s17
      %s31 = smul.u32 %s18, %s30
      %s32 = ssub.s32 1, %s29
      %s33 = smul.u32 %s25, %s32
      %s34 = ssub.s32 %s31, %s33
      %p35 = scmp.eq.s32.totalorder %s34, 0
      %s37 = sadd.s32 %s36, 1
      %s38 = scalar_select %p35, %s36, %s37
      %p41 = pneg %p35
      %p42 = scmp.eq.s32.totalorder %s10, 3
      %p43 = por %p41, %p42
      %p44 = scmp.ne.s32.totalorder %s36, %s39
      %p45 = scmp.eq.s32.totalorder %s10, 0
      %p46 = por %p44, %p45
      %p47 = scmp.ne.s32.totalorder %s36, %s39
      %p48 = scmp.eq.s32.totalorder %s15, 3
      %p49 = por %p47, %p48
      %p50 = scmp.ne.s32.totalorder %s39, %s40
      %p51 = scmp.eq.s32.totalorder %s15, 0
      %p52 = por %p50, %p51
      %p53 = scmp.ne.s32.totalorder %s39, %s40
      %p54 = scmp.eq.s32.totalorder %s16, 3
      %p55 = por %p53, %p54
      %p57 = scmp.ne.s32.totalorder %s40, %s56
      %p58 = scmp.eq.s32.totalorder %s16, 0
      %p59 = por %p57, %p58
      %s61 = sadd.s32 %s60, 1
      %p64 = scmp.eq.s32.totalorder %s10, 3
      %p65 = scmp.ne.s32.totalorder %s60, %s62
      %p66 = scmp.eq.s32.totalorder %s10, 0
      %p67 = por %p65, %p66
      %p68 = scmp.ne.s32.totalorder %s60, %s62
      %p69 = scmp.eq.s32.totalorder %s15, 3
      %p70 = por %p68, %p69
      %p71 = scmp.ne.s32.totalorder %s62, %s63
      %p72 = scmp.eq.s32.totalorder %s15, 0
      %p73 = por %p71, %p72
      %p74 = scmp.ne.s32.totalorder %s62, %s63
      %p75 = scmp.eq.s32.totalorder %s16, 3
      %p76 = por %p74, %p75
      %p78 = scmp.ne.s32.totalorder %s63, %s77
      %p79 = scmp.eq.s32.totalorder %s16, 0
      %p80 = por %p78, %p79
      %s82 = sadd.s32 %s81, 1
      %p85 = scmp.eq.s32.totalorder %s10, 3
      %p86 = scmp.ne.s32.totalorder %s81, %s83
      %p87 = scmp.eq.s32.totalorder %s10, 0
      %p88 = por %p86, %p87
      %p89 = scmp.ne.s32.totalorder %s81, %s83
      %p90 = scmp.eq.s32.totalorder %s15, 3
      %p91 = por %p89, %p90
      %p92 = scmp.ne.s32.totalorder %s83, %s84
      %p93 = scmp.eq.s32.totalorder %s15, 0
      %p94 = por %p92, %p93
      %p95 = scmp.ne.s32.totalorder %s83, %s84
      %p96 = scmp.eq.s32.totalorder %s16, 3
      %p97 = por %p95, %p96
      %p99 = scmp.ne.s32.totalorder %s84, %s98
      %p100 = scmp.eq.s32.totalorder %s16, 0
      %p101 = por %p99, %p100
      %s103 = sadd.s32 %s102, 1
      %p106 = scmp.eq.s32.totalorder %s10, 3
      %p107 = scmp.ne.s32.totalorder %s102, %s104
      %p108 = scmp.eq.s32.totalorder %s10, 0
      %p109 = por %p107, %p108
      %p110 = scmp.ne.s32.totalorder %s102, %s104
      %p111 = scmp.eq.s32.totalorder %s15, 3
      %p112 = por %p110, %p111
      %p113 = scmp.ne.s32.totalorder %s104, %s105
      %p114 = scmp.eq.s32.totalorder %s15, 0
      %p115 = por %p113, %p114
      %p116 = scmp.ne.s32.totalorder %s104, %s105
      %p117 = scmp.eq.s32.totalorder %s16, 3
      %p118 = por %p116, %p117
      %p120 = scmp.ne.s32.totalorder %s105, %s119
      %p121 = scmp.eq.s32.totalorder %s16, 0
      %p122 = por %p120, %p121
      %s123 = smul.u32 %s18, %s17
      %s124 = smul.u32 %s25, %s29
      %s125 = ssub.s32 %s123, %s124
      %p126 = scmp.eq.s32.totalorder %s125, 0
      %s128 = sadd.s32 %s127, 1
      %s129 = scalar_select %p126, %s127, %s128
      %p132 = pneg %p126
      %p133 = scmp.eq.s32.totalorder %s10, 3
      %p134 = por %p132, %p133
      %p135 = scmp.ne.s32.totalorder %s127, %s130
      %p136 = scmp.eq.s32.totalorder %s10, 0
      %p137 = por %p135, %p136
      %p138 = scmp.ne.s32.totalorder %s127, %s130
      %p139 = scmp.eq.s32.totalorder %s15, 3
      %p140 = por %p138, %p139
      %p141 = scmp.ne.s32.totalorder %s130, %s131
      %p142 = scmp.eq.s32.totalorder %s15, 0
      %p143 = por %p141, %p142
      %p144 = scmp.ne.s32.totalorder %s130, %s131
      %p145 = scmp.eq.s32.totalorder %s16, 3
      %p146 = por %p144, %p145
      %p148 = scmp.ne.s32.totalorder %s131, %s147
      %p149 = scmp.eq.s32.totalorder %s16, 0
      %p150 = por %p148, %p149
      %p151 = scmp.le.s32.totalorder 1, %s10
      %p152 = scmp.lt.s32.totalorder %s10, 5
      %p153 = pnand %p151, %p152
      %p154 = pneg %p153
      // Predicated region
      $region9: #{tpu_custom_call.1} parent=5 // pred_check
        _
      $region10: #{tpu_custom_call.1} parent=5 // pred_check_branch
        %156 = sbr.rel (%p153) target = $region12
      $region11: #{tpu_custom_call.1} parent=5 // pred_region
        %s157 = ssub.s32 %s10, 1
        // Predicated region
        $region13: #{tpu_custom_call.1} parent=11 // pred_check
          %p158 = pneg %p73
        $region14: #{tpu_custom_call.1} parent=11 // pred_check_branch
          %160 = sbr.rel (%p158) target = $region16
        $region15: #{tpu_custom_call.1} parent=11 // pred_region
          _
        $region16: #{tpu_custom_call.1} parent=11 // pred_fallthru
          _
        // Predicated region
        $region17: #{tpu_custom_call.1} parent=11 // pred_check
          %p161 = pneg %p94
        $region18: #{tpu_custom_call.1} parent=11 // pred_check_branch
          %163 = sbr.rel (%p161) target = $region20
        $region19: #{tpu_custom_call.1} parent=11 // pred_region
          _
        $region20: #{tpu_custom_call.1} parent=11 // pred_fallthru
          _
        // Predicated region
        $region21: #{tpu_custom_call.1} parent=11 // pred_check
          %p164 = pneg %p115
        $region22: #{tpu_custom_call.1} parent=11 // pred_check_branch
          %166 = sbr.rel (%p164) target = $region24
        $region23: #{tpu_custom_call.1} parent=11 // pred_region
          _
        $region24: #{tpu_custom_call.1} parent=11 // pred_fallthru
          _
      $region12: #{tpu_custom_call.1} parent=5 // pred_fallthru
        _
      %p167 = scmp.lt.s32.totalorder %s10, 4
      // Predicated region
      $region25: #{tpu_custom_call.1} parent=5 // pred_check
        %p168 = pneg %p167
      $region26: #{tpu_custom_call.1} parent=5 // pred_check_branch
        %170 = sbr.rel (%p168) target = $region28
      $region27: #{tpu_custom_call.1} parent=5 // pred_region
        // Predicated region
        $region29: #{tpu_custom_call.1} parent=27 // pred_check
          %p171 = pneg %p46
        $region30: #{tpu_custom_call.1} parent=27 // pred_check_branch
          %173 = sbr.rel (%p171) target = $region32
        $region31: #{tpu_custom_call.1} parent=27 // pred_region
          %s174 = ssub.s32 1, %s17
          %s175 = smul.u32 %s18, %s174
          %s176 = smul.u32 256, %s175
          %s177 = ssub.s32 325, %s176
          %p178 = scmp.lt.s32.totalorder %s177, 256
          %s179 = scalar_select %p178, %s177, 256
          %s180 = smul.u32 128, %s179
          %p181 = scmp.lt.s32.totalorder %s176, 324
          %s182 = scalar_select %p181, %s176, 324
          %s183 = smul.addr %s182, 8
          %s184 = scalar_lea.vmem %s0, %s183
          %s185 = ssub.s32 1, %s17
          %s186 = smul.u32 %s18, %s185
          %s187 = smul.u32 256, %s186
          %s188 = ssub.s32 325, %s187
          %p189 = scmp.lt.s32.totalorder %s188, 256
          %s190 = scalar_select %p189, %s188, 256
          %s191 = smul.u32 128, %s190
        $region32: #{tpu_custom_call.1} parent=27 // pred_fallthru
          _
      $region28: #{tpu_custom_call.1} parent=5 // pred_fallthru
        _
      %p192 = scmp.le.s32.totalorder 1, %s10
      %p193 = scmp.lt.s32.totalorder %s10, 5
      %p194 = pnand %p192, %p193
      %p195 = pneg %p194
      // Predicated region
      $region33: #{tpu_custom_call.1} parent=5 // pred_check
        _
      $region34: #{tpu_custom_call.1} parent=5 // pred_check_branch
        %197 = sbr.rel (%p194) target = $region36
      $region35: #{tpu_custom_call.1} parent=5 // pred_region
        %s198 = ssub.s32 %s10, 1
        %s199 = ssub.s32 1, %s19
        %s200 = smul.u32 %s20, %s199
        %s201 = smul.u32 256, %s200
        %s202 = ssub.s32 325, %s201
        %p203 = scmp.lt.s32.totalorder %s202, 256
        %s204 = scalar_select %p203, %s202, 256
        %s205 = smul.u32 128, %s204
        %p206 = scmp.lt.s32.totalorder %s201, 324
        %s207 = scalar_select %p206, %s201, 324
        %s208 = smul.addr %s207, 8
        %s209 = scalar_lea.vmem %s0, %s208
        %p210 = pneg %p52
        %p211 = pneg %p49
        %p212 = pneg %p73
        %p213 = pneg %p70
        %p214 = pneg %p94
        %p215 = pneg %p91
        %p216 = pneg %p115
        %p217 = pneg %p112
        %p218 = pneg %p143
        %p219 = pneg %p140
        %s220 = sand.u32 %s130, 1
        %s221 = sand.u32 %s130, 1
        %s222 = smul.addr %s221, 2048
        %s223 = scalar_lea.vmem [#allocation7], %s222
        %s224 = ssub.s32 1, %s19
        %s225 = smul.u32 %s20, %s224
        %s226 = smul.u32 256, %s225
        %s227 = ssub.s32 325, %s226
        %p228 = scmp.lt.s32.totalorder %s227, 256
        %s229 = scalar_select %p228, %s227, 256
        %s230 = smul.u32 128, %s229
        %p231 = scmp.lt.s32.totalorder %s226, 324
        %s232 = scalar_select %p231, %s226, 324
        %s233 = smul.addr %s232, 8
        %s234 = scalar_lea.vmem %s0, %s233
        %s235 = ssub.s32 1, %s19
        %s236 = smul.u32 %s20, %s235
        %s237 = smul.u32 256, %s236
        %s238 = ssub.s32 325, %s237
        %p239 = scmp.lt.s32.totalorder %s238, 256
        %s240 = scalar_select %p239, %s238, 256
        %s241 = smul.u32 128, %s240
        %s242 = smul.u32 %s20, %s19
        %s243 = smul.u32 256, %s242
        %s244 = ssub.s32 325, %s243
        %p245 = scmp.lt.s32.totalorder %s244, 256
        %s246 = scalar_select %p245, %s244, 256
        %s247 = smul.u32 128, %s246
        %p248 = scmp.eq.s32.totalorder %s19, 0
        %p249 = scmp.eq.s32.totalorder %s20, 0
        %p250 = pnand %p248, %p249
        %p251 = pneg %p250
        // Predicated region
        $region37: #{tpu_custom_call.1} parent=35 // pred_check
          _
        $region38: #{tpu_custom_call.1} parent=35 // pred_check_branch
          %253 = sbr.rel (%p250) target = $region40
        $region39: #{tpu_custom_call.1} parent=35 // pred_region
          %vm254 = vcmask 196608
          %255 = vst.msk [vmem:[#allocation2] sm:$0x1] %vm254, 0.0
          %256 = vst.msk [vmem:[#allocation3] sm:$0x1] %vm254, 0.0
        $region40: #{tpu_custom_call.1} parent=35 // pred_fallthru
          _
        // Predicated region
        $region41: #{tpu_custom_call.1} parent=35 // pred_check
          %p257 = pneg %p248
        $region42: #{tpu_custom_call.1} parent=35 // pred_check_branch
          %259 = sbr.rel (%p257) target = $region44
        $region43: #{tpu_custom_call.1} parent=35 // pred_region
          %v260 = vld [vmem:[%s234] sm:$0xff]
          %v261 = vld [vmem:[%s234 + $0x8] sm:$0xff]
          %v262 = vld [vmem:[%s234 + $0x10] sm:$0xff]
          %v263 = vld [vmem:[%s234 + $0x18] sm:$0xff]
          %v264 = vld [vmem:[%s234 + $0x20] sm:$0xff]
          %v265 = vld [vmem:[%s234 + $0x28] sm:$0xff]
          %v266 = vld [vmem:[%s234 + $0x30] sm:$0xff]
          %v267 = vld [vmem:[%s234 + $0x38] sm:$0xff]
          %v268 = vld [vmem:[%s234 + $0x40] sm:$0xff]
          %v269 = vld [vmem:[%s234 + $0x48] sm:$0xff]
          %v270 = vld [vmem:[%s234 + $0x50] sm:$0xff]
          %v271 = vld [vmem:[%s234 + $0x58] sm:$0xff]
          %v272 = vld [vmem:[%s234 + $0x60] sm:$0xff]
          %v273 = vld [vmem:[%s234 + $0x68] sm:$0xff]
          %v274 = vld [vmem:[%s234 + $0x70] sm:$0xff]
          %v275 = vld [vmem:[%s234 + $0x78] sm:$0xff]
          %v276 = vld [vmem:[%s234 + $0x80] sm:$0xff]
          %v277 = vld [vmem:[%s234 + $0x88] sm:$0xff]
          %v278 = vld [vmem:[%s234 + $0x90] sm:$0xff]
          %v279 = vld [vmem:[%s234 + $0x98] sm:$0xff]
          %v280 = vld [vmem:[%s234 + $0xa0] sm:$0xff]
          %v281 = vld [vmem:[%s234 + $0xa8] sm:$0xff]
          %v282 = vld [vmem:[%s234 + $0xb0] sm:$0xff]
          %v283 = vld [vmem:[%s234 + $0xb8] sm:$0xff]
          %v284 = vld [vmem:[%s234 + $0xc0] sm:$0xff]
          %v285 = vld [vmem:[%s234 + $0xc8] sm:$0xff]
          %v286 = vld [vmem:[%s234 + $0xd0] sm:$0xff]
          %v287 = vld [vmem:[%s234 + $0xd8] sm:$0xff]
          %v288 = vld [vmem:[%s234 + $0xe0] sm:$0xff]
          %v289 = vld [vmem:[%s234 + $0xe8] sm:$0xff]
          %v290 = vld [vmem:[%s234 + $0xf0] sm:$0xff]
          %v291 = vld [vmem:[%s234 + $0xf8] sm:$0xff]
          %v292 = vld [vmem:[%s234 + $0x100] sm:$0xff]
          %v293 = vld [vmem:[%s234 + $0x108] sm:$0xff]
          %v294 = vld [vmem:[%s234 + $0x110] sm:$0xff]
          %v295 = vld [vmem:[%s234 + $0x118] sm:$0xff]
          %v296 = vld [vmem:[%s234 + $0x120] sm:$0xff]
          %v297 = vld [vmem:[%s234 + $0x128] sm:$0xff]
          %v298 = vld [vmem:[%s234 + $0x130] sm:$0xff]
          %v299 = vld [vmem:[%s234 + $0x138] sm:$0xff]
          %v300 = vld [vmem:[%s234 + $0x140] sm:$0xff]
          %v301 = vld [vmem:[%s234 + $0x148] sm:$0xff]
          %v302 = vld [vmem:[%s234 + $0x150] sm:$0xff]
          %v303 = vld [vmem:[%s234 + $0x158] sm:$0xff]
          %v304 = vld [vmem:[%s234 + $0x160] sm:$0xff]
          %v305 = vld [vmem:[%s234 + $0x168] sm:$0xff]
          %v306 = vld [vmem:[%s234 + $0x170] sm:$0xff]
          %v307 = vld [vmem:[%s234 + $0x178] sm:$0xff]
          %v308 = vld [vmem:[%s234 + $0x180] sm:$0xff]
          %v309 = vld [vmem:[%s234 + $0x188] sm:$0xff]
          %v310 = vld [vmem:[%s234 + $0x190] sm:$0xff]
          %v311 = vld [vmem:[%s234 + $0x198] sm:$0xff]
          %v312 = vld [vmem:[%s234 + $0x1a0] sm:$0xff]
          %v313 = vld [vmem:[%s234 + $0x1a8] sm:$0xff]
          %v314 = vld [vmem:[%s234 + $0x1b0] sm:$0xff]
          %v315 = vld [vmem:[%s234 + $0x1b8] sm:$0xff]
          %v316 = vld [vmem:[%s234 + $0x1c0] sm:$0xff]
          %v317 = vld [vmem:[%s234 + $0x1c8] sm:$0xff]
          %v318 = vld [vmem:[%s234 + $0x1d0] sm:$0xff]
          %v319 = vld [vmem:[%s234 + $0x1d8] sm:$0xff]
          %v320 = vld [vmem:[%s234 + $0x1e0] sm:$0xff]
          %v321 = vld [vmem:[%s234 + $0x1e8] sm:$0xff]
          %v322 = vld [vmem:[%s234 + $0x1f0] sm:$0xff]
          %v323 = vld [vmem:[%s234 + $0x1f8] sm:$0xff]
          %v324 = vld [vmem:[%s234 + $0x200] sm:$0xff]
          %v325 = vld [vmem:[%s234 + $0x208] sm:$0xff]
          %v326 = vld [vmem:[%s234 + $0x210] sm:$0xff]
          %v327 = vld [vmem:[%s234 + $0x218] sm:$0xff]
          %v328 = vld [vmem:[%s234 + $0x220] sm:$0xff]
          %v329 = vld [vmem:[%s234 + $0x228] sm:$0xff]
          %v330 = vld [vmem:[%s234 + $0x230] sm:$0xff]
          %v331 = vld [vmem:[%s234 + $0x238] sm:$0xff]
          %v332 = vld [vmem:[%s234 + $0x240] sm:$0xff]
          %v333 = vld [vmem:[%s234 + $0x248] sm:$0xff]
          %v334 = vld [vmem:[%s234 + $0x250] sm:$0xff]
          %v335 = vld [vmem:[%s234 + $0x258] sm:$0xff]
          %v336 = vld [vmem:[%s234 + $0x260] sm:$0xff]
          %v337 = vld [vmem:[%s234 + $0x268] sm:$0xff]
          %v338 = vld [vmem:[%s234 + $0x270] sm:$0xff]
          %v339 = vld [vmem:[%s234 + $0x278] sm:$0xff]
          %v340 = vld [vmem:[%s234 + $0x280] sm:$0xff]
          %v341 = vld [vmem:[%s234 + $0x288] sm:$0xff]
          %v342 = vld [vmem:[%s234 + $0x290] sm:$0xff]
          %v343 = vld [vmem:[%s234 + $0x298] sm:$0xff]
          %v344 = vld [vmem:[%s234 + $0x2a0] sm:$0xff]
          %v345 = vld [vmem:[%s234 + $0x2a8] sm:$0xff]
          %v346 = vld [vmem:[%s234 + $0x2b0] sm:$0xff]
          %v347 = vld [vmem:[%s234 + $0x2b8] sm:$0xff]
          %v348 = vld [vmem:[%s234 + $0x2c0] sm:$0xff]
          %v349 = vld [vmem:[%s234 + $0x2c8] sm:$0xff]
          %v350 = vld [vmem:[%s234 + $0x2d0] sm:$0xff]
          %v351 = vld [vmem:[%s234 + $0x2d8] sm:$0xff]
          %v352 = vld [vmem:[%s234 + $0x2e0] sm:$0xff]
          %v353 = vld [vmem:[%s234 + $0x2e8] sm:$0xff]
          %v354 = vld [vmem:[%s234 + $0x2f0] sm:$0xff]
          %v355 = vld [vmem:[%s234 + $0x2f8] sm:$0xff]
          %v356 = vld [vmem:[%s234 + $0x300] sm:$0xff]
          %v357 = vld [vmem:[%s234 + $0x308] sm:$0xff]
          %v358 = vld [vmem:[%s234 + $0x310] sm:$0xff]
          %v359 = vld [vmem:[%s234 + $0x318] sm:$0xff]
          %v360 = vld [vmem:[%s234 + $0x320] sm:$0xff]
          %v361 = vld [vmem:[%s234 + $0x328] sm:$0xff]
          %v362 = vld [vmem:[%s234 + $0x330] sm:$0xff]
          %v363 = vld [vmem:[%s234 + $0x338] sm:$0xff]
          %v364 = vld [vmem:[%s234 + $0x340] sm:$0xff]
          %v365 = vld [vmem:[%s234 + $0x348] sm:$0xff]
          %v366 = vld [vmem:[%s234 + $0x350] sm:$0xff]
          %v367 = vld [vmem:[%s234 + $0x358] sm:$0xff]
          %v368 = vld [vmem:[%s234 + $0x360] sm:$0xff]
          %v369 = vld [vmem:[%s234 + $0x368] sm:$0xff]
          %v370 = vld [vmem:[%s234 + $0x370] sm:$0xff]
          %v371 = vld [vmem:[%s234 + $0x378] sm:$0xff]
          %v372 = vld [vmem:[%s234 + $0x380] sm:$0xff]
          %v373 = vld [vmem:[%s234 + $0x388] sm:$0xff]
          %v374 = vld [vmem:[%s234 + $0x390] sm:$0xff]
          %v375 = vld [vmem:[%s234 + $0x398] sm:$0xff]
          %v376 = vld [vmem:[%s234 + $0x3a0] sm:$0xff]
          %v377 = vld [vmem:[%s234 + $0x3a8] sm:$0xff]
          %v378 = vld [vmem:[%s234 + $0x3b0] sm:$0xff]
          %v379 = vld [vmem:[%s234 + $0x3b8] sm:$0xff]
          %v380 = vld [vmem:[%s234 + $0x3c0] sm:$0xff]
          %v381 = vld [vmem:[%s234 + $0x3c8] sm:$0xff]
          %v382 = vld [vmem:[%s234 + $0x3d0] sm:$0xff]
          %v383 = vld [vmem:[%s234 + $0x3d8] sm:$0xff]
          %v384 = vld [vmem:[%s234 + $0x3e0] sm:$0xff]
          %v385 = vld [vmem:[%s234 + $0x3e8] sm:$0xff]
          %v386 = vld [vmem:[%s234 + $0x3f0] sm:$0xff]
          %v387 = vld [vmem:[%s234 + $0x3f8] sm:$0xff]
          %v388 = vld [vmem:[%s234 + $0x400] sm:$0xff]
          %v389 = vld [vmem:[%s234 + $0x408] sm:$0xff]
          %v390 = vld [vmem:[%s234 + $0x410] sm:$0xff]
          %v391 = vld [vmem:[%s234 + $0x418] sm:$0xff]
          %v392 = vld [vmem:[%s234 + $0x420] sm:$0xff]
          %v393 = vld [vmem:[%s234 + $0x428] sm:$0xff]
          %v394 = vld [vmem:[%s234 + $0x430] sm:$0xff]
          %v395 = vld [vmem:[%s234 + $0x438] sm:$0xff]
          %v396 = vld [vmem:[%s234 + $0x440] sm:$0xff]
          %v397 = vld [vmem:[%s234 + $0x448] sm:$0xff]
          %v398 = vld [vmem:[%s234 + $0x450] sm:$0xff]
          %v399 = vld [vmem:[%s234 + $0x458] sm:$0xff]
          %v400 = vld [vmem:[%s234 + $0x460] sm:$0xff]
          %v401 = vld [vmem:[%s234 + $0x468] sm:$0xff]
          %v402 = vld [vmem:[%s234 + $0x470] sm:$0xff]
          %v403 = vld [vmem:[%s234 + $0x478] sm:$0xff]
          %v404 = vld [vmem:[%s234 + $0x480] sm:$0xff]
          %v405 = vld [vmem:[%s234 + $0x488] sm:$0xff]
          %v406 = vld [vmem:[%s234 + $0x490] sm:$0xff]
          %v407 = vld [vmem:[%s234 + $0x498] sm:$0xff]
          %v408 = vld [vmem:[%s234 + $0x4a0] sm:$0xff]
          %v409 = vld [vmem:[%s234 + $0x4a8] sm:$0xff]
          %v410 = vld [vmem:[%s234 + $0x4b0] sm:$0xff]
          %v411 = vld [vmem:[%s234 + $0x4b8] sm:$0xff]
          %v412 = vld [vmem:[%s234 + $0x4c0] sm:$0xff]
          %v413 = vld [vmem:[%s234 + $0x4c8] sm:$0xff]
          %v414 = vld [vmem:[%s234 + $0x4d0] sm:$0xff]
          %v415 = vld [vmem:[%s234 + $0x4d8] sm:$0xff]
          %v416 = vld [vmem:[%s234 + $0x4e0] sm:$0xff]
          %v417 = vld [vmem:[%s234 + $0x4e8] sm:$0xff]
          %v418 = vld [vmem:[%s234 + $0x4f0] sm:$0xff]
          %v419 = vld [vmem:[%s234 + $0x4f8] sm:$0xff]
          %v420 = vld [vmem:[%s234 + $0x500] sm:$0xff]
          %v421 = vld [vmem:[%s234 + $0x508] sm:$0xff]
          %v422 = vld [vmem:[%s234 + $0x510] sm:$0xff]
          %v423 = vld [vmem:[%s234 + $0x518] sm:$0xff]
          %v424 = vld [vmem:[%s234 + $0x520] sm:$0xff]
          %v425 = vld [vmem:[%s234 + $0x528] sm:$0xff]
          %v426 = vld [vmem:[%s234 + $0x530] sm:$0xff]
          %v427 = vld [vmem:[%s234 + $0x538] sm:$0xff]
          %v428 = vld [vmem:[%s234 + $0x540] sm:$0xff]
          %v429 = vld [vmem:[%s234 + $0x548] sm:$0xff]
          %v430 = vld [vmem:[%s234 + $0x550] sm:$0xff]
          %v431 = vld [vmem:[%s234 + $0x558] sm:$0xff]
          %v432 = vld [vmem:[%s234 + $0x560] sm:$0xff]
          %v433 = vld [vmem:[%s234 + $0x568] sm:$0xff]
          %v434 = vld [vmem:[%s234 + $0x570] sm:$0xff]
          %v435 = vld [vmem:[%s234 + $0x578] sm:$0xff]
          %v436 = vld [vmem:[%s234 + $0x580] sm:$0xff]
          %v437 = vld [vmem:[%s234 + $0x588] sm:$0xff]
          %v438 = vld [vmem:[%s234 + $0x590] sm:$0xff]
          %v439 = vld [vmem:[%s234 + $0x598] sm:$0xff]
          %v440 = vld [vmem:[%s234 + $0x5a0] sm:$0xff]
          %v441 = vld [vmem:[%s234 + $0x5a8] sm:$0xff]
          %v442 = vld [vmem:[%s234 + $0x5b0] sm:$0xff]
          %v443 = vld [vmem:[%s234 + $0x5b8] sm:$0xff]
          %v444 = vld [vmem:[%s234 + $0x5c0] sm:$0xff]
          %v445 = vld [vmem:[%s234 + $0x5c8] sm:$0xff]
          %v446 = vld [vmem:[%s234 + $0x5d0] sm:$0xff]
          %v447 = vld [vmem:[%s234 + $0x5d8] sm:$0xff]
          %v448 = vld [vmem:[%s234 + $0x5e0] sm:$0xff]
          %v449 = vld [vmem:[%s234 + $0x5e8] sm:$0xff]
          %v450 = vld [vmem:[%s234 + $0x5f0] sm:$0xff]
          %v451 = vld [vmem:[%s234 + $0x5f8] sm:$0xff]
          %v452 = vld [vmem:[%s234 + $0x600] sm:$0xff]
          %v453 = vld [vmem:[%s234 + $0x608] sm:$0xff]
          %v454 = vld [vmem:[%s234 + $0x610] sm:$0xff]
          %v455 = vld [vmem:[%s234 + $0x618] sm:$0xff]
          %v456 = vld [vmem:[%s234 + $0x620] sm:$0xff]
          %v457 = vld [vmem:[%s234 + $0x628] sm:$0xff]
          %v458 = vld [vmem:[%s234 + $0x630] sm:$0xff]
          %v459 = vld [vmem:[%s234 + $0x638] sm:$0xff]
          %v460 = vld [vmem:[%s234 + $0x640] sm:$0xff]
          %v461 = vld [vmem:[%s234 + $0x648] sm:$0xff]
          %v462 = vld [vmem:[%s234 + $0x650] sm:$0xff]
          %v463 = vld [vmem:[%s234 + $0x658] sm:$0xff]
          %v464 = vld [vmem:[%s234 + $0x660] sm:$0xff]
          %v465 = vld [vmem:[%s234 + $0x668] sm:$0xff]
          %v466 = vld [vmem:[%s234 + $0x670] sm:$0xff]
          %v467 = vld [vmem:[%s234 + $0x678] sm:$0xff]
          %v468 = vld [vmem:[%s234 + $0x680] sm:$0xff]
          %v469 = vld [vmem:[%s234 + $0x688] sm:$0xff]
          %v470 = vld [vmem:[%s234 + $0x690] sm:$0xff]
          %v471 = vld [vmem:[%s234 + $0x698] sm:$0xff]
          %v472 = vld [vmem:[%s234 + $0x6a0] sm:$0xff]
          %v473 = vld [vmem:[%s234 + $0x6a8] sm:$0xff]
          %v474 = vld [vmem:[%s234 + $0x6b0] sm:$0xff]
          %v475 = vld [vmem:[%s234 + $0x6b8] sm:$0xff]
          %v476 = vld [vmem:[%s234 + $0x6c0] sm:$0xff]
          %v477 = vld [vmem:[%s234 + $0x6c8] sm:$0xff]
          %v478 = vld [vmem:[%s234 + $0x6d0] sm:$0xff]
          %v479 = vld [vmem:[%s234 + $0x6d8] sm:$0xff]
          %v480 = vld [vmem:[%s234 + $0x6e0] sm:$0xff]
          %v481 = vld [vmem:[%s234 + $0x6e8] sm:$0xff]
          %v482 = vld [vmem:[%s234 + $0x6f0] sm:$0xff]
          %v483 = vld [vmem:[%s234 + $0x6f8] sm:$0xff]
          %v484 = vld [vmem:[%s234 + $0x700] sm:$0xff]
          %v485 = vld [vmem:[%s234 + $0x708] sm:$0xff]
          %v486 = vld [vmem:[%s234 + $0x710] sm:$0xff]
          %v487 = vld [vmem:[%s234 + $0x718] sm:$0xff]
          %v488 = vld [vmem:[%s234 + $0x720] sm:$0xff]
          %v489 = vld [vmem:[%s234 + $0x728] sm:$0xff]
          %v490 = vld [vmem:[%s234 + $0x730] sm:$0xff]
          %v491 = vld [vmem:[%s234 + $0x738] sm:$0xff]
          %v492 = vld [vmem:[%s234 + $0x740] sm:$0xff]
          %v493 = vld [vmem:[%s234 + $0x748] sm:$0xff]
          %v494 = vld [vmem:[%s234 + $0x750] sm:$0xff]
          %v495 = vld [vmem:[%s234 + $0x758] sm:$0xff]
          %v496 = vld [vmem:[%s234 + $0x760] sm:$0xff]
          %v497 = vld [vmem:[%s234 + $0x768] sm:$0xff]
          %v498 = vld [vmem:[%s234 + $0x770] sm:$0xff]
          %v499 = vld [vmem:[%s234 + $0x778] sm:$0xff]
          %v500 = vld [vmem:[%s234 + $0x780] sm:$0xff]
          %v501 = vld [vmem:[%s234 + $0x788] sm:$0xff]
          %v502 = vld [vmem:[%s234 + $0x790] sm:$0xff]
          %v503 = vld [vmem:[%s234 + $0x798] sm:$0xff]
          %v504 = vld [vmem:[%s234 + $0x7a0] sm:$0xff]
          %v505 = vld [vmem:[%s234 + $0x7a8] sm:$0xff]
          %v506 = vld [vmem:[%s234 + $0x7b0] sm:$0xff]
          %v507 = vld [vmem:[%s234 + $0x7b8] sm:$0xff]
          %v508 = vld [vmem:[%s234 + $0x7c0] sm:$0xff]
          %v509 = vld [vmem:[%s234 + $0x7c8] sm:$0xff]
          %v510 = vld [vmem:[%s234 + $0x7d0] sm:$0xff]
          %v511 = vld [vmem:[%s234 + $0x7d8] sm:$0xff]
          %v512 = vld [vmem:[%s234 + $0x7e0] sm:$0xff]
          %v513 = vld [vmem:[%s234 + $0x7e8] sm:$0xff]
          %v514 = vld [vmem:[%s234 + $0x7f0] sm:$0xff]
          %v515 = vld [vmem:[%s234 + $0x7f8] sm:$0xff]
          %v516 = vld [vmem:[%s1] sm:$0xff]
          %v517 = vld [vmem:[%s1 + $0x8] sm:$0xff]
          %v518 = vld [vmem:[%s1 + $0x10] sm:$0xff]
          %v519 = vld [vmem:[%s1 + $0x18] sm:$0x1]
          %vm520 = vcmask 203776
          %v522 = vsel %vm520, %v260, 0
          %v525 = vsel %vm520, %v261, 0
          %v528 = vsel %vm520, %v262, 0
          %v531 = vsel %vm520, %v263, 0
          %v534 = vsel %vm520, %v264, 0
          %v537 = vsel %vm520, %v265, 0
          %v540 = vsel %vm520, %v266, 0
          %v543 = vsel %vm520, %v267, 0
          %v546 = vsel %vm520, %v268, 0
          %v549 = vsel %vm520, %v269, 0
          %v552 = vsel %vm520, %v270, 0
          %v555 = vsel %vm520, %v271, 0
          %v558 = vsel %vm520, %v272, 0
          %v561 = vsel %vm520, %v273, 0
          %v564 = vsel %vm520, %v274, 0
          %v567 = vsel %vm520, %v275, 0
          %v570 = vsel %vm520, %v276, 0
          %v573 = vsel %vm520, %v277, 0
          %v576 = vsel %vm520, %v278, 0
          %v579 = vsel %vm520, %v279, 0
          %v582 = vsel %vm520, %v280, 0
          %v585 = vsel %vm520, %v281, 0
          %v588 = vsel %vm520, %v282, 0
          %v591 = vsel %vm520, %v283, 0
          %v594 = vsel %vm520, %v284, 0
          %v597 = vsel %vm520, %v285, 0
          %v600 = vsel %vm520, %v286, 0
          %v603 = vsel %vm520, %v287, 0
          %v606 = vsel %vm520, %v288, 0
          %v609 = vsel %vm520, %v289, 0
          %v612 = vsel %vm520, %v290, 0
          %v615 = vsel %vm520, %v291, 0
          %v618 = vsel %vm520, %v292, 0
          %v621 = vsel %vm520, %v293, 0
          %v624 = vsel %vm520, %v294, 0
          %v627 = vsel %vm520, %v295, 0
          %v630 = vsel %vm520, %v296, 0
          %v633 = vsel %vm520, %v297, 0
          %v636 = vsel %vm520, %v298, 0
          %v639 = vsel %vm520, %v299, 0
          %v642 = vsel %vm520, %v300, 0
          %v645 = vsel %vm520, %v301, 0
          %v648 = vsel %vm520, %v302, 0
          %v651 = vsel %vm520, %v303, 0
          %v654 = vsel %vm520, %v304, 0
          %v657 = vsel %vm520, %v305, 0
          %v660 = vsel %vm520, %v306, 0
          %v663 = vsel %vm520, %v307, 0
          %v666 = vsel %vm520, %v308, 0
          %v669 = vsel %vm520, %v309, 0
          %v672 = vsel %vm520, %v310, 0
          %v675 = vsel %vm520, %v311, 0
          %v678 = vsel %vm520, %v312, 0
          %v681 = vsel %vm520, %v313, 0
          %v684 = vsel %vm520, %v314, 0
          %v687 = vsel %vm520, %v315, 0
          %v690 = vsel %vm520, %v316, 0
          %v693 = vsel %vm520, %v317, 0
          %v696 = vsel %vm520, %v318, 0
          %v699 = vsel %vm520, %v319, 0
          %v702 = vsel %vm520, %v320, 0
          %v705 = vsel %vm520, %v321, 0
          %v708 = vsel %vm520, %v322, 0
          %v711 = vsel %vm520, %v323, 0
          %v714 = vsel %vm520, %v324, 0
          %v717 = vsel %vm520, %v325, 0
          %v720 = vsel %vm520, %v326, 0
          %v723 = vsel %vm520, %v327, 0
          %v726 = vsel %vm520, %v328, 0
          %v729 = vsel %vm520, %v329, 0
          %v732 = vsel %vm520, %v330, 0
          %v735 = vsel %vm520, %v331, 0
          %v738 = vsel %vm520, %v332, 0
          %v741 = vsel %vm520, %v333, 0
          %v744 = vsel %vm520, %v334, 0
          %v747 = vsel %vm520, %v335, 0
          %v750 = vsel %vm520, %v336, 0
          %v753 = vsel %vm520, %v337, 0
          %v756 = vsel %vm520, %v338, 0
          %v759 = vsel %vm520, %v339, 0
          %v762 = vsel %vm520, %v340, 0
          %v765 = vsel %vm520, %v341, 0
          %v768 = vsel %vm520, %v342, 0
          %v771 = vsel %vm520, %v343, 0
          %v774 = vsel %vm520, %v344, 0
          %v777 = vsel %vm520, %v345, 0
          %v780 = vsel %vm520, %v346, 0
          %v783 = vsel %vm520, %v347, 0
          %v786 = vsel %vm520, %v348, 0
          %v789 = vsel %vm520, %v349, 0
          %v792 = vsel %vm520, %v350, 0
          %v795 = vsel %vm520, %v351, 0
          %v798 = vsel %vm520, %v352, 0
          %v801 = vsel %vm520, %v353, 0
          %v804 = vsel %vm520, %v354, 0
          %v807 = vsel %vm520, %v355, 0
          %v810 = vsel %vm520, %v356, 0
          %v813 = vsel %vm520, %v357, 0
          %v816 = vsel %vm520, %v358, 0
          %v819 = vsel %vm520, %v359, 0
          %v822 = vsel %vm520, %v360, 0
          %v825 = vsel %vm520, %v361, 0
          %v828 = vsel %vm520, %v362, 0
          %v831 = vsel %vm520, %v363, 0
          %v834 = vsel %vm520, %v364, 0
          %v837 = vsel %vm520, %v365, 0
          %v840 = vsel %vm520, %v366, 0
          %v843 = vsel %vm520, %v367, 0
          %v846 = vsel %vm520, %v368, 0
          %v849 = vsel %vm520, %v369, 0
          %v852 = vsel %vm520, %v370, 0
          %v855 = vsel %vm520, %v371, 0
          %v858 = vsel %vm520, %v372, 0
          %v861 = vsel %vm520, %v373, 0
          %v864 = vsel %vm520, %v374, 0
          %v867 = vsel %vm520, %v375, 0
          %v870 = vsel %vm520, %v376, 0
          %v873 = vsel %vm520, %v377, 0
          %v876 = vsel %vm520, %v378, 0
          %v879 = vsel %vm520, %v379, 0
          %v882 = vsel %vm520, %v380, 0
          %v885 = vsel %vm520, %v381, 0
          %v888 = vsel %vm520, %v382, 0
          %v891 = vsel %vm520, %v383, 0
          %v894 = vsel %vm520, %v384, 0
          %v897 = vsel %vm520, %v385, 0
          %v900 = vsel %vm520, %v386, 0
          %v903 = vsel %vm520, %v387, 0
          %v906 = vsel %vm520, %v388, 0
          %v909 = vsel %vm520, %v389, 0
          %v912 = vsel %vm520, %v390, 0
          %v915 = vsel %vm520, %v391, 0
          %v918 = vsel %vm520, %v392, 0
          %v921 = vsel %vm520, %v393, 0
          %v924 = vsel %vm520, %v394, 0
          %v927 = vsel %vm520, %v395, 0
          %v930 = vsel %vm520, %v396, 0
          %v933 = vsel %vm520, %v397, 0
          %v936 = vsel %vm520, %v398, 0
          %v939 = vsel %vm520, %v399, 0
          %v942 = vsel %vm520, %v400, 0
          %v945 = vsel %vm520, %v401, 0
          %v948 = vsel %vm520, %v402, 0
          %v951 = vsel %vm520, %v403, 0
          %v954 = vsel %vm520, %v404, 0
          %v957 = vsel %vm520, %v405, 0
          %v960 = vsel %vm520, %v406, 0
          %v963 = vsel %vm520, %v407, 0
          %v966 = vsel %vm520, %v408, 0
          %v969 = vsel %vm520, %v409, 0
          %v972 = vsel %vm520, %v410, 0
          %v975 = vsel %vm520, %v411, 0
          %v978 = vsel %vm520, %v412, 0
          %v981 = vsel %vm520, %v413, 0
          %v984 = vsel %vm520, %v414, 0
          %v987 = vsel %vm520, %v415, 0
          %v990 = vsel %vm520, %v416, 0
          %v993 = vsel %vm520, %v417, 0
          %v996 = vsel %vm520, %v418, 0
          %v999 = vsel %vm520, %v419, 0
          %v1002 = vsel %vm520, %v420, 0
          %v1005 = vsel %vm520, %v421, 0
          %v1008 = vsel %vm520, %v422, 0
          %v1011 = vsel %vm520, %v423, 0
          %v1014 = vsel %vm520, %v424, 0
          %v1017 = vsel %vm520, %v425, 0
          %v1020 = vsel %vm520, %v426, 0
          %v1023 = vsel %vm520, %v427, 0
          %v1026 = vsel %vm520, %v428, 0
          %v1029 = vsel %vm520, %v429, 0
          %v1032 = vsel %vm520, %v430, 0
          %v1035 = vsel %vm520, %v431, 0
          %v1038 = vsel %vm520, %v432, 0
          %v1041 = vsel %vm520, %v433, 0
          %v1044 = vsel %vm520, %v434, 0
          %v1047 = vsel %vm520, %v435, 0
          %v1050 = vsel %vm520, %v436, 0
          %v1053 = vsel %vm520, %v437, 0
          %v1056 = vsel %vm520, %v438, 0
          %v1059 = vsel %vm520, %v439, 0
          %v1062 = vsel %vm520, %v440, 0
          %v1065 = vsel %vm520, %v441, 0
          %v1068 = vsel %vm520, %v442, 0
          %v1071 = vsel %vm520, %v443, 0
          %v1074 = vsel %vm520, %v444, 0
          %v1077 = vsel %vm520, %v445, 0
          %v1080 = vsel %vm520, %v446, 0
          %v1083 = vsel %vm520, %v447, 0
          %v1086 = vsel %vm520, %v448, 0
          %v1089 = vsel %vm520, %v449, 0
          %v1092 = vsel %vm520, %v450, 0
          %v1095 = vsel %vm520, %v451, 0
          %v1098 = vsel %vm520, %v452, 0
          %v1101 = vsel %vm520, %v453, 0
          %v1104 = vsel %vm520, %v454, 0
          %v1107 = vsel %vm520, %v455, 0
          %v1110 = vsel %vm520, %v456, 0
          %v1113 = vsel %vm520, %v457, 0
          %v1116 = vsel %vm520, %v458, 0
          %v1119 = vsel %vm520, %v459, 0
          %v1122 = vsel %vm520, %v460, 0
          %v1125 = vsel %vm520, %v461, 0
          %v1128 = vsel %vm520, %v462, 0
          %v1131 = vsel %vm520, %v463, 0
          %v1134 = vsel %vm520, %v464, 0
          %v1137 = vsel %vm520, %v465, 0
          %v1140 = vsel %vm520, %v466, 0
          %v1143 = vsel %vm520, %v467, 0
          %v1146 = vsel %vm520, %v468, 0
          %v1149 = vsel %vm520, %v469, 0
          %v1152 = vsel %vm520, %v470, 0
          %v1155 = vsel %vm520, %v471, 0
          %v1158 = vsel %vm520, %v472, 0
          %v1161 = vsel %vm520, %v473, 0
          %v1164 = vsel %vm520, %v474, 0
          %v1167 = vsel %vm520, %v475, 0
          %v1170 = vsel %vm520, %v476, 0
          %v1173 = vsel %vm520, %v477, 0
          %v1176 = vsel %vm520, %v478, 0
          %v1179 = vsel %vm520, %v479, 0
          %v1182 = vsel %vm520, %v480, 0
          %v1185 = vsel %vm520, %v481, 0
          %v1188 = vsel %vm520, %v482, 0
          %v1191 = vsel %vm520, %v483, 0
          %v1194 = vsel %vm520, %v484, 0
          %v1197 = vsel %vm520, %v485, 0
          %v1200 = vsel %vm520, %v486, 0
          %v1203 = vsel %vm520, %v487, 0
          %v1206 = vsel %vm520, %v488, 0
          %v1209 = vsel %vm520, %v489, 0
          %v1212 = vsel %vm520, %v490, 0
          %v1215 = vsel %vm520, %v491, 0
          %v1218 = vsel %vm520, %v492, 0
          %v1221 = vsel %vm520, %v493, 0
          %v1224 = vsel %vm520, %v494, 0
          %v1227 = vsel %vm520, %v495, 0
          %v1230 = vsel %vm520, %v496, 0
          %v1233 = vsel %vm520, %v497, 0
          %v1236 = vsel %vm520, %v498, 0
          %v1239 = vsel %vm520, %v499, 0
          %v1242 = vsel %vm520, %v500, 0
          %v1245 = vsel %vm520, %v501, 0
          %v1248 = vsel %vm520, %v502, 0
          %v1251 = vsel %vm520, %v503, 0
          %v1254 = vsel %vm520, %v504, 0
          %v1257 = vsel %vm520, %v505, 0
          %v1260 = vsel %vm520, %v506, 0
          %v1263 = vsel %vm520, %v507, 0
          %v1266 = vsel %vm520, %v508, 0
          %v1269 = vsel %vm520, %v509, 0
          %v1272 = vsel %vm520, %v510, 0
          %v1275 = vsel %vm520, %v511, 0
          %v1278 = vsel %vm520, %v512, 0
          %v1281 = vsel %vm520, %v513, 0
          %v1284 = vsel %vm520, %v514, 0
          %v1287 = vsel %vm520, %v515, 0
          %vm1289 = vcmask 1040384
          %v1291 = vsel %vm1289, %v519, 0
          %1293 = vmatprep.subr.mxu0 0.0
          %1294 = vmatpush1.msra.mxu0 0.0
          %1295 = vmatprep.subr.mxu0 0.0
          %1296 = vmatpush1.msra.mxu0 0.0
          %1297 = vmatprep.subr.mxu0 0.0
          %1298 = vmatpush1.msra.mxu0 0.0
          %1299 = vmatprep.subr.mxu0 0.0
          %1300 = vmatpush1.msra.mxu0 0.0
          %1301 = vmatprep.subr.mxu0 0.0
          %1302 = vmatpush1.msra.mxu0 0.0
          %1303 = vmatprep.subr.mxu0 0.0
          %1304 = vmatpush1.msra.mxu0 0.0
          %1305 = vmatprep.subr.mxu0 0.0
          %1306 = vmatpush1.msra.mxu0 0.0
          %1307 = vmatprep.subr.mxu0 0.0
          %1308 = vmatpush1.msra.mxu0 0.0
          %1309 = vmatprep.subr.mxu0 0.0
          %1310 = vmatpush1.msra.mxu0 0.0
          %1311 = vmatprep.subr.mxu0 0.0
          %1312 = vmatpush1.msra.mxu0 0.0
          %1313 = vmatprep.subr.mxu0 0.0
          %1314 = vmatpush1.msra.mxu0 0.0
          %1315 = vmatprep.subr.mxu0 0.0
          %1316 = vmatpush1.msra.mxu0 0.0
          %1317 = vmatprep.subr.mxu0 0.0
          %1318 = vmatpush1.msra.mxu0 %v1291
          %1319 = vmatprep.subr.mxu0 0.0
          %1320 = vmatpush1.msra.mxu0 %v518
          %1321 = vmatprep.subr.mxu0 0.0
          %1322 = vmatpush1.msra.mxu0 %v517
          %1323 = vmatprep.subr.mxu0 0.0
          %1324 = vmatpush1.msra.mxu0 %v516
          %1325 = vmatprep.subr.mxu0 0.0
          %1326 = vmatpush2.msra.mxu0 0.0
          %1327 = vmatprep.subr.mxu0 0.0
          %1328 = vmatpush2.msra.mxu0 0.0
          %1329 = vmatprep.subr.mxu0 0.0
          %1330 = vmatpush2.msra.mxu0 0.0
          %1331 = vmatprep.subr.mxu0 0.0
          %1332 = vmatpush2.msra.mxu0 0.0
          %1333 = vmatprep.subr.mxu0 0.0
          %1334 = vmatpush2.msra.mxu0 0.0
          %1335 = vmatprep.subr.mxu0 0.0
          %1336 = vmatpush2.msra.mxu0 0.0
          %1337 = vmatprep.subr.mxu0 0.0
          %1338 = vmatpush2.msra.mxu0 0.0
          %1339 = vmatprep.subr.mxu0 0.0
          %1340 = vmatpush2.msra.mxu0 0.0
          %1341 = vmatprep.subr.mxu0 0.0
          %1342 = vmatpush2.msra.mxu0 0.0
          %1343 = vmatprep.subr.mxu0 0.0
          %1344 = vmatpush2.msra.mxu0 0.0
          %1345 = vmatprep.subr.mxu0 0.0
          %1346 = vmatpush2.msra.mxu0 0.0
          %1347 = vmatprep.subr.mxu0 0.0
          %1348 = vmatpush2.msra.mxu0 0.0
          %1349 = vmatprep.subr.mxu0 0.0
          %1350 = vmatpush2.msra.mxu0 0.0
          %1351 = vmatprep.subr.mxu0 0.0
          %1352 = vmatpush2.msra.mxu0 0.0
          %1353 = vmatprep.subr.mxu0 0.0
          %1354 = vmatpush2.msra.mxu0 0.0
          %1355 = vmatprep.subr.mxu0 0.0
          %1356 = vmatpush2.msra.mxu0 0.0
          %1357 = vmatprep.mubr.f32.mxu0 0.0
          %1358 = vmatmul.mubr.f32.gmra.mxu0 %v522
          %v1359 = vpop.f32.mrf.mxu0
          %v1360 = vadd.f32 0.0, %v1359
          %v1361 = vpop.f32.mrf.mxu0
          %1362 = vmatprep.mubr.f32.mxu0 0.0
          %1363 = vmatmul.mubr.f32.gmra.mxu0 %v525
          %v1364 = vpop.f32.mrf.mxu0
          %v1365 = vadd.f32 0.0, %v1364
          %v1366 = vpop.f32.mrf.mxu0
          %1367 = vmatprep.mubr.f32.mxu0 0.0
          %1368 = vmatmul.mubr.f32.gmra.mxu0 %v528
          %v1369 = vpop.f32.mrf.mxu0
          %v1370 = vadd.f32 0.0, %v1369
          %v1371 = vpop.f32.mrf.mxu0
          %1372 = vmatprep.mubr.f32.mxu0 0.0
          %1373 = vmatmul.mubr.f32.gmra.mxu0 %v531
          %v1374 = vpop.f32.mrf.mxu0
          %v1375 = vadd.f32 0.0, %v1374
          %v1376 = vpop.f32.mrf.mxu0
          %1377 = vmatprep.mubr.f32.mxu0 0.0
          %1378 = vmatmul.mubr.f32.gmra.mxu0 %v534
          %v1379 = vpop.f32.mrf.mxu0
          %v1380 = vadd.f32 0.0, %v1379
          %v1381 = vpop.f32.mrf.mxu0
          %1382 = vmatprep.mubr.f32.mxu0 0.0
          %1383 = vmatmul.mubr.f32.gmra.mxu0 %v537
          %v1384 = vpop.f32.mrf.mxu0
          %v1385 = vadd.f32 0.0, %v1384
          %v1386 = vpop.f32.mrf.mxu0
          %1387 = vmatprep.mubr.f32.mxu0 0.0
          %1388 = vmatmul.mubr.f32.gmra.mxu0 %v540
          %v1389 = vpop.f32.mrf.mxu0
          %v1390 = vadd.f32 0.0, %v1389
          %v1391 = vpop.f32.mrf.mxu0
          %1392 = vmatprep.mubr.f32.mxu0 0.0
          %1393 = vmatmul.mubr.f32.gmra.mxu0 %v543
          %v1394 = vpop.f32.mrf.mxu0
          %v1395 = vadd.f32 0.0, %v1394
          %v1396 = vpop.f32.mrf.mxu0
          %1397 = vmatprep.mubr.f32.mxu0 0.0
          %1398 = vmatmul.mubr.f32.gmra.mxu0 %v546
          %v1399 = vpop.f32.mrf.mxu0
          %v1400 = vadd.f32 0.0, %v1399
          %v1401 = vpop.f32.mrf.mxu0
          %1402 = vmatprep.mubr.f32.mxu0 0.0
          %1403 = vmatmul.mubr.f32.gmra.mxu0 %v549
          %v1404 = vpop.f32.mrf.mxu0
          %v1405 = vadd.f32 0.0, %v1404
          %v1406 = vpop.f32.mrf.mxu0
          %1407 = vmatprep.mubr.f32.mxu0 0.0
          %1408 = vmatmul.mubr.f32.gmra.mxu0 %v552
          %v1409 = vpop.f32.mrf.mxu0
          %v1410 = vadd.f32 0.0, %v1409
          %v1411 = vpop.f32.mrf.mxu0
          %1412 = vmatprep.mubr.f32.mxu0 0.0
          %1413 = vmatmul.mubr.f32.gmra.mxu0 %v555
          %v1414 = vpop.f32.mrf.mxu0
          %v1415 = vadd.f32 0.0, %v1414
          %v1416 = vpop.f32.mrf.mxu0
          %1417 = vmatprep.mubr.f32.mxu0 0.0
          %1418 = vmatmul.mubr.f32.gmra.mxu0 %v558
          %v1419 = vpop.f32.mrf.mxu0
          %v1420 = vadd.f32 0.0, %v1419
          %v1421 = vpop.f32.mrf.mxu0
          %1422 = vmatprep.mubr.f32.mxu0 0.0
          %1423 = vmatmul.mubr.f32.gmra.mxu0 %v561
          %v1424 = vpop.f32.mrf.mxu0
          %v1425 = vadd.f32 0.0, %v1424
          %v1426 = vpop.f32.mrf.mxu0
          %1427 = vmatprep.mubr.f32.mxu0 0.0
          %1428 = vmatmul.mubr.f32.gmra.mxu0 %v564
          %v1429 = vpop.f32.mrf.mxu0
          %v1430 = vadd.f32 0.0, %v1429
          %v1431 = vpop.f32.mrf.mxu0
          %1432 = vmatprep.mubr.f32.mxu0 0.0
          %1433 = vmatmul.mubr.f32.gmra.mxu0 %v567
          %v1434 = vpop.f32.mrf.mxu0
          %v1435 = vadd.f32 0.0, %v1434
          %v1436 = vpop.f32.mrf.mxu0
          %1437 = vmatprep.mubr.f32.mxu0 0.0
          %1438 = vmatmul.mubr.f32.gmra.mxu0 %v570
          %v1439 = vpop.f32.mrf.mxu0
          %v1440 = vadd.f32 0.0, %v1439
          %v1441 = vpop.f32.mrf.mxu0
          %1442 = vmatprep.mubr.f32.mxu0 0.0
          %1443 = vmatmul.mubr.f32.gmra.mxu0 %v573
          %v1444 = vpop.f32.mrf.mxu0
          %v1445 = vadd.f32 0.0, %v1444
          %v1446 = vpop.f32.mrf.mxu0
          %1447 = vmatprep.mubr.f32.mxu0 0.0
          %1448 = vmatmul.mubr.f32.gmra.mxu0 %v576
          %v1449 = vpop.f32.mrf.mxu0
          %v1450 = vadd.f32 0.0, %v1449
          %v1451 = vpop.f32.mrf.mxu0
          %1452 = vmatprep.mubr.f32.mxu0 0.0
          %1453 = vmatmul.mubr.f32.gmra.mxu0 %v579
          %v1454 = vpop.f32.mrf.mxu0
          %v1455 = vadd.f32 0.0, %v1454
          %v1456 = vpop.f32.mrf.mxu0
          %1457 = vmatprep.mubr.f32.mxu0 0.0
          %1458 = vmatmul.mubr.f32.gmra.mxu0 %v582
          %v1459 = vpop.f32.mrf.mxu0
          %v1460 = vadd.f32 0.0, %v1459
          %v1461 = vpop.f32.mrf.mxu0
          %1462 = vmatprep.mubr.f32.mxu0 0.0
          %1463 = vmatmul.mubr.f32.gmra.mxu0 %v585
          %v1464 = vpop.f32.mrf.mxu0
          %v1465 = vadd.f32 0.0, %v1464
          %v1466 = vpop.f32.mrf.mxu0
          %1467 = vmatprep.mubr.f32.mxu0 0.0
          %1468 = vmatmul.mubr.f32.gmra.mxu0 %v588
          %v1469 = vpop.f32.mrf.mxu0
          %v1470 = vadd.f32 0.0, %v1469
          %v1471 = vpop.f32.mrf.mxu0
          %1472 = vmatprep.mubr.f32.mxu0 0.0
          %1473 = vmatmul.mubr.f32.gmra.mxu0 %v591
          %v1474 = vpop.f32.mrf.mxu0
          %v1475 = vadd.f32 0.0, %v1474
          %v1476 = vpop.f32.mrf.mxu0
          %1477 = vmatprep.mubr.f32.mxu0 0.0
          %1478 = vmatmul.mubr.f32.gmra.mxu0 %v594
          %v1479 = vpop.f32.mrf.mxu0
          %v1480 = vadd.f32 0.0, %v1479
          %v1481 = vpop.f32.mrf.mxu0
          %1482 = vmatprep.mubr.f32.mxu0 0.0
          %1483 = vmatmul.mubr.f32.gmra.mxu0 %v597
          %v1484 = vpop.f32.mrf.mxu0
          %v1485 = vadd.f32 0.0, %v1484
          %v1486 = vpop.f32.mrf.mxu0
          %1487 = vmatprep.mubr.f32.mxu0 0.0
          %1488 = vmatmul.mubr.f32.gmra.mxu0 %v600
          %v1489 = vpop.f32.mrf.mxu0
          %v1490 = vadd.f32 0.0, %v1489
          %v1491 = vpop.f32.mrf.mxu0
          %1492 = vmatprep.mubr.f32.mxu0 0.0
          %1493 = vmatmul.mubr.f32.gmra.mxu0 %v603
          %v1494 = vpop.f32.mrf.mxu0
          %v1495 = vadd.f32 0.0, %v1494
          %v1496 = vpop.f32.mrf.mxu0
          %1497 = vmatprep.mubr.f32.mxu0 0.0
          %1498 = vmatmul.mubr.f32.gmra.mxu0 %v606
          %v1499 = vpop.f32.mrf.mxu0
          %v1500 = vadd.f32 0.0, %v1499
          %v1501 = vpop.f32.mrf.mxu0
          %1502 = vmatprep.mubr.f32.mxu0 0.0
          %1503 = vmatmul.mubr.f32.gmra.mxu0 %v609
          %v1504 = vpop.f32.mrf.mxu0
          %v1505 = vadd.f32 0.0, %v1504
          %v1506 = vpop.f32.mrf.mxu0
          %1507 = vmatprep.mubr.f32.mxu0 0.0
          %1508 = vmatmul.mubr.f32.gmra.mxu0 %v612
          %v1509 = vpop.f32.mrf.mxu0
          %v1510 = vadd.f32 0.0, %v1509
          %v1511 = vpop.f32.mrf.mxu0
          %1512 = vmatprep.mubr.f32.mxu0 0.0
          %1513 = vmatmul.mubr.f32.gmra.mxu0 %v615
          %v1514 = vpop.f32.mrf.mxu0
          %v1515 = vadd.f32 0.0, %v1514
          %v1516 = vpop.f32.mrf.mxu0
          %1517 = vmatprep.mubr.f32.mxu0 0.0
          %1518 = vmatmul.mubr.f32.gmra.mxu0 %v618
          %v1519 = vpop.f32.mrf.mxu0
          %v1520 = vadd.f32 0.0, %v1519
          %v1521 = vpop.f32.mrf.mxu0
          %1522 = vmatprep.mubr.f32.mxu0 0.0
          %1523 = vmatmul.mubr.f32.gmra.mxu0 %v621
          %v1524 = vpop.f32.mrf.mxu0
          %v1525 = vadd.f32 0.0, %v1524
          %v1526 = vpop.f32.mrf.mxu0
          %1527 = vmatprep.mubr.f32.mxu0 0.0
          %1528 = vmatmul.mubr.f32.gmra.mxu0 %v624
          %v1529 = vpop.f32.mrf.mxu0
          %v1530 = vadd.f32 0.0, %v1529
          %v1531 = vpop.f32.mrf.mxu0
          %1532 = vmatprep.mubr.f32.mxu0 0.0
          %1533 = vmatmul.mubr.f32.gmra.mxu0 %v627
          %v1534 = vpop.f32.mrf.mxu0
          %v1535 = vadd.f32 0.0, %v1534
          %v1536 = vpop.f32.mrf.mxu0
          %1537 = vmatprep.mubr.f32.mxu0 0.0
          %1538 = vmatmul.mubr.f32.gmra.mxu0 %v630
          %v1539 = vpop.f32.mrf.mxu0
          %v1540 = vadd.f32 0.0, %v1539
          %v1541 = vpop.f32.mrf.mxu0
          %1542 = vmatprep.mubr.f32.mxu0 0.0
          %1543 = vmatmul.mubr.f32.gmra.mxu0 %v633
          %v1544 = vpop.f32.mrf.mxu0
          %v1545 = vadd.f32 0.0, %v1544
          %v1546 = vpop.f32.mrf.mxu0
          %1547 = vmatprep.mubr.f32.mxu0 0.0
          %1548 = vmatmul.mubr.f32.gmra.mxu0 %v636
          %v1549 = vpop.f32.mrf.mxu0
          %v1550 = vadd.f32 0.0, %v1549
          %v1551 = vpop.f32.mrf.mxu0
          %1552 = vmatprep.mubr.f32.mxu0 0.0
          %1553 = vmatmul.mubr.f32.gmra.mxu0 %v639
          %v1554 = vpop.f32.mrf.mxu0
          %v1555 = vadd.f32 0.0, %v1554
          %v1556 = vpop.f32.mrf.mxu0
          %1557 = vmatprep.mubr.f32.mxu0 0.0
          %1558 = vmatmul.mubr.f32.gmra.mxu0 %v642
          %v1559 = vpop.f32.mrf.mxu0
          %v1560 = vadd.f32 0.0, %v1559
          %v1561 = vpop.f32.mrf.mxu0
          %1562 = vmatprep.mubr.f32.mxu0 0.0
          %1563 = vmatmul.mubr.f32.gmra.mxu0 %v645
          %v1564 = vpop.f32.mrf.mxu0
          %v1565 = vadd.f32 0.0, %v1564
          %v1566 = vpop.f32.mrf.mxu0
          %1567 = vmatprep.mubr.f32.mxu0 0.0
          %1568 = vmatmul.mubr.f32.gmra.mxu0 %v648
          %v1569 = vpop.f32.mrf.mxu0
          %v1570 = vadd.f32 0.0, %v1569
          %v1571 = vpop.f32.mrf.mxu0
          %1572 = vmatprep.mubr.f32.mxu0 0.0
          %1573 = vmatmul.mubr.f32.gmra.mxu0 %v651
          %v1574 = vpop.f32.mrf.mxu0
          %v1575 = vadd.f32 0.0, %v1574
          %v1576 = vpop.f32.mrf.mxu0
          %1577 = vmatprep.mubr.f32.mxu0 0.0
          %1578 = vmatmul.mubr.f32.gmra.mxu0 %v654
          %v1579 = vpop.f32.mrf.mxu0
          %v1580 = vadd.f32 0.0, %v1579
          %v1581 = vpop.f32.mrf.mxu0
          %1582 = vmatprep.mubr.f32.mxu0 0.0
          %1583 = vmatmul.mubr.f32.gmra.mxu0 %v657
          %v1584 = vpop.f32.mrf.mxu0
          %v1585 = vadd.f32 0.0, %v1584
          %v1586 = vpop.f32.mrf.mxu0
          %1587 = vmatprep.mubr.f32.mxu0 0.0
          %1588 = vmatmul.mubr.f32.gmra.mxu0 %v660
          %v1589 = vpop.f32.mrf.mxu0
          %v1590 = vadd.f32 0.0, %v1589
          %v1591 = vpop.f32.mrf.mxu0
          %1592 = vmatprep.mubr.f32.mxu0 0.0
          %1593 = vmatmul.mubr.f32.gmra.mxu0 %v663
          %v1594 = vpop.f32.mrf.mxu0
          %v1595 = vadd.f32 0.0, %v1594
          %v1596 = vpop.f32.mrf.mxu0
          %1597 = vmatprep.mubr.f32.mxu0 0.0
          %1598 = vmatmul.mubr.f32.gmra.mxu0 %v666
          %v1599 = vpop.f32.mrf.mxu0
          %v1600 = vadd.f32 0.0, %v1599
          %v1601 = vpop.f32.mrf.mxu0
          %1602 = vmatprep.mubr.f32.mxu0 0.0
          %1603 = vmatmul.mubr.f32.gmra.mxu0 %v669
          %v1604 = vpop.f32.mrf.mxu0
          %v1605 = vadd.f32 0.0, %v1604
          %v1606 = vpop.f32.mrf.mxu0
          %1607 = vmatprep.mubr.f32.mxu0 0.0
          %1608 = vmatmul.mubr.f32.gmra.mxu0 %v672
          %v1609 = vpop.f32.mrf.mxu0
          %v1610 = vadd.f32 0.0, %v1609
          %v1611 = vpop.f32.mrf.mxu0
          %1612 = vmatprep.mubr.f32.mxu0 0.0
          %1613 = vmatmul.mubr.f32.gmra.mxu0 %v675
          %v1614 = vpop.f32.mrf.mxu0
          %v1615 = vadd.f32 0.0, %v1614
          %v1616 = vpop.f32.mrf.mxu0
          %1617 = vmatprep.mubr.f32.mxu0 0.0
          %1618 = vmatmul.mubr.f32.gmra.mxu0 %v678
          %v1619 = vpop.f32.mrf.mxu0
          %v1620 = vadd.f32 0.0, %v1619
          %v1621 = vpop.f32.mrf.mxu0
          %1622 = vmatprep.mubr.f32.mxu0 0.0
          %1623 = vmatmul.mubr.f32.gmra.mxu0 %v681
          %v1624 = vpop.f32.mrf.mxu0
          %v1625 = vadd.f32 0.0, %v1624
          %v1626 = vpop.f32.mrf.mxu0
          %1627 = vmatprep.mubr.f32.mxu0 0.0
          %1628 = vmatmul.mubr.f32.gmra.mxu0 %v684
          %v1629 = vpop.f32.mrf.mxu0
          %v1630 = vadd.f32 0.0, %v1629
          %v1631 = vpop.f32.mrf.mxu0
          %1632 = vmatprep.mubr.f32.mxu0 0.0
          %1633 = vmatmul.mubr.f32.gmra.mxu0 %v687
          %v1634 = vpop.f32.mrf.mxu0
          %v1635 = vadd.f32 0.0, %v1634
          %v1636 = vpop.f32.mrf.mxu0
          %1637 = vmatprep.mubr.f32.mxu0 0.0
          %1638 = vmatmul.mubr.f32.gmra.mxu0 %v690
          %v1639 = vpop.f32.mrf.mxu0
          %v1640 = vadd.f32 0.0, %v1639
          %v1641 = vpop.f32.mrf.mxu0
          %1642 = vmatprep.mubr.f32.mxu0 0.0
          %1643 = vmatmul.mubr.f32.gmra.mxu0 %v693
          %v1644 = vpop.f32.mrf.mxu0
          %v1645 = vadd.f32 0.0, %v1644
          %v1646 = vpop.f32.mrf.mxu0
          %1647 = vmatprep.mubr.f32.mxu0 0.0
          %1648 = vmatmul.mubr.f32.gmra.mxu0 %v696
          %v1649 = vpop.f32.mrf.mxu0
          %v1650 = vadd.f32 0.0, %v1649
          %v1651 = vpop.f32.mrf.mxu0
          %1652 = vmatprep.mubr.f32.mxu0 0.0
          %1653 = vmatmul.mubr.f32.gmra.mxu0 %v699
          %v1654 = vpop.f32.mrf.mxu0
          %v1655 = vadd.f32 0.0, %v1654
          %v1656 = vpop.f32.mrf.mxu0
          %1657 = vmatprep.mubr.f32.mxu0 0.0
          %1658 = vmatmul.mubr.f32.gmra.mxu0 %v702
          %v1659 = vpop.f32.mrf.mxu0
          %v1660 = vadd.f32 0.0, %v1659
          %v1661 = vpop.f32.mrf.mxu0
          %1662 = vmatprep.mubr.f32.mxu0 0.0
          %1663 = vmatmul.mubr.f32.gmra.mxu0 %v705
          %v1664 = vpop.f32.mrf.mxu0
          %v1665 = vadd.f32 0.0, %v1664
          %v1666 = vpop.f32.mrf.mxu0
          %1667 = vmatprep.mubr.f32.mxu0 0.0
          %1668 = vmatmul.mubr.f32.gmra.mxu0 %v708
          %v1669 = vpop.f32.mrf.mxu0
          %v1670 = vadd.f32 0.0, %v1669
          %v1671 = vpop.f32.mrf.mxu0
          %1672 = vmatprep.mubr.f32.mxu0 0.0
          %1673 = vmatmul.mubr.f32.gmra.mxu0 %v711
          %v1674 = vpop.f32.mrf.mxu0
          %v1675 = vadd.f32 0.0, %v1674
          %v1676 = vpop.f32.mrf.mxu0
          %1677 = vmatprep.mubr.f32.mxu0 0.0
          %1678 = vmatmul.mubr.f32.gmra.mxu0 %v714
          %v1679 = vpop.f32.mrf.mxu0
          %v1680 = vadd.f32 0.0, %v1679
          %v1681 = vpop.f32.mrf.mxu0
          %1682 = vmatprep.mubr.f32.mxu0 0.0
          %1683 = vmatmul.mubr.f32.gmra.mxu0 %v717
          %v1684 = vpop.f32.mrf.mxu0
          %v1685 = vadd.f32 0.0, %v1684
          %v1686 = vpop.f32.mrf.mxu0
          %1687 = vmatprep.mubr.f32.mxu0 0.0
          %1688 = vmatmul.mubr.f32.gmra.mxu0 %v720
          %v1689 = vpop.f32.mrf.mxu0
          %v1690 = vadd.f32 0.0, %v1689
          %v1691 = vpop.f32.mrf.mxu0
          %1692 = vmatprep.mubr.f32.mxu0 0.0
          %1693 = vmatmul.mubr.f32.gmra.mxu0 %v723
          %v1694 = vpop.f32.mrf.mxu0
          %v1695 = vadd.f32 0.0, %v1694
          %v1696 = vpop.f32.mrf.mxu0
          %1697 = vmatprep.mubr.f32.mxu0 0.0
          %1698 = vmatmul.mubr.f32.gmra.mxu0 %v726
          %v1699 = vpop.f32.mrf.mxu0
          %v1700 = vadd.f32 0.0, %v1699
          %v1701 = vpop.f32.mrf.mxu0
          %1702 = vmatprep.mubr.f32.mxu0 0.0
          %1703 = vmatmul.mubr.f32.gmra.mxu0 %v729
          %v1704 = vpop.f32.mrf.mxu0
          %v1705 = vadd.f32 0.0, %v1704
          %v1706 = vpop.f32.mrf.mxu0
          %1707 = vmatprep.mubr.f32.mxu0 0.0
          %1708 = vmatmul.mubr.f32.gmra.mxu0 %v732
          %v1709 = vpop.f32.mrf.mxu0
          %v1710 = vadd.f32 0.0, %v1709
          %v1711 = vpop.f32.mrf.mxu0
          %1712 = vmatprep.mubr.f32.mxu0 0.0
          %1713 = vmatmul.mubr.f32.gmra.mxu0 %v735
          %v1714 = vpop.f32.mrf.mxu0
          %v1715 = vadd.f32 0.0, %v1714
          %v1716 = vpop.f32.mrf.mxu0
          %1717 = vmatprep.mubr.f32.mxu0 0.0
          %1718 = vmatmul.mubr.f32.gmra.mxu0 %v738
          %v1719 = vpop.f32.mrf.mxu0
          %v1720 = vadd.f32 0.0, %v1719
          %v1721 = vpop.f32.mrf.mxu0
          %1722 = vmatprep.mubr.f32.mxu0 0.0
          %1723 = vmatmul.mubr.f32.gmra.mxu0 %v741
          %v1724 = vpop.f32.mrf.mxu0
          %v1725 = vadd.f32 0.0, %v1724
          %v1726 = vpop.f32.mrf.mxu0
          %1727 = vmatprep.mubr.f32.mxu0 0.0
          %1728 = vmatmul.mubr.f32.gmra.mxu0 %v744
          %v1729 = vpop.f32.mrf.mxu0
          %v1730 = vadd.f32 0.0, %v1729
          %v1731 = vpop.f32.mrf.mxu0
          %1732 = vmatprep.mubr.f32.mxu0 0.0
          %1733 = vmatmul.mubr.f32.gmra.mxu0 %v747
          %v1734 = vpop.f32.mrf.mxu0
          %v1735 = vadd.f32 0.0, %v1734
          %v1736 = vpop.f32.mrf.mxu0
          %1737 = vmatprep.mubr.f32.mxu0 0.0
          %1738 = vmatmul.mubr.f32.gmra.mxu0 %v750
          %v1739 = vpop.f32.mrf.mxu0
          %v1740 = vadd.f32 0.0, %v1739
          %v1741 = vpop.f32.mrf.mxu0
          %1742 = vmatprep.mubr.f32.mxu0 0.0
          %1743 = vmatmul.mubr.f32.gmra.mxu0 %v753
          %v1744 = vpop.f32.mrf.mxu0
          %v1745 = vadd.f32 0.0, %v1744
          %v1746 = vpop.f32.mrf.mxu0
          %1747 = vmatprep.mubr.f32.mxu0 0.0
          %1748 = vmatmul.mubr.f32.gmra.mxu0 %v756
          %v1749 = vpop.f32.mrf.mxu0
          %v1750 = vadd.f32 0.0, %v1749
          %v1751 = vpop.f32.mrf.mxu0
          %1752 = vmatprep.mubr.f32.mxu0 0.0
          %1753 = vmatmul.mubr.f32.gmra.mxu0 %v759
          %v1754 = vpop.f32.mrf.mxu0
          %v1755 = vadd.f32 0.0, %v1754
          %v1756 = vpop.f32.mrf.mxu0
          %1757 = vmatprep.mubr.f32.mxu0 0.0
          %1758 = vmatmul.mubr.f32.gmra.mxu0 %v762
          %v1759 = vpop.f32.mrf.mxu0
          %v1760 = vadd.f32 0.0, %v1759
          %v1761 = vpop.f32.mrf.mxu0
          %1762 = vmatprep.mubr.f32.mxu0 0.0
          %1763 = vmatmul.mubr.f32.gmra.mxu0 %v765
          %v1764 = vpop.f32.mrf.mxu0
          %v1765 = vadd.f32 0.0, %v1764
          %v1766 = vpop.f32.mrf.mxu0
          %1767 = vmatprep.mubr.f32.mxu0 0.0
          %1768 = vmatmul.mubr.f32.gmra.mxu0 %v768
          %v1769 = vpop.f32.mrf.mxu0
          %v1770 = vadd.f32 0.0, %v1769
          %v1771 = vpop.f32.mrf.mxu0
          %1772 = vmatprep.mubr.f32.mxu0 0.0
          %1773 = vmatmul.mubr.f32.gmra.mxu0 %v771
          %v1774 = vpop.f32.mrf.mxu0
          %v1775 = vadd.f32 0.0, %v1774
          %v1776 = vpop.f32.mrf.mxu0
          %1777 = vmatprep.mubr.f32.mxu0 0.0
          %1778 = vmatmul.mubr.f32.gmra.mxu0 %v774
          %v1779 = vpop.f32.mrf.mxu0
          %v1780 = vadd.f32 0.0, %v1779
          %v1781 = vpop.f32.mrf.mxu0
          %1782 = vmatprep.mubr.f32.mxu0 0.0
          %1783 = vmatmul.mubr.f32.gmra.mxu0 %v777
          %v1784 = vpop.f32.mrf.mxu0
          %v1785 = vadd.f32 0.0, %v1784
          %v1786 = vpop.f32.mrf.mxu0
          %1787 = vmatprep.mubr.f32.mxu0 0.0
          %1788 = vmatmul.mubr.f32.gmra.mxu0 %v780
          %v1789 = vpop.f32.mrf.mxu0
          %v1790 = vadd.f32 0.0, %v1789
          %v1791 = vpop.f32.mrf.mxu0
          %1792 = vmatprep.mubr.f32.mxu0 0.0
          %1793 = vmatmul.mubr.f32.gmra.mxu0 %v783
          %v1794 = vpop.f32.mrf.mxu0
          %v1795 = vadd.f32 0.0, %v1794
          %v1796 = vpop.f32.mrf.mxu0
          %1797 = vmatprep.mubr.f32.mxu0 0.0
          %1798 = vmatmul.mubr.f32.gmra.mxu0 %v786
          %v1799 = vpop.f32.mrf.mxu0
          %v1800 = vadd.f32 0.0, %v1799
          %v1801 = vpop.f32.mrf.mxu0
          %1802 = vmatprep.mubr.f32.mxu0 0.0
          %1803 = vmatmul.mubr.f32.gmra.mxu0 %v789
          %v1804 = vpop.f32.mrf.mxu0
          %v1805 = vadd.f32 0.0, %v1804
          %v1806 = vpop.f32.mrf.mxu0
          %1807 = vmatprep.mubr.f32.mxu0 0.0
          %1808 = vmatmul.mubr.f32.gmra.mxu0 %v792
          %v1809 = vpop.f32.mrf.mxu0
          %v1810 = vadd.f32 0.0, %v1809
          %v1811 = vpop.f32.mrf.mxu0
          %1812 = vmatprep.mubr.f32.mxu0 0.0
          %1813 = vmatmul.mubr.f32.gmra.mxu0 %v795
          %v1814 = vpop.f32.mrf.mxu0
          %v1815 = vadd.f32 0.0, %v1814
          %v1816 = vpop.f32.mrf.mxu0
          %1817 = vmatprep.mubr.f32.mxu0 0.0
          %1818 = vmatmul.mubr.f32.gmra.mxu0 %v798
          %v1819 = vpop.f32.mrf.mxu0
          %v1820 = vadd.f32 0.0, %v1819
          %v1821 = vpop.f32.mrf.mxu0
          %1822 = vmatprep.mubr.f32.mxu0 0.0
          %1823 = vmatmul.mubr.f32.gmra.mxu0 %v801
          %v1824 = vpop.f32.mrf.mxu0
          %v1825 = vadd.f32 0.0, %v1824
          %v1826 = vpop.f32.mrf.mxu0
          %1827 = vmatprep.mubr.f32.mxu0 0.0
          %1828 = vmatmul.mubr.f32.gmra.mxu0 %v804
          %v1829 = vpop.f32.mrf.mxu0
          %v1830 = vadd.f32 0.0, %v1829
          %v1831 = vpop.f32.mrf.mxu0
          %1832 = vmatprep.mubr.f32.mxu0 0.0
          %1833 = vmatmul.mubr.f32.gmra.mxu0 %v807
          %v1834 = vpop.f32.mrf.mxu0
          %v1835 = vadd.f32 0.0, %v1834
          %v1836 = vpop.f32.mrf.mxu0
          %1837 = vmatprep.mubr.f32.mxu0 0.0
          %1838 = vmatmul.mubr.f32.gmra.mxu0 %v810
          %v1839 = vpop.f32.mrf.mxu0
          %v1840 = vadd.f32 0.0, %v1839
          %v1841 = vpop.f32.mrf.mxu0
          %1842 = vmatprep.mubr.f32.mxu0 0.0
          %1843 = vmatmul.mubr.f32.gmra.mxu0 %v813
          %v1844 = vpop.f32.mrf.mxu0
          %v1845 = vadd.f32 0.0, %v1844
          %v1846 = vpop.f32.mrf.mxu0
          %1847 = vmatprep.mubr.f32.mxu0 0.0
          %1848 = vmatmul.mubr.f32.gmra.mxu0 %v816
          %v1849 = vpop.f32.mrf.mxu0
          %v1850 = vadd.f32 0.0, %v1849
          %v1851 = vpop.f32.mrf.mxu0
          %1852 = vmatprep.mubr.f32.mxu0 0.0
          %1853 = vmatmul.mubr.f32.gmra.mxu0 %v819
          %v1854 = vpop.f32.mrf.mxu0
          %v1855 = vadd.f32 0.0, %v1854
          %v1856 = vpop.f32.mrf.mxu0
          %1857 = vmatprep.mubr.f32.mxu0 0.0
          %1858 = vmatmul.mubr.f32.gmra.mxu0 %v822
          %v1859 = vpop.f32.mrf.mxu0
          %v1860 = vadd.f32 0.0, %v1859
          %v1861 = vpop.f32.mrf.mxu0
          %1862 = vmatprep.mubr.f32.mxu0 0.0
          %1863 = vmatmul.mubr.f32.gmra.mxu0 %v825
          %v1864 = vpop.f32.mrf.mxu0
          %v1865 = vadd.f32 0.0, %v1864
          %v1866 = vpop.f32.mrf.mxu0
          %1867 = vmatprep.mubr.f32.mxu0 0.0
          %1868 = vmatmul.mubr.f32.gmra.mxu0 %v828
          %v1869 = vpop.f32.mrf.mxu0
          %v1870 = vadd.f32 0.0, %v1869
          %v1871 = vpop.f32.mrf.mxu0
          %1872 = vmatprep.mubr.f32.mxu0 0.0
          %1873 = vmatmul.mubr.f32.gmra.mxu0 %v831
          %v1874 = vpop.f32.mrf.mxu0
          %v1875 = vadd.f32 0.0, %v1874
          %v1876 = vpop.f32.mrf.mxu0
          %1877 = vmatprep.mubr.f32.mxu0 0.0
          %1878 = vmatmul.mubr.f32.gmra.mxu0 %v834
          %v1879 = vpop.f32.mrf.mxu0
          %v1880 = vadd.f32 0.0, %v1879
          %v1881 = vpop.f32.mrf.mxu0
          %1882 = vmatprep.mubr.f32.mxu0 0.0
          %1883 = vmatmul.mubr.f32.gmra.mxu0 %v837
          %v1884 = vpop.f32.mrf.mxu0
          %v1885 = vadd.f32 0.0, %v1884
          %v1886 = vpop.f32.mrf.mxu0
          %1887 = vmatprep.mubr.f32.mxu0 0.0
          %1888 = vmatmul.mubr.f32.gmra.mxu0 %v840
          %v1889 = vpop.f32.mrf.mxu0
          %v1890 = vadd.f32 0.0, %v1889
          %v1891 = vpop.f32.mrf.mxu0
          %1892 = vmatprep.mubr.f32.mxu0 0.0
          %1893 = vmatmul.mubr.f32.gmra.mxu0 %v843
          %v1894 = vpop.f32.mrf.mxu0
          %v1895 = vadd.f32 0.0, %v1894
          %v1896 = vpop.f32.mrf.mxu0
          %1897 = vmatprep.mubr.f32.mxu0 0.0
          %1898 = vmatmul.mubr.f32.gmra.mxu0 %v846
          %v1899 = vpop.f32.mrf.mxu0
          %v1900 = vadd.f32 0.0, %v1899
          %v1901 = vpop.f32.mrf.mxu0
          %1902 = vmatprep.mubr.f32.mxu0 0.0
          %1903 = vmatmul.mubr.f32.gmra.mxu0 %v849
          %v1904 = vpop.f32.mrf.mxu0
          %v1905 = vadd.f32 0.0, %v1904
          %v1906 = vpop.f32.mrf.mxu0
          %1907 = vmatprep.mubr.f32.mxu0 0.0
          %1908 = vmatmul.mubr.f32.gmra.mxu0 %v852
          %v1909 = vpop.f32.mrf.mxu0
          %v1910 = vadd.f32 0.0, %v1909
          %v1911 = vpop.f32.mrf.mxu0
          %1912 = vmatprep.mubr.f32.mxu0 0.0
          %1913 = vmatmul.mubr.f32.gmra.mxu0 %v855
          %v1914 = vpop.f32.mrf.mxu0
          %v1915 = vadd.f32 0.0, %v1914
          %v1916 = vpop.f32.mrf.mxu0
          %1917 = vmatprep.mubr.f32.mxu0 0.0
          %1918 = vmatmul.mubr.f32.gmra.mxu0 %v858
          %v1919 = vpop.f32.mrf.mxu0
          %v1920 = vadd.f32 0.0, %v1919
          %v1921 = vpop.f32.mrf.mxu0
          %1922 = vmatprep.mubr.f32.mxu0 0.0
          %1923 = vmatmul.mubr.f32.gmra.mxu0 %v861
          %v1924 = vpop.f32.mrf.mxu0
          %v1925 = vadd.f32 0.0, %v1924
          %v1926 = vpop.f32.mrf.mxu0
          %1927 = vmatprep.mubr.f32.mxu0 0.0
          %1928 = vmatmul.mubr.f32.gmra.mxu0 %v864
          %v1929 = vpop.f32.mrf.mxu0
          %v1930 = vadd.f32 0.0, %v1929
          %v1931 = vpop.f32.mrf.mxu0
          %1932 = vmatprep.mubr.f32.mxu0 0.0
          %1933 = vmatmul.mubr.f32.gmra.mxu0 %v867
          %v1934 = vpop.f32.mrf.mxu0
          %v1935 = vadd.f32 0.0, %v1934
          %v1936 = vpop.f32.mrf.mxu0
          %1937 = vmatprep.mubr.f32.mxu0 0.0
          %1938 = vmatmul.mubr.f32.gmra.mxu0 %v870
          %v1939 = vpop.f32.mrf.mxu0
          %v1940 = vadd.f32 0.0, %v1939
          %v1941 = vpop.f32.mrf.mxu0
          %1942 = vmatprep.mubr.f32.mxu0 0.0
          %1943 = vmatmul.mubr.f32.gmra.mxu0 %v873
          %v1944 = vpop.f32.mrf.mxu0
          %v1945 = vadd.f32 0.0, %v1944
          %v1946 = vpop.f32.mrf.mxu0
          %1947 = vmatprep.mubr.f32.mxu0 0.0
          %1948 = vmatmul.mubr.f32.gmra.mxu0 %v876
          %v1949 = vpop.f32.mrf.mxu0
          %v1950 = vadd.f32 0.0, %v1949
          %v1951 = vpop.f32.mrf.mxu0
          %1952 = vmatprep.mubr.f32.mxu0 0.0
          %1953 = vmatmul.mubr.f32.gmra.mxu0 %v879
          %v1954 = vpop.f32.mrf.mxu0
          %v1955 = vadd.f32 0.0, %v1954
          %v1956 = vpop.f32.mrf.mxu0
          %1957 = vmatprep.mubr.f32.mxu0 0.0
          %1958 = vmatmul.mubr.f32.gmra.mxu0 %v882
          %v1959 = vpop.f32.mrf.mxu0
          %v1960 = vadd.f32 0.0, %v1959
          %v1961 = vpop.f32.mrf.mxu0
          %1962 = vmatprep.mubr.f32.mxu0 0.0
          %1963 = vmatmul.mubr.f32.gmra.mxu0 %v885
          %v1964 = vpop.f32.mrf.mxu0
          %v1965 = vadd.f32 0.0, %v1964
          %v1966 = vpop.f32.mrf.mxu0
          %1967 = vmatprep.mubr.f32.mxu0 0.0
          %1968 = vmatmul.mubr.f32.gmra.mxu0 %v888
          %v1969 = vpop.f32.mrf.mxu0
          %v1970 = vadd.f32 0.0, %v1969
          %v1971 = vpop.f32.mrf.mxu0
          %1972 = vmatprep.mubr.f32.mxu0 0.0
          %1973 = vmatmul.mubr.f32.gmra.mxu0 %v891
          %v1974 = vpop.f32.mrf.mxu0
          %v1975 = vadd.f32 0.0, %v1974
          %v1976 = vpop.f32.mrf.mxu0
          %1977 = vmatprep.mubr.f32.mxu0 0.0
          %1978 = vmatmul.mubr.f32.gmra.mxu0 %v894
          %v1979 = vpop.f32.mrf.mxu0
          %v1980 = vadd.f32 0.0, %v1979
          %v1981 = vpop.f32.mrf.mxu0
          %1982 = vmatprep.mubr.f32.mxu0 0.0
          %1983 = vmatmul.mubr.f32.gmra.mxu0 %v897
          %v1984 = vpop.f32.mrf.mxu0
          %v1985 = vadd.f32 0.0, %v1984
          %v1986 = vpop.f32.mrf.mxu0
          %1987 = vmatprep.mubr.f32.mxu0 0.0
          %1988 = vmatmul.mubr.f32.gmra.mxu0 %v900
          %v1989 = vpop.f32.mrf.mxu0
          %v1990 = vadd.f32 0.0, %v1989
          %v1991 = vpop.f32.mrf.mxu0
          %1992 = vmatprep.mubr.f32.mxu0 0.0
          %1993 = vmatmul.mubr.f32.gmra.mxu0 %v903
          %v1994 = vpop.f32.mrf.mxu0
          %v1995 = vadd.f32 0.0, %v1994
          %v1996 = vpop.f32.mrf.mxu0
          %1997 = vmatprep.mubr.f32.mxu0 0.0
          %1998 = vmatmul.mubr.f32.gmra.mxu0 %v906
          %v1999 = vpop.f32.mrf.mxu0
          %v2000 = vadd.f32 0.0, %v1999
          %v2001 = vpop.f32.mrf.mxu0
          %2002 = vmatprep.mubr.f32.mxu0 0.0
          %2003 = vmatmul.mubr.f32.gmra.mxu0 %v909
          %v2004 = vpop.f32.mrf.mxu0
          %v2005 = vadd.f32 0.0, %v2004
          %v2006 = vpop.f32.mrf.mxu0
          %2007 = vmatprep.mubr.f32.mxu0 0.0
          %2008 = vmatmul.mubr.f32.gmra.mxu0 %v912
          %v2009 = vpop.f32.mrf.mxu0
          %v2010 = vadd.f32 0.0, %v2009
          %v2011 = vpop.f32.mrf.mxu0
          %2012 = vmatprep.mubr.f32.mxu0 0.0
          %2013 = vmatmul.mubr.f32.gmra.mxu0 %v915
          %v2014 = vpop.f32.mrf.mxu0
          %v2015 = vadd.f32 0.0, %v2014
          %v2016 = vpop.f32.mrf.mxu0
          %2017 = vmatprep.mubr.f32.mxu0 0.0
          %2018 = vmatmul.mubr.f32.gmra.mxu0 %v918
          %v2019 = vpop.f32.mrf.mxu0
          %v2020 = vadd.f32 0.0, %v2019
          %v2021 = vpop.f32.mrf.mxu0
          %2022 = vmatprep.mubr.f32.mxu0 0.0
          %2023 = vmatmul.mubr.f32.gmra.mxu0 %v921
          %v2024 = vpop.f32.mrf.mxu0
          %v2025 = vadd.f32 0.0, %v2024
          %v2026 = vpop.f32.mrf.mxu0
          %2027 = vmatprep.mubr.f32.mxu0 0.0
          %2028 = vmatmul.mubr.f32.gmra.mxu0 %v924
          %v2029 = vpop.f32.mrf.mxu0
          %v2030 = vadd.f32 0.0, %v2029
          %v2031 = vpop.f32.mrf.mxu0
          %2032 = vmatprep.mubr.f32.mxu0 0.0
          %2033 = vmatmul.mubr.f32.gmra.mxu0 %v927
          %v2034 = vpop.f32.mrf.mxu0
          %v2035 = vadd.f32 0.0, %v2034
          %v2036 = vpop.f32.mrf.mxu0
          %2037 = vmatprep.mubr.f32.mxu0 0.0
          %2038 = vmatmul.mubr.f32.gmra.mxu0 %v930
          %v2039 = vpop.f32.mrf.mxu0
          %v2040 = vadd.f32 0.0, %v2039
          %v2041 = vpop.f32.mrf.mxu0
          %2042 = vmatprep.mubr.f32.mxu0 0.0
          %2043 = vmatmul.mubr.f32.gmra.mxu0 %v933
          %v2044 = vpop.f32.mrf.mxu0
          %v2045 = vadd.f32 0.0, %v2044
          %v2046 = vpop.f32.mrf.mxu0
          %2047 = vmatprep.mubr.f32.mxu0 0.0
          %2048 = vmatmul.mubr.f32.gmra.mxu0 %v936
          %v2049 = vpop.f32.mrf.mxu0
          %v2050 = vadd.f32 0.0, %v2049
          %v2051 = vpop.f32.mrf.mxu0
          %2052 = vmatprep.mubr.f32.mxu0 0.0
          %2053 = vmatmul.mubr.f32.gmra.mxu0 %v939
          %v2054 = vpop.f32.mrf.mxu0
          %v2055 = vadd.f32 0.0, %v2054
          %v2056 = vpop.f32.mrf.mxu0
          %2057 = vmatprep.mubr.f32.mxu0 0.0
          %2058 = vmatmul.mubr.f32.gmra.mxu0 %v942
          %v2059 = vpop.f32.mrf.mxu0
          %v2060 = vadd.f32 0.0, %v2059
          %v2061 = vpop.f32.mrf.mxu0
          %2062 = vmatprep.mubr.f32.mxu0 0.0
          %2063 = vmatmul.mubr.f32.gmra.mxu0 %v945
          %v2064 = vpop.f32.mrf.mxu0
          %v2065 = vadd.f32 0.0, %v2064
          %v2066 = vpop.f32.mrf.mxu0
          %2067 = vmatprep.mubr.f32.mxu0 0.0
          %2068 = vmatmul.mubr.f32.gmra.mxu0 %v948
          %v2069 = vpop.f32.mrf.mxu0
          %v2070 = vadd.f32 0.0, %v2069
          %v2071 = vpop.f32.mrf.mxu0
          %2072 = vmatprep.mubr.f32.mxu0 0.0
          %2073 = vmatmul.mubr.f32.gmra.mxu0 %v951
          %v2074 = vpop.f32.mrf.mxu0
          %v2075 = vadd.f32 0.0, %v2074
          %v2076 = vpop.f32.mrf.mxu0
          %2077 = vmatprep.mubr.f32.mxu0 0.0
          %2078 = vmatmul.mubr.f32.gmra.mxu0 %v954
          %v2079 = vpop.f32.mrf.mxu0
          %v2080 = vadd.f32 0.0, %v2079
          %v2081 = vpop.f32.mrf.mxu0
          %2082 = vmatprep.mubr.f32.mxu0 0.0
          %2083 = vmatmul.mubr.f32.gmra.mxu0 %v957
          %v2084 = vpop.f32.mrf.mxu0
          %v2085 = vadd.f32 0.0, %v2084
          %v2086 = vpop.f32.mrf.mxu0
          %2087 = vmatprep.mubr.f32.mxu0 0.0
          %2088 = vmatmul.mubr.f32.gmra.mxu0 %v960
          %v2089 = vpop.f32.mrf.mxu0
          %v2090 = vadd.f32 0.0, %v2089
          %v2091 = vpop.f32.mrf.mxu0
          %2092 = vmatprep.mubr.f32.mxu0 0.0
          %2093 = vmatmul.mubr.f32.gmra.mxu0 %v963
          %v2094 = vpop.f32.mrf.mxu0
          %v2095 = vadd.f32 0.0, %v2094
          %v2096 = vpop.f32.mrf.mxu0
          %2097 = vmatprep.mubr.f32.mxu0 0.0
          %2098 = vmatmul.mubr.f32.gmra.mxu0 %v966
          %v2099 = vpop.f32.mrf.mxu0
          %v2100 = vadd.f32 0.0, %v2099
          %v2101 = vpop.f32.mrf.mxu0
          %2102 = vmatprep.mubr.f32.mxu0 0.0
          %2103 = vmatmul.mubr.f32.gmra.mxu0 %v969
          %v2104 = vpop.f32.mrf.mxu0
          %v2105 = vadd.f32 0.0, %v2104
          %v2106 = vpop.f32.mrf.mxu0
          %2107 = vmatprep.mubr.f32.mxu0 0.0
          %2108 = vmatmul.mubr.f32.gmra.mxu0 %v972
          %v2109 = vpop.f32.mrf.mxu0
          %v2110 = vadd.f32 0.0, %v2109
          %v2111 = vpop.f32.mrf.mxu0
          %2112 = vmatprep.mubr.f32.mxu0 0.0
          %2113 = vmatmul.mubr.f32.gmra.mxu0 %v975
          %v2114 = vpop.f32.mrf.mxu0
          %v2115 = vadd.f32 0.0, %v2114
          %v2116 = vpop.f32.mrf.mxu0
          %2117 = vmatprep.mubr.f32.mxu0 0.0
          %2118 = vmatmul.mubr.f32.gmra.mxu0 %v978
          %v2119 = vpop.f32.mrf.mxu0
          %v2120 = vadd.f32 0.0, %v2119
          %v2121 = vpop.f32.mrf.mxu0
          %2122 = vmatprep.mubr.f32.mxu0 0.0
          %2123 = vmatmul.mubr.f32.gmra.mxu0 %v981
          %v2124 = vpop.f32.mrf.mxu0
          %v2125 = vadd.f32 0.0, %v2124
          %v2126 = vpop.f32.mrf.mxu0
          %2127 = vmatprep.mubr.f32.mxu0 0.0
          %2128 = vmatmul.mubr.f32.gmra.mxu0 %v984
          %v2129 = vpop.f32.mrf.mxu0
          %v2130 = vadd.f32 0.0, %v2129
          %v2131 = vpop.f32.mrf.mxu0
          %2132 = vmatprep.mubr.f32.mxu0 0.0
          %2133 = vmatmul.mubr.f32.gmra.mxu0 %v987
          %v2134 = vpop.f32.mrf.mxu0
          %v2135 = vadd.f32 0.0, %v2134
          %v2136 = vpop.f32.mrf.mxu0
          %2137 = vmatprep.mubr.f32.mxu0 0.0
          %2138 = vmatmul.mubr.f32.gmra.mxu0 %v990
          %v2139 = vpop.f32.mrf.mxu0
          %v2140 = vadd.f32 0.0, %v2139
          %v2141 = vpop.f32.mrf.mxu0
          %2142 = vmatprep.mubr.f32.mxu0 0.0
          %2143 = vmatmul.mubr.f32.gmra.mxu0 %v993
          %v2144 = vpop.f32.mrf.mxu0
          %v2145 = vadd.f32 0.0, %v2144
          %v2146 = vpop.f32.mrf.mxu0
          %2147 = vmatprep.mubr.f32.mxu0 0.0
          %2148 = vmatmul.mubr.f32.gmra.mxu0 %v996
          %v2149 = vpop.f32.mrf.mxu0
          %v2150 = vadd.f32 0.0, %v2149
          %v2151 = vpop.f32.mrf.mxu0
          %2152 = vmatprep.mubr.f32.mxu0 0.0
          %2153 = vmatmul.mubr.f32.gmra.mxu0 %v999
          %v2154 = vpop.f32.mrf.mxu0
          %v2155 = vadd.f32 0.0, %v2154
          %v2156 = vpop.f32.mrf.mxu0
          %2157 = vmatprep.mubr.f32.mxu0 0.0
          %2158 = vmatmul.mubr.f32.gmra.mxu0 %v1002
          %v2159 = vpop.f32.mrf.mxu0
          %v2160 = vadd.f32 0.0, %v2159
          %v2161 = vpop.f32.mrf.mxu0
          %2162 = vmatprep.mubr.f32.mxu0 0.0
          %2163 = vmatmul.mubr.f32.gmra.mxu0 %v1005
          %v2164 = vpop.f32.mrf.mxu0
          %v2165 = vadd.f32 0.0, %v2164
          %v2166 = vpop.f32.mrf.mxu0
          %2167 = vmatprep.mubr.f32.mxu0 0.0
          %2168 = vmatmul.mubr.f32.gmra.mxu0 %v1008
          %v2169 = vpop.f32.mrf.mxu0
          %v2170 = vadd.f32 0.0, %v2169
          %v2171 = vpop.f32.mrf.mxu0
          %2172 = vmatprep.mubr.f32.mxu0 0.0
          %2173 = vmatmul.mubr.f32.gmra.mxu0 %v1011
          %v2174 = vpop.f32.mrf.mxu0
          %v2175 = vadd.f32 0.0, %v2174
          %v2176 = vpop.f32.mrf.mxu0
          %2177 = vmatprep.mubr.f32.mxu0 0.0
          %2178 = vmatmul.mubr.f32.gmra.mxu0 %v1014
          %v2179 = vpop.f32.mrf.mxu0
          %v2180 = vadd.f32 0.0, %v2179
          %v2181 = vpop.f32.mrf.mxu0
          %2182 = vmatprep.mubr.f32.mxu0 0.0
          %2183 = vmatmul.mubr.f32.gmra.mxu0 %v1017
          %v2184 = vpop.f32.mrf.mxu0
          %v2185 = vadd.f32 0.0, %v2184
          %v2186 = vpop.f32.mrf.mxu0
          %2187 = vmatprep.mubr.f32.mxu0 0.0
          %2188 = vmatmul.mubr.f32.gmra.mxu0 %v1020
          %v2189 = vpop.f32.mrf.mxu0
          %v2190 = vadd.f32 0.0, %v2189
          %v2191 = vpop.f32.mrf.mxu0
          %2192 = vmatprep.mubr.f32.mxu0 0.0
          %2193 = vmatmul.mubr.f32.gmra.mxu0 %v1023
          %v2194 = vpop.f32.mrf.mxu0
          %v2195 = vadd.f32 0.0, %v2194
          %v2196 = vpop.f32.mrf.mxu0
          %2197 = vmatprep.mubr.f32.mxu0 0.0
          %2198 = vmatmul.mubr.f32.gmra.mxu0 %v1026
          %v2199 = vpop.f32.mrf.mxu0
          %v2200 = vadd.f32 0.0, %v2199
          %v2201 = vpop.f32.mrf.mxu0
          %2202 = vmatprep.mubr.f32.mxu0 0.0
          %2203 = vmatmul.mubr.f32.gmra.mxu0 %v1029
          %v2204 = vpop.f32.mrf.mxu0
          %v2205 = vadd.f32 0.0, %v2204
          %v2206 = vpop.f32.mrf.mxu0
          %2207 = vmatprep.mubr.f32.mxu0 0.0
          %2208 = vmatmul.mubr.f32.gmra.mxu0 %v1032
          %v2209 = vpop.f32.mrf.mxu0
          %v2210 = vadd.f32 0.0, %v2209
          %v2211 = vpop.f32.mrf.mxu0
          %2212 = vmatprep.mubr.f32.mxu0 0.0
          %2213 = vmatmul.mubr.f32.gmra.mxu0 %v1035
          %v2214 = vpop.f32.mrf.mxu0
          %v2215 = vadd.f32 0.0, %v2214
          %v2216 = vpop.f32.mrf.mxu0
          %2217 = vmatprep.mubr.f32.mxu0 0.0
          %2218 = vmatmul.mubr.f32.gmra.mxu0 %v1038
          %v2219 = vpop.f32.mrf.mxu0
          %v2220 = vadd.f32 0.0, %v2219
          %v2221 = vpop.f32.mrf.mxu0
          %2222 = vmatprep.mubr.f32.mxu0 0.0
          %2223 = vmatmul.mubr.f32.gmra.mxu0 %v1041
          %v2224 = vpop.f32.mrf.mxu0
          %v2225 = vadd.f32 0.0, %v2224
          %v2226 = vpop.f32.mrf.mxu0
          %2227 = vmatprep.mubr.f32.mxu0 0.0
          %2228 = vmatmul.mubr.f32.gmra.mxu0 %v1044
          %v2229 = vpop.f32.mrf.mxu0
          %v2230 = vadd.f32 0.0, %v2229
          %v2231 = vpop.f32.mrf.mxu0
          %2232 = vmatprep.mubr.f32.mxu0 0.0
          %2233 = vmatmul.mubr.f32.gmra.mxu0 %v1047
          %v2234 = vpop.f32.mrf.mxu0
          %v2235 = vadd.f32 0.0, %v2234
          %v2236 = vpop.f32.mrf.mxu0
          %2237 = vmatprep.mubr.f32.mxu0 0.0
          %2238 = vmatmul.mubr.f32.gmra.mxu0 %v1050
          %v2239 = vpop.f32.mrf.mxu0
          %v2240 = vadd.f32 0.0, %v2239
          %v2241 = vpop.f32.mrf.mxu0
          %2242 = vmatprep.mubr.f32.mxu0 0.0
          %2243 = vmatmul.mubr.f32.gmra.mxu0 %v1053
          %v2244 = vpop.f32.mrf.mxu0
          %v2245 = vadd.f32 0.0, %v2244
          %v2246 = vpop.f32.mrf.mxu0
          %2247 = vmatprep.mubr.f32.mxu0 0.0
          %2248 = vmatmul.mubr.f32.gmra.mxu0 %v1056
          %v2249 = vpop.f32.mrf.mxu0
          %v2250 = vadd.f32 0.0, %v2249
          %v2251 = vpop.f32.mrf.mxu0
          %2252 = vmatprep.mubr.f32.mxu0 0.0
          %2253 = vmatmul.mubr.f32.gmra.mxu0 %v1059
          %v2254 = vpop.f32.mrf.mxu0
          %v2255 = vadd.f32 0.0, %v2254
          %v2256 = vpop.f32.mrf.mxu0
          %2257 = vmatprep.mubr.f32.mxu0 0.0
          %2258 = vmatmul.mubr.f32.gmra.mxu0 %v1062
          %v2259 = vpop.f32.mrf.mxu0
          %v2260 = vadd.f32 0.0, %v2259
          %v2261 = vpop.f32.mrf.mxu0
          %2262 = vmatprep.mubr.f32.mxu0 0.0
          %2263 = vmatmul.mubr.f32.gmra.mxu0 %v1065
          %v2264 = vpop.f32.mrf.mxu0
          %v2265 = vadd.f32 0.0, %v2264
          %v2266 = vpop.f32.mrf.mxu0
          %2267 = vmatprep.mubr.f32.mxu0 0.0
          %2268 = vmatmul.mubr.f32.gmra.mxu0 %v1068
          %v2269 = vpop.f32.mrf.mxu0
          %v2270 = vadd.f32 0.0, %v2269
          %v2271 = vpop.f32.mrf.mxu0
          %2272 = vmatprep.mubr.f32.mxu0 0.0
          %2273 = vmatmul.mubr.f32.gmra.mxu0 %v1071
          %v2274 = vpop.f32.mrf.mxu0
          %v2275 = vadd.f32 0.0, %v2274
          %v2276 = vpop.f32.mrf.mxu0
          %2277 = vmatprep.mubr.f32.mxu0 0.0
          %2278 = vmatmul.mubr.f32.gmra.mxu0 %v1074
          %v2279 = vpop.f32.mrf.mxu0
          %v2280 = vadd.f32 0.0, %v2279
          %v2281 = vpop.f32.mrf.mxu0
          %2282 = vmatprep.mubr.f32.mxu0 0.0
          %2283 = vmatmul.mubr.f32.gmra.mxu0 %v1077
          %v2284 = vpop.f32.mrf.mxu0
          %v2285 = vadd.f32 0.0, %v2284
          %v2286 = vpop.f32.mrf.mxu0
          %2287 = vmatprep.mubr.f32.mxu0 0.0
          %2288 = vmatmul.mubr.f32.gmra.mxu0 %v1080
          %v2289 = vpop.f32.mrf.mxu0
          %v2290 = vadd.f32 0.0, %v2289
          %v2291 = vpop.f32.mrf.mxu0
          %2292 = vmatprep.mubr.f32.mxu0 0.0
          %2293 = vmatmul.mubr.f32.gmra.mxu0 %v1083
          %v2294 = vpop.f32.mrf.mxu0
          %v2295 = vadd.f32 0.0, %v2294
          %v2296 = vpop.f32.mrf.mxu0
          %2297 = vmatprep.mubr.f32.mxu0 0.0
          %2298 = vmatmul.mubr.f32.gmra.mxu0 %v1086
          %v2299 = vpop.f32.mrf.mxu0
          %v2300 = vadd.f32 0.0, %v2299
          %v2301 = vpop.f32.mrf.mxu0
          %2302 = vmatprep.mubr.f32.mxu0 0.0
          %2303 = vmatmul.mubr.f32.gmra.mxu0 %v1089
          %v2304 = vpop.f32.mrf.mxu0
          %v2305 = vadd.f32 0.0, %v2304
          %v2306 = vpop.f32.mrf.mxu0
          %2307 = vmatprep.mubr.f32.mxu0 0.0
          %2308 = vmatmul.mubr.f32.gmra.mxu0 %v1092
          %v2309 = vpop.f32.mrf.mxu0
          %v2310 = vadd.f32 0.0, %v2309
          %v2311 = vpop.f32.mrf.mxu0
          %2312 = vmatprep.mubr.f32.mxu0 0.0
          %2313 = vmatmul.mubr.f32.gmra.mxu0 %v1095
          %v2314 = vpop.f32.mrf.mxu0
          %v2315 = vadd.f32 0.0, %v2314
          %v2316 = vpop.f32.mrf.mxu0
          %2317 = vmatprep.mubr.f32.mxu0 0.0
          %2318 = vmatmul.mubr.f32.gmra.mxu0 %v1098
          %v2319 = vpop.f32.mrf.mxu0
          %v2320 = vadd.f32 0.0, %v2319
          %v2321 = vpop.f32.mrf.mxu0
          %2322 = vmatprep.mubr.f32.mxu0 0.0
          %2323 = vmatmul.mubr.f32.gmra.mxu0 %v1101
          %v2324 = vpop.f32.mrf.mxu0
          %v2325 = vadd.f32 0.0, %v2324
          %v2326 = vpop.f32.mrf.mxu0
          %2327 = vmatprep.mubr.f32.mxu0 0.0
          %2328 = vmatmul.mubr.f32.gmra.mxu0 %v1104
          %v2329 = vpop.f32.mrf.mxu0
          %v2330 = vadd.f32 0.0, %v2329
          %v2331 = vpop.f32.mrf.mxu0
          %2332 = vmatprep.mubr.f32.mxu0 0.0
          %2333 = vmatmul.mubr.f32.gmra.mxu0 %v1107
          %v2334 = vpop.f32.mrf.mxu0
          %v2335 = vadd.f32 0.0, %v2334
          %v2336 = vpop.f32.mrf.mxu0
          %2337 = vmatprep.mubr.f32.mxu0 0.0
          %2338 = vmatmul.mubr.f32.gmra.mxu0 %v1110
          %v2339 = vpop.f32.mrf.mxu0
          %v2340 = vadd.f32 0.0, %v2339
          %v2341 = vpop.f32.mrf.mxu0
          %2342 = vmatprep.mubr.f32.mxu0 0.0
          %2343 = vmatmul.mubr.f32.gmra.mxu0 %v1113
          %v2344 = vpop.f32.mrf.mxu0
          %v2345 = vadd.f32 0.0, %v2344
          %v2346 = vpop.f32.mrf.mxu0
          %2347 = vmatprep.mubr.f32.mxu0 0.0
          %2348 = vmatmul.mubr.f32.gmra.mxu0 %v1116
          %v2349 = vpop.f32.mrf.mxu0
          %v2350 = vadd.f32 0.0, %v2349
          %v2351 = vpop.f32.mrf.mxu0
          %2352 = vmatprep.mubr.f32.mxu0 0.0
          %2353 = vmatmul.mubr.f32.gmra.mxu0 %v1119
          %v2354 = vpop.f32.mrf.mxu0
          %v2355 = vadd.f32 0.0, %v2354
          %v2356 = vpop.f32.mrf.mxu0
          %2357 = vmatprep.mubr.f32.mxu0 0.0
          %2358 = vmatmul.mubr.f32.gmra.mxu0 %v1122
          %v2359 = vpop.f32.mrf.mxu0
          %v2360 = vadd.f32 0.0, %v2359
          %v2361 = vpop.f32.mrf.mxu0
          %2362 = vmatprep.mubr.f32.mxu0 0.0
          %2363 = vmatmul.mubr.f32.gmra.mxu0 %v1125
          %v2364 = vpop.f32.mrf.mxu0
          %v2365 = vadd.f32 0.0, %v2364
          %v2366 = vpop.f32.mrf.mxu0
          %2367 = vmatprep.mubr.f32.mxu0 0.0
          %2368 = vmatmul.mubr.f32.gmra.mxu0 %v1128
          %v2369 = vpop.f32.mrf.mxu0
          %v2370 = vadd.f32 0.0, %v2369
          %v2371 = vpop.f32.mrf.mxu0
          %2372 = vmatprep.mubr.f32.mxu0 0.0
          %2373 = vmatmul.mubr.f32.gmra.mxu0 %v1131
          %v2374 = vpop.f32.mrf.mxu0
          %v2375 = vadd.f32 0.0, %v2374
          %v2376 = vpop.f32.mrf.mxu0
          %2377 = vmatprep.mubr.f32.mxu0 0.0
          %2378 = vmatmul.mubr.f32.gmra.mxu0 %v1134
          %v2379 = vpop.f32.mrf.mxu0
          %v2380 = vadd.f32 0.0, %v2379
          %v2381 = vpop.f32.mrf.mxu0
          %2382 = vmatprep.mubr.f32.mxu0 0.0
          %2383 = vmatmul.mubr.f32.gmra.mxu0 %v1137
          %v2384 = vpop.f32.mrf.mxu0
          %v2385 = vadd.f32 0.0, %v2384
          %v2386 = vpop.f32.mrf.mxu0
          %2387 = vmatprep.mubr.f32.mxu0 0.0
          %2388 = vmatmul.mubr.f32.gmra.mxu0 %v1140
          %v2389 = vpop.f32.mrf.mxu0
          %v2390 = vadd.f32 0.0, %v2389
          %v2391 = vpop.f32.mrf.mxu0
          %2392 = vmatprep.mubr.f32.mxu0 0.0
          %2393 = vmatmul.mubr.f32.gmra.mxu0 %v1143
          %v2394 = vpop.f32.mrf.mxu0
          %v2395 = vadd.f32 0.0, %v2394
          %v2396 = vpop.f32.mrf.mxu0
          %2397 = vmatprep.mubr.f32.mxu0 0.0
          %2398 = vmatmul.mubr.f32.gmra.mxu0 %v1146
          %v2399 = vpop.f32.mrf.mxu0
          %v2400 = vadd.f32 0.0, %v2399
          %v2401 = vpop.f32.mrf.mxu0
          %2402 = vmatprep.mubr.f32.mxu0 0.0
          %2403 = vmatmul.mubr.f32.gmra.mxu0 %v1149
          %v2404 = vpop.f32.mrf.mxu0
          %v2405 = vadd.f32 0.0, %v2404
          %v2406 = vpop.f32.mrf.mxu0
          %2407 = vmatprep.mubr.f32.mxu0 0.0
          %2408 = vmatmul.mubr.f32.gmra.mxu0 %v1152
          %v2409 = vpop.f32.mrf.mxu0
          %v2410 = vadd.f32 0.0, %v2409
          %v2411 = vpop.f32.mrf.mxu0
          %2412 = vmatprep.mubr.f32.mxu0 0.0
          %2413 = vmatmul.mubr.f32.gmra.mxu0 %v1155
          %v2414 = vpop.f32.mrf.mxu0
          %v2415 = vadd.f32 0.0, %v2414
          %v2416 = vpop.f32.mrf.mxu0
          %2417 = vmatprep.mubr.f32.mxu0 0.0
          %2418 = vmatmul.mubr.f32.gmra.mxu0 %v1158
          %v2419 = vpop.f32.mrf.mxu0
          %v2420 = vadd.f32 0.0, %v2419
          %v2421 = vpop.f32.mrf.mxu0
          %2422 = vmatprep.mubr.f32.mxu0 0.0
          %2423 = vmatmul.mubr.f32.gmra.mxu0 %v1161
          %v2424 = vpop.f32.mrf.mxu0
          %v2425 = vadd.f32 0.0, %v2424
          %v2426 = vpop.f32.mrf.mxu0
          %2427 = vmatprep.mubr.f32.mxu0 0.0
          %2428 = vmatmul.mubr.f32.gmra.mxu0 %v1164
          %v2429 = vpop.f32.mrf.mxu0
          %v2430 = vadd.f32 0.0, %v2429
          %v2431 = vpop.f32.mrf.mxu0
          %2432 = vmatprep.mubr.f32.mxu0 0.0
          %2433 = vmatmul.mubr.f32.gmra.mxu0 %v1167
          %v2434 = vpop.f32.mrf.mxu0
          %v2435 = vadd.f32 0.0, %v2434
          %v2436 = vpop.f32.mrf.mxu0
          %2437 = vmatprep.mubr.f32.mxu0 0.0
          %2438 = vmatmul.mubr.f32.gmra.mxu0 %v1170
          %v2439 = vpop.f32.mrf.mxu0
          %v2440 = vadd.f32 0.0, %v2439
          %v2441 = vpop.f32.mrf.mxu0
          %2442 = vmatprep.mubr.f32.mxu0 0.0
          %2443 = vmatmul.mubr.f32.gmra.mxu0 %v1173
          %v2444 = vpop.f32.mrf.mxu0
          %v2445 = vadd.f32 0.0, %v2444
          %v2446 = vpop.f32.mrf.mxu0
          %2447 = vmatprep.mubr.f32.mxu0 0.0
          %2448 = vmatmul.mubr.f32.gmra.mxu0 %v1176
          %v2449 = vpop.f32.mrf.mxu0
          %v2450 = vadd.f32 0.0, %v2449
          %v2451 = vpop.f32.mrf.mxu0
          %2452 = vmatprep.mubr.f32.mxu0 0.0
          %2453 = vmatmul.mubr.f32.gmra.mxu0 %v1179
          %v2454 = vpop.f32.mrf.mxu0
          %v2455 = vadd.f32 0.0, %v2454
          %v2456 = vpop.f32.mrf.mxu0
          %2457 = vmatprep.mubr.f32.mxu0 0.0
          %2458 = vmatmul.mubr.f32.gmra.mxu0 %v1182
          %v2459 = vpop.f32.mrf.mxu0
          %v2460 = vadd.f32 0.0, %v2459
          %v2461 = vpop.f32.mrf.mxu0
          %2462 = vmatprep.mubr.f32.mxu0 0.0
          %2463 = vmatmul.mubr.f32.gmra.mxu0 %v1185
          %v2464 = vpop.f32.mrf.mxu0
          %v2465 = vadd.f32 0.0, %v2464
          %v2466 = vpop.f32.mrf.mxu0
          %2467 = vmatprep.mubr.f32.mxu0 0.0
          %2468 = vmatmul.mubr.f32.gmra.mxu0 %v1188
          %v2469 = vpop.f32.mrf.mxu0
          %v2470 = vadd.f32 0.0, %v2469
          %v2471 = vpop.f32.mrf.mxu0
          %2472 = vmatprep.mubr.f32.mxu0 0.0
          %2473 = vmatmul.mubr.f32.gmra.mxu0 %v1191
          %v2474 = vpop.f32.mrf.mxu0
          %v2475 = vadd.f32 0.0, %v2474
          %v2476 = vpop.f32.mrf.mxu0
          %2477 = vmatprep.mubr.f32.mxu0 0.0
          %2478 = vmatmul.mubr.f32.gmra.mxu0 %v1194
          %v2479 = vpop.f32.mrf.mxu0
          %v2480 = vadd.f32 0.0, %v2479
          %v2481 = vpop.f32.mrf.mxu0
          %2482 = vmatprep.mubr.f32.mxu0 0.0
          %2483 = vmatmul.mubr.f32.gmra.mxu0 %v1197
          %v2484 = vpop.f32.mrf.mxu0
          %v2485 = vadd.f32 0.0, %v2484
          %v2486 = vpop.f32.mrf.mxu0
          %2487 = vmatprep.mubr.f32.mxu0 0.0
          %2488 = vmatmul.mubr.f32.gmra.mxu0 %v1200
          %v2489 = vpop.f32.mrf.mxu0
          %v2490 = vadd.f32 0.0, %v2489
          %v2491 = vpop.f32.mrf.mxu0
          %2492 = vmatprep.mubr.f32.mxu0 0.0
          %2493 = vmatmul.mubr.f32.gmra.mxu0 %v1203
          %v2494 = vpop.f32.mrf.mxu0
          %v2495 = vadd.f32 0.0, %v2494
          %v2496 = vpop.f32.mrf.mxu0
          %2497 = vmatprep.mubr.f32.mxu0 0.0
          %2498 = vmatmul.mubr.f32.gmra.mxu0 %v1206
          %v2499 = vpop.f32.mrf.mxu0
          %v2500 = vadd.f32 0.0, %v2499
          %v2501 = vpop.f32.mrf.mxu0
          %2502 = vmatprep.mubr.f32.mxu0 0.0
          %2503 = vmatmul.mubr.f32.gmra.mxu0 %v1209
          %v2504 = vpop.f32.mrf.mxu0
          %v2505 = vadd.f32 0.0, %v2504
          %v2506 = vpop.f32.mrf.mxu0
          %2507 = vmatprep.mubr.f32.mxu0 0.0
          %2508 = vmatmul.mubr.f32.gmra.mxu0 %v1212
          %v2509 = vpop.f32.mrf.mxu0
          %v2510 = vadd.f32 0.0, %v2509
          %v2511 = vpop.f32.mrf.mxu0
          %2512 = vmatprep.mubr.f32.mxu0 0.0
          %2513 = vmatmul.mubr.f32.gmra.mxu0 %v1215
          %v2514 = vpop.f32.mrf.mxu0
          %v2515 = vadd.f32 0.0, %v2514
          %v2516 = vpop.f32.mrf.mxu0
          %2517 = vmatprep.mubr.f32.mxu0 0.0
          %2518 = vmatmul.mubr.f32.gmra.mxu0 %v1218
          %v2519 = vpop.f32.mrf.mxu0
          %v2520 = vadd.f32 0.0, %v2519
          %v2521 = vpop.f32.mrf.mxu0
          %2522 = vmatprep.mubr.f32.mxu0 0.0
          %2523 = vmatmul.mubr.f32.gmra.mxu0 %v1221
          %v2524 = vpop.f32.mrf.mxu0
          %v2525 = vadd.f32 0.0, %v2524
          %v2526 = vpop.f32.mrf.mxu0
          %2527 = vmatprep.mubr.f32.mxu0 0.0
          %2528 = vmatmul.mubr.f32.gmra.mxu0 %v1224
          %v2529 = vpop.f32.mrf.mxu0
          %v2530 = vadd.f32 0.0, %v2529
          %v2531 = vpop.f32.mrf.mxu0
          %2532 = vmatprep.mubr.f32.mxu0 0.0
          %2533 = vmatmul.mubr.f32.gmra.mxu0 %v1227
          %v2534 = vpop.f32.mrf.mxu0
          %v2535 = vadd.f32 0.0, %v2534
          %v2536 = vpop.f32.mrf.mxu0
          %2537 = vmatprep.mubr.f32.mxu0 0.0
          %2538 = vmatmul.mubr.f32.gmra.mxu0 %v1230
          %v2539 = vpop.f32.mrf.mxu0
          %v2540 = vadd.f32 0.0, %v2539
          %v2541 = vpop.f32.mrf.mxu0
          %2542 = vmatprep.mubr.f32.mxu0 0.0
          %2543 = vmatmul.mubr.f32.gmra.mxu0 %v1233
          %v2544 = vpop.f32.mrf.mxu0
          %v2545 = vadd.f32 0.0, %v2544
          %v2546 = vpop.f32.mrf.mxu0
          %2547 = vmatprep.mubr.f32.mxu0 0.0
          %2548 = vmatmul.mubr.f32.gmra.mxu0 %v1236
          %v2549 = vpop.f32.mrf.mxu0
          %v2550 = vadd.f32 0.0, %v2549
          %v2551 = vpop.f32.mrf.mxu0
          %2552 = vmatprep.mubr.f32.mxu0 0.0
          %2553 = vmatmul.mubr.f32.gmra.mxu0 %v1239
          %v2554 = vpop.f32.mrf.mxu0
          %v2555 = vadd.f32 0.0, %v2554
          %v2556 = vpop.f32.mrf.mxu0
          %2557 = vmatprep.mubr.f32.mxu0 0.0
          %2558 = vmatmul.mubr.f32.gmra.mxu0 %v1242
          %v2559 = vpop.f32.mrf.mxu0
          %v2560 = vadd.f32 0.0, %v2559
          %v2561 = vpop.f32.mrf.mxu0
          %2562 = vmatprep.mubr.f32.mxu0 0.0
          %2563 = vmatmul.mubr.f32.gmra.mxu0 %v1245
          %v2564 = vpop.f32.mrf.mxu0
          %v2565 = vadd.f32 0.0, %v2564
          %v2566 = vpop.f32.mrf.mxu0
          %2567 = vmatprep.mubr.f32.mxu0 0.0
          %2568 = vmatmul.mubr.f32.gmra.mxu0 %v1248
          %v2569 = vpop.f32.mrf.mxu0
          %v2570 = vadd.f32 0.0, %v2569
          %v2571 = vpop.f32.mrf.mxu0
          %2572 = vmatprep.mubr.f32.mxu0 0.0
          %2573 = vmatmul.mubr.f32.gmra.mxu0 %v1251
          %v2574 = vpop.f32.mrf.mxu0
          %v2575 = vadd.f32 0.0, %v2574
          %v2576 = vpop.f32.mrf.mxu0
          %2577 = vmatprep.mubr.f32.mxu0 0.0
          %2578 = vmatmul.mubr.f32.gmra.mxu0 %v1254
          %v2579 = vpop.f32.mrf.mxu0
          %v2580 = vadd.f32 0.0, %v2579
          %v2581 = vpop.f32.mrf.mxu0
          %2582 = vmatprep.mubr.f32.mxu0 0.0
          %2583 = vmatmul.mubr.f32.gmra.mxu0 %v1257
          %v2584 = vpop.f32.mrf.mxu0
          %v2585 = vadd.f32 0.0, %v2584
          %v2586 = vpop.f32.mrf.mxu0
          %2587 = vmatprep.mubr.f32.mxu0 0.0
          %2588 = vmatmul.mubr.f32.gmra.mxu0 %v1260
          %v2589 = vpop.f32.mrf.mxu0
          %v2590 = vadd.f32 0.0, %v2589
          %v2591 = vpop.f32.mrf.mxu0
          %2592 = vmatprep.mubr.f32.mxu0 0.0
          %2593 = vmatmul.mubr.f32.gmra.mxu0 %v1263
          %v2594 = vpop.f32.mrf.mxu0
          %v2595 = vadd.f32 0.0, %v2594
          %v2596 = vpop.f32.mrf.mxu0
          %2597 = vmatprep.mubr.f32.mxu0 0.0
          %2598 = vmatmul.mubr.f32.gmra.mxu0 %v1266
          %v2599 = vpop.f32.mrf.mxu0
          %v2600 = vadd.f32 0.0, %v2599
          %v2601 = vpop.f32.mrf.mxu0
          %2602 = vmatprep.mubr.f32.mxu0 0.0
          %2603 = vmatmul.mubr.f32.gmra.mxu0 %v1269
          %v2604 = vpop.f32.mrf.mxu0
          %v2605 = vadd.f32 0.0, %v2604
          %v2606 = vpop.f32.mrf.mxu0
          %2607 = vmatprep.mubr.f32.mxu0 0.0
          %2608 = vmatmul.mubr.f32.gmra.mxu0 %v1272
          %v2609 = vpop.f32.mrf.mxu0
          %v2610 = vadd.f32 0.0, %v2609
          %v2611 = vpop.f32.mrf.mxu0
          %2612 = vmatprep.mubr.f32.mxu0 0.0
          %2613 = vmatmul.mubr.f32.gmra.mxu0 %v1275
          %v2614 = vpop.f32.mrf.mxu0
          %v2615 = vadd.f32 0.0, %v2614
          %v2616 = vpop.f32.mrf.mxu0
          %2617 = vmatprep.mubr.f32.mxu0 0.0
          %2618 = vmatmul.mubr.f32.gmra.mxu0 %v1278
          %v2619 = vpop.f32.mrf.mxu0
          %v2620 = vadd.f32 0.0, %v2619
          %v2621 = vpop.f32.mrf.mxu0
          %2622 = vmatprep.mubr.f32.mxu0 0.0
          %2623 = vmatmul.mubr.f32.gmra.mxu0 %v1281
          %v2624 = vpop.f32.mrf.mxu0
          %v2625 = vadd.f32 0.0, %v2624
          %v2626 = vpop.f32.mrf.mxu0
          %2627 = vmatprep.mubr.f32.mxu0 0.0
          %2628 = vmatmul.mubr.f32.gmra.mxu0 %v1284
          %v2629 = vpop.f32.mrf.mxu0
          %v2630 = vadd.f32 0.0, %v2629
          %v2631 = vpop.f32.mrf.mxu0
          %2632 = vmatprep.mubr.f32.mxu0 0.0
          %2633 = vmatmul.mubr.f32.gmra.mxu0 %v1287
          %v2634 = vpop.f32.mrf.mxu0
          %v2635 = vadd.f32 0.0, %v2634
          %v2636 = vpop.f32.mrf.mxu0
          %2637 = vdwg.mxu0
          %v2638 = vmax.f32 %v1360, 0.0
          %v2639 = vmax.f32 %v1365, 0.0
          %v2640 = vmax.f32 %v1370, 0.0
          %v2641 = vmax.f32 %v1375, 0.0
          %v2642 = vmax.f32 %v1380, 0.0
          %v2643 = vmax.f32 %v1385, 0.0
          %v2644 = vmax.f32 %v1390, 0.0
          %v2645 = vmax.f32 %v1395, 0.0
          %v2646 = vmax.f32 %v1400, 0.0
          %v2647 = vmax.f32 %v1405, 0.0
          %v2648 = vmax.f32 %v1410, 0.0
          %v2649 = vmax.f32 %v1415, 0.0
          %v2650 = vmax.f32 %v1420, 0.0
          %v2651 = vmax.f32 %v1425, 0.0
          %v2652 = vmax.f32 %v1430, 0.0
          %v2653 = vmax.f32 %v1435, 0.0
          %v2654 = vmax.f32 %v1440, 0.0
          %v2655 = vmax.f32 %v1445, 0.0
          %v2656 = vmax.f32 %v1450, 0.0
          %v2657 = vmax.f32 %v1455, 0.0
          %v2658 = vmax.f32 %v1460, 0.0
          %v2659 = vmax.f32 %v1465, 0.0
          %v2660 = vmax.f32 %v1470, 0.0
          %v2661 = vmax.f32 %v1475, 0.0
          %v2662 = vmax.f32 %v1480, 0.0
          %v2663 = vmax.f32 %v1485, 0.0
          %v2664 = vmax.f32 %v1490, 0.0
          %v2665 = vmax.f32 %v1495, 0.0
          %v2666 = vmax.f32 %v1500, 0.0
          %v2667 = vmax.f32 %v1505, 0.0
          %v2668 = vmax.f32 %v1510, 0.0
          %v2669 = vmax.f32 %v1515, 0.0
          %v2670 = vmax.f32 %v1520, 0.0
          %v2671 = vmax.f32 %v1525, 0.0
          %v2672 = vmax.f32 %v1530, 0.0
          %v2673 = vmax.f32 %v1535, 0.0
          %v2674 = vmax.f32 %v1540, 0.0
          %v2675 = vmax.f32 %v1545, 0.0
          %v2676 = vmax.f32 %v1550, 0.0
          %v2677 = vmax.f32 %v1555, 0.0
          %v2678 = vmax.f32 %v1560, 0.0
          %v2679 = vmax.f32 %v1565, 0.0
          %v2680 = vmax.f32 %v1570, 0.0
          %v2681 = vmax.f32 %v1575, 0.0
          %v2682 = vmax.f32 %v1580, 0.0
          %v2683 = vmax.f32 %v1585, 0.0
          %v2684 = vmax.f32 %v1590, 0.0
          %v2685 = vmax.f32 %v1595, 0.0
          %v2686 = vmax.f32 %v1600, 0.0
          %v2687 = vmax.f32 %v1605, 0.0
          %v2688 = vmax.f32 %v1610, 0.0
          %v2689 = vmax.f32 %v1615, 0.0
          %v2690 = vmax.f32 %v1620, 0.0
          %v2691 = vmax.f32 %v1625, 0.0
          %v2692 = vmax.f32 %v1630, 0.0
          %v2693 = vmax.f32 %v1635, 0.0
          %v2694 = vmax.f32 %v1640, 0.0
          %v2695 = vmax.f32 %v1645, 0.0
          %v2696 = vmax.f32 %v1650, 0.0
          %v2697 = vmax.f32 %v1655, 0.0
          %v2698 = vmax.f32 %v1660, 0.0
          %v2699 = vmax.f32 %v1665, 0.0
          %v2700 = vmax.f32 %v1670, 0.0
          %v2701 = vmax.f32 %v1675, 0.0
          %v2702 = vmax.f32 %v1680, 0.0
          %v2703 = vmax.f32 %v1685, 0.0
          %v2704 = vmax.f32 %v1690, 0.0
          %v2705 = vmax.f32 %v1695, 0.0
          %v2706 = vmax.f32 %v1700, 0.0
          %v2707 = vmax.f32 %v1705, 0.0
          %v2708 = vmax.f32 %v1710, 0.0
          %v2709 = vmax.f32 %v1715, 0.0
          %v2710 = vmax.f32 %v1720, 0.0
          %v2711 = vmax.f32 %v1725, 0.0
          %v2712 = vmax.f32 %v1730, 0.0
          %v2713 = vmax.f32 %v1735, 0.0
          %v2714 = vmax.f32 %v1740, 0.0
          %v2715 = vmax.f32 %v1745, 0.0
          %v2716 = vmax.f32 %v1750, 0.0
          %v2717 = vmax.f32 %v1755, 0.0
          %v2718 = vmax.f32 %v1760, 0.0
          %v2719 = vmax.f32 %v1765, 0.0
          %v2720 = vmax.f32 %v1770, 0.0
          %v2721 = vmax.f32 %v1775, 0.0
          %v2722 = vmax.f32 %v1780, 0.0
          %v2723 = vmax.f32 %v1785, 0.0
          %v2724 = vmax.f32 %v1790, 0.0
          %v2725 = vmax.f32 %v1795, 0.0
          %v2726 = vmax.f32 %v1800, 0.0
          %v2727 = vmax.f32 %v1805, 0.0
          %v2728 = vmax.f32 %v1810, 0.0
          %v2729 = vmax.f32 %v1815, 0.0
          %v2730 = vmax.f32 %v1820, 0.0
          %v2731 = vmax.f32 %v1825, 0.0
          %v2732 = vmax.f32 %v1830, 0.0
          %v2733 = vmax.f32 %v1835, 0.0
          %v2734 = vmax.f32 %v1840, 0.0
          %v2735 = vmax.f32 %v1845, 0.0
          %v2736 = vmax.f32 %v1850, 0.0
          %v2737 = vmax.f32 %v1855, 0.0
          %v2738 = vmax.f32 %v1860, 0.0
          %v2739 = vmax.f32 %v1865, 0.0
          %v2740 = vmax.f32 %v1870, 0.0
          %v2741 = vmax.f32 %v1875, 0.0
          %v2742 = vmax.f32 %v1880, 0.0
          %v2743 = vmax.f32 %v1885, 0.0
          %v2744 = vmax.f32 %v1890, 0.0
          %v2745 = vmax.f32 %v1895, 0.0
          %v2746 = vmax.f32 %v1900, 0.0
          %v2747 = vmax.f32 %v1905, 0.0
          %v2748 = vmax.f32 %v1910, 0.0
          %v2749 = vmax.f32 %v1915, 0.0
          %v2750 = vmax.f32 %v1920, 0.0
          %v2751 = vmax.f32 %v1925, 0.0
          %v2752 = vmax.f32 %v1930, 0.0
          %v2753 = vmax.f32 %v1935, 0.0
          %v2754 = vmax.f32 %v1940, 0.0
          %v2755 = vmax.f32 %v1945, 0.0
          %v2756 = vmax.f32 %v1950, 0.0
          %v2757 = vmax.f32 %v1955, 0.0
          %v2758 = vmax.f32 %v1960, 0.0
          %v2759 = vmax.f32 %v1965, 0.0
          %v2760 = vmax.f32 %v1970, 0.0
          %v2761 = vmax.f32 %v1975, 0.0
          %v2762 = vmax.f32 %v1980, 0.0
          %v2763 = vmax.f32 %v1985, 0.0
          %v2764 = vmax.f32 %v1990, 0.0
          %v2765 = vmax.f32 %v1995, 0.0
          %v2766 = vmax.f32 %v2000, 0.0
          %v2767 = vmax.f32 %v2005, 0.0
          %v2768 = vmax.f32 %v2010, 0.0
          %v2769 = vmax.f32 %v2015, 0.0
          %v2770 = vmax.f32 %v2020, 0.0
          %v2771 = vmax.f32 %v2025, 0.0
          %v2772 = vmax.f32 %v2030, 0.0
          %v2773 = vmax.f32 %v2035, 0.0
          %v2774 = vmax.f32 %v2040, 0.0
          %v2775 = vmax.f32 %v2045, 0.0
          %v2776 = vmax.f32 %v2050, 0.0
          %v2777 = vmax.f32 %v2055, 0.0
          %v2778 = vmax.f32 %v2060, 0.0
          %v2779 = vmax.f32 %v2065, 0.0
          %v2780 = vmax.f32 %v2070, 0.0
          %v2781 = vmax.f32 %v2075, 0.0
          %v2782 = vmax.f32 %v2080, 0.0
          %v2783 = vmax.f32 %v2085, 0.0
          %v2784 = vmax.f32 %v2090, 0.0
          %v2785 = vmax.f32 %v2095, 0.0
          %v2786 = vmax.f32 %v2100, 0.0
          %v2787 = vmax.f32 %v2105, 0.0
          %v2788 = vmax.f32 %v2110, 0.0
          %v2789 = vmax.f32 %v2115, 0.0
          %v2790 = vmax.f32 %v2120, 0.0
          %v2791 = vmax.f32 %v2125, 0.0
          %v2792 = vmax.f32 %v2130, 0.0
          %v2793 = vmax.f32 %v2135, 0.0
          %v2794 = vmax.f32 %v2140, 0.0
          %v2795 = vmax.f32 %v2145, 0.0
          %v2796 = vmax.f32 %v2150, 0.0
          %v2797 = vmax.f32 %v2155, 0.0
          %v2798 = vmax.f32 %v2160, 0.0
          %v2799 = vmax.f32 %v2165, 0.0
          %v2800 = vmax.f32 %v2170, 0.0
          %v2801 = vmax.f32 %v2175, 0.0
          %v2802 = vmax.f32 %v2180, 0.0
          %v2803 = vmax.f32 %v2185, 0.0
          %v2804 = vmax.f32 %v2190, 0.0
          %v2805 = vmax.f32 %v2195, 0.0
          %v2806 = vmax.f32 %v2200, 0.0
          %v2807 = vmax.f32 %v2205, 0.0
          %v2808 = vmax.f32 %v2210, 0.0
          %v2809 = vmax.f32 %v2215, 0.0
          %v2810 = vmax.f32 %v2220, 0.0
          %v2811 = vmax.f32 %v2225, 0.0
          %v2812 = vmax.f32 %v2230, 0.0
          %v2813 = vmax.f32 %v2235, 0.0
          %v2814 = vmax.f32 %v2240, 0.0
          %v2815 = vmax.f32 %v2245, 0.0
          %v2816 = vmax.f32 %v2250, 0.0
          %v2817 = vmax.f32 %v2255, 0.0
          %v2818 = vmax.f32 %v2260, 0.0
          %v2819 = vmax.f32 %v2265, 0.0
          %v2820 = vmax.f32 %v2270, 0.0
          %v2821 = vmax.f32 %v2275, 0.0
          %v2822 = vmax.f32 %v2280, 0.0
          %v2823 = vmax.f32 %v2285, 0.0
          %v2824 = vmax.f32 %v2290, 0.0
          %v2825 = vmax.f32 %v2295, 0.0
          %v2826 = vmax.f32 %v2300, 0.0
          %v2827 = vmax.f32 %v2305, 0.0
          %v2828 = vmax.f32 %v2310, 0.0
          %v2829 = vmax.f32 %v2315, 0.0
          %v2830 = vmax.f32 %v2320, 0.0
          %v2831 = vmax.f32 %v2325, 0.0
          %v2832 = vmax.f32 %v2330, 0.0
          %v2833 = vmax.f32 %v2335, 0.0
          %v2834 = vmax.f32 %v2340, 0.0
          %v2835 = vmax.f32 %v2345, 0.0
          %v2836 = vmax.f32 %v2350, 0.0
          %v2837 = vmax.f32 %v2355, 0.0
          %v2838 = vmax.f32 %v2360, 0.0
          %v2839 = vmax.f32 %v2365, 0.0
          %v2840 = vmax.f32 %v2370, 0.0
          %v2841 = vmax.f32 %v2375, 0.0
          %v2842 = vmax.f32 %v2380, 0.0
          %v2843 = vmax.f32 %v2385, 0.0
          %v2844 = vmax.f32 %v2390, 0.0
          %v2845 = vmax.f32 %v2395, 0.0
          %v2846 = vmax.f32 %v2400, 0.0
          %v2847 = vmax.f32 %v2405, 0.0
          %v2848 = vmax.f32 %v2410, 0.0
          %v2849 = vmax.f32 %v2415, 0.0
          %v2850 = vmax.f32 %v2420, 0.0
          %v2851 = vmax.f32 %v2425, 0.0
          %v2852 = vmax.f32 %v2430, 0.0
          %v2853 = vmax.f32 %v2435, 0.0
          %v2854 = vmax.f32 %v2440, 0.0
          %v2855 = vmax.f32 %v2445, 0.0
          %v2856 = vmax.f32 %v2450, 0.0
          %v2857 = vmax.f32 %v2455, 0.0
          %v2858 = vmax.f32 %v2460, 0.0
          %v2859 = vmax.f32 %v2465, 0.0
          %v2860 = vmax.f32 %v2470, 0.0
          %v2861 = vmax.f32 %v2475, 0.0
          %v2862 = vmax.f32 %v2480, 0.0
          %v2863 = vmax.f32 %v2485, 0.0
          %v2864 = vmax.f32 %v2490, 0.0
          %v2865 = vmax.f32 %v2495, 0.0
          %v2866 = vmax.f32 %v2500, 0.0
          %v2867 = vmax.f32 %v2505, 0.0
          %v2868 = vmax.f32 %v2510, 0.0
          %v2869 = vmax.f32 %v2515, 0.0
          %v2870 = vmax.f32 %v2520, 0.0
          %v2871 = vmax.f32 %v2525, 0.0
          %v2872 = vmax.f32 %v2530, 0.0
          %v2873 = vmax.f32 %v2535, 0.0
          %v2874 = vmax.f32 %v2540, 0.0
          %v2875 = vmax.f32 %v2545, 0.0
          %v2876 = vmax.f32 %v2550, 0.0
          %v2877 = vmax.f32 %v2555, 0.0
          %v2878 = vmax.f32 %v2560, 0.0
          %v2879 = vmax.f32 %v2565, 0.0
          %v2880 = vmax.f32 %v2570, 0.0
          %v2881 = vmax.f32 %v2575, 0.0
          %v2882 = vmax.f32 %v2580, 0.0
          %v2883 = vmax.f32 %v2585, 0.0
          %v2884 = vmax.f32 %v2590, 0.0
          %v2885 = vmax.f32 %v2595, 0.0
          %v2886 = vmax.f32 %v2600, 0.0
          %v2887 = vmax.f32 %v2605, 0.0
          %v2888 = vmax.f32 %v2610, 0.0
          %v2889 = vmax.f32 %v2615, 0.0
          %v2890 = vmax.f32 %v2620, 0.0
          %v2891 = vmax.f32 %v2625, 0.0
          %v2892 = vmax.f32 %v2630, 0.0
          %v2893 = vmax.f32 %v2635, 0.0
          %s2894 = smul.u32 %s20, 2048
          %v2895 = vlaneseq
          %v2896 = vshrl.u32 %v2895, 7
          %v2897 = vadd.s32 %v2896, 8
          %v2898 = vadd.s32 %v2896, 16
          %v2899 = vadd.s32 %v2896, 24
          %v2900 = vadd.s32 %v2896, 32
          %v2901 = vadd.s32 %v2896, 40
          %v2902 = vadd.s32 %v2896, 48
          %v2903 = vadd.s32 %v2896, 56
          %v2904 = vadd.s32 %v2896, 64
          %v2905 = vadd.s32 %v2896, 72
          %v2906 = vadd.s32 %v2896, 80
          %v2907 = vadd.s32 %v2896, 88
          %v2908 = vadd.s32 %v2896, 96
          %v2909 = vadd.s32 %v2896, 104
          %v2910 = vadd.s32 %v2896, 112
          %v2911 = vadd.s32 %v2896, 120
          %v2912 = vadd.s32 %v2896, 128
          %v2913 = vadd.s32 %v2896, 136
          %v2914 = vadd.s32 %v2896, 144
          %v2915 = vadd.s32 %v2896, 152
          %v2916 = vadd.s32 %v2896, 160
          %v2917 = vadd.s32 %v2896, 168
          %v2918 = vadd.s32 %v2896, 176
          %v2919 = vadd.s32 %v2896, 184
          %v2920 = vadd.s32 %v2896, 192
          %v2921 = vadd.s32 %v2896, 200
          %v2922 = vadd.s32 %v2896, 208
          %v2923 = vadd.s32 %v2896, 216
          %v2924 = vadd.s32 %v2896, 224
          %v2925 = vadd.s32 %v2896, 232
          %v2926 = vadd.s32 %v2896, 240
          %v2927 = vadd.s32 %v2896, 248
          %v2928 = vadd.s32 %v2896, 256
          %v2929 = vadd.s32 %v2896, 264
          %v2930 = vadd.s32 %v2896, 272
          %v2931 = vadd.s32 %v2896, 280
          %v2932 = vadd.s32 %v2896, 288
          %v2933 = vadd.s32 %v2896, 296
          %v2934 = vadd.s32 %v2896, 304
          %v2935 = vadd.s32 %v2896, 312
          %v2936 = vadd.s32 %v2896, 320
          %v2937 = vadd.s32 %v2896, 328
          %v2938 = vadd.s32 %v2896, 336
          %v2939 = vadd.s32 %v2896, 344
          %v2940 = vadd.s32 %v2896, 352
          %v2941 = vadd.s32 %v2896, 360
          %v2942 = vadd.s32 %v2896, 368
          %v2943 = vadd.s32 %v2896, 376
          %v2944 = vadd.s32 %v2896, 384
          %v2945 = vadd.s32 %v2896, 392
          %v2946 = vadd.s32 %v2896, 400
          %v2947 = vadd.s32 %v2896, 408
          %v2948 = vadd.s32 %v2896, 416
          %v2949 = vadd.s32 %v2896, 424
          %v2950 = vadd.s32 %v2896, 432
          %v2951 = vadd.s32 %v2896, 440
          %v2952 = vadd.s32 %v2896, 448
          %v2953 = vadd.s32 %v2896, 456
          %v2954 = vadd.s32 %v2896, 464
          %v2955 = vadd.s32 %v2896, 472
          %v2956 = vadd.s32 %v2896, 480
          %v2957 = vadd.s32 %v2896, 488
          %v2958 = vadd.s32 %v2896, 496
          %v2959 = vadd.s32 %v2896, 504
          %v2960 = vadd.s32 %v2896, 512
          %v2961 = vadd.s32 %v2896, 520
          %v2962 = vadd.s32 %v2896, 528
          %v2963 = vadd.s32 %v2896, 536
          %v2964 = vadd.s32 %v2896, 544
          %v2965 = vadd.s32 %v2896, 552
          %v2966 = vadd.s32 %v2896, 560
          %v2967 = vadd.s32 %v2896, 568
          %v2968 = vadd.s32 %v2896, 576
          %v2969 = vadd.s32 %v2896, 584
          %v2970 = vadd.s32 %v2896, 592
          %v2971 = vadd.s32 %v2896, 600
          %v2972 = vadd.s32 %v2896, 608
          %v2973 = vadd.s32 %v2896, 616
          %v2974 = vadd.s32 %v2896, 624
          %v2975 = vadd.s32 %v2896, 632
          %v2976 = vadd.s32 %v2896, 640
          %v2977 = vadd.s32 %v2896, 648
          %v2978 = vadd.s32 %v2896, 656
          %v2979 = vadd.s32 %v2896, 664
          %v2980 = vadd.s32 %v2896, 672
          %v2981 = vadd.s32 %v2896, 680
          %v2982 = vadd.s32 %v2896, 688
          %v2983 = vadd.s32 %v2896, 696
          %v2984 = vadd.s32 %v2896, 704
          %v2985 = vadd.s32 %v2896, 712
          %v2986 = vadd.s32 %v2896, 720
          %v2987 = vadd.s32 %v2896, 728
          %v2988 = vadd.s32 %v2896, 736
          %v2989 = vadd.s32 %v2896, 744
          %v2990 = vadd.s32 %v2896, 752
          %v2991 = vadd.s32 %v2896, 760
          %v2992 = vadd.s32 %v2896, 768
          %v2993 = vadd.s32 %v2896, 776
          %v2994 = vadd.s32 %v2896, 784
          %v2995 = vadd.s32 %v2896, 792
          %v2996 = vadd.s32 %v2896, 800
          %v2997 = vadd.s32 %v2896, 808
          %v2998 = vadd.s32 %v2896, 816
          %v2999 = vadd.s32 %v2896, 824
          %v3000 = vadd.s32 %v2896, 832
          %v3001 = vadd.s32 %v2896, 840
          %v3002 = vadd.s32 %v2896, 848
          %v3003 = vadd.s32 %v2896, 856
          %v3004 = vadd.s32 %v2896, 864
          %v3005 = vadd.s32 %v2896, 872
          %v3006 = vadd.s32 %v2896, 880
          %v3007 = vadd.s32 %v2896, 888
          %v3008 = vadd.s32 %v2896, 896
          %v3009 = vadd.s32 %v2896, 904
          %v3010 = vadd.s32 %v2896, 912
          %v3011 = vadd.s32 %v2896, 920
          %v3012 = vadd.s32 %v2896, 928
          %v3013 = vadd.s32 %v2896, 936
          %v3014 = vadd.s32 %v2896, 944
          %v3015 = vadd.s32 %v2896, 952
          %v3016 = vadd.s32 %v2896, 960
          %v3017 = vadd.s32 %v2896, 968
          %v3018 = vadd.s32 %v2896, 976
          %v3019 = vadd.s32 %v2896, 984
          %v3020 = vadd.s32 %v2896, 992
          %v3021 = vadd.s32 %v2896, 1000
          %v3022 = vadd.s32 %v2896, 1008
          %v3023 = vadd.s32 %v2896, 1016
          %v3024 = vadd.s32 %v2896, 1024
          %v3025 = vadd.s32 %v2896, 1032
          %v3026 = vadd.s32 %v2896, 1040
          %v3027 = vadd.s32 %v2896, 1048
          %v3028 = vadd.s32 %v2896, 1056
          %v3029 = vadd.s32 %v2896, 1064
          %v3030 = vadd.s32 %v2896, 1072
          %v3031 = vadd.s32 %v2896, 1080
          %v3032 = vadd.s32 %v2896, 1088
          %v3033 = vadd.s32 %v2896, 1096
          %v3034 = vadd.s32 %v2896, 1104
          %v3035 = vadd.s32 %v2896, 1112
          %v3036 = vadd.s32 %v2896, 1120
          %v3037 = vadd.s32 %v2896, 1128
          %v3038 = vadd.s32 %v2896, 1136
          %v3039 = vadd.s32 %v2896, 1144
          %v3040 = vadd.s32 %v2896, 1152
          %v3041 = vadd.s32 %v2896, 1160
          %v3042 = vadd.s32 %v2896, 1168
          %v3043 = vadd.s32 %v2896, 1176
          %v3044 = vadd.s32 %v2896, 1184
          %v3045 = vadd.s32 %v2896, 1192
          %v3046 = vadd.s32 %v2896, 1200
          %v3047 = vadd.s32 %v2896, 1208
          %v3048 = vadd.s32 %v2896, 1216
          %v3049 = vadd.s32 %v2896, 1224
          %v3050 = vadd.s32 %v2896, 1232
          %v3051 = vadd.s32 %v2896, 1240
          %v3052 = vadd.s32 %v2896, 1248
          %v3053 = vadd.s32 %v2896, 1256
          %v3054 = vadd.s32 %v2896, 1264
          %v3055 = vadd.s32 %v2896, 1272
          %v3056 = vadd.s32 %v2896, 1280
          %v3057 = vadd.s32 %v2896, 1288
          %v3058 = vadd.s32 %v2896, 1296
          %v3059 = vadd.s32 %v2896, 1304
          %v3060 = vadd.s32 %v2896, 1312
          %v3061 = vadd.s32 %v2896, 1320
          %v3062 = vadd.s32 %v2896, 1328
          %v3063 = vadd.s32 %v2896, 1336
          %v3064 = vadd.s32 %v2896, 1344
          %v3065 = vadd.s32 %v2896, 1352
          %v3066 = vadd.s32 %v2896, 1360
          %v3067 = vadd.s32 %v2896, 1368
          %v3068 = vadd.s32 %v2896, 1376
          %v3069 = vadd.s32 %v2896, 1384
          %v3070 = vadd.s32 %v2896, 1392
          %v3071 = vadd.s32 %v2896, 1400
          %v3072 = vadd.s32 %v2896, 1408
          %v3073 = vadd.s32 %v2896, 1416
          %v3074 = vadd.s32 %v2896, 1424
          %v3075 = vadd.s32 %v2896, 1432
          %v3076 = vadd.s32 %v2896, 1440
          %v3077 = vadd.s32 %v2896, 1448
          %v3078 = vadd.s32 %v2896, 1456
          %v3079 = vadd.s32 %v2896, 1464
          %v3080 = vadd.s32 %v2896, 1472
          %v3081 = vadd.s32 %v2896, 1480
          %v3082 = vadd.s32 %v2896, 1488
          %v3083 = vadd.s32 %v2896, 1496
          %v3084 = vadd.s32 %v2896, 1504
          %v3085 = vadd.s32 %v2896, 1512
          %v3086 = vadd.s32 %v2896, 1520
          %v3087 = vadd.s32 %v2896, 1528
          %v3088 = vadd.s32 %v2896, 1536
          %v3089 = vadd.s32 %v2896, 1544
          %v3090 = vadd.s32 %v2896, 1552
          %v3091 = vadd.s32 %v2896, 1560
          %v3092 = vadd.s32 %v2896, 1568
          %v3093 = vadd.s32 %v2896, 1576
          %v3094 = vadd.s32 %v2896, 1584
          %v3095 = vadd.s32 %v2896, 1592
          %v3096 = vadd.s32 %v2896, 1600
          %v3097 = vadd.s32 %v2896, 1608
          %v3098 = vadd.s32 %v2896, 1616
          %v3099 = vadd.s32 %v2896, 1624
          %v3100 = vadd.s32 %v2896, 1632
          %v3101 = vadd.s32 %v2896, 1640
          %v3102 = vadd.s32 %v2896, 1648
          %v3103 = vadd.s32 %v2896, 1656
          %v3104 = vadd.s32 %v2896, 1664
          %v3105 = vadd.s32 %v2896, 1672
          %v3106 = vadd.s32 %v2896, 1680
          %v3107 = vadd.s32 %v2896, 1688
          %v3108 = vadd.s32 %v2896, 1696
          %v3109 = vadd.s32 %v2896, 1704
          %v3110 = vadd.s32 %v2896, 1712
          %v3111 = vadd.s32 %v2896, 1720
          %v3112 = vadd.s32 %v2896, 1728
          %v3113 = vadd.s32 %v2896, 1736
          %v3114 = vadd.s32 %v2896, 1744
          %v3115 = vadd.s32 %v2896, 1752
          %v3116 = vadd.s32 %v2896, 1760
          %v3117 = vadd.s32 %v2896, 1768
          %v3118 = vadd.s32 %v2896, 1776
          %v3119 = vadd.s32 %v2896, 1784
          %v3120 = vadd.s32 %v2896, 1792
          %v3121 = vadd.s32 %v2896, 1800
          %v3122 = vadd.s32 %v2896, 1808
          %v3123 = vadd.s32 %v2896, 1816
          %v3124 = vadd.s32 %v2896, 1824
          %v3125 = vadd.s32 %v2896, 1832
          %v3126 = vadd.s32 %v2896, 1840
          %v3127 = vadd.s32 %v2896, 1848
          %v3128 = vadd.s32 %v2896, 1856
          %v3129 = vadd.s32 %v2896, 1864
          %v3130 = vadd.s32 %v2896, 1872
          %v3131 = vadd.s32 %v2896, 1880
          %v3132 = vadd.s32 %v2896, 1888
          %v3133 = vadd.s32 %v2896, 1896
          %v3134 = vadd.s32 %v2896, 1904
          %v3135 = vadd.s32 %v2896, 1912
          %v3136 = vadd.s32 %v2896, 1920
          %v3137 = vadd.s32 %v2896, 1928
          %v3138 = vadd.s32 %v2896, 1936
          %v3139 = vadd.s32 %v2896, 1944
          %v3140 = vadd.s32 %v2896, 1952
          %v3141 = vadd.s32 %v2896, 1960
          %v3142 = vadd.s32 %v2896, 1968
          %v3143 = vadd.s32 %v2896, 1976
          %v3144 = vadd.s32 %v2896, 1984
          %v3145 = vadd.s32 %v2896, 1992
          %v3146 = vadd.s32 %v2896, 2000
          %v3147 = vadd.s32 %v2896, 2008
          %v3148 = vadd.s32 %v2896, 2016
          %v3149 = vadd.s32 %v2896, 2024
          %v3150 = vadd.s32 %v2896, 2032
          %v3151 = vadd.s32 %v2896, 2040
          %v3152 = vstv %s2894
          %v3153 = vadd.s32 %v3152, %v2896
          %v3154 = vadd.s32 %v3152, %v2897
          %v3155 = vadd.s32 %v3152, %v2898
          %v3156 = vadd.s32 %v3152, %v2899
          %v3157 = vadd.s32 %v3152, %v2900
          %v3158 = vadd.s32 %v3152, %v2901
          %v3159 = vadd.s32 %v3152, %v2902
          %v3160 = vadd.s32 %v3152, %v2903
          %v3161 = vadd.s32 %v3152, %v2904
          %v3162 = vadd.s32 %v3152, %v2905
          %v3163 = vadd.s32 %v3152, %v2906
          %v3164 = vadd.s32 %v3152, %v2907
          %v3165 = vadd.s32 %v3152, %v2908
          %v3166 = vadd.s32 %v3152, %v2909
          %v3167 = vadd.s32 %v3152, %v2910
          %v3168 = vadd.s32 %v3152, %v2911
          %v3169 = vadd.s32 %v3152, %v2912
          %v3170 = vadd.s32 %v3152, %v2913
          %v3171 = vadd.s32 %v3152, %v2914
          %v3172 = vadd.s32 %v3152, %v2915
          %v3173 = vadd.s32 %v3152, %v2916
          %v3174 = vadd.s32 %v3152, %v2917
          %v3175 = vadd.s32 %v3152, %v2918
          %v3176 = vadd.s32 %v3152, %v2919
          %v3177 = vadd.s32 %v3152, %v2920
          %v3178 = vadd.s32 %v3152, %v2921
          %v3179 = vadd.s32 %v3152, %v2922
          %v3180 = vadd.s32 %v3152, %v2923
          %v3181 = vadd.s32 %v3152, %v2924
          %v3182 = vadd.s32 %v3152, %v2925
          %v3183 = vadd.s32 %v3152, %v2926
          %v3184 = vadd.s32 %v3152, %v2927
          %v3185 = vadd.s32 %v3152, %v2928
          %v3186 = vadd.s32 %v3152, %v2929
          %v3187 = vadd.s32 %v3152, %v2930
          %v3188 = vadd.s32 %v3152, %v2931
          %v3189 = vadd.s32 %v3152, %v2932
          %v3190 = vadd.s32 %v3152, %v2933
          %v3191 = vadd.s32 %v3152, %v2934
          %v3192 = vadd.s32 %v3152, %v2935
          %v3193 = vadd.s32 %v3152, %v2936
          %v3194 = vadd.s32 %v3152, %v2937
          %v3195 = vadd.s32 %v3152, %v2938
          %v3196 = vadd.s32 %v3152, %v2939
          %v3197 = vadd.s32 %v3152, %v2940
          %v3198 = vadd.s32 %v3152, %v2941
          %v3199 = vadd.s32 %v3152, %v2942
          %v3200 = vadd.s32 %v3152, %v2943
          %v3201 = vadd.s32 %v3152, %v2944
          %v3202 = vadd.s32 %v3152, %v2945
          %v3203 = vadd.s32 %v3152, %v2946
          %v3204 = vadd.s32 %v3152, %v2947
          %v3205 = vadd.s32 %v3152, %v2948
          %v3206 = vadd.s32 %v3152, %v2949
          %v3207 = vadd.s32 %v3152, %v2950
          %v3208 = vadd.s32 %v3152, %v2951
          %v3209 = vadd.s32 %v3152, %v2952
          %v3210 = vadd.s32 %v3152, %v2953
          %v3211 = vadd.s32 %v3152, %v2954
          %v3212 = vadd.s32 %v3152, %v2955
          %v3213 = vadd.s32 %v3152, %v2956
          %v3214 = vadd.s32 %v3152, %v2957
          %v3215 = vadd.s32 %v3152, %v2958
          %v3216 = vadd.s32 %v3152, %v2959
          %v3217 = vadd.s32 %v3152, %v2960
          %v3218 = vadd.s32 %v3152, %v2961
          %v3219 = vadd.s32 %v3152, %v2962
          %v3220 = vadd.s32 %v3152, %v2963
          %v3221 = vadd.s32 %v3152, %v2964
          %v3222 = vadd.s32 %v3152, %v2965
          %v3223 = vadd.s32 %v3152, %v2966
          %v3224 = vadd.s32 %v3152, %v2967
          %v3225 = vadd.s32 %v3152, %v2968
          %v3226 = vadd.s32 %v3152, %v2969
          %v3227 = vadd.s32 %v3152, %v2970
          %v3228 = vadd.s32 %v3152, %v2971
          %v3229 = vadd.s32 %v3152, %v2972
          %v3230 = vadd.s32 %v3152, %v2973
          %v3231 = vadd.s32 %v3152, %v2974
          %v3232 = vadd.s32 %v3152, %v2975
          %v3233 = vadd.s32 %v3152, %v2976
          %v3234 = vadd.s32 %v3152, %v2977
          %v3235 = vadd.s32 %v3152, %v2978
          %v3236 = vadd.s32 %v3152, %v2979
          %v3237 = vadd.s32 %v3152, %v2980
          %v3238 = vadd.s32 %v3152, %v2981
          %v3239 = vadd.s32 %v3152, %v2982
          %v3240 = vadd.s32 %v3152, %v2983
          %v3241 = vadd.s32 %v3152, %v2984
          %v3242 = vadd.s32 %v3152, %v2985
          %v3243 = vadd.s32 %v3152, %v2986
          %v3244 = vadd.s32 %v3152, %v2987
          %v3245 = vadd.s32 %v3152, %v2988
          %v3246 = vadd.s32 %v3152, %v2989
          %v3247 = vadd.s32 %v3152, %v2990
          %v3248 = vadd.s32 %v3152, %v2991
          %v3249 = vadd.s32 %v3152, %v2992
          %v3250 = vadd.s32 %v3152, %v2993
          %v3251 = vadd.s32 %v3152, %v2994
          %v3252 = vadd.s32 %v3152, %v2995
          %v3253 = vadd.s32 %v3152, %v2996
          %v3254 = vadd.s32 %v3152, %v2997
          %v3255 = vadd.s32 %v3152, %v2998
          %v3256 = vadd.s32 %v3152, %v2999
          %v3257 = vadd.s32 %v3152, %v3000
          %v3258 = vadd.s32 %v3152, %v3001
          %v3259 = vadd.s32 %v3152, %v3002
          %v3260 = vadd.s32 %v3152, %v3003
          %v3261 = vadd.s32 %v3152, %v3004
          %v3262 = vadd.s32 %v3152, %v3005
          %v3263 = vadd.s32 %v3152, %v3006
          %v3264 = vadd.s32 %v3152, %v3007
          %v3265 = vadd.s32 %v3152, %v3008
          %v3266 = vadd.s32 %v3152, %v3009
          %v3267 = vadd.s32 %v3152, %v3010
          %v3268 = vadd.s32 %v3152, %v3011
          %v3269 = vadd.s32 %v3152, %v3012
          %v3270 = vadd.s32 %v3152, %v3013
          %v3271 = vadd.s32 %v3152, %v3014
          %v3272 = vadd.s32 %v3152, %v3015
          %v3273 = vadd.s32 %v3152, %v3016
          %v3274 = vadd.s32 %v3152, %v3017
          %v3275 = vadd.s32 %v3152, %v3018
          %v3276 = vadd.s32 %v3152, %v3019
          %v3277 = vadd.s32 %v3152, %v3020
          %v3278 = vadd.s32 %v3152, %v3021
          %v3279 = vadd.s32 %v3152, %v3022
          %v3280 = vadd.s32 %v3152, %v3023
          %v3281 = vadd.s32 %v3152, %v3024
          %v3282 = vadd.s32 %v3152, %v3025
          %v3283 = vadd.s32 %v3152, %v3026
          %v3284 = vadd.s32 %v3152, %v3027
          %v3285 = vadd.s32 %v3152, %v3028
          %v3286 = vadd.s32 %v3152, %v3029
          %v3287 = vadd.s32 %v3152, %v3030
          %v3288 = vadd.s32 %v3152, %v3031
          %v3289 = vadd.s32 %v3152, %v3032
          %v3290 = vadd.s32 %v3152, %v3033
          %v3291 = vadd.s32 %v3152, %v3034
          %v3292 = vadd.s32 %v3152, %v3035
          %v3293 = vadd.s32 %v3152, %v3036
          %v3294 = vadd.s32 %v3152, %v3037
          %v3295 = vadd.s32 %v3152, %v3038
          %v3296 = vadd.s32 %v3152, %v3039
          %v3297 = vadd.s32 %v3152, %v3040
          %v3298 = vadd.s32 %v3152, %v3041
          %v3299 = vadd.s32 %v3152, %v3042
          %v3300 = vadd.s32 %v3152, %v3043
          %v3301 = vadd.s32 %v3152, %v3044
          %v3302 = vadd.s32 %v3152, %v3045
          %v3303 = vadd.s32 %v3152, %v3046
          %v3304 = vadd.s32 %v3152, %v3047
          %v3305 = vadd.s32 %v3152, %v3048
          %v3306 = vadd.s32 %v3152, %v3049
          %v3307 = vadd.s32 %v3152, %v3050
          %v3308 = vadd.s32 %v3152, %v3051
          %v3309 = vadd.s32 %v3152, %v3052
          %v3310 = vadd.s32 %v3152, %v3053
          %v3311 = vadd.s32 %v3152, %v3054
          %v3312 = vadd.s32 %v3152, %v3055
          %v3313 = vadd.s32 %v3152, %v3056
          %v3314 = vadd.s32 %v3152, %v3057
          %v3315 = vadd.s32 %v3152, %v3058
          %v3316 = vadd.s32 %v3152, %v3059
          %v3317 = vadd.s32 %v3152, %v3060
          %v3318 = vadd.s32 %v3152, %v3061
          %v3319 = vadd.s32 %v3152, %v3062
          %v3320 = vadd.s32 %v3152, %v3063
          %v3321 = vadd.s32 %v3152, %v3064
          %v3322 = vadd.s32 %v3152, %v3065
          %v3323 = vadd.s32 %v3152, %v3066
          %v3324 = vadd.s32 %v3152, %v3067
          %v3325 = vadd.s32 %v3152, %v3068
          %v3326 = vadd.s32 %v3152, %v3069
          %v3327 = vadd.s32 %v3152, %v3070
          %v3328 = vadd.s32 %v3152, %v3071
          %v3329 = vadd.s32 %v3152, %v3072
          %v3330 = vadd.s32 %v3152, %v3073
          %v3331 = vadd.s32 %v3152, %v3074
          %v3332 = vadd.s32 %v3152, %v3075
          %v3333 = vadd.s32 %v3152, %v3076
          %v3334 = vadd.s32 %v3152, %v3077
          %v3335 = vadd.s32 %v3152, %v3078
          %v3336 = vadd.s32 %v3152, %v3079
          %v3337 = vadd.s32 %v3152, %v3080
          %v3338 = vadd.s32 %v3152, %v3081
          %v3339 = vadd.s32 %v3152, %v3082
          %v3340 = vadd.s32 %v3152, %v3083
          %v3341 = vadd.s32 %v3152, %v3084
          %v3342 = vadd.s32 %v3152, %v3085
          %v3343 = vadd.s32 %v3152, %v3086
          %v3344 = vadd.s32 %v3152, %v3087
          %v3345 = vadd.s32 %v3152, %v3088
          %v3346 = vadd.s32 %v3152, %v3089
          %v3347 = vadd.s32 %v3152, %v3090
          %v3348 = vadd.s32 %v3152, %v3091
          %v3349 = vadd.s32 %v3152, %v3092
          %v3350 = vadd.s32 %v3152, %v3093
          %v3351 = vadd.s32 %v3152, %v3094
          %v3352 = vadd.s32 %v3152, %v3095
          %v3353 = vadd.s32 %v3152, %v3096
          %v3354 = vadd.s32 %v3152, %v3097
          %v3355 = vadd.s32 %v3152, %v3098
          %v3356 = vadd.s32 %v3152, %v3099
          %v3357 = vadd.s32 %v3152, %v3100
          %v3358 = vadd.s32 %v3152, %v3101
          %v3359 = vadd.s32 %v3152, %v3102
          %v3360 = vadd.s32 %v3152, %v3103
          %v3361 = vadd.s32 %v3152, %v3104
          %v3362 = vadd.s32 %v3152, %v3105
          %v3363 = vadd.s32 %v3152, %v3106
          %v3364 = vadd.s32 %v3152, %v3107
          %v3365 = vadd.s32 %v3152, %v3108
          %v3366 = vadd.s32 %v3152, %v3109
          %v3367 = vadd.s32 %v3152, %v3110
          %v3368 = vadd.s32 %v3152, %v3111
          %v3369 = vadd.s32 %v3152, %v3112
          %v3370 = vadd.s32 %v3152, %v3113
          %v3371 = vadd.s32 %v3152, %v3114
          %v3372 = vadd.s32 %v3152, %v3115
          %v3373 = vadd.s32 %v3152, %v3116
          %v3374 = vadd.s32 %v3152, %v3117
          %v3375 = vadd.s32 %v3152, %v3118
          %v3376 = vadd.s32 %v3152, %v3119
          %v3377 = vadd.s32 %v3152, %v3120
          %v3378 = vadd.s32 %v3152, %v3121
          %v3379 = vadd.s32 %v3152, %v3122
          %v3380 = vadd.s32 %v3152, %v3123
          %v3381 = vadd.s32 %v3152, %v3124
          %v3382 = vadd.s32 %v3152, %v3125
          %v3383 = vadd.s32 %v3152, %v3126
          %v3384 = vadd.s32 %v3152, %v3127
          %v3385 = vadd.s32 %v3152, %v3128
          %v3386 = vadd.s32 %v3152, %v3129
          %v3387 = vadd.s32 %v3152, %v3130
          %v3388 = vadd.s32 %v3152, %v3131
          %v3389 = vadd.s32 %v3152, %v3132
          %v3390 = vadd.s32 %v3152, %v3133
          %v3391 = vadd.s32 %v3152, %v3134
          %v3392 = vadd.s32 %v3152, %v3135
          %v3393 = vadd.s32 %v3152, %v3136
          %v3394 = vadd.s32 %v3152, %v3137
          %v3395 = vadd.s32 %v3152, %v3138
          %v3396 = vadd.s32 %v3152, %v3139
          %v3397 = vadd.s32 %v3152, %v3140
          %v3398 = vadd.s32 %v3152, %v3141
          %v3399 = vadd.s32 %v3152, %v3142
          %v3400 = vadd.s32 %v3152, %v3143
          %v3401 = vadd.s32 %v3152, %v3144
          %v3402 = vadd.s32 %v3152, %v3145
          %v3403 = vadd.s32 %v3152, %v3146
          %v3404 = vadd.s32 %v3152, %v3147
          %v3405 = vadd.s32 %v3152, %v3148
          %v3406 = vadd.s32 %v3152, %v3149
          %v3407 = vadd.s32 %v3152, %v3150
          %v3408 = vadd.s32 %v3152, %v3151
          %vm3409 = vcmp.lt.s32.totalorder %v3153, 2600
          %vm3410 = vcmp.lt.s32.totalorder %v3154, 2600
          %vm3411 = vcmp.lt.s32.totalorder %v3155, 2600
          %vm3412 = vcmp.lt.s32.totalorder %v3156, 2600
          %vm3413 = vcmp.lt.s32.totalorder %v3157, 2600
          %vm3414 = vcmp.lt.s32.totalorder %v3158, 2600
          %vm3415 = vcmp.lt.s32.totalorder %v3159, 2600
          %vm3416 = vcmp.lt.s32.totalorder %v3160, 2600
          %vm3417 = vcmp.lt.s32.totalorder %v3161, 2600
          %vm3418 = vcmp.lt.s32.totalorder %v3162, 2600
          %vm3419 = vcmp.lt.s32.totalorder %v3163, 2600
          %vm3420 = vcmp.lt.s32.totalorder %v3164, 2600
          %vm3421 = vcmp.lt.s32.totalorder %v3165, 2600
          %vm3422 = vcmp.lt.s32.totalorder %v3166, 2600
          %vm3423 = vcmp.lt.s32.totalorder %v3167, 2600
          %vm3424 = vcmp.lt.s32.totalorder %v3168, 2600
          %vm3425 = vcmp.lt.s32.totalorder %v3169, 2600
          %vm3426 = vcmp.lt.s32.totalorder %v3170, 2600
          %vm3427 = vcmp.lt.s32.totalorder %v3171, 2600
          %vm3428 = vcmp.lt.s32.totalorder %v3172, 2600
          %vm3429 = vcmp.lt.s32.totalorder %v3173, 2600
          %vm3430 = vcmp.lt.s32.totalorder %v3174, 2600
          %vm3431 = vcmp.lt.s32.totalorder %v3175, 2600
          %vm3432 = vcmp.lt.s32.totalorder %v3176, 2600
          %vm3433 = vcmp.lt.s32.totalorder %v3177, 2600
          %vm3434 = vcmp.lt.s32.totalorder %v3178, 2600
          %vm3435 = vcmp.lt.s32.totalorder %v3179, 2600
          %vm3436 = vcmp.lt.s32.totalorder %v3180, 2600
          %vm3437 = vcmp.lt.s32.totalorder %v3181, 2600
          %vm3438 = vcmp.lt.s32.totalorder %v3182, 2600
          %vm3439 = vcmp.lt.s32.totalorder %v3183, 2600
          %vm3440 = vcmp.lt.s32.totalorder %v3184, 2600
          %vm3441 = vcmp.lt.s32.totalorder %v3185, 2600
          %vm3442 = vcmp.lt.s32.totalorder %v3186, 2600
          %vm3443 = vcmp.lt.s32.totalorder %v3187, 2600
          %vm3444 = vcmp.lt.s32.totalorder %v3188, 2600
          %vm3445 = vcmp.lt.s32.totalorder %v3189, 2600
          %vm3446 = vcmp.lt.s32.totalorder %v3190, 2600
          %vm3447 = vcmp.lt.s32.totalorder %v3191, 2600
          %vm3448 = vcmp.lt.s32.totalorder %v3192, 2600
          %vm3449 = vcmp.lt.s32.totalorder %v3193, 2600
          %vm3450 = vcmp.lt.s32.totalorder %v3194, 2600
          %vm3451 = vcmp.lt.s32.totalorder %v3195, 2600
          %vm3452 = vcmp.lt.s32.totalorder %v3196, 2600
          %vm3453 = vcmp.lt.s32.totalorder %v3197, 2600
          %vm3454 = vcmp.lt.s32.totalorder %v3198, 2600
          %vm3455 = vcmp.lt.s32.totalorder %v3199, 2600
          %vm3456 = vcmp.lt.s32.totalorder %v3200, 2600
          %vm3457 = vcmp.lt.s32.totalorder %v3201, 2600
          %vm3458 = vcmp.lt.s32.totalorder %v3202, 2600
          %vm3459 = vcmp.lt.s32.totalorder %v3203, 2600
          %vm3460 = vcmp.lt.s32.totalorder %v3204, 2600
          %vm3461 = vcmp.lt.s32.totalorder %v3205, 2600
          %vm3462 = vcmp.lt.s32.totalorder %v3206, 2600
          %vm3463 = vcmp.lt.s32.totalorder %v3207, 2600
          %vm3464 = vcmp.lt.s32.totalorder %v3208, 2600
          %vm3465 = vcmp.lt.s32.totalorder %v3209, 2600
          %vm3466 = vcmp.lt.s32.totalorder %v3210, 2600
          %vm3467 = vcmp.lt.s32.totalorder %v3211, 2600
          %vm3468 = vcmp.lt.s32.totalorder %v3212, 2600
          %vm3469 = vcmp.lt.s32.totalorder %v3213, 2600
          %vm3470 = vcmp.lt.s32.totalorder %v3214, 2600
          %vm3471 = vcmp.lt.s32.totalorder %v3215, 2600
          %vm3472 = vcmp.lt.s32.totalorder %v3216, 2600
          %vm3473 = vcmp.lt.s32.totalorder %v3217, 2600
          %vm3474 = vcmp.lt.s32.totalorder %v3218, 2600
          %vm3475 = vcmp.lt.s32.totalorder %v3219, 2600
          %vm3476 = vcmp.lt.s32.totalorder %v3220, 2600
          %vm3477 = vcmp.lt.s32.totalorder %v3221, 2600
          %vm3478 = vcmp.lt.s32.totalorder %v3222, 2600
          %vm3479 = vcmp.lt.s32.totalorder %v3223, 2600
          %vm3480 = vcmp.lt.s32.totalorder %v3224, 2600
          %vm3481 = vcmp.lt.s32.totalorder %v3225, 2600
          %vm3482 = vcmp.lt.s32.totalorder %v3226, 2600
          %vm3483 = vcmp.lt.s32.totalorder %v3227, 2600
          %vm3484 = vcmp.lt.s32.totalorder %v3228, 2600
          %vm3485 = vcmp.lt.s32.totalorder %v3229, 2600
          %vm3486 = vcmp.lt.s32.totalorder %v3230, 2600
          %vm3487 = vcmp.lt.s32.totalorder %v3231, 2600
          %vm3488 = vcmp.lt.s32.totalorder %v3232, 2600
          %vm3489 = vcmp.lt.s32.totalorder %v3233, 2600
          %vm3490 = vcmp.lt.s32.totalorder %v3234, 2600
          %vm3491 = vcmp.lt.s32.totalorder %v3235, 2600
          %vm3492 = vcmp.lt.s32.totalorder %v3236, 2600
          %vm3493 = vcmp.lt.s32.totalorder %v3237, 2600
          %vm3494 = vcmp.lt.s32.totalorder %v3238, 2600
          %vm3495 = vcmp.lt.s32.totalorder %v3239, 2600
          %vm3496 = vcmp.lt.s32.totalorder %v3240, 2600
          %vm3497 = vcmp.lt.s32.totalorder %v3241, 2600
          %vm3498 = vcmp.lt.s32.totalorder %v3242, 2600
          %vm3499 = vcmp.lt.s32.totalorder %v3243, 2600
          %vm3500 = vcmp.lt.s32.totalorder %v3244, 2600
          %vm3501 = vcmp.lt.s32.totalorder %v3245, 2600
          %vm3502 = vcmp.lt.s32.totalorder %v3246, 2600
          %vm3503 = vcmp.lt.s32.totalorder %v3247, 2600
          %vm3504 = vcmp.lt.s32.totalorder %v3248, 2600
          %vm3505 = vcmp.lt.s32.totalorder %v3249, 2600
          %vm3506 = vcmp.lt.s32.totalorder %v3250, 2600
          %vm3507 = vcmp.lt.s32.totalorder %v3251, 2600
          %vm3508 = vcmp.lt.s32.totalorder %v3252, 2600
          %vm3509 = vcmp.lt.s32.totalorder %v3253, 2600
          %vm3510 = vcmp.lt.s32.totalorder %v3254, 2600
          %vm3511 = vcmp.lt.s32.totalorder %v3255, 2600
          %vm3512 = vcmp.lt.s32.totalorder %v3256, 2600
          %vm3513 = vcmp.lt.s32.totalorder %v3257, 2600
          %vm3514 = vcmp.lt.s32.totalorder %v3258, 2600
          %vm3515 = vcmp.lt.s32.totalorder %v3259, 2600
          %vm3516 = vcmp.lt.s32.totalorder %v3260, 2600
          %vm3517 = vcmp.lt.s32.totalorder %v3261, 2600
          %vm3518 = vcmp.lt.s32.totalorder %v3262, 2600
          %vm3519 = vcmp.lt.s32.totalorder %v3263, 2600
          %vm3520 = vcmp.lt.s32.totalorder %v3264, 2600
          %vm3521 = vcmp.lt.s32.totalorder %v3265, 2600
          %vm3522 = vcmp.lt.s32.totalorder %v3266, 2600
          %vm3523 = vcmp.lt.s32.totalorder %v3267, 2600
          %vm3524 = vcmp.lt.s32.totalorder %v3268, 2600
          %vm3525 = vcmp.lt.s32.totalorder %v3269, 2600
          %vm3526 = vcmp.lt.s32.totalorder %v3270, 2600
          %vm3527 = vcmp.lt.s32.totalorder %v3271, 2600
          %vm3528 = vcmp.lt.s32.totalorder %v3272, 2600
          %vm3529 = vcmp.lt.s32.totalorder %v3273, 2600
          %vm3530 = vcmp.lt.s32.totalorder %v3274, 2600
          %vm3531 = vcmp.lt.s32.totalorder %v3275, 2600
          %vm3532 = vcmp.lt.s32.totalorder %v3276, 2600
          %vm3533 = vcmp.lt.s32.totalorder %v3277, 2600
          %vm3534 = vcmp.lt.s32.totalorder %v3278, 2600
          %vm3535 = vcmp.lt.s32.totalorder %v3279, 2600
          %vm3536 = vcmp.lt.s32.totalorder %v3280, 2600
          %vm3537 = vcmp.lt.s32.totalorder %v3281, 2600
          %vm3538 = vcmp.lt.s32.totalorder %v3282, 2600
          %vm3539 = vcmp.lt.s32.totalorder %v3283, 2600
          %vm3540 = vcmp.lt.s32.totalorder %v3284, 2600
          %vm3541 = vcmp.lt.s32.totalorder %v3285, 2600
          %vm3542 = vcmp.lt.s32.totalorder %v3286, 2600
          %vm3543 = vcmp.lt.s32.totalorder %v3287, 2600
          %vm3544 = vcmp.lt.s32.totalorder %v3288, 2600
          %vm3545 = vcmp.lt.s32.totalorder %v3289, 2600
          %vm3546 = vcmp.lt.s32.totalorder %v3290, 2600
          %vm3547 = vcmp.lt.s32.totalorder %v3291, 2600
          %vm3548 = vcmp.lt.s32.totalorder %v3292, 2600
          %vm3549 = vcmp.lt.s32.totalorder %v3293, 2600
          %vm3550 = vcmp.lt.s32.totalorder %v3294, 2600
          %vm3551 = vcmp.lt.s32.totalorder %v3295, 2600
          %vm3552 = vcmp.lt.s32.totalorder %v3296, 2600
          %vm3553 = vcmp.lt.s32.totalorder %v3297, 2600
          %vm3554 = vcmp.lt.s32.totalorder %v3298, 2600
          %vm3555 = vcmp.lt.s32.totalorder %v3299, 2600
          %vm3556 = vcmp.lt.s32.totalorder %v3300, 2600
          %vm3557 = vcmp.lt.s32.totalorder %v3301, 2600
          %vm3558 = vcmp.lt.s32.totalorder %v3302, 2600
          %vm3559 = vcmp.lt.s32.totalorder %v3303, 2600
          %vm3560 = vcmp.lt.s32.totalorder %v3304, 2600
          %vm3561 = vcmp.lt.s32.totalorder %v3305, 2600
          %vm3562 = vcmp.lt.s32.totalorder %v3306, 2600
          %vm3563 = vcmp.lt.s32.totalorder %v3307, 2600
          %vm3564 = vcmp.lt.s32.totalorder %v3308, 2600
          %vm3565 = vcmp.lt.s32.totalorder %v3309, 2600
          %vm3566 = vcmp.lt.s32.totalorder %v3310, 2600
          %vm3567 = vcmp.lt.s32.totalorder %v3311, 2600
          %vm3568 = vcmp.lt.s32.totalorder %v3312, 2600
          %vm3569 = vcmp.lt.s32.totalorder %v3313, 2600
          %vm3570 = vcmp.lt.s32.totalorder %v3314, 2600
          %vm3571 = vcmp.lt.s32.totalorder %v3315, 2600
          %vm3572 = vcmp.lt.s32.totalorder %v3316, 2600
          %vm3573 = vcmp.lt.s32.totalorder %v3317, 2600
          %vm3574 = vcmp.lt.s32.totalorder %v3318, 2600
          %vm3575 = vcmp.lt.s32.totalorder %v3319, 2600
          %vm3576 = vcmp.lt.s32.totalorder %v3320, 2600
          %vm3577 = vcmp.lt.s32.totalorder %v3321, 2600
          %vm3578 = vcmp.lt.s32.totalorder %v3322, 2600
          %vm3579 = vcmp.lt.s32.totalorder %v3323, 2600
          %vm3580 = vcmp.lt.s32.totalorder %v3324, 2600
          %vm3581 = vcmp.lt.s32.totalorder %v3325, 2600
          %vm3582 = vcmp.lt.s32.totalorder %v3326, 2600
          %vm3583 = vcmp.lt.s32.totalorder %v3327, 2600
          %vm3584 = vcmp.lt.s32.totalorder %v3328, 2600
          %vm3585 = vcmp.lt.s32.totalorder %v3329, 2600
          %vm3586 = vcmp.lt.s32.totalorder %v3330, 2600
          %vm3587 = vcmp.lt.s32.totalorder %v3331, 2600
          %vm3588 = vcmp.lt.s32.totalorder %v3332, 2600
          %vm3589 = vcmp.lt.s32.totalorder %v3333, 2600
          %vm3590 = vcmp.lt.s32.totalorder %v3334, 2600
          %vm3591 = vcmp.lt.s32.totalorder %v3335, 2600
          %vm3592 = vcmp.lt.s32.totalorder %v3336, 2600
          %vm3593 = vcmp.lt.s32.totalorder %v3337, 2600
          %vm3594 = vcmp.lt.s32.totalorder %v3338, 2600
          %vm3595 = vcmp.lt.s32.totalorder %v3339, 2600
          %vm3596 = vcmp.lt.s32.totalorder %v3340, 2600
          %vm3597 = vcmp.lt.s32.totalorder %v3341, 2600
          %vm3598 = vcmp.lt.s32.totalorder %v3342, 2600
          %vm3599 = vcmp.lt.s32.totalorder %v3343, 2600
          %vm3600 = vcmp.lt.s32.totalorder %v3344, 2600
          %vm3601 = vcmp.lt.s32.totalorder %v3345, 2600
          %vm3602 = vcmp.lt.s32.totalorder %v3346, 2600
          %vm3603 = vcmp.lt.s32.totalorder %v3347, 2600
          %vm3604 = vcmp.lt.s32.totalorder %v3348, 2600
          %vm3605 = vcmp.lt.s32.totalorder %v3349, 2600
          %vm3606 = vcmp.lt.s32.totalorder %v3350, 2600
          %vm3607 = vcmp.lt.s32.totalorder %v3351, 2600
          %vm3608 = vcmp.lt.s32.totalorder %v3352, 2600
          %vm3609 = vcmp.lt.s32.totalorder %v3353, 2600
          %vm3610 = vcmp.lt.s32.totalorder %v3354, 2600
          %vm3611 = vcmp.lt.s32.totalorder %v3355, 2600
          %vm3612 = vcmp.lt.s32.totalorder %v3356, 2600
          %vm3613 = vcmp.lt.s32.totalorder %v3357, 2600
          %vm3614 = vcmp.lt.s32.totalorder %v3358, 2600
          %vm3615 = vcmp.lt.s32.totalorder %v3359, 2600
          %vm3616 = vcmp.lt.s32.totalorder %v3360, 2600
          %vm3617 = vcmp.lt.s32.totalorder %v3361, 2600
          %vm3618 = vcmp.lt.s32.totalorder %v3362, 2600
          %vm3619 = vcmp.lt.s32.totalorder %v3363, 2600
          %vm3620 = vcmp.lt.s32.totalorder %v3364, 2600
          %vm3621 = vcmp.lt.s32.totalorder %v3365, 2600
          %vm3622 = vcmp.lt.s32.totalorder %v3366, 2600
          %vm3623 = vcmp.lt.s32.totalorder %v3367, 2600
          %vm3624 = vcmp.lt.s32.totalorder %v3368, 2600
          %vm3625 = vcmp.lt.s32.totalorder %v3369, 2600
          %vm3626 = vcmp.lt.s32.totalorder %v3370, 2600
          %vm3627 = vcmp.lt.s32.totalorder %v3371, 2600
          %vm3628 = vcmp.lt.s32.totalorder %v3372, 2600
          %vm3629 = vcmp.lt.s32.totalorder %v3373, 2600
          %vm3630 = vcmp.lt.s32.totalorder %v3374, 2600
          %vm3631 = vcmp.lt.s32.totalorder %v3375, 2600
          %vm3632 = vcmp.lt.s32.totalorder %v3376, 2600
          %vm3633 = vcmp.lt.s32.totalorder %v3377, 2600
          %vm3634 = vcmp.lt.s32.totalorder %v3378, 2600
          %vm3635 = vcmp.lt.s32.totalorder %v3379, 2600
          %vm3636 = vcmp.lt.s32.totalorder %v3380, 2600
          %vm3637 = vcmp.lt.s32.totalorder %v3381, 2600
          %vm3638 = vcmp.lt.s32.totalorder %v3382, 2600
          %vm3639 = vcmp.lt.s32.totalorder %v3383, 2600
          %vm3640 = vcmp.lt.s32.totalorder %v3384, 2600
          %vm3641 = vcmp.lt.s32.totalorder %v3385, 2600
          %vm3642 = vcmp.lt.s32.totalorder %v3386, 2600
          %vm3643 = vcmp.lt.s32.totalorder %v3387, 2600
          %vm3644 = vcmp.lt.s32.totalorder %v3388, 2600
          %vm3645 = vcmp.lt.s32.totalorder %v3389, 2600
          %vm3646 = vcmp.lt.s32.totalorder %v3390, 2600
          %vm3647 = vcmp.lt.s32.totalorder %v3391, 2600
          %vm3648 = vcmp.lt.s32.totalorder %v3392, 2600
          %vm3649 = vcmp.lt.s32.totalorder %v3393, 2600
          %vm3650 = vcmp.lt.s32.totalorder %v3394, 2600
          %vm3651 = vcmp.lt.s32.totalorder %v3395, 2600
          %vm3652 = vcmp.lt.s32.totalorder %v3396, 2600
          %vm3653 = vcmp.lt.s32.totalorder %v3397, 2600
          %vm3654 = vcmp.lt.s32.totalorder %v3398, 2600
          %vm3655 = vcmp.lt.s32.totalorder %v3399, 2600
          %vm3656 = vcmp.lt.s32.totalorder %v3400, 2600
          %vm3657 = vcmp.lt.s32.totalorder %v3401, 2600
          %vm3658 = vcmp.lt.s32.totalorder %v3402, 2600
          %vm3659 = vcmp.lt.s32.totalorder %v3403, 2600
          %vm3660 = vcmp.lt.s32.totalorder %v3404, 2600
          %vm3661 = vcmp.lt.s32.totalorder %v3405, 2600
          %vm3662 = vcmp.lt.s32.totalorder %v3406, 2600
          %vm3663 = vcmp.lt.s32.totalorder %v3407, 2600
          %vm3664 = vcmp.lt.s32.totalorder %v3408, 2600
          %v3665 = vsel %vm3409, 1, 0
          %v3666 = vsel %vm3410, 1, 0
          %v3667 = vsel %vm3411, 1, 0
          %v3668 = vsel %vm3412, 1, 0
          %v3669 = vsel %vm3413, 1, 0
          %v3670 = vsel %vm3414, 1, 0
          %v3671 = vsel %vm3415, 1, 0
          %v3672 = vsel %vm3416, 1, 0
          %v3673 = vsel %vm3417, 1, 0
          %v3674 = vsel %vm3418, 1, 0
          %v3675 = vsel %vm3419, 1, 0
          %v3676 = vsel %vm3420, 1, 0
          %v3677 = vsel %vm3421, 1, 0
          %v3678 = vsel %vm3422, 1, 0
          %v3679 = vsel %vm3423, 1, 0
          %v3680 = vsel %vm3424, 1, 0
          %v3681 = vsel %vm3425, 1, 0
          %v3682 = vsel %vm3426, 1, 0
          %v3683 = vsel %vm3427, 1, 0
          %v3684 = vsel %vm3428, 1, 0
          %v3685 = vsel %vm3429, 1, 0
          %v3686 = vsel %vm3430, 1, 0
          %v3687 = vsel %vm3431, 1, 0
          %v3688 = vsel %vm3432, 1, 0
          %v3689 = vsel %vm3433, 1, 0
          %v3690 = vsel %vm3434, 1, 0
          %v3691 = vsel %vm3435, 1, 0
          %v3692 = vsel %vm3436, 1, 0
          %v3693 = vsel %vm3437, 1, 0
          %v3694 = vsel %vm3438, 1, 0
          %v3695 = vsel %vm3439, 1, 0
          %v3696 = vsel %vm3440, 1, 0
          %v3697 = vsel %vm3441, 1, 0
          %v3698 = vsel %vm3442, 1, 0
          %v3699 = vsel %vm3443, 1, 0
          %v3700 = vsel %vm3444, 1, 0
          %v3701 = vsel %vm3445, 1, 0
          %v3702 = vsel %vm3446, 1, 0
          %v3703 = vsel %vm3447, 1, 0
          %v3704 = vsel %vm3448, 1, 0
          %v3705 = vsel %vm3449, 1, 0
          %v3706 = vsel %vm3450, 1, 0
          %v3707 = vsel %vm3451, 1, 0
          %v3708 = vsel %vm3452, 1, 0
          %v3709 = vsel %vm3453, 1, 0
          %v3710 = vsel %vm3454, 1, 0
          %v3711 = vsel %vm3455, 1, 0
          %v3712 = vsel %vm3456, 1, 0
          %v3713 = vsel %vm3457, 1, 0
          %v3714 = vsel %vm3458, 1, 0
          %v3715 = vsel %vm3459, 1, 0
          %v3716 = vsel %vm3460, 1, 0
          %v3717 = vsel %vm3461, 1, 0
          %v3718 = vsel %vm3462, 1, 0
          %v3719 = vsel %vm3463, 1, 0
          %v3720 = vsel %vm3464, 1, 0
          %v3721 = vsel %vm3465, 1, 0
          %v3722 = vsel %vm3466, 1, 0
          %v3723 = vsel %vm3467, 1, 0
          %v3724 = vsel %vm3468, 1, 0
          %v3725 = vsel %vm3469, 1, 0
          %v3726 = vsel %vm3470, 1, 0
          %v3727 = vsel %vm3471, 1, 0
          %v3728 = vsel %vm3472, 1, 0
          %v3729 = vsel %vm3473, 1, 0
          %v3730 = vsel %vm3474, 1, 0
          %v3731 = vsel %vm3475, 1, 0
          %v3732 = vsel %vm3476, 1, 0
          %v3733 = vsel %vm3477, 1, 0
          %v3734 = vsel %vm3478, 1, 0
          %v3735 = vsel %vm3479, 1, 0
          %v3736 = vsel %vm3480, 1, 0
          %v3737 = vsel %vm3481, 1, 0
          %v3738 = vsel %vm3482, 1, 0
          %v3739 = vsel %vm3483, 1, 0
          %v3740 = vsel %vm3484, 1, 0
          %v3741 = vsel %vm3485, 1, 0
          %v3742 = vsel %vm3486, 1, 0
          %v3743 = vsel %vm3487, 1, 0
          %v3744 = vsel %vm3488, 1, 0
          %v3745 = vsel %vm3489, 1, 0
          %v3746 = vsel %vm3490, 1, 0
          %v3747 = vsel %vm3491, 1, 0
          %v3748 = vsel %vm3492, 1, 0
          %v3749 = vsel %vm3493, 1, 0
          %v3750 = vsel %vm3494, 1, 0
          %v3751 = vsel %vm3495, 1, 0
          %v3752 = vsel %vm3496, 1, 0
          %v3753 = vsel %vm3497, 1, 0
          %v3754 = vsel %vm3498, 1, 0
          %v3755 = vsel %vm3499, 1, 0
          %v3756 = vsel %vm3500, 1, 0
          %v3757 = vsel %vm3501, 1, 0
          %v3758 = vsel %vm3502, 1, 0
          %v3759 = vsel %vm3503, 1, 0
          %v3760 = vsel %vm3504, 1, 0
          %v3761 = vsel %vm3505, 1, 0
          %v3762 = vsel %vm3506, 1, 0
          %v3763 = vsel %vm3507, 1, 0
          %v3764 = vsel %vm3508, 1, 0
          %v3765 = vsel %vm3509, 1, 0
          %v3766 = vsel %vm3510, 1, 0
          %v3767 = vsel %vm3511, 1, 0
          %v3768 = vsel %vm3512, 1, 0
          %v3769 = vsel %vm3513, 1, 0
          %v3770 = vsel %vm3514, 1, 0
          %v3771 = vsel %vm3515, 1, 0
          %v3772 = vsel %vm3516, 1, 0
          %v3773 = vsel %vm3517, 1, 0
          %v3774 = vsel %vm3518, 1, 0
          %v3775 = vsel %vm3519, 1, 0
          %v3776 = vsel %vm3520, 1, 0
          %v3777 = vsel %vm3521, 1, 0
          %v3778 = vsel %vm3522, 1, 0
          %v3779 = vsel %vm3523, 1, 0
          %v3780 = vsel %vm3524, 1, 0
          %v3781 = vsel %vm3525, 1, 0
          %v3782 = vsel %vm3526, 1, 0
          %v3783 = vsel %vm3527, 1, 0
          %v3784 = vsel %vm3528, 1, 0
          %v3785 = vsel %vm3529, 1, 0
          %v3786 = vsel %vm3530, 1, 0
          %v3787 = vsel %vm3531, 1, 0
          %v3788 = vsel %vm3532, 1, 0
          %v3789 = vsel %vm3533, 1, 0
          %v3790 = vsel %vm3534, 1, 0
          %v3791 = vsel %vm3535, 1, 0
          %v3792 = vsel %vm3536, 1, 0
          %v3793 = vsel %vm3537, 1, 0
          %v3794 = vsel %vm3538, 1, 0
          %v3795 = vsel %vm3539, 1, 0
          %v3796 = vsel %vm3540, 1, 0
          %v3797 = vsel %vm3541, 1, 0
          %v3798 = vsel %vm3542, 1, 0
          %v3799 = vsel %vm3543, 1, 0
          %v3800 = vsel %vm3544, 1, 0
          %v3801 = vsel %vm3545, 1, 0
          %v3802 = vsel %vm3546, 1, 0
          %v3803 = vsel %vm3547, 1, 0
          %v3804 = vsel %vm3548, 1, 0
          %v3805 = vsel %vm3549, 1, 0
          %v3806 = vsel %vm3550, 1, 0
          %v3807 = vsel %vm3551, 1, 0
          %v3808 = vsel %vm3552, 1, 0
          %v3809 = vsel %vm3553, 1, 0
          %v3810 = vsel %vm3554, 1, 0
          %v3811 = vsel %vm3555, 1, 0
          %v3812 = vsel %vm3556, 1, 0
          %v3813 = vsel %vm3557, 1, 0
          %v3814 = vsel %vm3558, 1, 0
          %v3815 = vsel %vm3559, 1, 0
          %v3816 = vsel %vm3560, 1, 0
          %v3817 = vsel %vm3561, 1, 0
          %v3818 = vsel %vm3562, 1, 0
          %v3819 = vsel %vm3563, 1, 0
          %v3820 = vsel %vm3564, 1, 0
          %v3821 = vsel %vm3565, 1, 0
          %v3822 = vsel %vm3566, 1, 0
          %v3823 = vsel %vm3567, 1, 0
          %v3824 = vsel %vm3568, 1, 0
          %v3825 = vsel %vm3569, 1, 0
          %v3826 = vsel %vm3570, 1, 0
          %v3827 = vsel %vm3571, 1, 0
          %v3828 = vsel %vm3572, 1, 0
          %v3829 = vsel %vm3573, 1, 0
          %v3830 = vsel %vm3574, 1, 0
          %v3831 = vsel %vm3575, 1, 0
          %v3832 = vsel %vm3576, 1, 0
          %v3833 = vsel %vm3577, 1, 0
          %v3834 = vsel %vm3578, 1, 0
          %v3835 = vsel %vm3579, 1, 0
          %v3836 = vsel %vm3580, 1, 0
          %v3837 = vsel %vm3581, 1, 0
          %v3838 = vsel %vm3582, 1, 0
          %v3839 = vsel %vm3583, 1, 0
          %v3840 = vsel %vm3584, 1, 0
          %v3841 = vsel %vm3585, 1, 0
          %v3842 = vsel %vm3586, 1, 0
          %v3843 = vsel %vm3587, 1, 0
          %v3844 = vsel %vm3588, 1, 0
          %v3845 = vsel %vm3589, 1, 0
          %v3846 = vsel %vm3590, 1, 0
          %v3847 = vsel %vm3591, 1, 0
          %v3848 = vsel %vm3592, 1, 0
          %v3849 = vsel %vm3593, 1, 0
          %v3850 = vsel %vm3594, 1, 0
          %v3851 = vsel %vm3595, 1, 0
          %v3852 = vsel %vm3596, 1, 0
          %v3853 = vsel %vm3597, 1, 0
          %v3854 = vsel %vm3598, 1, 0
          %v3855 = vsel %vm3599, 1, 0
          %v3856 = vsel %vm3600, 1, 0
          %v3857 = vsel %vm3601, 1, 0
          %v3858 = vsel %vm3602, 1, 0
          %v3859 = vsel %vm3603, 1, 0
          %v3860 = vsel %vm3604, 1, 0
          %v3861 = vsel %vm3605, 1, 0
          %v3862 = vsel %vm3606, 1, 0
          %v3863 = vsel %vm3607, 1, 0
          %v3864 = vsel %vm3608, 1, 0
          %v3865 = vsel %vm3609, 1, 0
          %v3866 = vsel %vm3610, 1, 0
          %v3867 = vsel %vm3611, 1, 0
          %v3868 = vsel %vm3612, 1, 0
          %v3869 = vsel %vm3613, 1, 0
          %v3870 = vsel %vm3614, 1, 0
          %v3871 = vsel %vm3615, 1, 0
          %v3872 = vsel %vm3616, 1, 0
          %v3873 = vsel %vm3617, 1, 0
          %v3874 = vsel %vm3618, 1, 0
          %v3875 = vsel %vm3619, 1, 0
          %v3876 = vsel %vm3620, 1, 0
          %v3877 = vsel %vm3621, 1, 0
          %v3878 = vsel %vm3622, 1, 0
          %v3879 = vsel %vm3623, 1, 0
          %v3880 = vsel %vm3624, 1, 0
          %v3881 = vsel %vm3625, 1, 0
          %v3882 = vsel %vm3626, 1, 0
          %v3883 = vsel %vm3627, 1, 0
          %v3884 = vsel %vm3628, 1, 0
          %v3885 = vsel %vm3629, 1, 0
          %v3886 = vsel %vm3630, 1, 0
          %v3887 = vsel %vm3631, 1, 0
          %v3888 = vsel %vm3632, 1, 0
          %v3889 = vsel %vm3633, 1, 0
          %v3890 = vsel %vm3634, 1, 0
          %v3891 = vsel %vm3635, 1, 0
          %v3892 = vsel %vm3636, 1, 0
          %v3893 = vsel %vm3637, 1, 0
          %v3894 = vsel %vm3638, 1, 0
          %v3895 = vsel %vm3639, 1, 0
          %v3896 = vsel %vm3640, 1, 0
          %v3897 = vsel %vm3641, 1, 0
          %v3898 = vsel %vm3642, 1, 0
          %v3899 = vsel %vm3643, 1, 0
          %v3900 = vsel %vm3644, 1, 0
          %v3901 = vsel %vm3645, 1, 0
          %v3902 = vsel %vm3646, 1, 0
          %v3903 = vsel %vm3647, 1, 0
          %v3904 = vsel %vm3648, 1, 0
          %v3905 = vsel %vm3649, 1, 0
          %v3906 = vsel %vm3650, 1, 0
          %v3907 = vsel %vm3651, 1, 0
          %v3908 = vsel %vm3652, 1, 0
          %v3909 = vsel %vm3653, 1, 0
          %v3910 = vsel %vm3654, 1, 0
          %v3911 = vsel %vm3655, 1, 0
          %v3912 = vsel %vm3656, 1, 0
          %v3913 = vsel %vm3657, 1, 0
          %v3914 = vsel %vm3658, 1, 0
          %v3915 = vsel %vm3659, 1, 0
          %v3916 = vsel %vm3660, 1, 0
          %v3917 = vsel %vm3661, 1, 0
          %v3918 = vsel %vm3662, 1, 0
          %v3919 = vsel %vm3663, 1, 0
          %v3920 = vsel %vm3664, 1, 0
          %vm3921 = vcmp.eq.s32.totalorder %v3665, 1
          %vm3922 = vcmp.eq.s32.totalorder %v3666, 1
          %vm3923 = vcmp.eq.s32.totalorder %v3667, 1
          %vm3924 = vcmp.eq.s32.totalorder %v3668, 1
          %vm3925 = vcmp.eq.s32.totalorder %v3669, 1
          %vm3926 = vcmp.eq.s32.totalorder %v3670, 1
          %vm3927 = vcmp.eq.s32.totalorder %v3671, 1
          %vm3928 = vcmp.eq.s32.totalorder %v3672, 1
          %vm3929 = vcmp.eq.s32.totalorder %v3673, 1
          %vm3930 = vcmp.eq.s32.totalorder %v3674, 1
          %vm3931 = vcmp.eq.s32.totalorder %v3675, 1
          %vm3932 = vcmp.eq.s32.totalorder %v3676, 1
          %vm3933 = vcmp.eq.s32.totalorder %v3677, 1
          %vm3934 = vcmp.eq.s32.totalorder %v3678, 1
          %vm3935 = vcmp.eq.s32.totalorder %v3679, 1
          %vm3936 = vcmp.eq.s32.totalorder %v3680, 1
          %vm3937 = vcmp.eq.s32.totalorder %v3681, 1
          %vm3938 = vcmp.eq.s32.totalorder %v3682, 1
          %vm3939 = vcmp.eq.s32.totalorder %v3683, 1
          %vm3940 = vcmp.eq.s32.totalorder %v3684, 1
          %vm3941 = vcmp.eq.s32.totalorder %v3685, 1
          %vm3942 = vcmp.eq.s32.totalorder %v3686, 1
          %vm3943 = vcmp.eq.s32.totalorder %v3687, 1
          %vm3944 = vcmp.eq.s32.totalorder %v3688, 1
          %vm3945 = vcmp.eq.s32.totalorder %v3689, 1
          %vm3946 = vcmp.eq.s32.totalorder %v3690, 1
          %vm3947 = vcmp.eq.s32.totalorder %v3691, 1
          %vm3948 = vcmp.eq.s32.totalorder %v3692, 1
          %vm3949 = vcmp.eq.s32.totalorder %v3693, 1
          %vm3950 = vcmp.eq.s32.totalorder %v3694, 1
          %vm3951 = vcmp.eq.s32.totalorder %v3695, 1
          %vm3952 = vcmp.eq.s32.totalorder %v3696, 1
          %vm3953 = vcmp.eq.s32.totalorder %v3697, 1
          %vm3954 = vcmp.eq.s32.totalorder %v3698, 1
          %vm3955 = vcmp.eq.s32.totalorder %v3699, 1
          %vm3956 = vcmp.eq.s32.totalorder %v3700, 1
          %vm3957 = vcmp.eq.s32.totalorder %v3701, 1
          %vm3958 = vcmp.eq.s32.totalorder %v3702, 1
          %vm3959 = vcmp.eq.s32.totalorder %v3703, 1
          %vm3960 = vcmp.eq.s32.totalorder %v3704, 1
          %vm3961 = vcmp.eq.s32.totalorder %v3705, 1
          %vm3962 = vcmp.eq.s32.totalorder %v3706, 1
          %vm3963 = vcmp.eq.s32.totalorder %v3707, 1
          %vm3964 = vcmp.eq.s32.totalorder %v3708, 1
          %vm3965 = vcmp.eq.s32.totalorder %v3709, 1
          %vm3966 = vcmp.eq.s32.totalorder %v3710, 1
          %vm3967 = vcmp.eq.s32.totalorder %v3711, 1
          %vm3968 = vcmp.eq.s32.totalorder %v3712, 1
          %vm3969 = vcmp.eq.s32.totalorder %v3713, 1
          %vm3970 = vcmp.eq.s32.totalorder %v3714, 1
          %vm3971 = vcmp.eq.s32.totalorder %v3715, 1
          %vm3972 = vcmp.eq.s32.totalorder %v3716, 1
          %vm3973 = vcmp.eq.s32.totalorder %v3717, 1
          %vm3974 = vcmp.eq.s32.totalorder %v3718, 1
          %vm3975 = vcmp.eq.s32.totalorder %v3719, 1
          %vm3976 = vcmp.eq.s32.totalorder %v3720, 1
          %vm3977 = vcmp.eq.s32.totalorder %v3721, 1
          %vm3978 = vcmp.eq.s32.totalorder %v3722, 1
          %vm3979 = vcmp.eq.s32.totalorder %v3723, 1
          %vm3980 = vcmp.eq.s32.totalorder %v3724, 1
          %vm3981 = vcmp.eq.s32.totalorder %v3725, 1
          %vm3982 = vcmp.eq.s32.totalorder %v3726, 1
          %vm3983 = vcmp.eq.s32.totalorder %v3727, 1
          %vm3984 = vcmp.eq.s32.totalorder %v3728, 1
          %vm3985 = vcmp.eq.s32.totalorder %v3729, 1
          %vm3986 = vcmp.eq.s32.totalorder %v3730, 1
          %vm3987 = vcmp.eq.s32.totalorder %v3731, 1
          %vm3988 = vcmp.eq.s32.totalorder %v3732, 1
          %vm3989 = vcmp.eq.s32.totalorder %v3733, 1
          %vm3990 = vcmp.eq.s32.totalorder %v3734, 1
          %vm3991 = vcmp.eq.s32.totalorder %v3735, 1
          %vm3992 = vcmp.eq.s32.totalorder %v3736, 1
          %vm3993 = vcmp.eq.s32.totalorder %v3737, 1
          %vm3994 = vcmp.eq.s32.totalorder %v3738, 1
          %vm3995 = vcmp.eq.s32.totalorder %v3739, 1
          %vm3996 = vcmp.eq.s32.totalorder %v3740, 1
          %vm3997 = vcmp.eq.s32.totalorder %v3741, 1
          %vm3998 = vcmp.eq.s32.totalorder %v3742, 1
          %vm3999 = vcmp.eq.s32.totalorder %v3743, 1
          %vm4000 = vcmp.eq.s32.totalorder %v3744, 1
          %vm4001 = vcmp.eq.s32.totalorder %v3745, 1
          %vm4002 = vcmp.eq.s32.totalorder %v3746, 1
          %vm4003 = vcmp.eq.s32.totalorder %v3747, 1
          %vm4004 = vcmp.eq.s32.totalorder %v3748, 1
          %vm4005 = vcmp.eq.s32.totalorder %v3749, 1
          %vm4006 = vcmp.eq.s32.totalorder %v3750, 1
          %vm4007 = vcmp.eq.s32.totalorder %v3751, 1
          %vm4008 = vcmp.eq.s32.totalorder %v3752, 1
          %vm4009 = vcmp.eq.s32.totalorder %v3753, 1
          %vm4010 = vcmp.eq.s32.totalorder %v3754, 1
          %vm4011 = vcmp.eq.s32.totalorder %v3755, 1
          %vm4012 = vcmp.eq.s32.totalorder %v3756, 1
          %vm4013 = vcmp.eq.s32.totalorder %v3757, 1
          %vm4014 = vcmp.eq.s32.totalorder %v3758, 1
          %vm4015 = vcmp.eq.s32.totalorder %v3759, 1
          %vm4016 = vcmp.eq.s32.totalorder %v3760, 1
          %vm4017 = vcmp.eq.s32.totalorder %v3761, 1
          %vm4018 = vcmp.eq.s32.totalorder %v3762, 1
          %vm4019 = vcmp.eq.s32.totalorder %v3763, 1
          %vm4020 = vcmp.eq.s32.totalorder %v3764, 1
          %vm4021 = vcmp.eq.s32.totalorder %v3765, 1
          %vm4022 = vcmp.eq.s32.totalorder %v3766, 1
          %vm4023 = vcmp.eq.s32.totalorder %v3767, 1
          %vm4024 = vcmp.eq.s32.totalorder %v3768, 1
          %vm4025 = vcmp.eq.s32.totalorder %v3769, 1
          %vm4026 = vcmp.eq.s32.totalorder %v3770, 1
          %vm4027 = vcmp.eq.s32.totalorder %v3771, 1
          %vm4028 = vcmp.eq.s32.totalorder %v3772, 1
          %vm4029 = vcmp.eq.s32.totalorder %v3773, 1
          %vm4030 = vcmp.eq.s32.totalorder %v3774, 1
          %vm4031 = vcmp.eq.s32.totalorder %v3775, 1
          %vm4032 = vcmp.eq.s32.totalorder %v3776, 1
          %vm4033 = vcmp.eq.s32.totalorder %v3777, 1
          %vm4034 = vcmp.eq.s32.totalorder %v3778, 1
          %vm4035 = vcmp.eq.s32.totalorder %v3779, 1
          %vm4036 = vcmp.eq.s32.totalorder %v3780, 1
          %vm4037 = vcmp.eq.s32.totalorder %v3781, 1
          %vm4038 = vcmp.eq.s32.totalorder %v3782, 1
          %vm4039 = vcmp.eq.s32.totalorder %v3783, 1
          %vm4040 = vcmp.eq.s32.totalorder %v3784, 1
          %vm4041 = vcmp.eq.s32.totalorder %v3785, 1
          %vm4042 = vcmp.eq.s32.totalorder %v3786, 1
          %vm4043 = vcmp.eq.s32.totalorder %v3787, 1
          %vm4044 = vcmp.eq.s32.totalorder %v3788, 1
          %vm4045 = vcmp.eq.s32.totalorder %v3789, 1
          %vm4046 = vcmp.eq.s32.totalorder %v3790, 1
          %vm4047 = vcmp.eq.s32.totalorder %v3791, 1
          %vm4048 = vcmp.eq.s32.totalorder %v3792, 1
          %vm4049 = vcmp.eq.s32.totalorder %v3793, 1
          %vm4050 = vcmp.eq.s32.totalorder %v3794, 1
          %vm4051 = vcmp.eq.s32.totalorder %v3795, 1
          %vm4052 = vcmp.eq.s32.totalorder %v3796, 1
          %vm4053 = vcmp.eq.s32.totalorder %v3797, 1
          %vm4054 = vcmp.eq.s32.totalorder %v3798, 1
          %vm4055 = vcmp.eq.s32.totalorder %v3799, 1
          %vm4056 = vcmp.eq.s32.totalorder %v3800, 1
          %vm4057 = vcmp.eq.s32.totalorder %v3801, 1
          %vm4058 = vcmp.eq.s32.totalorder %v3802, 1
          %vm4059 = vcmp.eq.s32.totalorder %v3803, 1
          %vm4060 = vcmp.eq.s32.totalorder %v3804, 1
          %vm4061 = vcmp.eq.s32.totalorder %v3805, 1
          %vm4062 = vcmp.eq.s32.totalorder %v3806, 1
          %vm4063 = vcmp.eq.s32.totalorder %v3807, 1
          %vm4064 = vcmp.eq.s32.totalorder %v3808, 1
          %vm4065 = vcmp.eq.s32.totalorder %v3809, 1
          %vm4066 = vcmp.eq.s32.totalorder %v3810, 1
          %vm4067 = vcmp.eq.s32.totalorder %v3811, 1
          %vm4068 = vcmp.eq.s32.totalorder %v3812, 1
          %vm4069 = vcmp.eq.s32.totalorder %v3813, 1
          %vm4070 = vcmp.eq.s32.totalorder %v3814, 1
          %vm4071 = vcmp.eq.s32.totalorder %v3815, 1
          %vm4072 = vcmp.eq.s32.totalorder %v3816, 1
          %vm4073 = vcmp.eq.s32.totalorder %v3817, 1
          %vm4074 = vcmp.eq.s32.totalorder %v3818, 1
          %vm4075 = vcmp.eq.s32.totalorder %v3819, 1
          %vm4076 = vcmp.eq.s32.totalorder %v3820, 1
          %vm4077 = vcmp.eq.s32.totalorder %v3821, 1
          %vm4078 = vcmp.eq.s32.totalorder %v3822, 1
          %vm4079 = vcmp.eq.s32.totalorder %v3823, 1
          %vm4080 = vcmp.eq.s32.totalorder %v3824, 1
          %vm4081 = vcmp.eq.s32.totalorder %v3825, 1
          %vm4082 = vcmp.eq.s32.totalorder %v3826, 1
          %vm4083 = vcmp.eq.s32.totalorder %v3827, 1
          %vm4084 = vcmp.eq.s32.totalorder %v3828, 1
          %vm4085 = vcmp.eq.s32.totalorder %v3829, 1
          %vm4086 = vcmp.eq.s32.totalorder %v3830, 1
          %vm4087 = vcmp.eq.s32.totalorder %v3831, 1
          %vm4088 = vcmp.eq.s32.totalorder %v3832, 1
          %vm4089 = vcmp.eq.s32.totalorder %v3833, 1
          %vm4090 = vcmp.eq.s32.totalorder %v3834, 1
          %vm4091 = vcmp.eq.s32.totalorder %v3835, 1
          %vm4092 = vcmp.eq.s32.totalorder %v3836, 1
          %vm4093 = vcmp.eq.s32.totalorder %v3837, 1
          %vm4094 = vcmp.eq.s32.totalorder %v3838, 1
          %vm4095 = vcmp.eq.s32.totalorder %v3839, 1
          %vm4096 = vcmp.eq.s32.totalorder %v3840, 1
          %vm4097 = vcmp.eq.s32.totalorder %v3841, 1
          %vm4098 = vcmp.eq.s32.totalorder %v3842, 1
          %vm4099 = vcmp.eq.s32.totalorder %v3843, 1
          %vm4100 = vcmp.eq.s32.totalorder %v3844, 1
          %vm4101 = vcmp.eq.s32.totalorder %v3845, 1
          %vm4102 = vcmp.eq.s32.totalorder %v3846, 1
          %vm4103 = vcmp.eq.s32.totalorder %v3847, 1
          %vm4104 = vcmp.eq.s32.totalorder %v3848, 1
          %vm4105 = vcmp.eq.s32.totalorder %v3849, 1
          %vm4106 = vcmp.eq.s32.totalorder %v3850, 1
          %vm4107 = vcmp.eq.s32.totalorder %v3851, 1
          %vm4108 = vcmp.eq.s32.totalorder %v3852, 1
          %vm4109 = vcmp.eq.s32.totalorder %v3853, 1
          %vm4110 = vcmp.eq.s32.totalorder %v3854, 1
          %vm4111 = vcmp.eq.s32.totalorder %v3855, 1
          %vm4112 = vcmp.eq.s32.totalorder %v3856, 1
          %vm4113 = vcmp.eq.s32.totalorder %v3857, 1
          %vm4114 = vcmp.eq.s32.totalorder %v3858, 1
          %vm4115 = vcmp.eq.s32.totalorder %v3859, 1
          %vm4116 = vcmp.eq.s32.totalorder %v3860, 1
          %vm4117 = vcmp.eq.s32.totalorder %v3861, 1
          %vm4118 = vcmp.eq.s32.totalorder %v3862, 1
          %vm4119 = vcmp.eq.s32.totalorder %v3863, 1
          %vm4120 = vcmp.eq.s32.totalorder %v3864, 1
          %vm4121 = vcmp.eq.s32.totalorder %v3865, 1
          %vm4122 = vcmp.eq.s32.totalorder %v3866, 1
          %vm4123 = vcmp.eq.s32.totalorder %v3867, 1
          %vm4124 = vcmp.eq.s32.totalorder %v3868, 1
          %vm4125 = vcmp.eq.s32.totalorder %v3869, 1
          %vm4126 = vcmp.eq.s32.totalorder %v3870, 1
          %vm4127 = vcmp.eq.s32.totalorder %v3871, 1
          %vm4128 = vcmp.eq.s32.totalorder %v3872, 1
          %vm4129 = vcmp.eq.s32.totalorder %v3873, 1
          %vm4130 = vcmp.eq.s32.totalorder %v3874, 1
          %vm4131 = vcmp.eq.s32.totalorder %v3875, 1
          %vm4132 = vcmp.eq.s32.totalorder %v3876, 1
          %vm4133 = vcmp.eq.s32.totalorder %v3877, 1
          %vm4134 = vcmp.eq.s32.totalorder %v3878, 1
          %vm4135 = vcmp.eq.s32.totalorder %v3879, 1
          %vm4136 = vcmp.eq.s32.totalorder %v3880, 1
          %vm4137 = vcmp.eq.s32.totalorder %v3881, 1
          %vm4138 = vcmp.eq.s32.totalorder %v3882, 1
          %vm4139 = vcmp.eq.s32.totalorder %v3883, 1
          %vm4140 = vcmp.eq.s32.totalorder %v3884, 1
          %vm4141 = vcmp.eq.s32.totalorder %v3885, 1
          %vm4142 = vcmp.eq.s32.totalorder %v3886, 1
          %vm4143 = vcmp.eq.s32.totalorder %v3887, 1
          %vm4144 = vcmp.eq.s32.totalorder %v3888, 1
          %vm4145 = vcmp.eq.s32.totalorder %v3889, 1
          %vm4146 = vcmp.eq.s32.totalorder %v3890, 1
          %vm4147 = vcmp.eq.s32.totalorder %v3891, 1
          %vm4148 = vcmp.eq.s32.totalorder %v3892, 1
          %vm4149 = vcmp.eq.s32.totalorder %v3893, 1
          %vm4150 = vcmp.eq.s32.totalorder %v3894, 1
          %vm4151 = vcmp.eq.s32.totalorder %v3895, 1
          %vm4152 = vcmp.eq.s32.totalorder %v3896, 1
          %vm4153 = vcmp.eq.s32.totalorder %v3897, 1
          %vm4154 = vcmp.eq.s32.totalorder %v3898, 1
          %vm4155 = vcmp.eq.s32.totalorder %v3899, 1
          %vm4156 = vcmp.eq.s32.totalorder %v3900, 1
          %vm4157 = vcmp.eq.s32.totalorder %v3901, 1
          %vm4158 = vcmp.eq.s32.totalorder %v3902, 1
          %vm4159 = vcmp.eq.s32.totalorder %v3903, 1
          %vm4160 = vcmp.eq.s32.totalorder %v3904, 1
          %vm4161 = vcmp.eq.s32.totalorder %v3905, 1
          %vm4162 = vcmp.eq.s32.totalorder %v3906, 1
          %vm4163 = vcmp.eq.s32.totalorder %v3907, 1
          %vm4164 = vcmp.eq.s32.totalorder %v3908, 1
          %vm4165 = vcmp.eq.s32.totalorder %v3909, 1
          %vm4166 = vcmp.eq.s32.totalorder %v3910, 1
          %vm4167 = vcmp.eq.s32.totalorder %v3911, 1
          %vm4168 = vcmp.eq.s32.totalorder %v3912, 1
          %vm4169 = vcmp.eq.s32.totalorder %v3913, 1
          %vm4170 = vcmp.eq.s32.totalorder %v3914, 1
          %vm4171 = vcmp.eq.s32.totalorder %v3915, 1
          %vm4172 = vcmp.eq.s32.totalorder %v3916, 1
          %vm4173 = vcmp.eq.s32.totalorder %v3917, 1
          %vm4174 = vcmp.eq.s32.totalorder %v3918, 1
          %vm4175 = vcmp.eq.s32.totalorder %v3919, 1
          %vm4176 = vcmp.eq.s32.totalorder %v3920, 1
          %v4177 = vsel %vm3921, %v2638, 0.0
          %v4178 = vsel %vm3922, %v2639, 0.0
          %v4179 = vsel %vm3923, %v2640, 0.0
          %v4180 = vsel %vm3924, %v2641, 0.0
          %v4181 = vsel %vm3925, %v2642, 0.0
          %v4182 = vsel %vm3926, %v2643, 0.0
          %v4183 = vsel %vm3927, %v2644, 0.0
          %v4184 = vsel %vm3928, %v2645, 0.0
          %v4185 = vsel %vm3929, %v2646, 0.0
          %v4186 = vsel %vm3930, %v2647, 0.0
          %v4187 = vsel %vm3931, %v2648, 0.0
          %v4188 = vsel %vm3932, %v2649, 0.0
          %v4189 = vsel %vm3933, %v2650, 0.0
          %v4190 = vsel %vm3934, %v2651, 0.0
          %v4191 = vsel %vm3935, %v2652, 0.0
          %v4192 = vsel %vm3936, %v2653, 0.0
          %v4193 = vsel %vm3937, %v2654, 0.0
          %v4194 = vsel %vm3938, %v2655, 0.0
          %v4195 = vsel %vm3939, %v2656, 0.0
          %v4196 = vsel %vm3940, %v2657, 0.0
          %v4197 = vsel %vm3941, %v2658, 0.0
          %v4198 = vsel %vm3942, %v2659, 0.0
          %v4199 = vsel %vm3943, %v2660, 0.0
          %v4200 = vsel %vm3944, %v2661, 0.0
          %v4201 = vsel %vm3945, %v2662, 0.0
          %v4202 = vsel %vm3946, %v2663, 0.0
          %v4203 = vsel %vm3947, %v2664, 0.0
          %v4204 = vsel %vm3948, %v2665, 0.0
          %v4205 = vsel %vm3949, %v2666, 0.0
          %v4206 = vsel %vm3950, %v2667, 0.0
          %v4207 = vsel %vm3951, %v2668, 0.0
          %v4208 = vsel %vm3952, %v2669, 0.0
          %v4209 = vsel %vm3953, %v2670, 0.0
          %v4210 = vsel %vm3954, %v2671, 0.0
          %v4211 = vsel %vm3955, %v2672, 0.0
          %v4212 = vsel %vm3956, %v2673, 0.0
          %v4213 = vsel %vm3957, %v2674, 0.0
          %v4214 = vsel %vm3958, %v2675, 0.0
          %v4215 = vsel %vm3959, %v2676, 0.0
          %v4216 = vsel %vm3960, %v2677, 0.0
          %v4217 = vsel %vm3961, %v2678, 0.0
          %v4218 = vsel %vm3962, %v2679, 0.0
          %v4219 = vsel %vm3963, %v2680, 0.0
          %v4220 = vsel %vm3964, %v2681, 0.0
          %v4221 = vsel %vm3965, %v2682, 0.0
          %v4222 = vsel %vm3966, %v2683, 0.0
          %v4223 = vsel %vm3967, %v2684, 0.0
          %v4224 = vsel %vm3968, %v2685, 0.0
          %v4225 = vsel %vm3969, %v2686, 0.0
          %v4226 = vsel %vm3970, %v2687, 0.0
          %v4227 = vsel %vm3971, %v2688, 0.0
          %v4228 = vsel %vm3972, %v2689, 0.0
          %v4229 = vsel %vm3973, %v2690, 0.0
          %v4230 = vsel %vm3974, %v2691, 0.0
          %v4231 = vsel %vm3975, %v2692, 0.0
          %v4232 = vsel %vm3976, %v2693, 0.0
          %v4233 = vsel %vm3977, %v2694, 0.0
          %v4234 = vsel %vm3978, %v2695, 0.0
          %v4235 = vsel %vm3979, %v2696, 0.0
          %v4236 = vsel %vm3980, %v2697, 0.0
          %v4237 = vsel %vm3981, %v2698, 0.0
          %v4238 = vsel %vm3982, %v2699, 0.0
          %v4239 = vsel %vm3983, %v2700, 0.0
          %v4240 = vsel %vm3984, %v2701, 0.0
          %v4241 = vsel %vm3985, %v2702, 0.0
          %v4242 = vsel %vm3986, %v2703, 0.0
          %v4243 = vsel %vm3987, %v2704, 0.0
          %v4244 = vsel %vm3988, %v2705, 0.0
          %v4245 = vsel %vm3989, %v2706, 0.0
          %v4246 = vsel %vm3990, %v2707, 0.0
          %v4247 = vsel %vm3991, %v2708, 0.0
          %v4248 = vsel %vm3992, %v2709, 0.0
          %v4249 = vsel %vm3993, %v2710, 0.0
          %v4250 = vsel %vm3994, %v2711, 0.0
          %v4251 = vsel %vm3995, %v2712, 0.0
          %v4252 = vsel %vm3996, %v2713, 0.0
          %v4253 = vsel %vm3997, %v2714, 0.0
          %v4254 = vsel %vm3998, %v2715, 0.0
          %v4255 = vsel %vm3999, %v2716, 0.0
          %v4256 = vsel %vm4000, %v2717, 0.0
          %v4257 = vsel %vm4001, %v2718, 0.0
          %v4258 = vsel %vm4002, %v2719, 0.0
          %v4259 = vsel %vm4003, %v2720, 0.0
          %v4260 = vsel %vm4004, %v2721, 0.0
          %v4261 = vsel %vm4005, %v2722, 0.0
          %v4262 = vsel %vm4006, %v2723, 0.0
          %v4263 = vsel %vm4007, %v2724, 0.0
          %v4264 = vsel %vm4008, %v2725, 0.0
          %v4265 = vsel %vm4009, %v2726, 0.0
          %v4266 = vsel %vm4010, %v2727, 0.0
          %v4267 = vsel %vm4011, %v2728, 0.0
          %v4268 = vsel %vm4012, %v2729, 0.0
          %v4269 = vsel %vm4013, %v2730, 0.0
          %v4270 = vsel %vm4014, %v2731, 0.0
          %v4271 = vsel %vm4015, %v2732, 0.0
          %v4272 = vsel %vm4016, %v2733, 0.0
          %v4273 = vsel %vm4017, %v2734, 0.0
          %v4274 = vsel %vm4018, %v2735, 0.0
          %v4275 = vsel %vm4019, %v2736, 0.0
          %v4276 = vsel %vm4020, %v2737, 0.0
          %v4277 = vsel %vm4021, %v2738, 0.0
          %v4278 = vsel %vm4022, %v2739, 0.0
          %v4279 = vsel %vm4023, %v2740, 0.0
          %v4280 = vsel %vm4024, %v2741, 0.0
          %v4281 = vsel %vm4025, %v2742, 0.0
          %v4282 = vsel %vm4026, %v2743, 0.0
          %v4283 = vsel %vm4027, %v2744, 0.0
          %v4284 = vsel %vm4028, %v2745, 0.0
          %v4285 = vsel %vm4029, %v2746, 0.0
          %v4286 = vsel %vm4030, %v2747, 0.0
          %v4287 = vsel %vm4031, %v2748, 0.0
          %v4288 = vsel %vm4032, %v2749, 0.0
          %v4289 = vsel %vm4033, %v2750, 0.0
          %v4290 = vsel %vm4034, %v2751, 0.0
          %v4291 = vsel %vm4035, %v2752, 0.0
          %v4292 = vsel %vm4036, %v2753, 0.0
          %v4293 = vsel %vm4037, %v2754, 0.0
          %v4294 = vsel %vm4038, %v2755, 0.0
          %v4295 = vsel %vm4039, %v2756, 0.0
          %v4296 = vsel %vm4040, %v2757, 0.0
          %v4297 = vsel %vm4041, %v2758, 0.0
          %v4298 = vsel %vm4042, %v2759, 0.0
          %v4299 = vsel %vm4043, %v2760, 0.0
          %v4300 = vsel %vm4044, %v2761, 0.0
          %v4301 = vsel %vm4045, %v2762, 0.0
          %v4302 = vsel %vm4046, %v2763, 0.0
          %v4303 = vsel %vm4047, %v2764, 0.0
          %v4304 = vsel %vm4048, %v2765, 0.0
          %v4305 = vsel %vm4049, %v2766, 0.0
          %v4306 = vsel %vm4050, %v2767, 0.0
          %v4307 = vsel %vm4051, %v2768, 0.0
          %v4308 = vsel %vm4052, %v2769, 0.0
          %v4309 = vsel %vm4053, %v2770, 0.0
          %v4310 = vsel %vm4054, %v2771, 0.0
          %v4311 = vsel %vm4055, %v2772, 0.0
          %v4312 = vsel %vm4056, %v2773, 0.0
          %v4313 = vsel %vm4057, %v2774, 0.0
          %v4314 = vsel %vm4058, %v2775, 0.0
          %v4315 = vsel %vm4059, %v2776, 0.0
          %v4316 = vsel %vm4060, %v2777, 0.0
          %v4317 = vsel %vm4061, %v2778, 0.0
          %v4318 = vsel %vm4062, %v2779, 0.0
          %v4319 = vsel %vm4063, %v2780, 0.0
          %v4320 = vsel %vm4064, %v2781, 0.0
          %v4321 = vsel %vm4065, %v2782, 0.0
          %v4322 = vsel %vm4066, %v2783, 0.0
          %v4323 = vsel %vm4067, %v2784, 0.0
          %v4324 = vsel %vm4068, %v2785, 0.0
          %v4325 = vsel %vm4069, %v2786, 0.0
          %v4326 = vsel %vm4070, %v2787, 0.0
          %v4327 = vsel %vm4071, %v2788, 0.0
          %v4328 = vsel %vm4072, %v2789, 0.0
          %v4329 = vsel %vm4073, %v2790, 0.0
          %v4330 = vsel %vm4074, %v2791, 0.0
          %v4331 = vsel %vm4075, %v2792, 0.0
          %v4332 = vsel %vm4076, %v2793, 0.0
          %v4333 = vsel %vm4077, %v2794, 0.0
          %v4334 = vsel %vm4078, %v2795, 0.0
          %v4335 = vsel %vm4079, %v2796, 0.0
          %v4336 = vsel %vm4080, %v2797, 0.0
          %v4337 = vsel %vm4081, %v2798, 0.0
          %v4338 = vsel %vm4082, %v2799, 0.0
          %v4339 = vsel %vm4083, %v2800, 0.0
          %v4340 = vsel %vm4084, %v2801, 0.0
          %v4341 = vsel %vm4085, %v2802, 0.0
          %v4342 = vsel %vm4086, %v2803, 0.0
          %v4343 = vsel %vm4087, %v2804, 0.0
          %v4344 = vsel %vm4088, %v2805, 0.0
          %v4345 = vsel %vm4089, %v2806, 0.0
          %v4346 = vsel %vm4090, %v2807, 0.0
          %v4347 = vsel %vm4091, %v2808, 0.0
          %v4348 = vsel %vm4092, %v2809, 0.0
          %v4349 = vsel %vm4093, %v2810, 0.0
          %v4350 = vsel %vm4094, %v2811, 0.0
          %v4351 = vsel %vm4095, %v2812, 0.0
          %v4352 = vsel %vm4096, %v2813, 0.0
          %v4353 = vsel %vm4097, %v2814, 0.0
          %v4354 = vsel %vm4098, %v2815, 0.0
          %v4355 = vsel %vm4099, %v2816, 0.0
          %v4356 = vsel %vm4100, %v2817, 0.0
          %v4357 = vsel %vm4101, %v2818, 0.0
          %v4358 = vsel %vm4102, %v2819, 0.0
          %v4359 = vsel %vm4103, %v2820, 0.0
          %v4360 = vsel %vm4104, %v2821, 0.0
          %v4361 = vsel %vm4105, %v2822, 0.0
          %v4362 = vsel %vm4106, %v2823, 0.0
          %v4363 = vsel %vm4107, %v2824, 0.0
          %v4364 = vsel %vm4108, %v2825, 0.0
          %v4365 = vsel %vm4109, %v2826, 0.0
          %v4366 = vsel %vm4110, %v2827, 0.0
          %v4367 = vsel %vm4111, %v2828, 0.0
          %v4368 = vsel %vm4112, %v2829, 0.0
          %v4369 = vsel %vm4113, %v2830, 0.0
          %v4370 = vsel %vm4114, %v2831, 0.0
          %v4371 = vsel %vm4115, %v2832, 0.0
          %v4372 = vsel %vm4116, %v2833, 0.0
          %v4373 = vsel %vm4117, %v2834, 0.0
          %v4374 = vsel %vm4118, %v2835, 0.0
          %v4375 = vsel %vm4119, %v2836, 0.0
          %v4376 = vsel %vm4120, %v2837, 0.0
          %v4377 = vsel %vm4121, %v2838, 0.0
          %v4378 = vsel %vm4122, %v2839, 0.0
          %v4379 = vsel %vm4123, %v2840, 0.0
          %v4380 = vsel %vm4124, %v2841, 0.0
          %v4381 = vsel %vm4125, %v2842, 0.0
          %v4382 = vsel %vm4126, %v2843, 0.0
          %v4383 = vsel %vm4127, %v2844, 0.0
          %v4384 = vsel %vm4128, %v2845, 0.0
          %v4385 = vsel %vm4129, %v2846, 0.0
          %v4386 = vsel %vm4130, %v2847, 0.0
          %v4387 = vsel %vm4131, %v2848, 0.0
          %v4388 = vsel %vm4132, %v2849, 0.0
          %v4389 = vsel %vm4133, %v2850, 0.0
          %v4390 = vsel %vm4134, %v2851, 0.0
          %v4391 = vsel %vm4135, %v2852, 0.0
          %v4392 = vsel %vm4136, %v2853, 0.0
          %v4393 = vsel %vm4137, %v2854, 0.0
          %v4394 = vsel %vm4138, %v2855, 0.0
          %v4395 = vsel %vm4139, %v2856, 0.0
          %v4396 = vsel %vm4140, %v2857, 0.0
          %v4397 = vsel %vm4141, %v2858, 0.0
          %v4398 = vsel %vm4142, %v2859, 0.0
          %v4399 = vsel %vm4143, %v2860, 0.0
          %v4400 = vsel %vm4144, %v2861, 0.0
          %v4401 = vsel %vm4145, %v2862, 0.0
          %v4402 = vsel %vm4146, %v2863, 0.0
          %v4403 = vsel %vm4147, %v2864, 0.0
          %v4404 = vsel %vm4148, %v2865, 0.0
          %v4405 = vsel %vm4149, %v2866, 0.0
          %v4406 = vsel %vm4150, %v2867, 0.0
          %v4407 = vsel %vm4151, %v2868, 0.0
          %v4408 = vsel %vm4152, %v2869, 0.0
          %v4409 = vsel %vm4153, %v2870, 0.0
          %v4410 = vsel %vm4154, %v2871, 0.0
          %v4411 = vsel %vm4155, %v2872, 0.0
          %v4412 = vsel %vm4156, %v2873, 0.0
          %v4413 = vsel %vm4157, %v2874, 0.0
          %v4414 = vsel %vm4158, %v2875, 0.0
          %v4415 = vsel %vm4159, %v2876, 0.0
          %v4416 = vsel %vm4160, %v2877, 0.0
          %v4417 = vsel %vm4161, %v2878, 0.0
          %v4418 = vsel %vm4162, %v2879, 0.0
          %v4419 = vsel %vm4163, %v2880, 0.0
          %v4420 = vsel %vm4164, %v2881, 0.0
          %v4421 = vsel %vm4165, %v2882, 0.0
          %v4422 = vsel %vm4166, %v2883, 0.0
          %v4423 = vsel %vm4167, %v2884, 0.0
          %v4424 = vsel %vm4168, %v2885, 0.0
          %v4425 = vsel %vm4169, %v2886, 0.0
          %v4426 = vsel %vm4170, %v2887, 0.0
          %v4427 = vsel %vm4171, %v2888, 0.0
          %v4428 = vsel %vm4172, %v2889, 0.0
          %v4429 = vsel %vm4173, %v2890, 0.0
          %v4430 = vsel %vm4174, %v2891, 0.0
          %v4431 = vsel %vm4175, %v2892, 0.0
          %v4432 = vsel %vm4176, %v2893, 0.0
          %v4433 = vld [vmem:[#allocation2] sm:$0x1]
          %v4434 = vsel %vm520, %v4177, 0.0
          %v4435 = vsel %vm520, %v4178, 0.0
          %v4436 = vadd.f32 %v4434, %v4435
          %v4437 = vsel %vm520, %v4179, 0.0
          %v4438 = vadd.f32 %v4436, %v4437
          %v4439 = vsel %vm520, %v4180, 0.0
          %v4440 = vadd.f32 %v4438, %v4439
          %v4441 = vsel %vm520, %v4181, 0.0
          %v4442 = vadd.f32 %v4440, %v4441
          %v4443 = vsel %vm520, %v4182, 0.0
          %v4444 = vadd.f32 %v4442, %v4443
          %v4445 = vsel %vm520, %v4183, 0.0
          %v4446 = vadd.f32 %v4444, %v4445
          %v4447 = vsel %vm520, %v4184, 0.0
          %v4448 = vadd.f32 %v4446, %v4447
          %v4449 = vsel %vm520, %v4185, 0.0
          %v4450 = vadd.f32 %v4448, %v4449
          %v4451 = vsel %vm520, %v4186, 0.0
          %v4452 = vadd.f32 %v4450, %v4451
          %v4453 = vsel %vm520, %v4187, 0.0
          %v4454 = vadd.f32 %v4452, %v4453
          %v4455 = vsel %vm520, %v4188, 0.0
          %v4456 = vadd.f32 %v4454, %v4455
          %v4457 = vsel %vm520, %v4189, 0.0
          %v4458 = vadd.f32 %v4456, %v4457
          %v4459 = vsel %vm520, %v4190, 0.0
          %v4460 = vadd.f32 %v4458, %v4459
          %v4461 = vsel %vm520, %v4191, 0.0
          %v4462 = vadd.f32 %v4460, %v4461
          %v4463 = vsel %vm520, %v4192, 0.0
          %v4464 = vadd.f32 %v4462, %v4463
          %v4465 = vsel %vm520, %v4193, 0.0
          %v4466 = vadd.f32 %v4464, %v4465
          %v4467 = vsel %vm520, %v4194, 0.0
          %v4468 = vadd.f32 %v4466, %v4467
          %v4469 = vsel %vm520, %v4195, 0.0
          %v4470 = vadd.f32 %v4468, %v4469
          %v4471 = vsel %vm520, %v4196, 0.0
          %v4472 = vadd.f32 %v4470, %v4471
          %v4473 = vsel %vm520, %v4197, 0.0
          %v4474 = vadd.f32 %v4472, %v4473
          %v4475 = vsel %vm520, %v4198, 0.0
          %v4476 = vadd.f32 %v4474, %v4475
          %v4477 = vsel %vm520, %v4199, 0.0
          %v4478 = vadd.f32 %v4476, %v4477
          %v4479 = vsel %vm520, %v4200, 0.0
          %v4480 = vadd.f32 %v4478, %v4479
          %v4481 = vsel %vm520, %v4201, 0.0
          %v4482 = vadd.f32 %v4480, %v4481
          %v4483 = vsel %vm520, %v4202, 0.0
          %v4484 = vadd.f32 %v4482, %v4483
          %v4485 = vsel %vm520, %v4203, 0.0
          %v4486 = vadd.f32 %v4484, %v4485
          %v4487 = vsel %vm520, %v4204, 0.0
          %v4488 = vadd.f32 %v4486, %v4487
          %v4489 = vsel %vm520, %v4205, 0.0
          %v4490 = vadd.f32 %v4488, %v4489
          %v4491 = vsel %vm520, %v4206, 0.0
          %v4492 = vadd.f32 %v4490, %v4491
          %v4493 = vsel %vm520, %v4207, 0.0
          %v4494 = vadd.f32 %v4492, %v4493
          %v4495 = vsel %vm520, %v4208, 0.0
          %v4496 = vadd.f32 %v4494, %v4495
          %v4497 = vsel %vm520, %v4209, 0.0
          %v4498 = vadd.f32 %v4496, %v4497
          %v4499 = vsel %vm520, %v4210, 0.0
          %v4500 = vadd.f32 %v4498, %v4499
          %v4501 = vsel %vm520, %v4211, 0.0
          %v4502 = vadd.f32 %v4500, %v4501
          %v4503 = vsel %vm520, %v4212, 0.0
          %v4504 = vadd.f32 %v4502, %v4503
          %v4505 = vsel %vm520, %v4213, 0.0
          %v4506 = vadd.f32 %v4504, %v4505
          %v4507 = vsel %vm520, %v4214, 0.0
          %v4508 = vadd.f32 %v4506, %v4507
          %v4509 = vsel %vm520, %v4215, 0.0
          %v4510 = vadd.f32 %v4508, %v4509
          %v4511 = vsel %vm520, %v4216, 0.0
          %v4512 = vadd.f32 %v4510, %v4511
          %v4513 = vsel %vm520, %v4217, 0.0
          %v4514 = vadd.f32 %v4512, %v4513
          %v4515 = vsel %vm520, %v4218, 0.0
          %v4516 = vadd.f32 %v4514, %v4515
          %v4517 = vsel %vm520, %v4219, 0.0
          %v4518 = vadd.f32 %v4516, %v4517
          %v4519 = vsel %vm520, %v4220, 0.0
          %v4520 = vadd.f32 %v4518, %v4519
          %v4521 = vsel %vm520, %v4221, 0.0
          %v4522 = vadd.f32 %v4520, %v4521
          %v4523 = vsel %vm520, %v4222, 0.0
          %v4524 = vadd.f32 %v4522, %v4523
          %v4525 = vsel %vm520, %v4223, 0.0
          %v4526 = vadd.f32 %v4524, %v4525
          %v4527 = vsel %vm520, %v4224, 0.0
          %v4528 = vadd.f32 %v4526, %v4527
          %v4529 = vsel %vm520, %v4225, 0.0
          %v4530 = vadd.f32 %v4528, %v4529
          %v4531 = vsel %vm520, %v4226, 0.0
          %v4532 = vadd.f32 %v4530, %v4531
          %v4533 = vsel %vm520, %v4227, 0.0
          %v4534 = vadd.f32 %v4532, %v4533
          %v4535 = vsel %vm520, %v4228, 0.0
          %v4536 = vadd.f32 %v4534, %v4535
          %v4537 = vsel %vm520, %v4229, 0.0
          %v4538 = vadd.f32 %v4536, %v4537
          %v4539 = vsel %vm520, %v4230, 0.0
          %v4540 = vadd.f32 %v4538, %v4539
          %v4541 = vsel %vm520, %v4231, 0.0
          %v4542 = vadd.f32 %v4540, %v4541
          %v4543 = vsel %vm520, %v4232, 0.0
          %v4544 = vadd.f32 %v4542, %v4543
          %v4545 = vsel %vm520, %v4233, 0.0
          %v4546 = vadd.f32 %v4544, %v4545
          %v4547 = vsel %vm520, %v4234, 0.0
          %v4548 = vadd.f32 %v4546, %v4547
          %v4549 = vsel %vm520, %v4235, 0.0
          %v4550 = vadd.f32 %v4548, %v4549
          %v4551 = vsel %vm520, %v4236, 0.0
          %v4552 = vadd.f32 %v4550, %v4551
          %v4553 = vsel %vm520, %v4237, 0.0
          %v4554 = vadd.f32 %v4552, %v4553
          %v4555 = vsel %vm520, %v4238, 0.0
          %v4556 = vadd.f32 %v4554, %v4555
          %v4557 = vsel %vm520, %v4239, 0.0
          %v4558 = vadd.f32 %v4556, %v4557
          %v4559 = vsel %vm520, %v4240, 0.0
          %v4560 = vadd.f32 %v4558, %v4559
          %v4561 = vsel %vm520, %v4241, 0.0
          %v4562 = vadd.f32 %v4560, %v4561
          %v4563 = vsel %vm520, %v4242, 0.0
          %v4564 = vadd.f32 %v4562, %v4563
          %v4565 = vsel %vm520, %v4243, 0.0
          %v4566 = vadd.f32 %v4564, %v4565
          %v4567 = vsel %vm520, %v4244, 0.0
          %v4568 = vadd.f32 %v4566, %v4567
          %v4569 = vsel %vm520, %v4245, 0.0
          %v4570 = vadd.f32 %v4568, %v4569
          %v4571 = vsel %vm520, %v4246, 0.0
          %v4572 = vadd.f32 %v4570, %v4571
          %v4573 = vsel %vm520, %v4247, 0.0
          %v4574 = vadd.f32 %v4572, %v4573
          %v4575 = vsel %vm520, %v4248, 0.0
          %v4576 = vadd.f32 %v4574, %v4575
          %v4577 = vsel %vm520, %v4249, 0.0
          %v4578 = vadd.f32 %v4576, %v4577
          %v4579 = vsel %vm520, %v4250, 0.0
          %v4580 = vadd.f32 %v4578, %v4579
          %v4581 = vsel %vm520, %v4251, 0.0
          %v4582 = vadd.f32 %v4580, %v4581
          %v4583 = vsel %vm520, %v4252, 0.0
          %v4584 = vadd.f32 %v4582, %v4583
          %v4585 = vsel %vm520, %v4253, 0.0
          %v4586 = vadd.f32 %v4584, %v4585
          %v4587 = vsel %vm520, %v4254, 0.0
          %v4588 = vadd.f32 %v4586, %v4587
          %v4589 = vsel %vm520, %v4255, 0.0
          %v4590 = vadd.f32 %v4588, %v4589
          %v4591 = vsel %vm520, %v4256, 0.0
          %v4592 = vadd.f32 %v4590, %v4591
          %v4593 = vsel %vm520, %v4257, 0.0
          %v4594 = vadd.f32 %v4592, %v4593
          %v4595 = vsel %vm520, %v4258, 0.0
          %v4596 = vadd.f32 %v4594, %v4595
          %v4597 = vsel %vm520, %v4259, 0.0
          %v4598 = vadd.f32 %v4596, %v4597
          %v4599 = vsel %vm520, %v4260, 0.0
          %v4600 = vadd.f32 %v4598, %v4599
          %v4601 = vsel %vm520, %v4261, 0.0
          %v4602 = vadd.f32 %v4600, %v4601
          %v4603 = vsel %vm520, %v4262, 0.0
          %v4604 = vadd.f32 %v4602, %v4603
          %v4605 = vsel %vm520, %v4263, 0.0
          %v4606 = vadd.f32 %v4604, %v4605
          %v4607 = vsel %vm520, %v4264, 0.0
          %v4608 = vadd.f32 %v4606, %v4607
          %v4609 = vsel %vm520, %v4265, 0.0
          %v4610 = vadd.f32 %v4608, %v4609
          %v4611 = vsel %vm520, %v4266, 0.0
          %v4612 = vadd.f32 %v4610, %v4611
          %v4613 = vsel %vm520, %v4267, 0.0
          %v4614 = vadd.f32 %v4612, %v4613
          %v4615 = vsel %vm520, %v4268, 0.0
          %v4616 = vadd.f32 %v4614, %v4615
          %v4617 = vsel %vm520, %v4269, 0.0
          %v4618 = vadd.f32 %v4616, %v4617
          %v4619 = vsel %vm520, %v4270, 0.0
          %v4620 = vadd.f32 %v4618, %v4619
          %v4621 = vsel %vm520, %v4271, 0.0
          %v4622 = vadd.f32 %v4620, %v4621
          %v4623 = vsel %vm520, %v4272, 0.0
          %v4624 = vadd.f32 %v4622, %v4623
          %v4625 = vsel %vm520, %v4273, 0.0
          %v4626 = vadd.f32 %v4624, %v4625
          %v4627 = vsel %vm520, %v4274, 0.0
          %v4628 = vadd.f32 %v4626, %v4627
          %v4629 = vsel %vm520, %v4275, 0.0
          %v4630 = vadd.f32 %v4628, %v4629
          %v4631 = vsel %vm520, %v4276, 0.0
          %v4632 = vadd.f32 %v4630, %v4631
          %v4633 = vsel %vm520, %v4277, 0.0
          %v4634 = vadd.f32 %v4632, %v4633
          %v4635 = vsel %vm520, %v4278, 0.0
          %v4636 = vadd.f32 %v4634, %v4635
          %v4637 = vsel %vm520, %v4279, 0.0
          %v4638 = vadd.f32 %v4636, %v4637
          %v4639 = vsel %vm520, %v4280, 0.0
          %v4640 = vadd.f32 %v4638, %v4639
          %v4641 = vsel %vm520, %v4281, 0.0
          %v4642 = vadd.f32 %v4640, %v4641
          %v4643 = vsel %vm520, %v4282, 0.0
          %v4644 = vadd.f32 %v4642, %v4643
          %v4645 = vsel %vm520, %v4283, 0.0
          %v4646 = vadd.f32 %v4644, %v4645
          %v4647 = vsel %vm520, %v4284, 0.0
          %v4648 = vadd.f32 %v4646, %v4647
          %v4649 = vsel %vm520, %v4285, 0.0
          %v4650 = vadd.f32 %v4648, %v4649
          %v4651 = vsel %vm520, %v4286, 0.0
          %v4652 = vadd.f32 %v4650, %v4651
          %v4653 = vsel %vm520, %v4287, 0.0
          %v4654 = vadd.f32 %v4652, %v4653
          %v4655 = vsel %vm520, %v4288, 0.0
          %v4656 = vadd.f32 %v4654, %v4655
          %v4657 = vsel %vm520, %v4289, 0.0
          %v4658 = vadd.f32 %v4656, %v4657
          %v4659 = vsel %vm520, %v4290, 0.0
          %v4660 = vadd.f32 %v4658, %v4659
          %v4661 = vsel %vm520, %v4291, 0.0
          %v4662 = vadd.f32 %v4660, %v4661
          %v4663 = vsel %vm520, %v4292, 0.0
          %v4664 = vadd.f32 %v4662, %v4663
          %v4665 = vsel %vm520, %v4293, 0.0
          %v4666 = vadd.f32 %v4664, %v4665
          %v4667 = vsel %vm520, %v4294, 0.0
          %v4668 = vadd.f32 %v4666, %v4667
          %v4669 = vsel %vm520, %v4295, 0.0
          %v4670 = vadd.f32 %v4668, %v4669
          %v4671 = vsel %vm520, %v4296, 0.0
          %v4672 = vadd.f32 %v4670, %v4671
          %v4673 = vsel %vm520, %v4297, 0.0
          %v4674 = vadd.f32 %v4672, %v4673
          %v4675 = vsel %vm520, %v4298, 0.0
          %v4676 = vadd.f32 %v4674, %v4675
          %v4677 = vsel %vm520, %v4299, 0.0
          %v4678 = vadd.f32 %v4676, %v4677
          %v4679 = vsel %vm520, %v4300, 0.0
          %v4680 = vadd.f32 %v4678, %v4679
          %v4681 = vsel %vm520, %v4301, 0.0
          %v4682 = vadd.f32 %v4680, %v4681
          %v4683 = vsel %vm520, %v4302, 0.0
          %v4684 = vadd.f32 %v4682, %v4683
          %v4685 = vsel %vm520, %v4303, 0.0
          %v4686 = vadd.f32 %v4684, %v4685
          %v4687 = vsel %vm520, %v4304, 0.0
          %v4688 = vadd.f32 %v4686, %v4687
          %v4689 = vsel %vm520, %v4305, 0.0
          %v4690 = vadd.f32 %v4688, %v4689
          %v4691 = vsel %vm520, %v4306, 0.0
          %v4692 = vadd.f32 %v4690, %v4691
          %v4693 = vsel %vm520, %v4307, 0.0
          %v4694 = vadd.f32 %v4692, %v4693
          %v4695 = vsel %vm520, %v4308, 0.0
          %v4696 = vadd.f32 %v4694, %v4695
          %v4697 = vsel %vm520, %v4309, 0.0
          %v4698 = vadd.f32 %v4696, %v4697
          %v4699 = vsel %vm520, %v4310, 0.0
          %v4700 = vadd.f32 %v4698, %v4699
          %v4701 = vsel %vm520, %v4311, 0.0
          %v4702 = vadd.f32 %v4700, %v4701
          %v4703 = vsel %vm520, %v4312, 0.0
          %v4704 = vadd.f32 %v4702, %v4703
          %v4705 = vsel %vm520, %v4313, 0.0
          %v4706 = vadd.f32 %v4704, %v4705
          %v4707 = vsel %vm520, %v4314, 0.0
          %v4708 = vadd.f32 %v4706, %v4707
          %v4709 = vsel %vm520, %v4315, 0.0
          %v4710 = vadd.f32 %v4708, %v4709
          %v4711 = vsel %vm520, %v4316, 0.0
          %v4712 = vadd.f32 %v4710, %v4711
          %v4713 = vsel %vm520, %v4317, 0.0
          %v4714 = vadd.f32 %v4712, %v4713
          %v4715 = vsel %vm520, %v4318, 0.0
          %v4716 = vadd.f32 %v4714, %v4715
          %v4717 = vsel %vm520, %v4319, 0.0
          %v4718 = vadd.f32 %v4716, %v4717
          %v4719 = vsel %vm520, %v4320, 0.0
          %v4720 = vadd.f32 %v4718, %v4719
          %v4721 = vsel %vm520, %v4321, 0.0
          %v4722 = vadd.f32 %v4720, %v4721
          %v4723 = vsel %vm520, %v4322, 0.0
          %v4724 = vadd.f32 %v4722, %v4723
          %v4725 = vsel %vm520, %v4323, 0.0
          %v4726 = vadd.f32 %v4724, %v4725
          %v4727 = vsel %vm520, %v4324, 0.0
          %v4728 = vadd.f32 %v4726, %v4727
          %v4729 = vsel %vm520, %v4325, 0.0
          %v4730 = vadd.f32 %v4728, %v4729
          %v4731 = vsel %vm520, %v4326, 0.0
          %v4732 = vadd.f32 %v4730, %v4731
          %v4733 = vsel %vm520, %v4327, 0.0
          %v4734 = vadd.f32 %v4732, %v4733
          %v4735 = vsel %vm520, %v4328, 0.0
          %v4736 = vadd.f32 %v4734, %v4735
          %v4737 = vsel %vm520, %v4329, 0.0
          %v4738 = vadd.f32 %v4736, %v4737
          %v4739 = vsel %vm520, %v4330, 0.0
          %v4740 = vadd.f32 %v4738, %v4739
          %v4741 = vsel %vm520, %v4331, 0.0
          %v4742 = vadd.f32 %v4740, %v4741
          %v4743 = vsel %vm520, %v4332, 0.0
          %v4744 = vadd.f32 %v4742, %v4743
          %v4745 = vsel %vm520, %v4333, 0.0
          %v4746 = vadd.f32 %v4744, %v4745
          %v4747 = vsel %vm520, %v4334, 0.0
          %v4748 = vadd.f32 %v4746, %v4747
          %v4749 = vsel %vm520, %v4335, 0.0
          %v4750 = vadd.f32 %v4748, %v4749
          %v4751 = vsel %vm520, %v4336, 0.0
          %v4752 = vadd.f32 %v4750, %v4751
          %v4753 = vsel %vm520, %v4337, 0.0
          %v4754 = vadd.f32 %v4752, %v4753
          %v4755 = vsel %vm520, %v4338, 0.0
          %v4756 = vadd.f32 %v4754, %v4755
          %v4757 = vsel %vm520, %v4339, 0.0
          %v4758 = vadd.f32 %v4756, %v4757
          %v4759 = vsel %vm520, %v4340, 0.0
          %v4760 = vadd.f32 %v4758, %v4759
          %v4761 = vsel %vm520, %v4341, 0.0
          %v4762 = vadd.f32 %v4760, %v4761
          %v4763 = vsel %vm520, %v4342, 0.0
          %v4764 = vadd.f32 %v4762, %v4763
          %v4765 = vsel %vm520, %v4343, 0.0
          %v4766 = vadd.f32 %v4764, %v4765
          %v4767 = vsel %vm520, %v4344, 0.0
          %v4768 = vadd.f32 %v4766, %v4767
          %v4769 = vsel %vm520, %v4345, 0.0
          %v4770 = vadd.f32 %v4768, %v4769
          %v4771 = vsel %vm520, %v4346, 0.0
          %v4772 = vadd.f32 %v4770, %v4771
          %v4773 = vsel %vm520, %v4347, 0.0
          %v4774 = vadd.f32 %v4772, %v4773
          %v4775 = vsel %vm520, %v4348, 0.0
          %v4776 = vadd.f32 %v4774, %v4775
          %v4777 = vsel %vm520, %v4349, 0.0
          %v4778 = vadd.f32 %v4776, %v4777
          %v4779 = vsel %vm520, %v4350, 0.0
          %v4780 = vadd.f32 %v4778, %v4779
          %v4781 = vsel %vm520, %v4351, 0.0
          %v4782 = vadd.f32 %v4780, %v4781
          %v4783 = vsel %vm520, %v4352, 0.0
          %v4784 = vadd.f32 %v4782, %v4783
          %v4785 = vsel %vm520, %v4353, 0.0
          %v4786 = vadd.f32 %v4784, %v4785
          %v4787 = vsel %vm520, %v4354, 0.0
          %v4788 = vadd.f32 %v4786, %v4787
          %v4789 = vsel %vm520, %v4355, 0.0
          %v4790 = vadd.f32 %v4788, %v4789
          %v4791 = vsel %vm520, %v4356, 0.0
          %v4792 = vadd.f32 %v4790, %v4791
          %v4793 = vsel %vm520, %v4357, 0.0
          %v4794 = vadd.f32 %v4792, %v4793
          %v4795 = vsel %vm520, %v4358, 0.0
          %v4796 = vadd.f32 %v4794, %v4795
          %v4797 = vsel %vm520, %v4359, 0.0
          %v4798 = vadd.f32 %v4796, %v4797
          %v4799 = vsel %vm520, %v4360, 0.0
          %v4800 = vadd.f32 %v4798, %v4799
          %v4801 = vsel %vm520, %v4361, 0.0
          %v4802 = vadd.f32 %v4800, %v4801
          %v4803 = vsel %vm520, %v4362, 0.0
          %v4804 = vadd.f32 %v4802, %v4803
          %v4805 = vsel %vm520, %v4363, 0.0
          %v4806 = vadd.f32 %v4804, %v4805
          %v4807 = vsel %vm520, %v4364, 0.0
          %v4808 = vadd.f32 %v4806, %v4807
          %v4809 = vsel %vm520, %v4365, 0.0
          %v4810 = vadd.f32 %v4808, %v4809
          %v4811 = vsel %vm520, %v4366, 0.0
          %v4812 = vadd.f32 %v4810, %v4811
          %v4813 = vsel %vm520, %v4367, 0.0
          %v4814 = vadd.f32 %v4812, %v4813
          %v4815 = vsel %vm520, %v4368, 0.0
          %v4816 = vadd.f32 %v4814, %v4815
          %v4817 = vsel %vm520, %v4369, 0.0
          %v4818 = vadd.f32 %v4816, %v4817
          %v4819 = vsel %vm520, %v4370, 0.0
          %v4820 = vadd.f32 %v4818, %v4819
          %v4821 = vsel %vm520, %v4371, 0.0
          %v4822 = vadd.f32 %v4820, %v4821
          %v4823 = vsel %vm520, %v4372, 0.0
          %v4824 = vadd.f32 %v4822, %v4823
          %v4825 = vsel %vm520, %v4373, 0.0
          %v4826 = vadd.f32 %v4824, %v4825
          %v4827 = vsel %vm520, %v4374, 0.0
          %v4828 = vadd.f32 %v4826, %v4827
          %v4829 = vsel %vm520, %v4375, 0.0
          %v4830 = vadd.f32 %v4828, %v4829
          %v4831 = vsel %vm520, %v4376, 0.0
          %v4832 = vadd.f32 %v4830, %v4831
          %v4833 = vsel %vm520, %v4377, 0.0
          %v4834 = vadd.f32 %v4832, %v4833
          %v4835 = vsel %vm520, %v4378, 0.0
          %v4836 = vadd.f32 %v4834, %v4835
          %v4837 = vsel %vm520, %v4379, 0.0
          %v4838 = vadd.f32 %v4836, %v4837
          %v4839 = vsel %vm520, %v4380, 0.0
          %v4840 = vadd.f32 %v4838, %v4839
          %v4841 = vsel %vm520, %v4381, 0.0
          %v4842 = vadd.f32 %v4840, %v4841
          %v4843 = vsel %vm520, %v4382, 0.0
          %v4844 = vadd.f32 %v4842, %v4843
          %v4845 = vsel %vm520, %v4383, 0.0
          %v4846 = vadd.f32 %v4844, %v4845
          %v4847 = vsel %vm520, %v4384, 0.0
          %v4848 = vadd.f32 %v4846, %v4847
          %v4849 = vsel %vm520, %v4385, 0.0
          %v4850 = vadd.f32 %v4848, %v4849
          %v4851 = vsel %vm520, %v4386, 0.0
          %v4852 = vadd.f32 %v4850, %v4851
          %v4853 = vsel %vm520, %v4387, 0.0
          %v4854 = vadd.f32 %v4852, %v4853
          %v4855 = vsel %vm520, %v4388, 0.0
          %v4856 = vadd.f32 %v4854, %v4855
          %v4857 = vsel %vm520, %v4389, 0.0
          %v4858 = vadd.f32 %v4856, %v4857
          %v4859 = vsel %vm520, %v4390, 0.0
          %v4860 = vadd.f32 %v4858, %v4859
          %v4861 = vsel %vm520, %v4391, 0.0
          %v4862 = vadd.f32 %v4860, %v4861
          %v4863 = vsel %vm520, %v4392, 0.0
          %v4864 = vadd.f32 %v4862, %v4863
          %v4865 = vsel %vm520, %v4393, 0.0
          %v4866 = vadd.f32 %v4864, %v4865
          %v4867 = vsel %vm520, %v4394, 0.0
          %v4868 = vadd.f32 %v4866, %v4867
          %v4869 = vsel %vm520, %v4395, 0.0
          %v4870 = vadd.f32 %v4868, %v4869
          %v4871 = vsel %vm520, %v4396, 0.0
          %v4872 = vadd.f32 %v4870, %v4871
          %v4873 = vsel %vm520, %v4397, 0.0
          %v4874 = vadd.f32 %v4872, %v4873
          %v4875 = vsel %vm520, %v4398, 0.0
          %v4876 = vadd.f32 %v4874, %v4875
          %v4877 = vsel %vm520, %v4399, 0.0
          %v4878 = vadd.f32 %v4876, %v4877
          %v4879 = vsel %vm520, %v4400, 0.0
          %v4880 = vadd.f32 %v4878, %v4879
          %v4881 = vsel %vm520, %v4401, 0.0
          %v4882 = vadd.f32 %v4880, %v4881
          %v4883 = vsel %vm520, %v4402, 0.0
          %v4884 = vadd.f32 %v4882, %v4883
          %v4885 = vsel %vm520, %v4403, 0.0
          %v4886 = vadd.f32 %v4884, %v4885
          %v4887 = vsel %vm520, %v4404, 0.0
          %v4888 = vadd.f32 %v4886, %v4887
          %v4889 = vsel %vm520, %v4405, 0.0
          %v4890 = vadd.f32 %v4888, %v4889
          %v4891 = vsel %vm520, %v4406, 0.0
          %v4892 = vadd.f32 %v4890, %v4891
          %v4893 = vsel %vm520, %v4407, 0.0
          %v4894 = vadd.f32 %v4892, %v4893
          %v4895 = vsel %vm520, %v4408, 0.0
          %v4896 = vadd.f32 %v4894, %v4895
          %v4897 = vsel %vm520, %v4409, 0.0
          %v4898 = vadd.f32 %v4896, %v4897
          %v4899 = vsel %vm520, %v4410, 0.0
          %v4900 = vadd.f32 %v4898, %v4899
          %v4901 = vsel %vm520, %v4411, 0.0
          %v4902 = vadd.f32 %v4900, %v4901
          %v4903 = vsel %vm520, %v4412, 0.0
          %v4904 = vadd.f32 %v4902, %v4903
          %v4905 = vsel %vm520, %v4413, 0.0
          %v4906 = vadd.f32 %v4904, %v4905
          %v4907 = vsel %vm520, %v4414, 0.0
          %v4908 = vadd.f32 %v4906, %v4907
          %v4909 = vsel %vm520, %v4415, 0.0
          %v4910 = vadd.f32 %v4908, %v4909
          %v4911 = vsel %vm520, %v4416, 0.0
          %v4912 = vadd.f32 %v4910, %v4911
          %v4913 = vsel %vm520, %v4417, 0.0
          %v4914 = vadd.f32 %v4912, %v4913
          %v4915 = vsel %vm520, %v4418, 0.0
          %v4916 = vadd.f32 %v4914, %v4915
          %v4917 = vsel %vm520, %v4419, 0.0
          %v4918 = vadd.f32 %v4916, %v4917
          %v4919 = vsel %vm520, %v4420, 0.0
          %v4920 = vadd.f32 %v4918, %v4919
          %v4921 = vsel %vm520, %v4421, 0.0
          %v4922 = vadd.f32 %v4920, %v4921
          %v4923 = vsel %vm520, %v4422, 0.0
          %v4924 = vadd.f32 %v4922, %v4923
          %v4925 = vsel %vm520, %v4423, 0.0
          %v4926 = vadd.f32 %v4924, %v4925
          %v4927 = vsel %vm520, %v4424, 0.0
          %v4928 = vadd.f32 %v4926, %v4927
          %v4929 = vsel %vm520, %v4425, 0.0
          %v4930 = vadd.f32 %v4928, %v4929
          %v4931 = vsel %vm520, %v4426, 0.0
          %v4932 = vadd.f32 %v4930, %v4931
          %v4933 = vsel %vm520, %v4427, 0.0
          %v4934 = vadd.f32 %v4932, %v4933
          %v4935 = vsel %vm520, %v4428, 0.0
          %v4936 = vadd.f32 %v4934, %v4935
          %v4937 = vsel %vm520, %v4429, 0.0
          %v4938 = vadd.f32 %v4936, %v4937
          %v4939 = vsel %vm520, %v4430, 0.0
          %v4940 = vadd.f32 %v4938, %v4939
          %v4941 = vsel %vm520, %v4431, 0.0
          %v4942 = vadd.f32 %v4940, %v4941
          %v4943 = vsel %vm520, %v4432, 0.0
          %v4944 = vadd.f32 %v4942, %v4943
          %v4945 = vrot.slane %v4944, 4
          %v4946 = vadd.f32 %v4944, %v4945
          %v4947 = vrot.slane %v4946, 2
          %v4948 = vadd.f32 %v4946, %v4947
          %v4949 = vrot.slane %v4948, 1
          %v4950 = vadd.f32 %v4948, %v4949
          %v4951 = vadd.f32 %v4433, %v4950
          %vm4952 = vcmask 196608
          %4953 = vst.msk [vmem:[#allocation2] sm:$0x1] %vm4952, %v4951
          %v4954 = vld [vmem:[#allocation3] sm:$0x1]
          %v4955 = vmul.f32 %v4177, %v4177
          %v4956 = vmul.f32 %v4178, %v4178
          %v4957 = vmul.f32 %v4179, %v4179
          %v4958 = vmul.f32 %v4180, %v4180
          %v4959 = vmul.f32 %v4181, %v4181
          %v4960 = vmul.f32 %v4182, %v4182
          %v4961 = vmul.f32 %v4183, %v4183
          %v4962 = vmul.f32 %v4184, %v4184
          %v4963 = vmul.f32 %v4185, %v4185
          %v4964 = vmul.f32 %v4186, %v4186
          %v4965 = vmul.f32 %v4187, %v4187
          %v4966 = vmul.f32 %v4188, %v4188
          %v4967 = vmul.f32 %v4189, %v4189
          %v4968 = vmul.f32 %v4190, %v4190
          %v4969 = vmul.f32 %v4191, %v4191
          %v4970 = vmul.f32 %v4192, %v4192
          %v4971 = vmul.f32 %v4193, %v4193
          %v4972 = vmul.f32 %v4194, %v4194
          %v4973 = vmul.f32 %v4195, %v4195
          %v4974 = vmul.f32 %v4196, %v4196
          %v4975 = vmul.f32 %v4197, %v4197
          %v4976 = vmul.f32 %v4198, %v4198
          %v4977 = vmul.f32 %v4199, %v4199
          %v4978 = vmul.f32 %v4200, %v4200
          %v4979 = vmul.f32 %v4201, %v4201
          %v4980 = vmul.f32 %v4202, %v4202
          %v4981 = vmul.f32 %v4203, %v4203
          %v4982 = vmul.f32 %v4204, %v4204
          %v4983 = vmul.f32 %v4205, %v4205
          %v4984 = vmul.f32 %v4206, %v4206
          %v4985 = vmul.f32 %v4207, %v4207
          %v4986 = vmul.f32 %v4208, %v4208
          %v4987 = vmul.f32 %v4209, %v4209
          %v4988 = vmul.f32 %v4210, %v4210
          %v4989 = vmul.f32 %v4211, %v4211
          %v4990 = vmul.f32 %v4212, %v4212
          %v4991 = vmul.f32 %v4213, %v4213
          %v4992 = vmul.f32 %v4214, %v4214
          %v4993 = vmul.f32 %v4215, %v4215
          %v4994 = vmul.f32 %v4216, %v4216
          %v4995 = vmul.f32 %v4217, %v4217
          %v4996 = vmul.f32 %v4218, %v4218
          %v4997 = vmul.f32 %v4219, %v4219
          %v4998 = vmul.f32 %v4220, %v4220
          %v4999 = vmul.f32 %v4221, %v4221
          %v5000 = vmul.f32 %v4222, %v4222
          %v5001 = vmul.f32 %v4223, %v4223
          %v5002 = vmul.f32 %v4224, %v4224
          %v5003 = vmul.f32 %v4225, %v4225
          %v5004 = vmul.f32 %v4226, %v4226
          %v5005 = vmul.f32 %v4227, %v4227
          %v5006 = vmul.f32 %v4228, %v4228
          %v5007 = vmul.f32 %v4229, %v4229
          %v5008 = vmul.f32 %v4230, %v4230
          %v5009 = vmul.f32 %v4231, %v4231
          %v5010 = vmul.f32 %v4232, %v4232
          %v5011 = vmul.f32 %v4233, %v4233
          %v5012 = vmul.f32 %v4234, %v4234
          %v5013 = vmul.f32 %v4235, %v4235
          %v5014 = vmul.f32 %v4236, %v4236
          %v5015 = vmul.f32 %v4237, %v4237
          %v5016 = vmul.f32 %v4238, %v4238
          %v5017 = vmul.f32 %v4239, %v4239
          %v5018 = vmul.f32 %v4240, %v4240
          %v5019 = vmul.f32 %v4241, %v4241
          %v5020 = vmul.f32 %v4242, %v4242
          %v5021 = vmul.f32 %v4243, %v4243
          %v5022 = vmul.f32 %v4244, %v4244
          %v5023 = vmul.f32 %v4245, %v4245
          %v5024 = vmul.f32 %v4246, %v4246
          %v5025 = vmul.f32 %v4247, %v4247
          %v5026 = vmul.f32 %v4248, %v4248
          %v5027 = vmul.f32 %v4249, %v4249
          %v5028 = vmul.f32 %v4250, %v4250
          %v5029 = vmul.f32 %v4251, %v4251
          %v5030 = vmul.f32 %v4252, %v4252
          %v5031 = vmul.f32 %v4253, %v4253
          %v5032 = vmul.f32 %v4254, %v4254
          %v5033 = vmul.f32 %v4255, %v4255
          %v5034 = vmul.f32 %v4256, %v4256
          %v5035 = vmul.f32 %v4257, %v4257
          %v5036 = vmul.f32 %v4258, %v4258
          %v5037 = vmul.f32 %v4259, %v4259
          %v5038 = vmul.f32 %v4260, %v4260
          %v5039 = vmul.f32 %v4261, %v4261
          %v5040 = vmul.f32 %v4262, %v4262
          %v5041 = vmul.f32 %v4263, %v4263
          %v5042 = vmul.f32 %v4264, %v4264
          %v5043 = vmul.f32 %v4265, %v4265
          %v5044 = vmul.f32 %v4266, %v4266
          %v5045 = vmul.f32 %v4267, %v4267
          %v5046 = vmul.f32 %v4268, %v4268
          %v5047 = vmul.f32 %v4269, %v4269
          %v5048 = vmul.f32 %v4270, %v4270
          %v5049 = vmul.f32 %v4271, %v4271
          %v5050 = vmul.f32 %v4272, %v4272
          %v5051 = vmul.f32 %v4273, %v4273
          %v5052 = vmul.f32 %v4274, %v4274
          %v5053 = vmul.f32 %v4275, %v4275
          %v5054 = vmul.f32 %v4276, %v4276
          %v5055 = vmul.f32 %v4277, %v4277
          %v5056 = vmul.f32 %v4278, %v4278
          %v5057 = vmul.f32 %v4279, %v4279
          %v5058 = vmul.f32 %v4280, %v4280
          %v5059 = vmul.f32 %v4281, %v4281
          %v5060 = vmul.f32 %v4282, %v4282
          %v5061 = vmul.f32 %v4283, %v4283
          %v5062 = vmul.f32 %v4284, %v4284
          %v5063 = vmul.f32 %v4285, %v4285
          %v5064 = vmul.f32 %v4286, %v4286
          %v5065 = vmul.f32 %v4287, %v4287
          %v5066 = vmul.f32 %v4288, %v4288
          %v5067 = vmul.f32 %v4289, %v4289
          %v5068 = vmul.f32 %v4290, %v4290
          %v5069 = vmul.f32 %v4291, %v4291
          %v5070 = vmul.f32 %v4292, %v4292
          %v5071 = vmul.f32 %v4293, %v4293
          %v5072 = vmul.f32 %v4294, %v4294
          %v5073 = vmul.f32 %v4295, %v4295
          %v5074 = vmul.f32 %v4296, %v4296
          %v5075 = vmul.f32 %v4297, %v4297
          %v5076 = vmul.f32 %v4298, %v4298
          %v5077 = vmul.f32 %v4299, %v4299
          %v5078 = vmul.f32 %v4300, %v4300
          %v5079 = vmul.f32 %v4301, %v4301
          %v5080 = vmul.f32 %v4302, %v4302
          %v5081 = vmul.f32 %v4303, %v4303
          %v5082 = vmul.f32 %v4304, %v4304
          %v5083 = vmul.f32 %v4305, %v4305
          %v5084 = vmul.f32 %v4306, %v4306
          %v5085 = vmul.f32 %v4307, %v4307
          %v5086 = vmul.f32 %v4308, %v4308
          %v5087 = vmul.f32 %v4309, %v4309
          %v5088 = vmul.f32 %v4310, %v4310
          %v5089 = vmul.f32 %v4311, %v4311
          %v5090 = vmul.f32 %v4312, %v4312
          %v5091 = vmul.f32 %v4313, %v4313
          %v5092 = vmul.f32 %v4314, %v4314
          %v5093 = vmul.f32 %v4315, %v4315
          %v5094 = vmul.f32 %v4316, %v4316
          %v5095 = vmul.f32 %v4317, %v4317
          %v5096 = vmul.f32 %v4318, %v4318
          %v5097 = vmul.f32 %v4319, %v4319
          %v5098 = vmul.f32 %v4320, %v4320
          %v5099 = vmul.f32 %v4321, %v4321
          %v5100 = vmul.f32 %v4322, %v4322
          %v5101 = vmul.f32 %v4323, %v4323
          %v5102 = vmul.f32 %v4324, %v4324
          %v5103 = vmul.f32 %v4325, %v4325
          %v5104 = vmul.f32 %v4326, %v4326
          %v5105 = vmul.f32 %v4327, %v4327
          %v5106 = vmul.f32 %v4328, %v4328
          %v5107 = vmul.f32 %v4329, %v4329
          %v5108 = vmul.f32 %v4330, %v4330
          %v5109 = vmul.f32 %v4331, %v4331
          %v5110 = vmul.f32 %v4332, %v4332
          %v5111 = vmul.f32 %v4333, %v4333
          %v5112 = vmul.f32 %v4334, %v4334
          %v5113 = vmul.f32 %v4335, %v4335
          %v5114 = vmul.f32 %v4336, %v4336
          %v5115 = vmul.f32 %v4337, %v4337
          %v5116 = vmul.f32 %v4338, %v4338
          %v5117 = vmul.f32 %v4339, %v4339
          %v5118 = vmul.f32 %v4340, %v4340
          %v5119 = vmul.f32 %v4341, %v4341
          %v5120 = vmul.f32 %v4342, %v4342
          %v5121 = vmul.f32 %v4343, %v4343
          %v5122 = vmul.f32 %v4344, %v4344
          %v5123 = vmul.f32 %v4345, %v4345
          %v5124 = vmul.f32 %v4346, %v4346
          %v5125 = vmul.f32 %v4347, %v4347
          %v5126 = vmul.f32 %v4348, %v4348
          %v5127 = vmul.f32 %v4349, %v4349
          %v5128 = vmul.f32 %v4350, %v4350
          %v5129 = vmul.f32 %v4351, %v4351
          %v5130 = vmul.f32 %v4352, %v4352
          %v5131 = vmul.f32 %v4353, %v4353
          %v5132 = vmul.f32 %v4354, %v4354
          %v5133 = vmul.f32 %v4355, %v4355
          %v5134 = vmul.f32 %v4356, %v4356
          %v5135 = vmul.f32 %v4357, %v4357
          %v5136 = vmul.f32 %v4358, %v4358
          %v5137 = vmul.f32 %v4359, %v4359
          %v5138 = vmul.f32 %v4360, %v4360
          %v5139 = vmul.f32 %v4361, %v4361
          %v5140 = vmul.f32 %v4362, %v4362
          %v5141 = vmul.f32 %v4363, %v4363
          %v5142 = vmul.f32 %v4364, %v4364
          %v5143 = vmul.f32 %v4365, %v4365
          %v5144 = vmul.f32 %v4366, %v4366
          %v5145 = vmul.f32 %v4367, %v4367
          %v5146 = vmul.f32 %v4368, %v4368
          %v5147 = vmul.f32 %v4369, %v4369
          %v5148 = vmul.f32 %v4370, %v4370
          %v5149 = vmul.f32 %v4371, %v4371
          %v5150 = vmul.f32 %v4372, %v4372
          %v5151 = vmul.f32 %v4373, %v4373
          %v5152 = vmul.f32 %v4374, %v4374
          %v5153 = vmul.f32 %v4375, %v4375
          %v5154 = vmul.f32 %v4376, %v4376
          %v5155 = vmul.f32 %v4377, %v4377
          %v5156 = vmul.f32 %v4378, %v4378
          %v5157 = vmul.f32 %v4379, %v4379
          %v5158 = vmul.f32 %v4380, %v4380
          %v5159 = vmul.f32 %v4381, %v4381
          %v5160 = vmul.f32 %v4382, %v4382
          %v5161 = vmul.f32 %v4383, %v4383
          %v5162 = vmul.f32 %v4384, %v4384
          %v5163 = vmul.f32 %v4385, %v4385
          %v5164 = vmul.f32 %v4386, %v4386
          %v5165 = vmul.f32 %v4387, %v4387
          %v5166 = vmul.f32 %v4388, %v4388
          %v5167 = vmul.f32 %v4389, %v4389
          %v5168 = vmul.f32 %v4390, %v4390
          %v5169 = vmul.f32 %v4391, %v4391
          %v5170 = vmul.f32 %v4392, %v4392
          %v5171 = vmul.f32 %v4393, %v4393
          %v5172 = vmul.f32 %v4394, %v4394
          %v5173 = vmul.f32 %v4395, %v4395
          %v5174 = vmul.f32 %v4396, %v4396
          %v5175 = vmul.f32 %v4397, %v4397
          %v5176 = vmul.f32 %v4398, %v4398
          %v5177 = vmul.f32 %v4399, %v4399
          %v5178 = vmul.f32 %v4400, %v4400
          %v5179 = vmul.f32 %v4401, %v4401
          %v5180 = vmul.f32 %v4402, %v4402
          %v5181 = vmul.f32 %v4403, %v4403
          %v5182 = vmul.f32 %v4404, %v4404
          %v5183 = vmul.f32 %v4405, %v4405
          %v5184 = vmul.f32 %v4406, %v4406
          %v5185 = vmul.f32 %v4407, %v4407
          %v5186 = vmul.f32 %v4408, %v4408
          %v5187 = vmul.f32 %v4409, %v4409
          %v5188 = vmul.f32 %v4410, %v4410
          %v5189 = vmul.f32 %v4411, %v4411
          %v5190 = vmul.f32 %v4412, %v4412
          %v5191 = vmul.f32 %v4413, %v4413
          %v5192 = vmul.f32 %v4414, %v4414
          %v5193 = vmul.f32 %v4415, %v4415
          %v5194 = vmul.f32 %v4416, %v4416
          %v5195 = vmul.f32 %v4417, %v4417
          %v5196 = vmul.f32 %v4418, %v4418
          %v5197 = vmul.f32 %v4419, %v4419
          %v5198 = vmul.f32 %v4420, %v4420
          %v5199 = vmul.f32 %v4421, %v4421
          %v5200 = vmul.f32 %v4422, %v4422
          %v5201 = vmul.f32 %v4423, %v4423
          %v5202 = vmul.f32 %v4424, %v4424
          %v5203 = vmul.f32 %v4425, %v4425
          %v5204 = vmul.f32 %v4426, %v4426
          %v5205 = vmul.f32 %v4427, %v4427
          %v5206 = vmul.f32 %v4428, %v4428
          %v5207 = vmul.f32 %v4429, %v4429
          %v5208 = vmul.f32 %v4430, %v4430
          %v5209 = vmul.f32 %v4431, %v4431
          %v5210 = vmul.f32 %v4432, %v4432
          %v5211 = vsel %vm520, %v4955, 0.0
          %v5212 = vsel %vm520, %v4956, 0.0
          %v5213 = vadd.f32 %v5211, %v5212
          %v5214 = vsel %vm520, %v4957, 0.0
          %v5215 = vadd.f32 %v5213, %v5214
          %v5216 = vsel %vm520, %v4958, 0.0
          %v5217 = vadd.f32 %v5215, %v5216
          %v5218 = vsel %vm520, %v4959, 0.0
          %v5219 = vadd.f32 %v5217, %v5218
          %v5220 = vsel %vm520, %v4960, 0.0
          %v5221 = vadd.f32 %v5219, %v5220
          %v5222 = vsel %vm520, %v4961, 0.0
          %v5223 = vadd.f32 %v5221, %v5222
          %v5224 = vsel %vm520, %v4962, 0.0
          %v5225 = vadd.f32 %v5223, %v5224
          %v5226 = vsel %vm520, %v4963, 0.0
          %v5227 = vadd.f32 %v5225, %v5226
          %v5228 = vsel %vm520, %v4964, 0.0
          %v5229 = vadd.f32 %v5227, %v5228
          %v5230 = vsel %vm520, %v4965, 0.0
          %v5231 = vadd.f32 %v5229, %v5230
          %v5232 = vsel %vm520, %v4966, 0.0
          %v5233 = vadd.f32 %v5231, %v5232
          %v5234 = vsel %vm520, %v4967, 0.0
          %v5235 = vadd.f32 %v5233, %v5234
          %v5236 = vsel %vm520, %v4968, 0.0
          %v5237 = vadd.f32 %v5235, %v5236
          %v5238 = vsel %vm520, %v4969, 0.0
          %v5239 = vadd.f32 %v5237, %v5238
          %v5240 = vsel %vm520, %v4970, 0.0
          %v5241 = vadd.f32 %v5239, %v5240
          %v5242 = vsel %vm520, %v4971, 0.0
          %v5243 = vadd.f32 %v5241, %v5242
          %v5244 = vsel %vm520, %v4972, 0.0
          %v5245 = vadd.f32 %v5243, %v5244
          %v5246 = vsel %vm520, %v4973, 0.0
          %v5247 = vadd.f32 %v5245, %v5246
          %v5248 = vsel %vm520, %v4974, 0.0
          %v5249 = vadd.f32 %v5247, %v5248
          %v5250 = vsel %vm520, %v4975, 0.0
          %v5251 = vadd.f32 %v5249, %v5250
          %v5252 = vsel %vm520, %v4976, 0.0
          %v5253 = vadd.f32 %v5251, %v5252
          %v5254 = vsel %vm520, %v4977, 0.0
          %v5255 = vadd.f32 %v5253, %v5254
          %v5256 = vsel %vm520, %v4978, 0.0
          %v5257 = vadd.f32 %v5255, %v5256
          %v5258 = vsel %vm520, %v4979, 0.0
          %v5259 = vadd.f32 %v5257, %v5258
          %v5260 = vsel %vm520, %v4980, 0.0
          %v5261 = vadd.f32 %v5259, %v5260
          %v5262 = vsel %vm520, %v4981, 0.0
          %v5263 = vadd.f32 %v5261, %v5262
          %v5264 = vsel %vm520, %v4982, 0.0
          %v5265 = vadd.f32 %v5263, %v5264
          %v5266 = vsel %vm520, %v4983, 0.0
          %v5267 = vadd.f32 %v5265, %v5266
          %v5268 = vsel %vm520, %v4984, 0.0
          %v5269 = vadd.f32 %v5267, %v5268
          %v5270 = vsel %vm520, %v4985, 0.0
          %v5271 = vadd.f32 %v5269, %v5270
          %v5272 = vsel %vm520, %v4986, 0.0
          %v5273 = vadd.f32 %v5271, %v5272
          %v5274 = vsel %vm520, %v4987, 0.0
          %v5275 = vadd.f32 %v5273, %v5274
          %v5276 = vsel %vm520, %v4988, 0.0
          %v5277 = vadd.f32 %v5275, %v5276
          %v5278 = vsel %vm520, %v4989, 0.0
          %v5279 = vadd.f32 %v5277, %v5278
          %v5280 = vsel %vm520, %v4990, 0.0
          %v5281 = vadd.f32 %v5279, %v5280
          %v5282 = vsel %vm520, %v4991, 0.0
          %v5283 = vadd.f32 %v5281, %v5282
          %v5284 = vsel %vm520, %v4992, 0.0
          %v5285 = vadd.f32 %v5283, %v5284
          %v5286 = vsel %vm520, %v4993, 0.0
          %v5287 = vadd.f32 %v5285, %v5286
          %v5288 = vsel %vm520, %v4994, 0.0
          %v5289 = vadd.f32 %v5287, %v5288
          %v5290 = vsel %vm520, %v4995, 0.0
          %v5291 = vadd.f32 %v5289, %v5290
          %v5292 = vsel %vm520, %v4996, 0.0
          %v5293 = vadd.f32 %v5291, %v5292
          %v5294 = vsel %vm520, %v4997, 0.0
          %v5295 = vadd.f32 %v5293, %v5294
          %v5296 = vsel %vm520, %v4998, 0.0
          %v5297 = vadd.f32 %v5295, %v5296
          %v5298 = vsel %vm520, %v4999, 0.0
          %v5299 = vadd.f32 %v5297, %v5298
          %v5300 = vsel %vm520, %v5000, 0.0
          %v5301 = vadd.f32 %v5299, %v5300
          %v5302 = vsel %vm520, %v5001, 0.0
          %v5303 = vadd.f32 %v5301, %v5302
          %v5304 = vsel %vm520, %v5002, 0.0
          %v5305 = vadd.f32 %v5303, %v5304
          %v5306 = vsel %vm520, %v5003, 0.0
          %v5307 = vadd.f32 %v5305, %v5306
          %v5308 = vsel %vm520, %v5004, 0.0
          %v5309 = vadd.f32 %v5307, %v5308
          %v5310 = vsel %vm520, %v5005, 0.0
          %v5311 = vadd.f32 %v5309, %v5310
          %v5312 = vsel %vm520, %v5006, 0.0
          %v5313 = vadd.f32 %v5311, %v5312
          %v5314 = vsel %vm520, %v5007, 0.0
          %v5315 = vadd.f32 %v5313, %v5314
          %v5316 = vsel %vm520, %v5008, 0.0
          %v5317 = vadd.f32 %v5315, %v5316
          %v5318 = vsel %vm520, %v5009, 0.0
          %v5319 = vadd.f32 %v5317, %v5318
          %v5320 = vsel %vm520, %v5010, 0.0
          %v5321 = vadd.f32 %v5319, %v5320
          %v5322 = vsel %vm520, %v5011, 0.0
          %v5323 = vadd.f32 %v5321, %v5322
          %v5324 = vsel %vm520, %v5012, 0.0
          %v5325 = vadd.f32 %v5323, %v5324
          %v5326 = vsel %vm520, %v5013, 0.0
          %v5327 = vadd.f32 %v5325, %v5326
          %v5328 = vsel %vm520, %v5014, 0.0
          %v5329 = vadd.f32 %v5327, %v5328
          %v5330 = vsel %vm520, %v5015, 0.0
          %v5331 = vadd.f32 %v5329, %v5330
          %v5332 = vsel %vm520, %v5016, 0.0
          %v5333 = vadd.f32 %v5331, %v5332
          %v5334 = vsel %vm520, %v5017, 0.0
          %v5335 = vadd.f32 %v5333, %v5334
          %v5336 = vsel %vm520, %v5018, 0.0
          %v5337 = vadd.f32 %v5335, %v5336
          %v5338 = vsel %vm520, %v5019, 0.0
          %v5339 = vadd.f32 %v5337, %v5338
          %v5340 = vsel %vm520, %v5020, 0.0
          %v5341 = vadd.f32 %v5339, %v5340
          %v5342 = vsel %vm520, %v5021, 0.0
          %v5343 = vadd.f32 %v5341, %v5342
          %v5344 = vsel %vm520, %v5022, 0.0
          %v5345 = vadd.f32 %v5343, %v5344
          %v5346 = vsel %vm520, %v5023, 0.0
          %v5347 = vadd.f32 %v5345, %v5346
          %v5348 = vsel %vm520, %v5024, 0.0
          %v5349 = vadd.f32 %v5347, %v5348
          %v5350 = vsel %vm520, %v5025, 0.0
          %v5351 = vadd.f32 %v5349, %v5350
          %v5352 = vsel %vm520, %v5026, 0.0
          %v5353 = vadd.f32 %v5351, %v5352
          %v5354 = vsel %vm520, %v5027, 0.0
          %v5355 = vadd.f32 %v5353, %v5354
          %v5356 = vsel %vm520, %v5028, 0.0
          %v5357 = vadd.f32 %v5355, %v5356
          %v5358 = vsel %vm520, %v5029, 0.0
          %v5359 = vadd.f32 %v5357, %v5358
          %v5360 = vsel %vm520, %v5030, 0.0
          %v5361 = vadd.f32 %v5359, %v5360
          %v5362 = vsel %vm520, %v5031, 0.0
          %v5363 = vadd.f32 %v5361, %v5362
          %v5364 = vsel %vm520, %v5032, 0.0
          %v5365 = vadd.f32 %v5363, %v5364
          %v5366 = vsel %vm520, %v5033, 0.0
          %v5367 = vadd.f32 %v5365, %v5366
          %v5368 = vsel %vm520, %v5034, 0.0
          %v5369 = vadd.f32 %v5367, %v5368
          %v5370 = vsel %vm520, %v5035, 0.0
          %v5371 = vadd.f32 %v5369, %v5370
          %v5372 = vsel %vm520, %v5036, 0.0
          %v5373 = vadd.f32 %v5371, %v5372
          %v5374 = vsel %vm520, %v5037, 0.0
          %v5375 = vadd.f32 %v5373, %v5374
          %v5376 = vsel %vm520, %v5038, 0.0
          %v5377 = vadd.f32 %v5375, %v5376
          %v5378 = vsel %vm520, %v5039, 0.0
          %v5379 = vadd.f32 %v5377, %v5378
          %v5380 = vsel %vm520, %v5040, 0.0
          %v5381 = vadd.f32 %v5379, %v5380
          %v5382 = vsel %vm520, %v5041, 0.0
          %v5383 = vadd.f32 %v5381, %v5382
          %v5384 = vsel %vm520, %v5042, 0.0
          %v5385 = vadd.f32 %v5383, %v5384
          %v5386 = vsel %vm520, %v5043, 0.0
          %v5387 = vadd.f32 %v5385, %v5386
          %v5388 = vsel %vm520, %v5044, 0.0
          %v5389 = vadd.f32 %v5387, %v5388
          %v5390 = vsel %vm520, %v5045, 0.0
          %v5391 = vadd.f32 %v5389, %v5390
          %v5392 = vsel %vm520, %v5046, 0.0
          %v5393 = vadd.f32 %v5391, %v5392
          %v5394 = vsel %vm520, %v5047, 0.0
          %v5395 = vadd.f32 %v5393, %v5394
          %v5396 = vsel %vm520, %v5048, 0.0
          %v5397 = vadd.f32 %v5395, %v5396
          %v5398 = vsel %vm520, %v5049, 0.0
          %v5399 = vadd.f32 %v5397, %v5398
          %v5400 = vsel %vm520, %v5050, 0.0
          %v5401 = vadd.f32 %v5399, %v5400
          %v5402 = vsel %vm520, %v5051, 0.0
          %v5403 = vadd.f32 %v5401, %v5402
          %v5404 = vsel %vm520, %v5052, 0.0
          %v5405 = vadd.f32 %v5403, %v5404
          %v5406 = vsel %vm520, %v5053, 0.0
          %v5407 = vadd.f32 %v5405, %v5406
          %v5408 = vsel %vm520, %v5054, 0.0
          %v5409 = vadd.f32 %v5407, %v5408
          %v5410 = vsel %vm520, %v5055, 0.0
          %v5411 = vadd.f32 %v5409, %v5410
          %v5412 = vsel %vm520, %v5056, 0.0
          %v5413 = vadd.f32 %v5411, %v5412
          %v5414 = vsel %vm520, %v5057, 0.0
          %v5415 = vadd.f32 %v5413, %v5414
          %v5416 = vsel %vm520, %v5058, 0.0
          %v5417 = vadd.f32 %v5415, %v5416
          %v5418 = vsel %vm520, %v5059, 0.0
          %v5419 = vadd.f32 %v5417, %v5418
          %v5420 = vsel %vm520, %v5060, 0.0
          %v5421 = vadd.f32 %v5419, %v5420
          %v5422 = vsel %vm520, %v5061, 0.0
          %v5423 = vadd.f32 %v5421, %v5422
          %v5424 = vsel %vm520, %v5062, 0.0
          %v5425 = vadd.f32 %v5423, %v5424
          %v5426 = vsel %vm520, %v5063, 0.0
          %v5427 = vadd.f32 %v5425, %v5426
          %v5428 = vsel %vm520, %v5064, 0.0
          %v5429 = vadd.f32 %v5427, %v5428
          %v5430 = vsel %vm520, %v5065, 0.0
          %v5431 = vadd.f32 %v5429, %v5430
          %v5432 = vsel %vm520, %v5066, 0.0
          %v5433 = vadd.f32 %v5431, %v5432
          %v5434 = vsel %vm520, %v5067, 0.0
          %v5435 = vadd.f32 %v5433, %v5434
          %v5436 = vsel %vm520, %v5068, 0.0
          %v5437 = vadd.f32 %v5435, %v5436
          %v5438 = vsel %vm520, %v5069, 0.0
          %v5439 = vadd.f32 %v5437, %v5438
          %v5440 = vsel %vm520, %v5070, 0.0
          %v5441 = vadd.f32 %v5439, %v5440
          %v5442 = vsel %vm520, %v5071, 0.0
          %v5443 = vadd.f32 %v5441, %v5442
          %v5444 = vsel %vm520, %v5072, 0.0
          %v5445 = vadd.f32 %v5443, %v5444
          %v5446 = vsel %vm520, %v5073, 0.0
          %v5447 = vadd.f32 %v5445, %v5446
          %v5448 = vsel %vm520, %v5074, 0.0
          %v5449 = vadd.f32 %v5447, %v5448
          %v5450 = vsel %vm520, %v5075, 0.0
          %v5451 = vadd.f32 %v5449, %v5450
          %v5452 = vsel %vm520, %v5076, 0.0
          %v5453 = vadd.f32 %v5451, %v5452
          %v5454 = vsel %vm520, %v5077, 0.0
          %v5455 = vadd.f32 %v5453, %v5454
          %v5456 = vsel %vm520, %v5078, 0.0
          %v5457 = vadd.f32 %v5455, %v5456
          %v5458 = vsel %vm520, %v5079, 0.0
          %v5459 = vadd.f32 %v5457, %v5458
          %v5460 = vsel %vm520, %v5080, 0.0
          %v5461 = vadd.f32 %v5459, %v5460
          %v5462 = vsel %vm520, %v5081, 0.0
          %v5463 = vadd.f32 %v5461, %v5462
          %v5464 = vsel %vm520, %v5082, 0.0
          %v5465 = vadd.f32 %v5463, %v5464
          %v5466 = vsel %vm520, %v5083, 0.0
          %v5467 = vadd.f32 %v5465, %v5466
          %v5468 = vsel %vm520, %v5084, 0.0
          %v5469 = vadd.f32 %v5467, %v5468
          %v5470 = vsel %vm520, %v5085, 0.0
          %v5471 = vadd.f32 %v5469, %v5470
          %v5472 = vsel %vm520, %v5086, 0.0
          %v5473 = vadd.f32 %v5471, %v5472
          %v5474 = vsel %vm520, %v5087, 0.0
          %v5475 = vadd.f32 %v5473, %v5474
          %v5476 = vsel %vm520, %v5088, 0.0
          %v5477 = vadd.f32 %v5475, %v5476
          %v5478 = vsel %vm520, %v5089, 0.0
          %v5479 = vadd.f32 %v5477, %v5478
          %v5480 = vsel %vm520, %v5090, 0.0
          %v5481 = vadd.f32 %v5479, %v5480
          %v5482 = vsel %vm520, %v5091, 0.0
          %v5483 = vadd.f32 %v5481, %v5482
          %v5484 = vsel %vm520, %v5092, 0.0
          %v5485 = vadd.f32 %v5483, %v5484
          %v5486 = vsel %vm520, %v5093, 0.0
          %v5487 = vadd.f32 %v5485, %v5486
          %v5488 = vsel %vm520, %v5094, 0.0
          %v5489 = vadd.f32 %v5487, %v5488
          %v5490 = vsel %vm520, %v5095, 0.0
          %v5491 = vadd.f32 %v5489, %v5490
          %v5492 = vsel %vm520, %v5096, 0.0
          %v5493 = vadd.f32 %v5491, %v5492
          %v5494 = vsel %vm520, %v5097, 0.0
          %v5495 = vadd.f32 %v5493, %v5494
          %v5496 = vsel %vm520, %v5098, 0.0
          %v5497 = vadd.f32 %v5495, %v5496
          %v5498 = vsel %vm520, %v5099, 0.0
          %v5499 = vadd.f32 %v5497, %v5498
          %v5500 = vsel %vm520, %v5100, 0.0
          %v5501 = vadd.f32 %v5499, %v5500
          %v5502 = vsel %vm520, %v5101, 0.0
          %v5503 = vadd.f32 %v5501, %v5502
          %v5504 = vsel %vm520, %v5102, 0.0
          %v5505 = vadd.f32 %v5503, %v5504
          %v5506 = vsel %vm520, %v5103, 0.0
          %v5507 = vadd.f32 %v5505, %v5506
          %v5508 = vsel %vm520, %v5104, 0.0
          %v5509 = vadd.f32 %v5507, %v5508
          %v5510 = vsel %vm520, %v5105, 0.0
          %v5511 = vadd.f32 %v5509, %v5510
          %v5512 = vsel %vm520, %v5106, 0.0
          %v5513 = vadd.f32 %v5511, %v5512
          %v5514 = vsel %vm520, %v5107, 0.0
          %v5515 = vadd.f32 %v5513, %v5514
          %v5516 = vsel %vm520, %v5108, 0.0
          %v5517 = vadd.f32 %v5515, %v5516
          %v5518 = vsel %vm520, %v5109, 0.0
          %v5519 = vadd.f32 %v5517, %v5518
          %v5520 = vsel %vm520, %v5110, 0.0
          %v5521 = vadd.f32 %v5519, %v5520
          %v5522 = vsel %vm520, %v5111, 0.0
          %v5523 = vadd.f32 %v5521, %v5522
          %v5524 = vsel %vm520, %v5112, 0.0
          %v5525 = vadd.f32 %v5523, %v5524
          %v5526 = vsel %vm520, %v5113, 0.0
          %v5527 = vadd.f32 %v5525, %v5526
          %v5528 = vsel %vm520, %v5114, 0.0
          %v5529 = vadd.f32 %v5527, %v5528
          %v5530 = vsel %vm520, %v5115, 0.0
          %v5531 = vadd.f32 %v5529, %v5530
          %v5532 = vsel %vm520, %v5116, 0.0
          %v5533 = vadd.f32 %v5531, %v5532
          %v5534 = vsel %vm520, %v5117, 0.0
          %v5535 = vadd.f32 %v5533, %v5534
          %v5536 = vsel %vm520, %v5118, 0.0
          %v5537 = vadd.f32 %v5535, %v5536
          %v5538 = vsel %vm520, %v5119, 0.0
          %v5539 = vadd.f32 %v5537, %v5538
          %v5540 = vsel %vm520, %v5120, 0.0
          %v5541 = vadd.f32 %v5539, %v5540
          %v5542 = vsel %vm520, %v5121, 0.0
          %v5543 = vadd.f32 %v5541, %v5542
          %v5544 = vsel %vm520, %v5122, 0.0
          %v5545 = vadd.f32 %v5543, %v5544
          %v5546 = vsel %vm520, %v5123, 0.0
          %v5547 = vadd.f32 %v5545, %v5546
          %v5548 = vsel %vm520, %v5124, 0.0
          %v5549 = vadd.f32 %v5547, %v5548
          %v5550 = vsel %vm520, %v5125, 0.0
          %v5551 = vadd.f32 %v5549, %v5550
          %v5552 = vsel %vm520, %v5126, 0.0
          %v5553 = vadd.f32 %v5551, %v5552
          %v5554 = vsel %vm520, %v5127, 0.0
          %v5555 = vadd.f32 %v5553, %v5554
          %v5556 = vsel %vm520, %v5128, 0.0
          %v5557 = vadd.f32 %v5555, %v5556
          %v5558 = vsel %vm520, %v5129, 0.0
          %v5559 = vadd.f32 %v5557, %v5558
          %v5560 = vsel %vm520, %v5130, 0.0
          %v5561 = vadd.f32 %v5559, %v5560
          %v5562 = vsel %vm520, %v5131, 0.0
          %v5563 = vadd.f32 %v5561, %v5562
          %v5564 = vsel %vm520, %v5132, 0.0
          %v5565 = vadd.f32 %v5563, %v5564
          %v5566 = vsel %vm520, %v5133, 0.0
          %v5567 = vadd.f32 %v5565, %v5566
          %v5568 = vsel %vm520, %v5134, 0.0
          %v5569 = vadd.f32 %v5567, %v5568
          %v5570 = vsel %vm520, %v5135, 0.0
          %v5571 = vadd.f32 %v5569, %v5570
          %v5572 = vsel %vm520, %v5136, 0.0
          %v5573 = vadd.f32 %v5571, %v5572
          %v5574 = vsel %vm520, %v5137, 0.0
          %v5575 = vadd.f32 %v5573, %v5574
          %v5576 = vsel %vm520, %v5138, 0.0
          %v5577 = vadd.f32 %v5575, %v5576
          %v5578 = vsel %vm520, %v5139, 0.0
          %v5579 = vadd.f32 %v5577, %v5578
          %v5580 = vsel %vm520, %v5140, 0.0
          %v5581 = vadd.f32 %v5579, %v5580
          %v5582 = vsel %vm520, %v5141, 0.0
          %v5583 = vadd.f32 %v5581, %v5582
          %v5584 = vsel %vm520, %v5142, 0.0
          %v5585 = vadd.f32 %v5583, %v5584
          %v5586 = vsel %vm520, %v5143, 0.0
          %v5587 = vadd.f32 %v5585, %v5586
          %v5588 = vsel %vm520, %v5144, 0.0
          %v5589 = vadd.f32 %v5587, %v5588
          %v5590 = vsel %vm520, %v5145, 0.0
          %v5591 = vadd.f32 %v5589, %v5590
          %v5592 = vsel %vm520, %v5146, 0.0
          %v5593 = vadd.f32 %v5591, %v5592
          %v5594 = vsel %vm520, %v5147, 0.0
          %v5595 = vadd.f32 %v5593, %v5594
          %v5596 = vsel %vm520, %v5148, 0.0
          %v5597 = vadd.f32 %v5595, %v5596
          %v5598 = vsel %vm520, %v5149, 0.0
          %v5599 = vadd.f32 %v5597, %v5598
          %v5600 = vsel %vm520, %v5150, 0.0
          %v5601 = vadd.f32 %v5599, %v5600
          %v5602 = vsel %vm520, %v5151, 0.0
          %v5603 = vadd.f32 %v5601, %v5602
          %v5604 = vsel %vm520, %v5152, 0.0
          %v5605 = vadd.f32 %v5603, %v5604
          %v5606 = vsel %vm520, %v5153, 0.0
          %v5607 = vadd.f32 %v5605, %v5606
          %v5608 = vsel %vm520, %v5154, 0.0
          %v5609 = vadd.f32 %v5607, %v5608
          %v5610 = vsel %vm520, %v5155, 0.0
          %v5611 = vadd.f32 %v5609, %v5610
          %v5612 = vsel %vm520, %v5156, 0.0
          %v5613 = vadd.f32 %v5611, %v5612
          %v5614 = vsel %vm520, %v5157, 0.0
          %v5615 = vadd.f32 %v5613, %v5614
          %v5616 = vsel %vm520, %v5158, 0.0
          %v5617 = vadd.f32 %v5615, %v5616
          %v5618 = vsel %vm520, %v5159, 0.0
          %v5619 = vadd.f32 %v5617, %v5618
          %v5620 = vsel %vm520, %v5160, 0.0
          %v5621 = vadd.f32 %v5619, %v5620
          %v5622 = vsel %vm520, %v5161, 0.0
          %v5623 = vadd.f32 %v5621, %v5622
          %v5624 = vsel %vm520, %v5162, 0.0
          %v5625 = vadd.f32 %v5623, %v5624
          %v5626 = vsel %vm520, %v5163, 0.0
          %v5627 = vadd.f32 %v5625, %v5626
          %v5628 = vsel %vm520, %v5164, 0.0
          %v5629 = vadd.f32 %v5627, %v5628
          %v5630 = vsel %vm520, %v5165, 0.0
          %v5631 = vadd.f32 %v5629, %v5630
          %v5632 = vsel %vm520, %v5166, 0.0
          %v5633 = vadd.f32 %v5631, %v5632
          %v5634 = vsel %vm520, %v5167, 0.0
          %v5635 = vadd.f32 %v5633, %v5634
          %v5636 = vsel %vm520, %v5168, 0.0
          %v5637 = vadd.f32 %v5635, %v5636
          %v5638 = vsel %vm520, %v5169, 0.0
          %v5639 = vadd.f32 %v5637, %v5638
          %v5640 = vsel %vm520, %v5170, 0.0
          %v5641 = vadd.f32 %v5639, %v5640
          %v5642 = vsel %vm520, %v5171, 0.0
          %v5643 = vadd.f32 %v5641, %v5642
          %v5644 = vsel %vm520, %v5172, 0.0
          %v5645 = vadd.f32 %v5643, %v5644
          %v5646 = vsel %vm520, %v5173, 0.0
          %v5647 = vadd.f32 %v5645, %v5646
          %v5648 = vsel %vm520, %v5174, 0.0
          %v5649 = vadd.f32 %v5647, %v5648
          %v5650 = vsel %vm520, %v5175, 0.0
          %v5651 = vadd.f32 %v5649, %v5650
          %v5652 = vsel %vm520, %v5176, 0.0
          %v5653 = vadd.f32 %v5651, %v5652
          %v5654 = vsel %vm520, %v5177, 0.0
          %v5655 = vadd.f32 %v5653, %v5654
          %v5656 = vsel %vm520, %v5178, 0.0
          %v5657 = vadd.f32 %v5655, %v5656
          %v5658 = vsel %vm520, %v5179, 0.0
          %v5659 = vadd.f32 %v5657, %v5658
          %v5660 = vsel %vm520, %v5180, 0.0
          %v5661 = vadd.f32 %v5659, %v5660
          %v5662 = vsel %vm520, %v5181, 0.0
          %v5663 = vadd.f32 %v5661, %v5662
          %v5664 = vsel %vm520, %v5182, 0.0
          %v5665 = vadd.f32 %v5663, %v5664
          %v5666 = vsel %vm520, %v5183, 0.0
          %v5667 = vadd.f32 %v5665, %v5666
          %v5668 = vsel %vm520, %v5184, 0.0
          %v5669 = vadd.f32 %v5667, %v5668
          %v5670 = vsel %vm520, %v5185, 0.0
          %v5671 = vadd.f32 %v5669, %v5670
          %v5672 = vsel %vm520, %v5186, 0.0
          %v5673 = vadd.f32 %v5671, %v5672
          %v5674 = vsel %vm520, %v5187, 0.0
          %v5675 = vadd.f32 %v5673, %v5674
          %v5676 = vsel %vm520, %v5188, 0.0
          %v5677 = vadd.f32 %v5675, %v5676
          %v5678 = vsel %vm520, %v5189, 0.0
          %v5679 = vadd.f32 %v5677, %v5678
          %v5680 = vsel %vm520, %v5190, 0.0
          %v5681 = vadd.f32 %v5679, %v5680
          %v5682 = vsel %vm520, %v5191, 0.0
          %v5683 = vadd.f32 %v5681, %v5682
          %v5684 = vsel %vm520, %v5192, 0.0
          %v5685 = vadd.f32 %v5683, %v5684
          %v5686 = vsel %vm520, %v5193, 0.0
          %v5687 = vadd.f32 %v5685, %v5686
          %v5688 = vsel %vm520, %v5194, 0.0
          %v5689 = vadd.f32 %v5687, %v5688
          %v5690 = vsel %vm520, %v5195, 0.0
          %v5691 = vadd.f32 %v5689, %v5690
          %v5692 = vsel %vm520, %v5196, 0.0
          %v5693 = vadd.f32 %v5691, %v5692
          %v5694 = vsel %vm520, %v5197, 0.0
          %v5695 = vadd.f32 %v5693, %v5694
          %v5696 = vsel %vm520, %v5198, 0.0
          %v5697 = vadd.f32 %v5695, %v5696
          %v5698 = vsel %vm520, %v5199, 0.0
          %v5699 = vadd.f32 %v5697, %v5698
          %v5700 = vsel %vm520, %v5200, 0.0
          %v5701 = vadd.f32 %v5699, %v5700
          %v5702 = vsel %vm520, %v5201, 0.0
          %v5703 = vadd.f32 %v5701, %v5702
          %v5704 = vsel %vm520, %v5202, 0.0
          %v5705 = vadd.f32 %v5703, %v5704
          %v5706 = vsel %vm520, %v5203, 0.0
          %v5707 = vadd.f32 %v5705, %v5706
          %v5708 = vsel %vm520, %v5204, 0.0
          %v5709 = vadd.f32 %v5707, %v5708
          %v5710 = vsel %vm520, %v5205, 0.0
          %v5711 = vadd.f32 %v5709, %v5710
          %v5712 = vsel %vm520, %v5206, 0.0
          %v5713 = vadd.f32 %v5711, %v5712
          %v5714 = vsel %vm520, %v5207, 0.0
          %v5715 = vadd.f32 %v5713, %v5714
          %v5716 = vsel %vm520, %v5208, 0.0
          %v5717 = vadd.f32 %v5715, %v5716
          %v5718 = vsel %vm520, %v5209, 0.0
          %v5719 = vadd.f32 %v5717, %v5718
          %v5720 = vsel %vm520, %v5210, 0.0
          %v5721 = vadd.f32 %v5719, %v5720
          %v5722 = vrot.slane %v5721, 4
          %v5723 = vadd.f32 %v5721, %v5722
          %v5724 = vrot.slane %v5723, 2
          %v5725 = vadd.f32 %v5723, %v5724
          %v5726 = vrot.slane %v5725, 1
          %v5727 = vadd.f32 %v5725, %v5726
          %v5728 = vadd.f32 %v4954, %v5727
          %5729 = vst.msk [vmem:[#allocation3] sm:$0x1] %vm4952, %v5728
          %s5730 = scalar_lea.vmem [#allocation6], %s2894
          %5731 = vst.msk [vmem:[%s5730] sm:$0xff] %vm520, %v2638
          %5732 = vst.msk [vmem:[%s5730 + $0x8] sm:$0xff] %vm520, %v2639
          %5733 = vst.msk [vmem:[%s5730 + $0x10] sm:$0xff] %vm520, %v2640
          %5734 = vst.msk [vmem:[%s5730 + $0x18] sm:$0xff] %vm520, %v2641
          %5735 = vst.msk [vmem:[%s5730 + $0x20] sm:$0xff] %vm520, %v2642
          %5736 = vst.msk [vmem:[%s5730 + $0x28] sm:$0xff] %vm520, %v2643
          %5737 = vst.msk [vmem:[%s5730 + $0x30] sm:$0xff] %vm520, %v2644
          %5738 = vst.msk [vmem:[%s5730 + $0x38] sm:$0xff] %vm520, %v2645
          %5739 = vst.msk [vmem:[%s5730 + $0x40] sm:$0xff] %vm520, %v2646
          %5740 = vst.msk [vmem:[%s5730 + $0x48] sm:$0xff] %vm520, %v2647
          %5741 = vst.msk [vmem:[%s5730 + $0x50] sm:$0xff] %vm520, %v2648
          %5742 = vst.msk [vmem:[%s5730 + $0x58] sm:$0xff] %vm520, %v2649
          %5743 = vst.msk [vmem:[%s5730 + $0x60] sm:$0xff] %vm520, %v2650
          %5744 = vst.msk [vmem:[%s5730 + $0x68] sm:$0xff] %vm520, %v2651
          %5745 = vst.msk [vmem:[%s5730 + $0x70] sm:$0xff] %vm520, %v2652
          %5746 = vst.msk [vmem:[%s5730 + $0x78] sm:$0xff] %vm520, %v2653
          %5747 = vst.msk [vmem:[%s5730 + $0x80] sm:$0xff] %vm520, %v2654
          %5748 = vst.msk [vmem:[%s5730 + $0x88] sm:$0xff] %vm520, %v2655
          %5749 = vst.msk [vmem:[%s5730 + $0x90] sm:$0xff] %vm520, %v2656
          %5750 = vst.msk [vmem:[%s5730 + $0x98] sm:$0xff] %vm520, %v2657
          %5751 = vst.msk [vmem:[%s5730 + $0xa0] sm:$0xff] %vm520, %v2658
          %5752 = vst.msk [vmem:[%s5730 + $0xa8] sm:$0xff] %vm520, %v2659
          %5753 = vst.msk [vmem:[%s5730 + $0xb0] sm:$0xff] %vm520, %v2660
          %5754 = vst.msk [vmem:[%s5730 + $0xb8] sm:$0xff] %vm520, %v2661
          %5755 = vst.msk [vmem:[%s5730 + $0xc0] sm:$0xff] %vm520, %v2662
          %5756 = vst.msk [vmem:[%s5730 + $0xc8] sm:$0xff] %vm520, %v2663
          %5757 = vst.msk [vmem:[%s5730 + $0xd0] sm:$0xff] %vm520, %v2664
          %5758 = vst.msk [vmem:[%s5730 + $0xd8] sm:$0xff] %vm520, %v2665
          %5759 = vst.msk [vmem:[%s5730 + $0xe0] sm:$0xff] %vm520, %v2666
          %5760 = vst.msk [vmem:[%s5730 + $0xe8] sm:$0xff] %vm520, %v2667
          %5761 = vst.msk [vmem:[%s5730 + $0xf0] sm:$0xff] %vm520, %v2668
          %5762 = vst.msk [vmem:[%s5730 + $0xf8] sm:$0xff] %vm520, %v2669
          %5763 = vst.msk [vmem:[%s5730 + $0x100] sm:$0xff] %vm520, %v2670
          %5764 = vst.msk [vmem:[%s5730 + $0x108] sm:$0xff] %vm520, %v2671
          %5765 = vst.msk [vmem:[%s5730 + $0x110] sm:$0xff] %vm520, %v2672
          %5766 = vst.msk [vmem:[%s5730 + $0x118] sm:$0xff] %vm520, %v2673
          %5767 = vst.msk [vmem:[%s5730 + $0x120] sm:$0xff] %vm520, %v2674
          %5768 = vst.msk [vmem:[%s5730 + $0x128] sm:$0xff] %vm520, %v2675
          %5769 = vst.msk [vmem:[%s5730 + $0x130] sm:$0xff] %vm520, %v2676
          %5770 = vst.msk [vmem:[%s5730 + $0x138] sm:$0xff] %vm520, %v2677
          %5771 = vst.msk [vmem:[%s5730 + $0x140] sm:$0xff] %vm520, %v2678
          %5772 = vst.msk [vmem:[%s5730 + $0x148] sm:$0xff] %vm520, %v2679
          %5773 = vst.msk [vmem:[%s5730 + $0x150] sm:$0xff] %vm520, %v2680
          %5774 = vst.msk [vmem:[%s5730 + $0x158] sm:$0xff] %vm520, %v2681
          %5775 = vst.msk [vmem:[%s5730 + $0x160] sm:$0xff] %vm520, %v2682
          %5776 = vst.msk [vmem:[%s5730 + $0x168] sm:$0xff] %vm520, %v2683
          %5777 = vst.msk [vmem:[%s5730 + $0x170] sm:$0xff] %vm520, %v2684
          %5778 = vst.msk [vmem:[%s5730 + $0x178] sm:$0xff] %vm520, %v2685
          %5779 = vst.msk [vmem:[%s5730 + $0x180] sm:$0xff] %vm520, %v2686
          %5780 = vst.msk [vmem:[%s5730 + $0x188] sm:$0xff] %vm520, %v2687
          %5781 = vst.msk [vmem:[%s5730 + $0x190] sm:$0xff] %vm520, %v2688
          %5782 = vst.msk [vmem:[%s5730 + $0x198] sm:$0xff] %vm520, %v2689
          %5783 = vst.msk [vmem:[%s5730 + $0x1a0] sm:$0xff] %vm520, %v2690
          %5784 = vst.msk [vmem:[%s5730 + $0x1a8] sm:$0xff] %vm520, %v2691
          %5785 = vst.msk [vmem:[%s5730 + $0x1b0] sm:$0xff] %vm520, %v2692
          %5786 = vst.msk [vmem:[%s5730 + $0x1b8] sm:$0xff] %vm520, %v2693
          %5787 = vst.msk [vmem:[%s5730 + $0x1c0] sm:$0xff] %vm520, %v2694
          %5788 = vst.msk [vmem:[%s5730 + $0x1c8] sm:$0xff] %vm520, %v2695
          %5789 = vst.msk [vmem:[%s5730 + $0x1d0] sm:$0xff] %vm520, %v2696
          %5790 = vst.msk [vmem:[%s5730 + $0x1d8] sm:$0xff] %vm520, %v2697
          %5791 = vst.msk [vmem:[%s5730 + $0x1e0] sm:$0xff] %vm520, %v2698
          %5792 = vst.msk [vmem:[%s5730 + $0x1e8] sm:$0xff] %vm520, %v2699
          %5793 = vst.msk [vmem:[%s5730 + $0x1f0] sm:$0xff] %vm520, %v2700
          %5794 = vst.msk [vmem:[%s5730 + $0x1f8] sm:$0xff] %vm520, %v2701
          %5795 = vst.msk [vmem:[%s5730 + $0x200] sm:$0xff] %vm520, %v2702
          %5796 = vst.msk [vmem:[%s5730 + $0x208] sm:$0xff] %vm520, %v2703
          %5797 = vst.msk [vmem:[%s5730 + $0x210] sm:$0xff] %vm520, %v2704
          %5798 = vst.msk [vmem:[%s5730 + $0x218] sm:$0xff] %vm520, %v2705
          %5799 = vst.msk [vmem:[%s5730 + $0x220] sm:$0xff] %vm520, %v2706
          %5800 = vst.msk [vmem:[%s5730 + $0x228] sm:$0xff] %vm520, %v2707
          %5801 = vst.msk [vmem:[%s5730 + $0x230] sm:$0xff] %vm520, %v2708
          %5802 = vst.msk [vmem:[%s5730 + $0x238] sm:$0xff] %vm520, %v2709
          %5803 = vst.msk [vmem:[%s5730 + $0x240] sm:$0xff] %vm520, %v2710
          %5804 = vst.msk [vmem:[%s5730 + $0x248] sm:$0xff] %vm520, %v2711
          %5805 = vst.msk [vmem:[%s5730 + $0x250] sm:$0xff] %vm520, %v2712
          %5806 = vst.msk [vmem:[%s5730 + $0x258] sm:$0xff] %vm520, %v2713
          %5807 = vst.msk [vmem:[%s5730 + $0x260] sm:$0xff] %vm520, %v2714
          %5808 = vst.msk [vmem:[%s5730 + $0x268] sm:$0xff] %vm520, %v2715
          %5809 = vst.msk [vmem:[%s5730 + $0x270] sm:$0xff] %vm520, %v2716
          %5810 = vst.msk [vmem:[%s5730 + $0x278] sm:$0xff] %vm520, %v2717
          %5811 = vst.msk [vmem:[%s5730 + $0x280] sm:$0xff] %vm520, %v2718
          %5812 = vst.msk [vmem:[%s5730 + $0x288] sm:$0xff] %vm520, %v2719
          %5813 = vst.msk [vmem:[%s5730 + $0x290] sm:$0xff] %vm520, %v2720
          %5814 = vst.msk [vmem:[%s5730 + $0x298] sm:$0xff] %vm520, %v2721
          %5815 = vst.msk [vmem:[%s5730 + $0x2a0] sm:$0xff] %vm520, %v2722
          %5816 = vst.msk [vmem:[%s5730 + $0x2a8] sm:$0xff] %vm520, %v2723
          %5817 = vst.msk [vmem:[%s5730 + $0x2b0] sm:$0xff] %vm520, %v2724
          %5818 = vst.msk [vmem:[%s5730 + $0x2b8] sm:$0xff] %vm520, %v2725
          %5819 = vst.msk [vmem:[%s5730 + $0x2c0] sm:$0xff] %vm520, %v2726
          %5820 = vst.msk [vmem:[%s5730 + $0x2c8] sm:$0xff] %vm520, %v2727
          %5821 = vst.msk [vmem:[%s5730 + $0x2d0] sm:$0xff] %vm520, %v2728
          %5822 = vst.msk [vmem:[%s5730 + $0x2d8] sm:$0xff] %vm520, %v2729
          %5823 = vst.msk [vmem:[%s5730 + $0x2e0] sm:$0xff] %vm520, %v2730
          %5824 = vst.msk [vmem:[%s5730 + $0x2e8] sm:$0xff] %vm520, %v2731
          %5825 = vst.msk [vmem:[%s5730 + $0x2f0] sm:$0xff] %vm520, %v2732
          %5826 = vst.msk [vmem:[%s5730 + $0x2f8] sm:$0xff] %vm520, %v2733
          %5827 = vst.msk [vmem:[%s5730 + $0x300] sm:$0xff] %vm520, %v2734
          %5828 = vst.msk [vmem:[%s5730 + $0x308] sm:$0xff] %vm520, %v2735
          %5829 = vst.msk [vmem:[%s5730 + $0x310] sm:$0xff] %vm520, %v2736
          %5830 = vst.msk [vmem:[%s5730 + $0x318] sm:$0xff] %vm520, %v2737
          %5831 = vst.msk [vmem:[%s5730 + $0x320] sm:$0xff] %vm520, %v2738
          %5832 = vst.msk [vmem:[%s5730 + $0x328] sm:$0xff] %vm520, %v2739
          %5833 = vst.msk [vmem:[%s5730 + $0x330] sm:$0xff] %vm520, %v2740
          %5834 = vst.msk [vmem:[%s5730 + $0x338] sm:$0xff] %vm520, %v2741
          %5835 = vst.msk [vmem:[%s5730 + $0x340] sm:$0xff] %vm520, %v2742
          %5836 = vst.msk [vmem:[%s5730 + $0x348] sm:$0xff] %vm520, %v2743
          %5837 = vst.msk [vmem:[%s5730 + $0x350] sm:$0xff] %vm520, %v2744
          %5838 = vst.msk [vmem:[%s5730 + $0x358] sm:$0xff] %vm520, %v2745
          %5839 = vst.msk [vmem:[%s5730 + $0x360] sm:$0xff] %vm520, %v2746
          %5840 = vst.msk [vmem:[%s5730 + $0x368] sm:$0xff] %vm520, %v2747
          %5841 = vst.msk [vmem:[%s5730 + $0x370] sm:$0xff] %vm520, %v2748
          %5842 = vst.msk [vmem:[%s5730 + $0x378] sm:$0xff] %vm520, %v2749
          %5843 = vst.msk [vmem:[%s5730 + $0x380] sm:$0xff] %vm520, %v2750
          %5844 = vst.msk [vmem:[%s5730 + $0x388] sm:$0xff] %vm520, %v2751
          %5845 = vst.msk [vmem:[%s5730 + $0x390] sm:$0xff] %vm520, %v2752
          %5846 = vst.msk [vmem:[%s5730 + $0x398] sm:$0xff] %vm520, %v2753
          %5847 = vst.msk [vmem:[%s5730 + $0x3a0] sm:$0xff] %vm520, %v2754
          %5848 = vst.msk [vmem:[%s5730 + $0x3a8] sm:$0xff] %vm520, %v2755
          %5849 = vst.msk [vmem:[%s5730 + $0x3b0] sm:$0xff] %vm520, %v2756
          %5850 = vst.msk [vmem:[%s5730 + $0x3b8] sm:$0xff] %vm520, %v2757
          %5851 = vst.msk [vmem:[%s5730 + $0x3c0] sm:$0xff] %vm520, %v2758
          %5852 = vst.msk [vmem:[%s5730 + $0x3c8] sm:$0xff] %vm520, %v2759
          %5853 = vst.msk [vmem:[%s5730 + $0x3d0] sm:$0xff] %vm520, %v2760
          %5854 = vst.msk [vmem:[%s5730 + $0x3d8] sm:$0xff] %vm520, %v2761
          %5855 = vst.msk [vmem:[%s5730 + $0x3e0] sm:$0xff] %vm520, %v2762
          %5856 = vst.msk [vmem:[%s5730 + $0x3e8] sm:$0xff] %vm520, %v2763
          %5857 = vst.msk [vmem:[%s5730 + $0x3f0] sm:$0xff] %vm520, %v2764
          %5858 = vst.msk [vmem:[%s5730 + $0x3f8] sm:$0xff] %vm520, %v2765
          %5859 = vst.msk [vmem:[%s5730 + $0x400] sm:$0xff] %vm520, %v2766
          %5860 = vst.msk [vmem:[%s5730 + $0x408] sm:$0xff] %vm520, %v2767
          %5861 = vst.msk [vmem:[%s5730 + $0x410] sm:$0xff] %vm520, %v2768
          %5862 = vst.msk [vmem:[%s5730 + $0x418] sm:$0xff] %vm520, %v2769
          %5863 = vst.msk [vmem:[%s5730 + $0x420] sm:$0xff] %vm520, %v2770
          %5864 = vst.msk [vmem:[%s5730 + $0x428] sm:$0xff] %vm520, %v2771
          %5865 = vst.msk [vmem:[%s5730 + $0x430] sm:$0xff] %vm520, %v2772
          %5866 = vst.msk [vmem:[%s5730 + $0x438] sm:$0xff] %vm520, %v2773
          %5867 = vst.msk [vmem:[%s5730 + $0x440] sm:$0xff] %vm520, %v2774
          %5868 = vst.msk [vmem:[%s5730 + $0x448] sm:$0xff] %vm520, %v2775
          %5869 = vst.msk [vmem:[%s5730 + $0x450] sm:$0xff] %vm520, %v2776
          %5870 = vst.msk [vmem:[%s5730 + $0x458] sm:$0xff] %vm520, %v2777
          %5871 = vst.msk [vmem:[%s5730 + $0x460] sm:$0xff] %vm520, %v2778
          %5872 = vst.msk [vmem:[%s5730 + $0x468] sm:$0xff] %vm520, %v2779
          %5873 = vst.msk [vmem:[%s5730 + $0x470] sm:$0xff] %vm520, %v2780
          %5874 = vst.msk [vmem:[%s5730 + $0x478] sm:$0xff] %vm520, %v2781
          %5875 = vst.msk [vmem:[%s5730 + $0x480] sm:$0xff] %vm520, %v2782
          %5876 = vst.msk [vmem:[%s5730 + $0x488] sm:$0xff] %vm520, %v2783
          %5877 = vst.msk [vmem:[%s5730 + $0x490] sm:$0xff] %vm520, %v2784
          %5878 = vst.msk [vmem:[%s5730 + $0x498] sm:$0xff] %vm520, %v2785
          %5879 = vst.msk [vmem:[%s5730 + $0x4a0] sm:$0xff] %vm520, %v2786
          %5880 = vst.msk [vmem:[%s5730 + $0x4a8] sm:$0xff] %vm520, %v2787
          %5881 = vst.msk [vmem:[%s5730 + $0x4b0] sm:$0xff] %vm520, %v2788
          %5882 = vst.msk [vmem:[%s5730 + $0x4b8] sm:$0xff] %vm520, %v2789
          %5883 = vst.msk [vmem:[%s5730 + $0x4c0] sm:$0xff] %vm520, %v2790
          %5884 = vst.msk [vmem:[%s5730 + $0x4c8] sm:$0xff] %vm520, %v2791
          %5885 = vst.msk [vmem:[%s5730 + $0x4d0] sm:$0xff] %vm520, %v2792
          %5886 = vst.msk [vmem:[%s5730 + $0x4d8] sm:$0xff] %vm520, %v2793
          %5887 = vst.msk [vmem:[%s5730 + $0x4e0] sm:$0xff] %vm520, %v2794
          %5888 = vst.msk [vmem:[%s5730 + $0x4e8] sm:$0xff] %vm520, %v2795
          %5889 = vst.msk [vmem:[%s5730 + $0x4f0] sm:$0xff] %vm520, %v2796
          %5890 = vst.msk [vmem:[%s5730 + $0x4f8] sm:$0xff] %vm520, %v2797
          %5891 = vst.msk [vmem:[%s5730 + $0x500] sm:$0xff] %vm520, %v2798
          %5892 = vst.msk [vmem:[%s5730 + $0x508] sm:$0xff] %vm520, %v2799
          %5893 = vst.msk [vmem:[%s5730 + $0x510] sm:$0xff] %vm520, %v2800
          %5894 = vst.msk [vmem:[%s5730 + $0x518] sm:$0xff] %vm520, %v2801
          %5895 = vst.msk [vmem:[%s5730 + $0x520] sm:$0xff] %vm520, %v2802
          %5896 = vst.msk [vmem:[%s5730 + $0x528] sm:$0xff] %vm520, %v2803
          %5897 = vst.msk [vmem:[%s5730 + $0x530] sm:$0xff] %vm520, %v2804
          %5898 = vst.msk [vmem:[%s5730 + $0x538] sm:$0xff] %vm520, %v2805
          %5899 = vst.msk [vmem:[%s5730 + $0x540] sm:$0xff] %vm520, %v2806
          %5900 = vst.msk [vmem:[%s5730 + $0x548] sm:$0xff] %vm520, %v2807
          %5901 = vst.msk [vmem:[%s5730 + $0x550] sm:$0xff] %vm520, %v2808
          %5902 = vst.msk [vmem:[%s5730 + $0x558] sm:$0xff] %vm520, %v2809
          %5903 = vst.msk [vmem:[%s5730 + $0x560] sm:$0xff] %vm520, %v2810
          %5904 = vst.msk [vmem:[%s5730 + $0x568] sm:$0xff] %vm520, %v2811
          %5905 = vst.msk [vmem:[%s5730 + $0x570] sm:$0xff] %vm520, %v2812
          %5906 = vst.msk [vmem:[%s5730 + $0x578] sm:$0xff] %vm520, %v2813
          %5907 = vst.msk [vmem:[%s5730 + $0x580] sm:$0xff] %vm520, %v2814
          %5908 = vst.msk [vmem:[%s5730 + $0x588] sm:$0xff] %vm520, %v2815
          %5909 = vst.msk [vmem:[%s5730 + $0x590] sm:$0xff] %vm520, %v2816
          %5910 = vst.msk [vmem:[%s5730 + $0x598] sm:$0xff] %vm520, %v2817
          %5911 = vst.msk [vmem:[%s5730 + $0x5a0] sm:$0xff] %vm520, %v2818
          %5912 = vst.msk [vmem:[%s5730 + $0x5a8] sm:$0xff] %vm520, %v2819
          %5913 = vst.msk [vmem:[%s5730 + $0x5b0] sm:$0xff] %vm520, %v2820
          %5914 = vst.msk [vmem:[%s5730 + $0x5b8] sm:$0xff] %vm520, %v2821
          %5915 = vst.msk [vmem:[%s5730 + $0x5c0] sm:$0xff] %vm520, %v2822
          %5916 = vst.msk [vmem:[%s5730 + $0x5c8] sm:$0xff] %vm520, %v2823
          %5917 = vst.msk [vmem:[%s5730 + $0x5d0] sm:$0xff] %vm520, %v2824
          %5918 = vst.msk [vmem:[%s5730 + $0x5d8] sm:$0xff] %vm520, %v2825
          %5919 = vst.msk [vmem:[%s5730 + $0x5e0] sm:$0xff] %vm520, %v2826
          %5920 = vst.msk [vmem:[%s5730 + $0x5e8] sm:$0xff] %vm520, %v2827
          %5921 = vst.msk [vmem:[%s5730 + $0x5f0] sm:$0xff] %vm520, %v2828
          %5922 = vst.msk [vmem:[%s5730 + $0x5f8] sm:$0xff] %vm520, %v2829
          %5923 = vst.msk [vmem:[%s5730 + $0x600] sm:$0xff] %vm520, %v2830
          %5924 = vst.msk [vmem:[%s5730 + $0x608] sm:$0xff] %vm520, %v2831
          %5925 = vst.msk [vmem:[%s5730 + $0x610] sm:$0xff] %vm520, %v2832
          %5926 = vst.msk [vmem:[%s5730 + $0x618] sm:$0xff] %vm520, %v2833
          %5927 = vst.msk [vmem:[%s5730 + $0x620] sm:$0xff] %vm520, %v2834
          %5928 = vst.msk [vmem:[%s5730 + $0x628] sm:$0xff] %vm520, %v2835
          %5929 = vst.msk [vmem:[%s5730 + $0x630] sm:$0xff] %vm520, %v2836
          %5930 = vst.msk [vmem:[%s5730 + $0x638] sm:$0xff] %vm520, %v2837
          %5931 = vst.msk [vmem:[%s5730 + $0x640] sm:$0xff] %vm520, %v2838
          %5932 = vst.msk [vmem:[%s5730 + $0x648] sm:$0xff] %vm520, %v2839
          %5933 = vst.msk [vmem:[%s5730 + $0x650] sm:$0xff] %vm520, %v2840
          %5934 = vst.msk [vmem:[%s5730 + $0x658] sm:$0xff] %vm520, %v2841
          %5935 = vst.msk [vmem:[%s5730 + $0x660] sm:$0xff] %vm520, %v2842
          %5936 = vst.msk [vmem:[%s5730 + $0x668] sm:$0xff] %vm520, %v2843
          %5937 = vst.msk [vmem:[%s5730 + $0x670] sm:$0xff] %vm520, %v2844
          %5938 = vst.msk [vmem:[%s5730 + $0x678] sm:$0xff] %vm520, %v2845
          %5939 = vst.msk [vmem:[%s5730 + $0x680] sm:$0xff] %vm520, %v2846
          %5940 = vst.msk [vmem:[%s5730 + $0x688] sm:$0xff] %vm520, %v2847
          %5941 = vst.msk [vmem:[%s5730 + $0x690] sm:$0xff] %vm520, %v2848
          %5942 = vst.msk [vmem:[%s5730 + $0x698] sm:$0xff] %vm520, %v2849
          %5943 = vst.msk [vmem:[%s5730 + $0x6a0] sm:$0xff] %vm520, %v2850
          %5944 = vst.msk [vmem:[%s5730 + $0x6a8] sm:$0xff] %vm520, %v2851
          %5945 = vst.msk [vmem:[%s5730 + $0x6b0] sm:$0xff] %vm520, %v2852
          %5946 = vst.msk [vmem:[%s5730 + $0x6b8] sm:$0xff] %vm520, %v2853
          %5947 = vst.msk [vmem:[%s5730 + $0x6c0] sm:$0xff] %vm520, %v2854
          %5948 = vst.msk [vmem:[%s5730 + $0x6c8] sm:$0xff] %vm520, %v2855
          %5949 = vst.msk [vmem:[%s5730 + $0x6d0] sm:$0xff] %vm520, %v2856
          %5950 = vst.msk [vmem:[%s5730 + $0x6d8] sm:$0xff] %vm520, %v2857
          %5951 = vst.msk [vmem:[%s5730 + $0x6e0] sm:$0xff] %vm520, %v2858
          %5952 = vst.msk [vmem:[%s5730 + $0x6e8] sm:$0xff] %vm520, %v2859
          %5953 = vst.msk [vmem:[%s5730 + $0x6f0] sm:$0xff] %vm520, %v2860
          %5954 = vst.msk [vmem:[%s5730 + $0x6f8] sm:$0xff] %vm520, %v2861
          %5955 = vst.msk [vmem:[%s5730 + $0x700] sm:$0xff] %vm520, %v2862
          %5956 = vst.msk [vmem:[%s5730 + $0x708] sm:$0xff] %vm520, %v2863
          %5957 = vst.msk [vmem:[%s5730 + $0x710] sm:$0xff] %vm520, %v2864
          %5958 = vst.msk [vmem:[%s5730 + $0x718] sm:$0xff] %vm520, %v2865
          %5959 = vst.msk [vmem:[%s5730 + $0x720] sm:$0xff] %vm520, %v2866
          %5960 = vst.msk [vmem:[%s5730 + $0x728] sm:$0xff] %vm520, %v2867
          %5961 = vst.msk [vmem:[%s5730 + $0x730] sm:$0xff] %vm520, %v2868
          %5962 = vst.msk [vmem:[%s5730 + $0x738] sm:$0xff] %vm520, %v2869
          %5963 = vst.msk [vmem:[%s5730 + $0x740] sm:$0xff] %vm520, %v2870
          %5964 = vst.msk [vmem:[%s5730 + $0x748] sm:$0xff] %vm520, %v2871
          %5965 = vst.msk [vmem:[%s5730 + $0x750] sm:$0xff] %vm520, %v2872
          %5966 = vst.msk [vmem:[%s5730 + $0x758] sm:$0xff] %vm520, %v2873
          %5967 = vst.msk [vmem:[%s5730 + $0x760] sm:$0xff] %vm520, %v2874
          %5968 = vst.msk [vmem:[%s5730 + $0x768] sm:$0xff] %vm520, %v2875
          %5969 = vst.msk [vmem:[%s5730 + $0x770] sm:$0xff] %vm520, %v2876
          %5970 = vst.msk [vmem:[%s5730 + $0x778] sm:$0xff] %vm520, %v2877
          %5971 = vst.msk [vmem:[%s5730 + $0x780] sm:$0xff] %vm520, %v2878
          %5972 = vst.msk [vmem:[%s5730 + $0x788] sm:$0xff] %vm520, %v2879
          %5973 = vst.msk [vmem:[%s5730 + $0x790] sm:$0xff] %vm520, %v2880
          %5974 = vst.msk [vmem:[%s5730 + $0x798] sm:$0xff] %vm520, %v2881
          %5975 = vst.msk [vmem:[%s5730 + $0x7a0] sm:$0xff] %vm520, %v2882
          %5976 = vst.msk [vmem:[%s5730 + $0x7a8] sm:$0xff] %vm520, %v2883
          %5977 = vst.msk [vmem:[%s5730 + $0x7b0] sm:$0xff] %vm520, %v2884
          %5978 = vst.msk [vmem:[%s5730 + $0x7b8] sm:$0xff] %vm520, %v2885
          %5979 = vst.msk [vmem:[%s5730 + $0x7c0] sm:$0xff] %vm520, %v2886
          %5980 = vst.msk [vmem:[%s5730 + $0x7c8] sm:$0xff] %vm520, %v2887
          %5981 = vst.msk [vmem:[%s5730 + $0x7d0] sm:$0xff] %vm520, %v2888
          %5982 = vst.msk [vmem:[%s5730 + $0x7d8] sm:$0xff] %vm520, %v2889
          %5983 = vst.msk [vmem:[%s5730 + $0x7e0] sm:$0xff] %vm520, %v2890
          %5984 = vst.msk [vmem:[%s5730 + $0x7e8] sm:$0xff] %vm520, %v2891
          %5985 = vst.msk [vmem:[%s5730 + $0x7f0] sm:$0xff] %vm520, %v2892
          %5986 = vst.msk [vmem:[%s5730 + $0x7f8] sm:$0xff] %vm520, %v2893
        $region44: #{tpu_custom_call.1} parent=35 // pred_fallthru
          _
        %p5987 = scmp.eq.s32.totalorder %s19, 1
        %p5988 = pnand %p5987, %p249
        %p5989 = pneg %p5988
        // Predicated region
        $region45: #{tpu_custom_call.1} parent=35 // pred_check
          _
        $region46: #{tpu_custom_call.1} parent=35 // pred_check_branch
          %5991 = sbr.rel (%p5988) target = $region48
        $region47: #{tpu_custom_call.1} parent=35 // pred_region
          %v5992 = vld [vmem:[#allocation2] sm:$0x1]
          %v5993 = vmul.f32 %v5992, 0.00038461538
          %v5994 = vld [vmem:[#allocation3] sm:$0x1]
          %v5995 = vmul.f32 %v5994, 0.00038461538
          %v5996 = vmul.f32 %v5993, %v5993
          %v5997 = vsub.f32 %v5995, %v5996
          %v5998 = vmax.f32 %v5997, 0.0
          %v5999 = vadd.f32 %v5998, 1e-05
          %v6000 = vrsqrt.pop %v5999
          %v6001 = vld [vmem:[%s2] sm:$0x1]
          %v6002 = vmul.f32 %v6000, %v6001
          %vm6003 = vcmask 196608
          %6004 = vst.msk [vmem:[#allocation4] sm:$0x1] %vm6003, %v6002
          %v6005 = vld [vmem:[%s3] sm:$0x1]
          %v6006 = vmul.f32 %v5993, %v6002
          %v6007 = vsub.f32 %v6005, %v6006
          %6008 = vst.msk [vmem:[#allocation5] sm:$0x1] %vm6003, %v6007
        $region48: #{tpu_custom_call.1} parent=35 // pred_fallthru
          _
        // Predicated region
        $region49: #{tpu_custom_call.1} parent=35 // pred_check
          %p6009 = pneg %p5987
        $region50: #{tpu_custom_call.1} parent=35 // pred_check_branch
          %6011 = sbr.rel (%p6009) target = $region52
        $region51: #{tpu_custom_call.1} parent=35 // pred_region
          %s6012 = smul.u32 %s20, 2048
          %s6013 = scalar_lea.vmem [#allocation6], %s6012
          %v6014 = vld [vmem:[%s6013] sm:$0xff]
          %v6015 = vld [vmem:[%s6013 + $0x8] sm:$0xff]
          %v6016 = vld [vmem:[%s6013 + $0x10] sm:$0xff]
          %v6017 = vld [vmem:[%s6013 + $0x18] sm:$0xff]
          %v6018 = vld [vmem:[%s6013 + $0x20] sm:$0xff]
          %v6019 = vld [vmem:[%s6013 + $0x28] sm:$0xff]
          %v6020 = vld [vmem:[%s6013 + $0x30] sm:$0xff]
          %v6021 = vld [vmem:[%s6013 + $0x38] sm:$0xff]
          %v6022 = vld [vmem:[%s6013 + $0x40] sm:$0xff]
          %v6023 = vld [vmem:[%s6013 + $0x48] sm:$0xff]
          %v6024 = vld [vmem:[%s6013 + $0x50] sm:$0xff]
          %v6025 = vld [vmem:[%s6013 + $0x58] sm:$0xff]
          %v6026 = vld [vmem:[%s6013 + $0x60] sm:$0xff]
          %v6027 = vld [vmem:[%s6013 + $0x68] sm:$0xff]
          %v6028 = vld [vmem:[%s6013 + $0x70] sm:$0xff]
          %v6029 = vld [vmem:[%s6013 + $0x78] sm:$0xff]
          %v6030 = vld [vmem:[%s6013 + $0x80] sm:$0xff]
          %v6031 = vld [vmem:[%s6013 + $0x88] sm:$0xff]
          %v6032 = vld [vmem:[%s6013 + $0x90] sm:$0xff]
          %v6033 = vld [vmem:[%s6013 + $0x98] sm:$0xff]
          %v6034 = vld [vmem:[%s6013 + $0xa0] sm:$0xff]
          %v6035 = vld [vmem:[%s6013 + $0xa8] sm:$0xff]
          %v6036 = vld [vmem:[%s6013 + $0xb0] sm:$0xff]
          %v6037 = vld [vmem:[%s6013 + $0xb8] sm:$0xff]
          %v6038 = vld [vmem:[%s6013 + $0xc0] sm:$0xff]
          %v6039 = vld [vmem:[%s6013 + $0xc8] sm:$0xff]
          %v6040 = vld [vmem:[%s6013 + $0xd0] sm:$0xff]
          %v6041 = vld [vmem:[%s6013 + $0xd8] sm:$0xff]
          %v6042 = vld [vmem:[%s6013 + $0xe0] sm:$0xff]
          %v6043 = vld [vmem:[%s6013 + $0xe8] sm:$0xff]
          %v6044 = vld [vmem:[%s6013 + $0xf0] sm:$0xff]
          %v6045 = vld [vmem:[%s6013 + $0xf8] sm:$0xff]
          %v6046 = vld [vmem:[%s6013 + $0x100] sm:$0xff]
          %v6047 = vld [vmem:[%s6013 + $0x108] sm:$0xff]
          %v6048 = vld [vmem:[%s6013 + $0x110] sm:$0xff]
          %v6049 = vld [vmem:[%s6013 + $0x118] sm:$0xff]
          %v6050 = vld [vmem:[%s6013 + $0x120] sm:$0xff]
          %v6051 = vld [vmem:[%s6013 + $0x128] sm:$0xff]
          %v6052 = vld [vmem:[%s6013 + $0x130] sm:$0xff]
          %v6053 = vld [vmem:[%s6013 + $0x138] sm:$0xff]
          %v6054 = vld [vmem:[%s6013 + $0x140] sm:$0xff]
          %v6055 = vld [vmem:[%s6013 + $0x148] sm:$0xff]
          %v6056 = vld [vmem:[%s6013 + $0x150] sm:$0xff]
          %v6057 = vld [vmem:[%s6013 + $0x158] sm:$0xff]
          %v6058 = vld [vmem:[%s6013 + $0x160] sm:$0xff]
          %v6059 = vld [vmem:[%s6013 + $0x168] sm:$0xff]
          %v6060 = vld [vmem:[%s6013 + $0x170] sm:$0xff]
          %v6061 = vld [vmem:[%s6013 + $0x178] sm:$0xff]
          %v6062 = vld [vmem:[%s6013 + $0x180] sm:$0xff]
          %v6063 = vld [vmem:[%s6013 + $0x188] sm:$0xff]
          %v6064 = vld [vmem:[%s6013 + $0x190] sm:$0xff]
          %v6065 = vld [vmem:[%s6013 + $0x198] sm:$0xff]
          %v6066 = vld [vmem:[%s6013 + $0x1a0] sm:$0xff]
          %v6067 = vld [vmem:[%s6013 + $0x1a8] sm:$0xff]
          %v6068 = vld [vmem:[%s6013 + $0x1b0] sm:$0xff]
          %v6069 = vld [vmem:[%s6013 + $0x1b8] sm:$0xff]
          %v6070 = vld [vmem:[%s6013 + $0x1c0] sm:$0xff]
          %v6071 = vld [vmem:[%s6013 + $0x1c8] sm:$0xff]
          %v6072 = vld [vmem:[%s6013 + $0x1d0] sm:$0xff]
          %v6073 = vld [vmem:[%s6013 + $0x1d8] sm:$0xff]
          %v6074 = vld [vmem:[%s6013 + $0x1e0] sm:$0xff]
          %v6075 = vld [vmem:[%s6013 + $0x1e8] sm:$0xff]
          %v6076 = vld [vmem:[%s6013 + $0x1f0] sm:$0xff]
          %v6077 = vld [vmem:[%s6013 + $0x1f8] sm:$0xff]
          %v6078 = vld [vmem:[%s6013 + $0x200] sm:$0xff]
          %v6079 = vld [vmem:[%s6013 + $0x208] sm:$0xff]
          %v6080 = vld [vmem:[%s6013 + $0x210] sm:$0xff]
          %v6081 = vld [vmem:[%s6013 + $0x218] sm:$0xff]
          %v6082 = vld [vmem:[%s6013 + $0x220] sm:$0xff]
          %v6083 = vld [vmem:[%s6013 + $0x228] sm:$0xff]
          %v6084 = vld [vmem:[%s6013 + $0x230] sm:$0xff]
          %v6085 = vld [vmem:[%s6013 + $0x238] sm:$0xff]
          %v6086 = vld [vmem:[%s6013 + $0x240] sm:$0xff]
          %v6087 = vld [vmem:[%s6013 + $0x248] sm:$0xff]
          %v6088 = vld [vmem:[%s6013 + $0x250] sm:$0xff]
          %v6089 = vld [vmem:[%s6013 + $0x258] sm:$0xff]
          %v6090 = vld [vmem:[%s6013 + $0x260] sm:$0xff]
          %v6091 = vld [vmem:[%s6013 + $0x268] sm:$0xff]
          %v6092 = vld [vmem:[%s6013 + $0x270] sm:$0xff]
          %v6093 = vld [vmem:[%s6013 + $0x278] sm:$0xff]
          %v6094 = vld [vmem:[%s6013 + $0x280] sm:$0xff]
          %v6095 = vld [vmem:[%s6013 + $0x288] sm:$0xff]
          %v6096 = vld [vmem:[%s6013 + $0x290] sm:$0xff]
          %v6097 = vld [vmem:[%s6013 + $0x298] sm:$0xff]
          %v6098 = vld [vmem:[%s6013 + $0x2a0] sm:$0xff]
          %v6099 = vld [vmem:[%s6013 + $0x2a8] sm:$0xff]
          %v6100 = vld [vmem:[%s6013 + $0x2b0] sm:$0xff]
          %v6101 = vld [vmem:[%s6013 + $0x2b8] sm:$0xff]
          %v6102 = vld [vmem:[%s6013 + $0x2c0] sm:$0xff]
          %v6103 = vld [vmem:[%s6013 + $0x2c8] sm:$0xff]
          %v6104 = vld [vmem:[%s6013 + $0x2d0] sm:$0xff]
          %v6105 = vld [vmem:[%s6013 + $0x2d8] sm:$0xff]
          %v6106 = vld [vmem:[%s6013 + $0x2e0] sm:$0xff]
          %v6107 = vld [vmem:[%s6013 + $0x2e8] sm:$0xff]
          %v6108 = vld [vmem:[%s6013 + $0x2f0] sm:$0xff]
          %v6109 = vld [vmem:[%s6013 + $0x2f8] sm:$0xff]
          %v6110 = vld [vmem:[%s6013 + $0x300] sm:$0xff]
          %v6111 = vld [vmem:[%s6013 + $0x308] sm:$0xff]
          %v6112 = vld [vmem:[%s6013 + $0x310] sm:$0xff]
          %v6113 = vld [vmem:[%s6013 + $0x318] sm:$0xff]
          %v6114 = vld [vmem:[%s6013 + $0x320] sm:$0xff]
          %v6115 = vld [vmem:[%s6013 + $0x328] sm:$0xff]
          %v6116 = vld [vmem:[%s6013 + $0x330] sm:$0xff]
          %v6117 = vld [vmem:[%s6013 + $0x338] sm:$0xff]
          %v6118 = vld [vmem:[%s6013 + $0x340] sm:$0xff]
          %v6119 = vld [vmem:[%s6013 + $0x348] sm:$0xff]
          %v6120 = vld [vmem:[%s6013 + $0x350] sm:$0xff]
          %v6121 = vld [vmem:[%s6013 + $0x358] sm:$0xff]
          %v6122 = vld [vmem:[%s6013 + $0x360] sm:$0xff]
          %v6123 = vld [vmem:[%s6013 + $0x368] sm:$0xff]
          %v6124 = vld [vmem:[%s6013 + $0x370] sm:$0xff]
          %v6125 = vld [vmem:[%s6013 + $0x378] sm:$0xff]
          %v6126 = vld [vmem:[%s6013 + $0x380] sm:$0xff]
          %v6127 = vld [vmem:[%s6013 + $0x388] sm:$0xff]
          %v6128 = vld [vmem:[%s6013 + $0x390] sm:$0xff]
          %v6129 = vld [vmem:[%s6013 + $0x398] sm:$0xff]
          %v6130 = vld [vmem:[%s6013 + $0x3a0] sm:$0xff]
          %v6131 = vld [vmem:[%s6013 + $0x3a8] sm:$0xff]
          %v6132 = vld [vmem:[%s6013 + $0x3b0] sm:$0xff]
          %v6133 = vld [vmem:[%s6013 + $0x3b8] sm:$0xff]
          %v6134 = vld [vmem:[%s6013 + $0x3c0] sm:$0xff]
          %v6135 = vld [vmem:[%s6013 + $0x3c8] sm:$0xff]
          %v6136 = vld [vmem:[%s6013 + $0x3d0] sm:$0xff]
          %v6137 = vld [vmem:[%s6013 + $0x3d8] sm:$0xff]
          %v6138 = vld [vmem:[%s6013 + $0x3e0] sm:$0xff]
          %v6139 = vld [vmem:[%s6013 + $0x3e8] sm:$0xff]
          %v6140 = vld [vmem:[%s6013 + $0x3f0] sm:$0xff]
          %v6141 = vld [vmem:[%s6013 + $0x3f8] sm:$0xff]
          %v6142 = vld [vmem:[%s6013 + $0x400] sm:$0xff]
          %v6143 = vld [vmem:[%s6013 + $0x408] sm:$0xff]
          %v6144 = vld [vmem:[%s6013 + $0x410] sm:$0xff]
          %v6145 = vld [vmem:[%s6013 + $0x418] sm:$0xff]
          %v6146 = vld [vmem:[%s6013 + $0x420] sm:$0xff]
          %v6147 = vld [vmem:[%s6013 + $0x428] sm:$0xff]
          %v6148 = vld [vmem:[%s6013 + $0x430] sm:$0xff]
          %v6149 = vld [vmem:[%s6013 + $0x438] sm:$0xff]
          %v6150 = vld [vmem:[%s6013 + $0x440] sm:$0xff]
          %v6151 = vld [vmem:[%s6013 + $0x448] sm:$0xff]
          %v6152 = vld [vmem:[%s6013 + $0x450] sm:$0xff]
          %v6153 = vld [vmem:[%s6013 + $0x458] sm:$0xff]
          %v6154 = vld [vmem:[%s6013 + $0x460] sm:$0xff]
          %v6155 = vld [vmem:[%s6013 + $0x468] sm:$0xff]
          %v6156 = vld [vmem:[%s6013 + $0x470] sm:$0xff]
          %v6157 = vld [vmem:[%s6013 + $0x478] sm:$0xff]
          %v6158 = vld [vmem:[%s6013 + $0x480] sm:$0xff]
          %v6159 = vld [vmem:[%s6013 + $0x488] sm:$0xff]
          %v6160 = vld [vmem:[%s6013 + $0x490] sm:$0xff]
          %v6161 = vld [vmem:[%s6013 + $0x498] sm:$0xff]
          %v6162 = vld [vmem:[%s6013 + $0x4a0] sm:$0xff]
          %v6163 = vld [vmem:[%s6013 + $0x4a8] sm:$0xff]
          %v6164 = vld [vmem:[%s6013 + $0x4b0] sm:$0xff]
          %v6165 = vld [vmem:[%s6013 + $0x4b8] sm:$0xff]
          %v6166 = vld [vmem:[%s6013 + $0x4c0] sm:$0xff]
          %v6167 = vld [vmem:[%s6013 + $0x4c8] sm:$0xff]
          %v6168 = vld [vmem:[%s6013 + $0x4d0] sm:$0xff]
          %v6169 = vld [vmem:[%s6013 + $0x4d8] sm:$0xff]
          %v6170 = vld [vmem:[%s6013 + $0x4e0] sm:$0xff]
          %v6171 = vld [vmem:[%s6013 + $0x4e8] sm:$0xff]
          %v6172 = vld [vmem:[%s6013 + $0x4f0] sm:$0xff]
          %v6173 = vld [vmem:[%s6013 + $0x4f8] sm:$0xff]
          %v6174 = vld [vmem:[%s6013 + $0x500] sm:$0xff]
          %v6175 = vld [vmem:[%s6013 + $0x508] sm:$0xff]
          %v6176 = vld [vmem:[%s6013 + $0x510] sm:$0xff]
          %v6177 = vld [vmem:[%s6013 + $0x518] sm:$0xff]
          %v6178 = vld [vmem:[%s6013 + $0x520] sm:$0xff]
          %v6179 = vld [vmem:[%s6013 + $0x528] sm:$0xff]
          %v6180 = vld [vmem:[%s6013 + $0x530] sm:$0xff]
          %v6181 = vld [vmem:[%s6013 + $0x538] sm:$0xff]
          %v6182 = vld [vmem:[%s6013 + $0x540] sm:$0xff]
          %v6183 = vld [vmem:[%s6013 + $0x548] sm:$0xff]
          %v6184 = vld [vmem:[%s6013 + $0x550] sm:$0xff]
          %v6185 = vld [vmem:[%s6013 + $0x558] sm:$0xff]
          %v6186 = vld [vmem:[%s6013 + $0x560] sm:$0xff]
          %v6187 = vld [vmem:[%s6013 + $0x568] sm:$0xff]
          %v6188 = vld [vmem:[%s6013 + $0x570] sm:$0xff]
          %v6189 = vld [vmem:[%s6013 + $0x578] sm:$0xff]
          %v6190 = vld [vmem:[%s6013 + $0x580] sm:$0xff]
          %v6191 = vld [vmem:[%s6013 + $0x588] sm:$0xff]
          %v6192 = vld [vmem:[%s6013 + $0x590] sm:$0xff]
          %v6193 = vld [vmem:[%s6013 + $0x598] sm:$0xff]
          %v6194 = vld [vmem:[%s6013 + $0x5a0] sm:$0xff]
          %v6195 = vld [vmem:[%s6013 + $0x5a8] sm:$0xff]
          %v6196 = vld [vmem:[%s6013 + $0x5b0] sm:$0xff]
          %v6197 = vld [vmem:[%s6013 + $0x5b8] sm:$0xff]
          %v6198 = vld [vmem:[%s6013 + $0x5c0] sm:$0xff]
          %v6199 = vld [vmem:[%s6013 + $0x5c8] sm:$0xff]
          %v6200 = vld [vmem:[%s6013 + $0x5d0] sm:$0xff]
          %v6201 = vld [vmem:[%s6013 + $0x5d8] sm:$0xff]
          %v6202 = vld [vmem:[%s6013 + $0x5e0] sm:$0xff]
          %v6203 = vld [vmem:[%s6013 + $0x5e8] sm:$0xff]
          %v6204 = vld [vmem:[%s6013 + $0x5f0] sm:$0xff]
          %v6205 = vld [vmem:[%s6013 + $0x5f8] sm:$0xff]
          %v6206 = vld [vmem:[%s6013 + $0x600] sm:$0xff]
          %v6207 = vld [vmem:[%s6013 + $0x608] sm:$0xff]
          %v6208 = vld [vmem:[%s6013 + $0x610] sm:$0xff]
          %v6209 = vld [vmem:[%s6013 + $0x618] sm:$0xff]
          %v6210 = vld [vmem:[%s6013 + $0x620] sm:$0xff]
          %v6211 = vld [vmem:[%s6013 + $0x628] sm:$0xff]
          %v6212 = vld [vmem:[%s6013 + $0x630] sm:$0xff]
          %v6213 = vld [vmem:[%s6013 + $0x638] sm:$0xff]
          %v6214 = vld [vmem:[%s6013 + $0x640] sm:$0xff]
          %v6215 = vld [vmem:[%s6013 + $0x648] sm:$0xff]
          %v6216 = vld [vmem:[%s6013 + $0x650] sm:$0xff]
          %v6217 = vld [vmem:[%s6013 + $0x658] sm:$0xff]
          %v6218 = vld [vmem:[%s6013 + $0x660] sm:$0xff]
          %v6219 = vld [vmem:[%s6013 + $0x668] sm:$0xff]
          %v6220 = vld [vmem:[%s6013 + $0x670] sm:$0xff]
          %v6221 = vld [vmem:[%s6013 + $0x678] sm:$0xff]
          %v6222 = vld [vmem:[%s6013 + $0x680] sm:$0xff]
          %v6223 = vld [vmem:[%s6013 + $0x688] sm:$0xff]
          %v6224 = vld [vmem:[%s6013 + $0x690] sm:$0xff]
          %v6225 = vld [vmem:[%s6013 + $0x698] sm:$0xff]
          %v6226 = vld [vmem:[%s6013 + $0x6a0] sm:$0xff]
          %v6227 = vld [vmem:[%s6013 + $0x6a8] sm:$0xff]
          %v6228 = vld [vmem:[%s6013 + $0x6b0] sm:$0xff]
          %v6229 = vld [vmem:[%s6013 + $0x6b8] sm:$0xff]
          %v6230 = vld [vmem:[%s6013 + $0x6c0] sm:$0xff]
          %v6231 = vld [vmem:[%s6013 + $0x6c8] sm:$0xff]
          %v6232 = vld [vmem:[%s6013 + $0x6d0] sm:$0xff]
          %v6233 = vld [vmem:[%s6013 + $0x6d8] sm:$0xff]
          %v6234 = vld [vmem:[%s6013 + $0x6e0] sm:$0xff]
          %v6235 = vld [vmem:[%s6013 + $0x6e8] sm:$0xff]
          %v6236 = vld [vmem:[%s6013 + $0x6f0] sm:$0xff]
          %v6237 = vld [vmem:[%s6013 + $0x6f8] sm:$0xff]
          %v6238 = vld [vmem:[%s6013 + $0x700] sm:$0xff]
          %v6239 = vld [vmem:[%s6013 + $0x708] sm:$0xff]
          %v6240 = vld [vmem:[%s6013 + $0x710] sm:$0xff]
          %v6241 = vld [vmem:[%s6013 + $0x718] sm:$0xff]
          %v6242 = vld [vmem:[%s6013 + $0x720] sm:$0xff]
          %v6243 = vld [vmem:[%s6013 + $0x728] sm:$0xff]
          %v6244 = vld [vmem:[%s6013 + $0x730] sm:$0xff]
          %v6245 = vld [vmem:[%s6013 + $0x738] sm:$0xff]
          %v6246 = vld [vmem:[%s6013 + $0x740] sm:$0xff]
          %v6247 = vld [vmem:[%s6013 + $0x748] sm:$0xff]
          %v6248 = vld [vmem:[%s6013 + $0x750] sm:$0xff]
          %v6249 = vld [vmem:[%s6013 + $0x758] sm:$0xff]
          %v6250 = vld [vmem:[%s6013 + $0x760] sm:$0xff]
          %v6251 = vld [vmem:[%s6013 + $0x768] sm:$0xff]
          %v6252 = vld [vmem:[%s6013 + $0x770] sm:$0xff]
          %v6253 = vld [vmem:[%s6013 + $0x778] sm:$0xff]
          %v6254 = vld [vmem:[%s6013 + $0x780] sm:$0xff]
          %v6255 = vld [vmem:[%s6013 + $0x788] sm:$0xff]
          %v6256 = vld [vmem:[%s6013 + $0x790] sm:$0xff]
          %v6257 = vld [vmem:[%s6013 + $0x798] sm:$0xff]
          %v6258 = vld [vmem:[%s6013 + $0x7a0] sm:$0xff]
          %v6259 = vld [vmem:[%s6013 + $0x7a8] sm:$0xff]
          %v6260 = vld [vmem:[%s6013 + $0x7b0] sm:$0xff]
          %v6261 = vld [vmem:[%s6013 + $0x7b8] sm:$0xff]
          %v6262 = vld [vmem:[%s6013 + $0x7c0] sm:$0xff]
          %v6263 = vld [vmem:[%s6013 + $0x7c8] sm:$0xff]
          %v6264 = vld [vmem:[%s6013 + $0x7d0] sm:$0xff]
          %v6265 = vld [vmem:[%s6013 + $0x7d8] sm:$0xff]
          %v6266 = vld [vmem:[%s6013 + $0x7e0] sm:$0xff]
          %v6267 = vld [vmem:[%s6013 + $0x7e8] sm:$0xff]
          %v6268 = vld [vmem:[%s6013 + $0x7f0] sm:$0xff]
          %v6269 = vld [vmem:[%s6013 + $0x7f8] sm:$0xff]
          %v6270 = vld [vmem:[#allocation4] sm:$0x1]
          %v6272 = vlaneseq
          %v6273 = vshrl.u32 %v6272, 7
          %v6274 = vsub.s32 0, %v6273
          %v6275 = vrot.slane %v6270, %v6274
          %v6277 = vmul.f32 %v6014, %v6275
          %v6278 = vmul.f32 %v6015, %v6275
          %v6279 = vmul.f32 %v6016, %v6275
          %v6280 = vmul.f32 %v6017, %v6275
          %v6281 = vmul.f32 %v6018, %v6275
          %v6282 = vmul.f32 %v6019, %v6275
          %v6283 = vmul.f32 %v6020, %v6275
          %v6284 = vmul.f32 %v6021, %v6275
          %v6285 = vmul.f32 %v6022, %v6275
          %v6286 = vmul.f32 %v6023, %v6275
          %v6287 = vmul.f32 %v6024, %v6275
          %v6288 = vmul.f32 %v6025, %v6275
          %v6289 = vmul.f32 %v6026, %v6275
          %v6290 = vmul.f32 %v6027, %v6275
          %v6291 = vmul.f32 %v6028, %v6275
          %v6292 = vmul.f32 %v6029, %v6275
          %v6293 = vmul.f32 %v6030, %v6275
          %v6294 = vmul.f32 %v6031, %v6275
          %v6295 = vmul.f32 %v6032, %v6275
          %v6296 = vmul.f32 %v6033, %v6275
          %v6297 = vmul.f32 %v6034, %v6275
          %v6298 = vmul.f32 %v6035, %v6275
          %v6299 = vmul.f32 %v6036, %v6275
          %v6300 = vmul.f32 %v6037, %v6275
          %v6301 = vmul.f32 %v6038, %v6275
          %v6302 = vmul.f32 %v6039, %v6275
          %v6303 = vmul.f32 %v6040, %v6275
          %v6304 = vmul.f32 %v6041, %v6275
          %v6305 = vmul.f32 %v6042, %v6275
          %v6306 = vmul.f32 %v6043, %v6275
          %v6307 = vmul.f32 %v6044, %v6275
          %v6308 = vmul.f32 %v6045, %v6275
          %v6309 = vmul.f32 %v6046, %v6275
          %v6310 = vmul.f32 %v6047, %v6275
          %v6311 = vmul.f32 %v6048, %v6275
          %v6312 = vmul.f32 %v6049, %v6275
          %v6313 = vmul.f32 %v6050, %v6275
          %v6314 = vmul.f32 %v6051, %v6275
          %v6315 = vmul.f32 %v6052, %v6275
          %v6316 = vmul.f32 %v6053, %v6275
          %v6317 = vmul.f32 %v6054, %v6275
          %v6318 = vmul.f32 %v6055, %v6275
          %v6319 = vmul.f32 %v6056, %v6275
          %v6320 = vmul.f32 %v6057, %v6275
          %v6321 = vmul.f32 %v6058, %v6275
          %v6322 = vmul.f32 %v6059, %v6275
          %v6323 = vmul.f32 %v6060, %v6275
          %v6324 = vmul.f32 %v6061, %v6275
          %v6325 = vmul.f32 %v6062, %v6275
          %v6326 = vmul.f32 %v6063, %v6275
          %v6327 = vmul.f32 %v6064, %v6275
          %v6328 = vmul.f32 %v6065, %v6275
          %v6329 = vmul.f32 %v6066, %v6275
          %v6330 = vmul.f32 %v6067, %v6275
          %v6331 = vmul.f32 %v6068, %v6275
          %v6332 = vmul.f32 %v6069, %v6275
          %v6333 = vmul.f32 %v6070, %v6275
          %v6334 = vmul.f32 %v6071, %v6275
          %v6335 = vmul.f32 %v6072, %v6275
          %v6336 = vmul.f32 %v6073, %v6275
          %v6337 = vmul.f32 %v6074, %v6275
          %v6338 = vmul.f32 %v6075, %v6275
          %v6339 = vmul.f32 %v6076, %v6275
          %v6340 = vmul.f32 %v6077, %v6275
          %v6341 = vmul.f32 %v6078, %v6275
          %v6342 = vmul.f32 %v6079, %v6275
          %v6343 = vmul.f32 %v6080, %v6275
          %v6344 = vmul.f32 %v6081, %v6275
          %v6345 = vmul.f32 %v6082, %v6275
          %v6346 = vmul.f32 %v6083, %v6275
          %v6347 = vmul.f32 %v6084, %v6275
          %v6348 = vmul.f32 %v6085, %v6275
          %v6349 = vmul.f32 %v6086, %v6275
          %v6350 = vmul.f32 %v6087, %v6275
          %v6351 = vmul.f32 %v6088, %v6275
          %v6352 = vmul.f32 %v6089, %v6275
          %v6353 = vmul.f32 %v6090, %v6275
          %v6354 = vmul.f32 %v6091, %v6275
          %v6355 = vmul.f32 %v6092, %v6275
          %v6356 = vmul.f32 %v6093, %v6275
          %v6357 = vmul.f32 %v6094, %v6275
          %v6358 = vmul.f32 %v6095, %v6275
          %v6359 = vmul.f32 %v6096, %v6275
          %v6360 = vmul.f32 %v6097, %v6275
          %v6361 = vmul.f32 %v6098, %v6275
          %v6362 = vmul.f32 %v6099, %v6275
          %v6363 = vmul.f32 %v6100, %v6275
          %v6364 = vmul.f32 %v6101, %v6275
          %v6365 = vmul.f32 %v6102, %v6275
          %v6366 = vmul.f32 %v6103, %v6275
          %v6367 = vmul.f32 %v6104, %v6275
          %v6368 = vmul.f32 %v6105, %v6275
          %v6369 = vmul.f32 %v6106, %v6275
          %v6370 = vmul.f32 %v6107, %v6275
          %v6371 = vmul.f32 %v6108, %v6275
          %v6372 = vmul.f32 %v6109, %v6275
          %v6373 = vmul.f32 %v6110, %v6275
          %v6374 = vmul.f32 %v6111, %v6275
          %v6375 = vmul.f32 %v6112, %v6275
          %v6376 = vmul.f32 %v6113, %v6275
          %v6377 = vmul.f32 %v6114, %v6275
          %v6378 = vmul.f32 %v6115, %v6275
          %v6379 = vmul.f32 %v6116, %v6275
          %v6380 = vmul.f32 %v6117, %v6275
          %v6381 = vmul.f32 %v6118, %v6275
          %v6382 = vmul.f32 %v6119, %v6275
          %v6383 = vmul.f32 %v6120, %v6275
          %v6384 = vmul.f32 %v6121, %v6275
          %v6385 = vmul.f32 %v6122, %v6275
          %v6386 = vmul.f32 %v6123, %v6275
          %v6387 = vmul.f32 %v6124, %v6275
          %v6388 = vmul.f32 %v6125, %v6275
          %v6389 = vmul.f32 %v6126, %v6275
          %v6390 = vmul.f32 %v6127, %v6275
          %v6391 = vmul.f32 %v6128, %v6275
          %v6392 = vmul.f32 %v6129, %v6275
          %v6393 = vmul.f32 %v6130, %v6275
          %v6394 = vmul.f32 %v6131, %v6275
          %v6395 = vmul.f32 %v6132, %v6275
          %v6396 = vmul.f32 %v6133, %v6275
          %v6397 = vmul.f32 %v6134, %v6275
          %v6398 = vmul.f32 %v6135, %v6275
          %v6399 = vmul.f32 %v6136, %v6275
          %v6400 = vmul.f32 %v6137, %v6275
          %v6401 = vmul.f32 %v6138, %v6275
          %v6402 = vmul.f32 %v6139, %v6275
          %v6403 = vmul.f32 %v6140, %v6275
          %v6404 = vmul.f32 %v6141, %v6275
          %v6405 = vmul.f32 %v6142, %v6275
          %v6406 = vmul.f32 %v6143, %v6275
          %v6407 = vmul.f32 %v6144, %v6275
          %v6408 = vmul.f32 %v6145, %v6275
          %v6409 = vmul.f32 %v6146, %v6275
          %v6410 = vmul.f32 %v6147, %v6275
          %v6411 = vmul.f32 %v6148, %v6275
          %v6412 = vmul.f32 %v6149, %v6275
          %v6413 = vmul.f32 %v6150, %v6275
          %v6414 = vmul.f32 %v6151, %v6275
          %v6415 = vmul.f32 %v6152, %v6275
          %v6416 = vmul.f32 %v6153, %v6275
          %v6417 = vmul.f32 %v6154, %v6275
          %v6418 = vmul.f32 %v6155, %v6275
          %v6419 = vmul.f32 %v6156, %v6275
          %v6420 = vmul.f32 %v6157, %v6275
          %v6421 = vmul.f32 %v6158, %v6275
          %v6422 = vmul.f32 %v6159, %v6275
          %v6423 = vmul.f32 %v6160, %v6275
          %v6424 = vmul.f32 %v6161, %v6275
          %v6425 = vmul.f32 %v6162, %v6275
          %v6426 = vmul.f32 %v6163, %v6275
          %v6427 = vmul.f32 %v6164, %v6275
          %v6428 = vmul.f32 %v6165, %v6275
          %v6429 = vmul.f32 %v6166, %v6275
          %v6430 = vmul.f32 %v6167, %v6275
          %v6431 = vmul.f32 %v6168, %v6275
          %v6432 = vmul.f32 %v6169, %v6275
          %v6433 = vmul.f32 %v6170, %v6275
          %v6434 = vmul.f32 %v6171, %v6275
          %v6435 = vmul.f32 %v6172, %v6275
          %v6436 = vmul.f32 %v6173, %v6275
          %v6437 = vmul.f32 %v6174, %v6275
          %v6438 = vmul.f32 %v6175, %v6275
          %v6439 = vmul.f32 %v6176, %v6275
          %v6440 = vmul.f32 %v6177, %v6275
          %v6441 = vmul.f32 %v6178, %v6275
          %v6442 = vmul.f32 %v6179, %v6275
          %v6443 = vmul.f32 %v6180, %v6275
          %v6444 = vmul.f32 %v6181, %v6275
          %v6445 = vmul.f32 %v6182, %v6275
          %v6446 = vmul.f32 %v6183, %v6275
          %v6447 = vmul.f32 %v6184, %v6275
          %v6448 = vmul.f32 %v6185, %v6275
          %v6449 = vmul.f32 %v6186, %v6275
          %v6450 = vmul.f32 %v6187, %v6275
          %v6451 = vmul.f32 %v6188, %v6275
          %v6452 = vmul.f32 %v6189, %v6275
          %v6453 = vmul.f32 %v6190, %v6275
          %v6454 = vmul.f32 %v6191, %v6275
          %v6455 = vmul.f32 %v6192, %v6275
          %v6456 = vmul.f32 %v6193, %v6275
          %v6457 = vmul.f32 %v6194, %v6275
          %v6458 = vmul.f32 %v6195, %v6275
          %v6459 = vmul.f32 %v6196, %v6275
          %v6460 = vmul.f32 %v6197, %v6275
          %v6461 = vmul.f32 %v6198, %v6275
          %v6462 = vmul.f32 %v6199, %v6275
          %v6463 = vmul.f32 %v6200, %v6275
          %v6464 = vmul.f32 %v6201, %v6275
          %v6465 = vmul.f32 %v6202, %v6275
          %v6466 = vmul.f32 %v6203, %v6275
          %v6467 = vmul.f32 %v6204, %v6275
          %v6468 = vmul.f32 %v6205, %v6275
          %v6469 = vmul.f32 %v6206, %v6275
          %v6470 = vmul.f32 %v6207, %v6275
          %v6471 = vmul.f32 %v6208, %v6275
          %v6472 = vmul.f32 %v6209, %v6275
          %v6473 = vmul.f32 %v6210, %v6275
          %v6474 = vmul.f32 %v6211, %v6275
          %v6475 = vmul.f32 %v6212, %v6275
          %v6476 = vmul.f32 %v6213, %v6275
          %v6477 = vmul.f32 %v6214, %v6275
          %v6478 = vmul.f32 %v6215, %v6275
          %v6479 = vmul.f32 %v6216, %v6275
          %v6480 = vmul.f32 %v6217, %v6275
          %v6481 = vmul.f32 %v6218, %v6275
          %v6482 = vmul.f32 %v6219, %v6275
          %v6483 = vmul.f32 %v6220, %v6275
          %v6484 = vmul.f32 %v6221, %v6275
          %v6485 = vmul.f32 %v6222, %v6275
          %v6486 = vmul.f32 %v6223, %v6275
          %v6487 = vmul.f32 %v6224, %v6275
          %v6488 = vmul.f32 %v6225, %v6275
          %v6489 = vmul.f32 %v6226, %v6275
          %v6490 = vmul.f32 %v6227, %v6275
          %v6491 = vmul.f32 %v6228, %v6275
          %v6492 = vmul.f32 %v6229, %v6275
          %v6493 = vmul.f32 %v6230, %v6275
          %v6494 = vmul.f32 %v6231, %v6275
          %v6495 = vmul.f32 %v6232, %v6275
          %v6496 = vmul.f32 %v6233, %v6275
          %v6497 = vmul.f32 %v6234, %v6275
          %v6498 = vmul.f32 %v6235, %v6275
          %v6499 = vmul.f32 %v6236, %v6275
          %v6500 = vmul.f32 %v6237, %v6275
          %v6501 = vmul.f32 %v6238, %v6275
          %v6502 = vmul.f32 %v6239, %v6275
          %v6503 = vmul.f32 %v6240, %v6275
          %v6504 = vmul.f32 %v6241, %v6275
          %v6505 = vmul.f32 %v6242, %v6275
          %v6506 = vmul.f32 %v6243, %v6275
          %v6507 = vmul.f32 %v6244, %v6275
          %v6508 = vmul.f32 %v6245, %v6275
          %v6509 = vmul.f32 %v6246, %v6275
          %v6510 = vmul.f32 %v6247, %v6275
          %v6511 = vmul.f32 %v6248, %v6275
          %v6512 = vmul.f32 %v6249, %v6275
          %v6513 = vmul.f32 %v6250, %v6275
          %v6514 = vmul.f32 %v6251, %v6275
          %v6515 = vmul.f32 %v6252, %v6275
          %v6516 = vmul.f32 %v6253, %v6275
          %v6517 = vmul.f32 %v6254, %v6275
          %v6518 = vmul.f32 %v6255, %v6275
          %v6519 = vmul.f32 %v6256, %v6275
          %v6520 = vmul.f32 %v6257, %v6275
          %v6521 = vmul.f32 %v6258, %v6275
          %v6522 = vmul.f32 %v6259, %v6275
          %v6523 = vmul.f32 %v6260, %v6275
          %v6524 = vmul.f32 %v6261, %v6275
          %v6525 = vmul.f32 %v6262, %v6275
          %v6526 = vmul.f32 %v6263, %v6275
          %v6527 = vmul.f32 %v6264, %v6275
          %v6528 = vmul.f32 %v6265, %v6275
          %v6529 = vmul.f32 %v6266, %v6275
          %v6530 = vmul.f32 %v6267, %v6275
          %v6531 = vmul.f32 %v6268, %v6275
          %v6532 = vmul.f32 %v6269, %v6275
          %v6533 = vld [vmem:[#allocation5] sm:$0x1]
          %v6535 = vlaneseq
          %v6536 = vshrl.u32 %v6535, 7
          %v6537 = vsub.s32 0, %v6536
          %v6538 = vrot.slane %v6533, %v6537
          %v6540 = vadd.f32 %v6277, %v6538
          %v6541 = vadd.f32 %v6278, %v6538
          %v6542 = vadd.f32 %v6279, %v6538
          %v6543 = vadd.f32 %v6280, %v6538
          %v6544 = vadd.f32 %v6281, %v6538
          %v6545 = vadd.f32 %v6282, %v6538
          %v6546 = vadd.f32 %v6283, %v6538
          %v6547 = vadd.f32 %v6284, %v6538
          %v6548 = vadd.f32 %v6285, %v6538
          %v6549 = vadd.f32 %v6286, %v6538
          %v6550 = vadd.f32 %v6287, %v6538
          %v6551 = vadd.f32 %v6288, %v6538
          %v6552 = vadd.f32 %v6289, %v6538
          %v6553 = vadd.f32 %v6290, %v6538
          %v6554 = vadd.f32 %v6291, %v6538
          %v6555 = vadd.f32 %v6292, %v6538
          %v6556 = vadd.f32 %v6293, %v6538
          %v6557 = vadd.f32 %v6294, %v6538
          %v6558 = vadd.f32 %v6295, %v6538
          %v6559 = vadd.f32 %v6296, %v6538
          %v6560 = vadd.f32 %v6297, %v6538
          %v6561 = vadd.f32 %v6298, %v6538
          %v6562 = vadd.f32 %v6299, %v6538
          %v6563 = vadd.f32 %v6300, %v6538
          %v6564 = vadd.f32 %v6301, %v6538
          %v6565 = vadd.f32 %v6302, %v6538
          %v6566 = vadd.f32 %v6303, %v6538
          %v6567 = vadd.f32 %v6304, %v6538
          %v6568 = vadd.f32 %v6305, %v6538
          %v6569 = vadd.f32 %v6306, %v6538
          %v6570 = vadd.f32 %v6307, %v6538
          %v6571 = vadd.f32 %v6308, %v6538
          %v6572 = vadd.f32 %v6309, %v6538
          %v6573 = vadd.f32 %v6310, %v6538
          %v6574 = vadd.f32 %v6311, %v6538
          %v6575 = vadd.f32 %v6312, %v6538
          %v6576 = vadd.f32 %v6313, %v6538
          %v6577 = vadd.f32 %v6314, %v6538
          %v6578 = vadd.f32 %v6315, %v6538
          %v6579 = vadd.f32 %v6316, %v6538
          %v6580 = vadd.f32 %v6317, %v6538
          %v6581 = vadd.f32 %v6318, %v6538
          %v6582 = vadd.f32 %v6319, %v6538
          %v6583 = vadd.f32 %v6320, %v6538
          %v6584 = vadd.f32 %v6321, %v6538
          %v6585 = vadd.f32 %v6322, %v6538
          %v6586 = vadd.f32 %v6323, %v6538
          %v6587 = vadd.f32 %v6324, %v6538
          %v6588 = vadd.f32 %v6325, %v6538
          %v6589 = vadd.f32 %v6326, %v6538
          %v6590 = vadd.f32 %v6327, %v6538
          %v6591 = vadd.f32 %v6328, %v6538
          %v6592 = vadd.f32 %v6329, %v6538
          %v6593 = vadd.f32 %v6330, %v6538
          %v6594 = vadd.f32 %v6331, %v6538
          %v6595 = vadd.f32 %v6332, %v6538
          %v6596 = vadd.f32 %v6333, %v6538
          %v6597 = vadd.f32 %v6334, %v6538
          %v6598 = vadd.f32 %v6335, %v6538
          %v6599 = vadd.f32 %v6336, %v6538
          %v6600 = vadd.f32 %v6337, %v6538
          %v6601 = vadd.f32 %v6338, %v6538
          %v6602 = vadd.f32 %v6339, %v6538
          %v6603 = vadd.f32 %v6340, %v6538
          %v6604 = vadd.f32 %v6341, %v6538
          %v6605 = vadd.f32 %v6342, %v6538
          %v6606 = vadd.f32 %v6343, %v6538
          %v6607 = vadd.f32 %v6344, %v6538
          %v6608 = vadd.f32 %v6345, %v6538
          %v6609 = vadd.f32 %v6346, %v6538
          %v6610 = vadd.f32 %v6347, %v6538
          %v6611 = vadd.f32 %v6348, %v6538
          %v6612 = vadd.f32 %v6349, %v6538
          %v6613 = vadd.f32 %v6350, %v6538
          %v6614 = vadd.f32 %v6351, %v6538
          %v6615 = vadd.f32 %v6352, %v6538
          %v6616 = vadd.f32 %v6353, %v6538
          %v6617 = vadd.f32 %v6354, %v6538
          %v6618 = vadd.f32 %v6355, %v6538
          %v6619 = vadd.f32 %v6356, %v6538
          %v6620 = vadd.f32 %v6357, %v6538
          %v6621 = vadd.f32 %v6358, %v6538
          %v6622 = vadd.f32 %v6359, %v6538
          %v6623 = vadd.f32 %v6360, %v6538
          %v6624 = vadd.f32 %v6361, %v6538
          %v6625 = vadd.f32 %v6362, %v6538
          %v6626 = vadd.f32 %v6363, %v6538
          %v6627 = vadd.f32 %v6364, %v6538
          %v6628 = vadd.f32 %v6365, %v6538
          %v6629 = vadd.f32 %v6366, %v6538
          %v6630 = vadd.f32 %v6367, %v6538
          %v6631 = vadd.f32 %v6368, %v6538
          %v6632 = vadd.f32 %v6369, %v6538
          %v6633 = vadd.f32 %v6370, %v6538
          %v6634 = vadd.f32 %v6371, %v6538
          %v6635 = vadd.f32 %v6372, %v6538
          %v6636 = vadd.f32 %v6373, %v6538
          %v6637 = vadd.f32 %v6374, %v6538
          %v6638 = vadd.f32 %v6375, %v6538
          %v6639 = vadd.f32 %v6376, %v6538
          %v6640 = vadd.f32 %v6377, %v6538
          %v6641 = vadd.f32 %v6378, %v6538
          %v6642 = vadd.f32 %v6379, %v6538
          %v6643 = vadd.f32 %v6380, %v6538
          %v6644 = vadd.f32 %v6381, %v6538
          %v6645 = vadd.f32 %v6382, %v6538
          %v6646 = vadd.f32 %v6383, %v6538
          %v6647 = vadd.f32 %v6384, %v6538
          %v6648 = vadd.f32 %v6385, %v6538
          %v6649 = vadd.f32 %v6386, %v6538
          %v6650 = vadd.f32 %v6387, %v6538
          %v6651 = vadd.f32 %v6388, %v6538
          %v6652 = vadd.f32 %v6389, %v6538
          %v6653 = vadd.f32 %v6390, %v6538
          %v6654 = vadd.f32 %v6391, %v6538
          %v6655 = vadd.f32 %v6392, %v6538
          %v6656 = vadd.f32 %v6393, %v6538
          %v6657 = vadd.f32 %v6394, %v6538
          %v6658 = vadd.f32 %v6395, %v6538
          %v6659 = vadd.f32 %v6396, %v6538
          %v6660 = vadd.f32 %v6397, %v6538
          %v6661 = vadd.f32 %v6398, %v6538
          %v6662 = vadd.f32 %v6399, %v6538
          %v6663 = vadd.f32 %v6400, %v6538
          %v6664 = vadd.f32 %v6401, %v6538
          %v6665 = vadd.f32 %v6402, %v6538
          %v6666 = vadd.f32 %v6403, %v6538
          %v6667 = vadd.f32 %v6404, %v6538
          %v6668 = vadd.f32 %v6405, %v6538
          %v6669 = vadd.f32 %v6406, %v6538
          %v6670 = vadd.f32 %v6407, %v6538
          %v6671 = vadd.f32 %v6408, %v6538
          %v6672 = vadd.f32 %v6409, %v6538
          %v6673 = vadd.f32 %v6410, %v6538
          %v6674 = vadd.f32 %v6411, %v6538
          %v6675 = vadd.f32 %v6412, %v6538
          %v6676 = vadd.f32 %v6413, %v6538
          %v6677 = vadd.f32 %v6414, %v6538
          %v6678 = vadd.f32 %v6415, %v6538
          %v6679 = vadd.f32 %v6416, %v6538
          %v6680 = vadd.f32 %v6417, %v6538
          %v6681 = vadd.f32 %v6418, %v6538
          %v6682 = vadd.f32 %v6419, %v6538
          %v6683 = vadd.f32 %v6420, %v6538
          %v6684 = vadd.f32 %v6421, %v6538
          %v6685 = vadd.f32 %v6422, %v6538
          %v6686 = vadd.f32 %v6423, %v6538
          %v6687 = vadd.f32 %v6424, %v6538
          %v6688 = vadd.f32 %v6425, %v6538
          %v6689 = vadd.f32 %v6426, %v6538
          %v6690 = vadd.f32 %v6427, %v6538
          %v6691 = vadd.f32 %v6428, %v6538
          %v6692 = vadd.f32 %v6429, %v6538
          %v6693 = vadd.f32 %v6430, %v6538
          %v6694 = vadd.f32 %v6431, %v6538
          %v6695 = vadd.f32 %v6432, %v6538
          %v6696 = vadd.f32 %v6433, %v6538
          %v6697 = vadd.f32 %v6434, %v6538
          %v6698 = vadd.f32 %v6435, %v6538
          %v6699 = vadd.f32 %v6436, %v6538
          %v6700 = vadd.f32 %v6437, %v6538
          %v6701 = vadd.f32 %v6438, %v6538
          %v6702 = vadd.f32 %v6439, %v6538
          %v6703 = vadd.f32 %v6440, %v6538
          %v6704 = vadd.f32 %v6441, %v6538
          %v6705 = vadd.f32 %v6442, %v6538
          %v6706 = vadd.f32 %v6443, %v6538
          %v6707 = vadd.f32 %v6444, %v6538
          %v6708 = vadd.f32 %v6445, %v6538
          %v6709 = vadd.f32 %v6446, %v6538
          %v6710 = vadd.f32 %v6447, %v6538
          %v6711 = vadd.f32 %v6448, %v6538
          %v6712 = vadd.f32 %v6449, %v6538
          %v6713 = vadd.f32 %v6450, %v6538
          %v6714 = vadd.f32 %v6451, %v6538
          %v6715 = vadd.f32 %v6452, %v6538
          %v6716 = vadd.f32 %v6453, %v6538
          %v6717 = vadd.f32 %v6454, %v6538
          %v6718 = vadd.f32 %v6455, %v6538
          %v6719 = vadd.f32 %v6456, %v6538
          %v6720 = vadd.f32 %v6457, %v6538
          %v6721 = vadd.f32 %v6458, %v6538
          %v6722 = vadd.f32 %v6459, %v6538
          %v6723 = vadd.f32 %v6460, %v6538
          %v6724 = vadd.f32 %v6461, %v6538
          %v6725 = vadd.f32 %v6462, %v6538
          %v6726 = vadd.f32 %v6463, %v6538
          %v6727 = vadd.f32 %v6464, %v6538
          %v6728 = vadd.f32 %v6465, %v6538
          %v6729 = vadd.f32 %v6466, %v6538
          %v6730 = vadd.f32 %v6467, %v6538
          %v6731 = vadd.f32 %v6468, %v6538
          %v6732 = vadd.f32 %v6469, %v6538
          %v6733 = vadd.f32 %v6470, %v6538
          %v6734 = vadd.f32 %v6471, %v6538
          %v6735 = vadd.f32 %v6472, %v6538
          %v6736 = vadd.f32 %v6473, %v6538
          %v6737 = vadd.f32 %v6474, %v6538
          %v6738 = vadd.f32 %v6475, %v6538
          %v6739 = vadd.f32 %v6476, %v6538
          %v6740 = vadd.f32 %v6477, %v6538
          %v6741 = vadd.f32 %v6478, %v6538
          %v6742 = vadd.f32 %v6479, %v6538
          %v6743 = vadd.f32 %v6480, %v6538
          %v6744 = vadd.f32 %v6481, %v6538
          %v6745 = vadd.f32 %v6482, %v6538
          %v6746 = vadd.f32 %v6483, %v6538
          %v6747 = vadd.f32 %v6484, %v6538
          %v6748 = vadd.f32 %v6485, %v6538
          %v6749 = vadd.f32 %v6486, %v6538
          %v6750 = vadd.f32 %v6487, %v6538
          %v6751 = vadd.f32 %v6488, %v6538
          %v6752 = vadd.f32 %v6489, %v6538
          %v6753 = vadd.f32 %v6490, %v6538
          %v6754 = vadd.f32 %v6491, %v6538
          %v6755 = vadd.f32 %v6492, %v6538
          %v6756 = vadd.f32 %v6493, %v6538
          %v6757 = vadd.f32 %v6494, %v6538
          %v6758 = vadd.f32 %v6495, %v6538
          %v6759 = vadd.f32 %v6496, %v6538
          %v6760 = vadd.f32 %v6497, %v6538
          %v6761 = vadd.f32 %v6498, %v6538
          %v6762 = vadd.f32 %v6499, %v6538
          %v6763 = vadd.f32 %v6500, %v6538
          %v6764 = vadd.f32 %v6501, %v6538
          %v6765 = vadd.f32 %v6502, %v6538
          %v6766 = vadd.f32 %v6503, %v6538
          %v6767 = vadd.f32 %v6504, %v6538
          %v6768 = vadd.f32 %v6505, %v6538
          %v6769 = vadd.f32 %v6506, %v6538
          %v6770 = vadd.f32 %v6507, %v6538
          %v6771 = vadd.f32 %v6508, %v6538
          %v6772 = vadd.f32 %v6509, %v6538
          %v6773 = vadd.f32 %v6510, %v6538
          %v6774 = vadd.f32 %v6511, %v6538
          %v6775 = vadd.f32 %v6512, %v6538
          %v6776 = vadd.f32 %v6513, %v6538
          %v6777 = vadd.f32 %v6514, %v6538
          %v6778 = vadd.f32 %v6515, %v6538
          %v6779 = vadd.f32 %v6516, %v6538
          %v6780 = vadd.f32 %v6517, %v6538
          %v6781 = vadd.f32 %v6518, %v6538
          %v6782 = vadd.f32 %v6519, %v6538
          %v6783 = vadd.f32 %v6520, %v6538
          %v6784 = vadd.f32 %v6521, %v6538
          %v6785 = vadd.f32 %v6522, %v6538
          %v6786 = vadd.f32 %v6523, %v6538
          %v6787 = vadd.f32 %v6524, %v6538
          %v6788 = vadd.f32 %v6525, %v6538
          %v6789 = vadd.f32 %v6526, %v6538
          %v6790 = vadd.f32 %v6527, %v6538
          %v6791 = vadd.f32 %v6528, %v6538
          %v6792 = vadd.f32 %v6529, %v6538
          %v6793 = vadd.f32 %v6530, %v6538
          %v6794 = vadd.f32 %v6531, %v6538
          %v6795 = vadd.f32 %v6532, %v6538
          %vm6796 = vcmask 203776
          %6797 = vst.msk [vmem:[%s223] sm:$0xff] %vm6796, %v6540
          %6798 = vst.msk [vmem:[%s223 + $0x8] sm:$0xff] %vm6796, %v6541
          %6799 = vst.msk [vmem:[%s223 + $0x10] sm:$0xff] %vm6796, %v6542
          %6800 = vst.msk [vmem:[%s223 + $0x18] sm:$0xff] %vm6796, %v6543
          %6801 = vst.msk [vmem:[%s223 + $0x20] sm:$0xff] %vm6796, %v6544
          %6802 = vst.msk [vmem:[%s223 + $0x28] sm:$0xff] %vm6796, %v6545
          %6803 = vst.msk [vmem:[%s223 + $0x30] sm:$0xff] %vm6796, %v6546
          %6804 = vst.msk [vmem:[%s223 + $0x38] sm:$0xff] %vm6796, %v6547
          %6805 = vst.msk [vmem:[%s223 + $0x40] sm:$0xff] %vm6796, %v6548
          %6806 = vst.msk [vmem:[%s223 + $0x48] sm:$0xff] %vm6796, %v6549
          %6807 = vst.msk [vmem:[%s223 + $0x50] sm:$0xff] %vm6796, %v6550
          %6808 = vst.msk [vmem:[%s223 + $0x58] sm:$0xff] %vm6796, %v6551
          %6809 = vst.msk [vmem:[%s223 + $0x60] sm:$0xff] %vm6796, %v6552
          %6810 = vst.msk [vmem:[%s223 + $0x68] sm:$0xff] %vm6796, %v6553
          %6811 = vst.msk [vmem:[%s223 + $0x70] sm:$0xff] %vm6796, %v6554
          %6812 = vst.msk [vmem:[%s223 + $0x78] sm:$0xff] %vm6796, %v6555
          %6813 = vst.msk [vmem:[%s223 + $0x80] sm:$0xff] %vm6796, %v6556
          %6814 = vst.msk [vmem:[%s223 + $0x88] sm:$0xff] %vm6796, %v6557
          %6815 = vst.msk [vmem:[%s223 + $0x90] sm:$0xff] %vm6796, %v6558
          %6816 = vst.msk [vmem:[%s223 + $0x98] sm:$0xff] %vm6796, %v6559
          %6817 = vst.msk [vmem:[%s223 + $0xa0] sm:$0xff] %vm6796, %v6560
          %6818 = vst.msk [vmem:[%s223 + $0xa8] sm:$0xff] %vm6796, %v6561
          %6819 = vst.msk [vmem:[%s223 + $0xb0] sm:$0xff] %vm6796, %v6562
          %6820 = vst.msk [vmem:[%s223 + $0xb8] sm:$0xff] %vm6796, %v6563
          %6821 = vst.msk [vmem:[%s223 + $0xc0] sm:$0xff] %vm6796, %v6564
          %6822 = vst.msk [vmem:[%s223 + $0xc8] sm:$0xff] %vm6796, %v6565
          %6823 = vst.msk [vmem:[%s223 + $0xd0] sm:$0xff] %vm6796, %v6566
          %6824 = vst.msk [vmem:[%s223 + $0xd8] sm:$0xff] %vm6796, %v6567
          %6825 = vst.msk [vmem:[%s223 + $0xe0] sm:$0xff] %vm6796, %v6568
          %6826 = vst.msk [vmem:[%s223 + $0xe8] sm:$0xff] %vm6796, %v6569
          %6827 = vst.msk [vmem:[%s223 + $0xf0] sm:$0xff] %vm6796, %v6570
          %6828 = vst.msk [vmem:[%s223 + $0xf8] sm:$0xff] %vm6796, %v6571
          %6829 = vst.msk [vmem:[%s223 + $0x100] sm:$0xff] %vm6796, %v6572
          %6830 = vst.msk [vmem:[%s223 + $0x108] sm:$0xff] %vm6796, %v6573
          %6831 = vst.msk [vmem:[%s223 + $0x110] sm:$0xff] %vm6796, %v6574
          %6832 = vst.msk [vmem:[%s223 + $0x118] sm:$0xff] %vm6796, %v6575
          %6833 = vst.msk [vmem:[%s223 + $0x120] sm:$0xff] %vm6796, %v6576
          %6834 = vst.msk [vmem:[%s223 + $0x128] sm:$0xff] %vm6796, %v6577
          %6835 = vst.msk [vmem:[%s223 + $0x130] sm:$0xff] %vm6796, %v6578
          %6836 = vst.msk [vmem:[%s223 + $0x138] sm:$0xff] %vm6796, %v6579
          %6837 = vst.msk [vmem:[%s223 + $0x140] sm:$0xff] %vm6796, %v6580
          %6838 = vst.msk [vmem:[%s223 + $0x148] sm:$0xff] %vm6796, %v6581
          %6839 = vst.msk [vmem:[%s223 + $0x150] sm:$0xff] %vm6796, %v6582
          %6840 = vst.msk [vmem:[%s223 + $0x158] sm:$0xff] %vm6796, %v6583
          %6841 = vst.msk [vmem:[%s223 + $0x160] sm:$0xff] %vm6796, %v6584
          %6842 = vst.msk [vmem:[%s223 + $0x168] sm:$0xff] %vm6796, %v6585
          %6843 = vst.msk [vmem:[%s223 + $0x170] sm:$0xff] %vm6796, %v6586
          %6844 = vst.msk [vmem:[%s223 + $0x178] sm:$0xff] %vm6796, %v6587
          %6845 = vst.msk [vmem:[%s223 + $0x180] sm:$0xff] %vm6796, %v6588
          %6846 = vst.msk [vmem:[%s223 + $0x188] sm:$0xff] %vm6796, %v6589
          %6847 = vst.msk [vmem:[%s223 + $0x190] sm:$0xff] %vm6796, %v6590
          %6848 = vst.msk [vmem:[%s223 + $0x198] sm:$0xff] %vm6796, %v6591
          %6849 = vst.msk [vmem:[%s223 + $0x1a0] sm:$0xff] %vm6796, %v6592
          %6850 = vst.msk [vmem:[%s223 + $0x1a8] sm:$0xff] %vm6796, %v6593
          %6851 = vst.msk [vmem:[%s223 + $0x1b0] sm:$0xff] %vm6796, %v6594
          %6852 = vst.msk [vmem:[%s223 + $0x1b8] sm:$0xff] %vm6796, %v6595
          %6853 = vst.msk [vmem:[%s223 + $0x1c0] sm:$0xff] %vm6796, %v6596
          %6854 = vst.msk [vmem:[%s223 + $0x1c8] sm:$0xff] %vm6796, %v6597
          %6855 = vst.msk [vmem:[%s223 + $0x1d0] sm:$0xff] %vm6796, %v6598
          %6856 = vst.msk [vmem:[%s223 + $0x1d8] sm:$0xff] %vm6796, %v6599
          %6857 = vst.msk [vmem:[%s223 + $0x1e0] sm:$0xff] %vm6796, %v6600
          %6858 = vst.msk [vmem:[%s223 + $0x1e8] sm:$0xff] %vm6796, %v6601
          %6859 = vst.msk [vmem:[%s223 + $0x1f0] sm:$0xff] %vm6796, %v6602
          %6860 = vst.msk [vmem:[%s223 + $0x1f8] sm:$0xff] %vm6796, %v6603
          %6861 = vst.msk [vmem:[%s223 + $0x200] sm:$0xff] %vm6796, %v6604
          %6862 = vst.msk [vmem:[%s223 + $0x208] sm:$0xff] %vm6796, %v6605
          %6863 = vst.msk [vmem:[%s223 + $0x210] sm:$0xff] %vm6796, %v6606
          %6864 = vst.msk [vmem:[%s223 + $0x218] sm:$0xff] %vm6796, %v6607
          %6865 = vst.msk [vmem:[%s223 + $0x220] sm:$0xff] %vm6796, %v6608
          %6866 = vst.msk [vmem:[%s223 + $0x228] sm:$0xff] %vm6796, %v6609
          %6867 = vst.msk [vmem:[%s223 + $0x230] sm:$0xff] %vm6796, %v6610
          %6868 = vst.msk [vmem:[%s223 + $0x238] sm:$0xff] %vm6796, %v6611
          %6869 = vst.msk [vmem:[%s223 + $0x240] sm:$0xff] %vm6796, %v6612
          %6870 = vst.msk [vmem:[%s223 + $0x248] sm:$0xff] %vm6796, %v6613
          %6871 = vst.msk [vmem:[%s223 + $0x250] sm:$0xff] %vm6796, %v6614
          %6872 = vst.msk [vmem:[%s223 + $0x258] sm:$0xff] %vm6796, %v6615
          %6873 = vst.msk [vmem:[%s223 + $0x260] sm:$0xff] %vm6796, %v6616
          %6874 = vst.msk [vmem:[%s223 + $0x268] sm:$0xff] %vm6796, %v6617
          %6875 = vst.msk [vmem:[%s223 + $0x270] sm:$0xff] %vm6796, %v6618
          %6876 = vst.msk [vmem:[%s223 + $0x278] sm:$0xff] %vm6796, %v6619
          %6877 = vst.msk [vmem:[%s223 + $0x280] sm:$0xff] %vm6796, %v6620
          %6878 = vst.msk [vmem:[%s223 + $0x288] sm:$0xff] %vm6796, %v6621
          %6879 = vst.msk [vmem:[%s223 + $0x290] sm:$0xff] %vm6796, %v6622
          %6880 = vst.msk [vmem:[%s223 + $0x298] sm:$0xff] %vm6796, %v6623
          %6881 = vst.msk [vmem:[%s223 + $0x2a0] sm:$0xff] %vm6796, %v6624
          %6882 = vst.msk [vmem:[%s223 + $0x2a8] sm:$0xff] %vm6796, %v6625
          %6883 = vst.msk [vmem:[%s223 + $0x2b0] sm:$0xff] %vm6796, %v6626
          %6884 = vst.msk [vmem:[%s223 + $0x2b8] sm:$0xff] %vm6796, %v6627
          %6885 = vst.msk [vmem:[%s223 + $0x2c0] sm:$0xff] %vm6796, %v6628
          %6886 = vst.msk [vmem:[%s223 + $0x2c8] sm:$0xff] %vm6796, %v6629
          %6887 = vst.msk [vmem:[%s223 + $0x2d0] sm:$0xff] %vm6796, %v6630
          %6888 = vst.msk [vmem:[%s223 + $0x2d8] sm:$0xff] %vm6796, %v6631
          %6889 = vst.msk [vmem:[%s223 + $0x2e0] sm:$0xff] %vm6796, %v6632
          %6890 = vst.msk [vmem:[%s223 + $0x2e8] sm:$0xff] %vm6796, %v6633
          %6891 = vst.msk [vmem:[%s223 + $0x2f0] sm:$0xff] %vm6796, %v6634
          %6892 = vst.msk [vmem:[%s223 + $0x2f8] sm:$0xff] %vm6796, %v6635
          %6893 = vst.msk [vmem:[%s223 + $0x300] sm:$0xff] %vm6796, %v6636
          %6894 = vst.msk [vmem:[%s223 + $0x308] sm:$0xff] %vm6796, %v6637
          %6895 = vst.msk [vmem:[%s223 + $0x310] sm:$0xff] %vm6796, %v6638
          %6896 = vst.msk [vmem:[%s223 + $0x318] sm:$0xff] %vm6796, %v6639
          %6897 = vst.msk [vmem:[%s223 + $0x320] sm:$0xff] %vm6796, %v6640
          %6898 = vst.msk [vmem:[%s223 + $0x328] sm:$0xff] %vm6796, %v6641
          %6899 = vst.msk [vmem:[%s223 + $0x330] sm:$0xff] %vm6796, %v6642
          %6900 = vst.msk [vmem:[%s223 + $0x338] sm:$0xff] %vm6796, %v6643
          %6901 = vst.msk [vmem:[%s223 + $0x340] sm:$0xff] %vm6796, %v6644
          %6902 = vst.msk [vmem:[%s223 + $0x348] sm:$0xff] %vm6796, %v6645
          %6903 = vst.msk [vmem:[%s223 + $0x350] sm:$0xff] %vm6796, %v6646
          %6904 = vst.msk [vmem:[%s223 + $0x358] sm:$0xff] %vm6796, %v6647
          %6905 = vst.msk [vmem:[%s223 + $0x360] sm:$0xff] %vm6796, %v6648
          %6906 = vst.msk [vmem:[%s223 + $0x368] sm:$0xff] %vm6796, %v6649
          %6907 = vst.msk [vmem:[%s223 + $0x370] sm:$0xff] %vm6796, %v6650
          %6908 = vst.msk [vmem:[%s223 + $0x378] sm:$0xff] %vm6796, %v6651
          %6909 = vst.msk [vmem:[%s223 + $0x380] sm:$0xff] %vm6796, %v6652
          %6910 = vst.msk [vmem:[%s223 + $0x388] sm:$0xff] %vm6796, %v6653
          %6911 = vst.msk [vmem:[%s223 + $0x390] sm:$0xff] %vm6796, %v6654
          %6912 = vst.msk [vmem:[%s223 + $0x398] sm:$0xff] %vm6796, %v6655
          %6913 = vst.msk [vmem:[%s223 + $0x3a0] sm:$0xff] %vm6796, %v6656
          %6914 = vst.msk [vmem:[%s223 + $0x3a8] sm:$0xff] %vm6796, %v6657
          %6915 = vst.msk [vmem:[%s223 + $0x3b0] sm:$0xff] %vm6796, %v6658
          %6916 = vst.msk [vmem:[%s223 + $0x3b8] sm:$0xff] %vm6796, %v6659
          %6917 = vst.msk [vmem:[%s223 + $0x3c0] sm:$0xff] %vm6796, %v6660
          %6918 = vst.msk [vmem:[%s223 + $0x3c8] sm:$0xff] %vm6796, %v6661
          %6919 = vst.msk [vmem:[%s223 + $0x3d0] sm:$0xff] %vm6796, %v6662
          %6920 = vst.msk [vmem:[%s223 + $0x3d8] sm:$0xff] %vm6796, %v6663
          %6921 = vst.msk [vmem:[%s223 + $0x3e0] sm:$0xff] %vm6796, %v6664
          %6922 = vst.msk [vmem:[%s223 + $0x3e8] sm:$0xff] %vm6796, %v6665
          %6923 = vst.msk [vmem:[%s223 + $0x3f0] sm:$0xff] %vm6796, %v6666
          %6924 = vst.msk [vmem:[%s223 + $0x3f8] sm:$0xff] %vm6796, %v6667
          %6925 = vst.msk [vmem:[%s223 + $0x400] sm:$0xff] %vm6796, %v6668
          %6926 = vst.msk [vmem:[%s223 + $0x408] sm:$0xff] %vm6796, %v6669
          %6927 = vst.msk [vmem:[%s223 + $0x410] sm:$0xff] %vm6796, %v6670
          %6928 = vst.msk [vmem:[%s223 + $0x418] sm:$0xff] %vm6796, %v6671
          %6929 = vst.msk [vmem:[%s223 + $0x420] sm:$0xff] %vm6796, %v6672
          %6930 = vst.msk [vmem:[%s223 + $0x428] sm:$0xff] %vm6796, %v6673
          %6931 = vst.msk [vmem:[%s223 + $0x430] sm:$0xff] %vm6796, %v6674
          %6932 = vst.msk [vmem:[%s223 + $0x438] sm:$0xff] %vm6796, %v6675
          %6933 = vst.msk [vmem:[%s223 + $0x440] sm:$0xff] %vm6796, %v6676
          %6934 = vst.msk [vmem:[%s223 + $0x448] sm:$0xff] %vm6796, %v6677
          %6935 = vst.msk [vmem:[%s223 + $0x450] sm:$0xff] %vm6796, %v6678
          %6936 = vst.msk [vmem:[%s223 + $0x458] sm:$0xff] %vm6796, %v6679
          %6937 = vst.msk [vmem:[%s223 + $0x460] sm:$0xff] %vm6796, %v6680
          %6938 = vst.msk [vmem:[%s223 + $0x468] sm:$0xff] %vm6796, %v6681
          %6939 = vst.msk [vmem:[%s223 + $0x470] sm:$0xff] %vm6796, %v6682
          %6940 = vst.msk [vmem:[%s223 + $0x478] sm:$0xff] %vm6796, %v6683
          %6941 = vst.msk [vmem:[%s223 + $0x480] sm:$0xff] %vm6796, %v6684
          %6942 = vst.msk [vmem:[%s223 + $0x488] sm:$0xff] %vm6796, %v6685
          %6943 = vst.msk [vmem:[%s223 + $0x490] sm:$0xff] %vm6796, %v6686
          %6944 = vst.msk [vmem:[%s223 + $0x498] sm:$0xff] %vm6796, %v6687
          %6945 = vst.msk [vmem:[%s223 + $0x4a0] sm:$0xff] %vm6796, %v6688
          %6946 = vst.msk [vmem:[%s223 + $0x4a8] sm:$0xff] %vm6796, %v6689
          %6947 = vst.msk [vmem:[%s223 + $0x4b0] sm:$0xff] %vm6796, %v6690
          %6948 = vst.msk [vmem:[%s223 + $0x4b8] sm:$0xff] %vm6796, %v6691
          %6949 = vst.msk [vmem:[%s223 + $0x4c0] sm:$0xff] %vm6796, %v6692
          %6950 = vst.msk [vmem:[%s223 + $0x4c8] sm:$0xff] %vm6796, %v6693
          %6951 = vst.msk [vmem:[%s223 + $0x4d0] sm:$0xff] %vm6796, %v6694
          %6952 = vst.msk [vmem:[%s223 + $0x4d8] sm:$0xff] %vm6796, %v6695
          %6953 = vst.msk [vmem:[%s223 + $0x4e0] sm:$0xff] %vm6796, %v6696
          %6954 = vst.msk [vmem:[%s223 + $0x4e8] sm:$0xff] %vm6796, %v6697
          %6955 = vst.msk [vmem:[%s223 + $0x4f0] sm:$0xff] %vm6796, %v6698
          %6956 = vst.msk [vmem:[%s223 + $0x4f8] sm:$0xff] %vm6796, %v6699
          %6957 = vst.msk [vmem:[%s223 + $0x500] sm:$0xff] %vm6796, %v6700
          %6958 = vst.msk [vmem:[%s223 + $0x508] sm:$0xff] %vm6796, %v6701
          %6959 = vst.msk [vmem:[%s223 + $0x510] sm:$0xff] %vm6796, %v6702
          %6960 = vst.msk [vmem:[%s223 + $0x518] sm:$0xff] %vm6796, %v6703
          %6961 = vst.msk [vmem:[%s223 + $0x520] sm:$0xff] %vm6796, %v6704
          %6962 = vst.msk [vmem:[%s223 + $0x528] sm:$0xff] %vm6796, %v6705
          %6963 = vst.msk [vmem:[%s223 + $0x530] sm:$0xff] %vm6796, %v6706
          %6964 = vst.msk [vmem:[%s223 + $0x538] sm:$0xff] %vm6796, %v6707
          %6965 = vst.msk [vmem:[%s223 + $0x540] sm:$0xff] %vm6796, %v6708
          %6966 = vst.msk [vmem:[%s223 + $0x548] sm:$0xff] %vm6796, %v6709
          %6967 = vst.msk [vmem:[%s223 + $0x550] sm:$0xff] %vm6796, %v6710
          %6968 = vst.msk [vmem:[%s223 + $0x558] sm:$0xff] %vm6796, %v6711
          %6969 = vst.msk [vmem:[%s223 + $0x560] sm:$0xff] %vm6796, %v6712
          %6970 = vst.msk [vmem:[%s223 + $0x568] sm:$0xff] %vm6796, %v6713
          %6971 = vst.msk [vmem:[%s223 + $0x570] sm:$0xff] %vm6796, %v6714
          %6972 = vst.msk [vmem:[%s223 + $0x578] sm:$0xff] %vm6796, %v6715
          %6973 = vst.msk [vmem:[%s223 + $0x580] sm:$0xff] %vm6796, %v6716
          %6974 = vst.msk [vmem:[%s223 + $0x588] sm:$0xff] %vm6796, %v6717
          %6975 = vst.msk [vmem:[%s223 + $0x590] sm:$0xff] %vm6796, %v6718
          %6976 = vst.msk [vmem:[%s223 + $0x598] sm:$0xff] %vm6796, %v6719
          %6977 = vst.msk [vmem:[%s223 + $0x5a0] sm:$0xff] %vm6796, %v6720
          %6978 = vst.msk [vmem:[%s223 + $0x5a8] sm:$0xff] %vm6796, %v6721
          %6979 = vst.msk [vmem:[%s223 + $0x5b0] sm:$0xff] %vm6796, %v6722
          %6980 = vst.msk [vmem:[%s223 + $0x5b8] sm:$0xff] %vm6796, %v6723
          %6981 = vst.msk [vmem:[%s223 + $0x5c0] sm:$0xff] %vm6796, %v6724
          %6982 = vst.msk [vmem:[%s223 + $0x5c8] sm:$0xff] %vm6796, %v6725
          %6983 = vst.msk [vmem:[%s223 + $0x5d0] sm:$0xff] %vm6796, %v6726
          %6984 = vst.msk [vmem:[%s223 + $0x5d8] sm:$0xff] %vm6796, %v6727
          %6985 = vst.msk [vmem:[%s223 + $0x5e0] sm:$0xff] %vm6796, %v6728
          %6986 = vst.msk [vmem:[%s223 + $0x5e8] sm:$0xff] %vm6796, %v6729
          %6987 = vst.msk [vmem:[%s223 + $0x5f0] sm:$0xff] %vm6796, %v6730
          %6988 = vst.msk [vmem:[%s223 + $0x5f8] sm:$0xff] %vm6796, %v6731
          %6989 = vst.msk [vmem:[%s223 + $0x600] sm:$0xff] %vm6796, %v6732
          %6990 = vst.msk [vmem:[%s223 + $0x608] sm:$0xff] %vm6796, %v6733
          %6991 = vst.msk [vmem:[%s223 + $0x610] sm:$0xff] %vm6796, %v6734
          %6992 = vst.msk [vmem:[%s223 + $0x618] sm:$0xff] %vm6796, %v6735
          %6993 = vst.msk [vmem:[%s223 + $0x620] sm:$0xff] %vm6796, %v6736
          %6994 = vst.msk [vmem:[%s223 + $0x628] sm:$0xff] %vm6796, %v6737
          %6995 = vst.msk [vmem:[%s223 + $0x630] sm:$0xff] %vm6796, %v6738
          %6996 = vst.msk [vmem:[%s223 + $0x638] sm:$0xff] %vm6796, %v6739
          %6997 = vst.msk [vmem:[%s223 + $0x640] sm:$0xff] %vm6796, %v6740
          %6998 = vst.msk [vmem:[%s223 + $0x648] sm:$0xff] %vm6796, %v6741
          %6999 = vst.msk [vmem:[%s223 + $0x650] sm:$0xff] %vm6796, %v6742
          %7000 = vst.msk [vmem:[%s223 + $0x658] sm:$0xff] %vm6796, %v6743
          %7001 = vst.msk [vmem:[%s223 + $0x660] sm:$0xff] %vm6796, %v6744
          %7002 = vst.msk [vmem:[%s223 + $0x668] sm:$0xff] %vm6796, %v6745
          %7003 = vst.msk [vmem:[%s223 + $0x670] sm:$0xff] %vm6796, %v6746
          %7004 = vst.msk [vmem:[%s223 + $0x678] sm:$0xff] %vm6796, %v6747
          %7005 = vst.msk [vmem:[%s223 + $0x680] sm:$0xff] %vm6796, %v6748
          %7006 = vst.msk [vmem:[%s223 + $0x688] sm:$0xff] %vm6796, %v6749
          %7007 = vst.msk [vmem:[%s223 + $0x690] sm:$0xff] %vm6796, %v6750
          %7008 = vst.msk [vmem:[%s223 + $0x698] sm:$0xff] %vm6796, %v6751
          %7009 = vst.msk [vmem:[%s223 + $0x6a0] sm:$0xff] %vm6796, %v6752
          %7010 = vst.msk [vmem:[%s223 + $0x6a8] sm:$0xff] %vm6796, %v6753
          %7011 = vst.msk [vmem:[%s223 + $0x6b0] sm:$0xff] %vm6796, %v6754
          %7012 = vst.msk [vmem:[%s223 + $0x6b8] sm:$0xff] %vm6796, %v6755
          %7013 = vst.msk [vmem:[%s223 + $0x6c0] sm:$0xff] %vm6796, %v6756
          %7014 = vst.msk [vmem:[%s223 + $0x6c8] sm:$0xff] %vm6796, %v6757
          %7015 = vst.msk [vmem:[%s223 + $0x6d0] sm:$0xff] %vm6796, %v6758
          %7016 = vst.msk [vmem:[%s223 + $0x6d8] sm:$0xff] %vm6796, %v6759
          %7017 = vst.msk [vmem:[%s223 + $0x6e0] sm:$0xff] %vm6796, %v6760
          %7018 = vst.msk [vmem:[%s223 + $0x6e8] sm:$0xff] %vm6796, %v6761
          %7019 = vst.msk [vmem:[%s223 + $0x6f0] sm:$0xff] %vm6796, %v6762
          %7020 = vst.msk [vmem:[%s223 + $0x6f8] sm:$0xff] %vm6796, %v6763
          %7021 = vst.msk [vmem:[%s223 + $0x700] sm:$0xff] %vm6796, %v6764
          %7022 = vst.msk [vmem:[%s223 + $0x708] sm:$0xff] %vm6796, %v6765
          %7023 = vst.msk [vmem:[%s223 + $0x710] sm:$0xff] %vm6796, %v6766
          %7024 = vst.msk [vmem:[%s223 + $0x718] sm:$0xff] %vm6796, %v6767
          %7025 = vst.msk [vmem:[%s223 + $0x720] sm:$0xff] %vm6796, %v6768
          %7026 = vst.msk [vmem:[%s223 + $0x728] sm:$0xff] %vm6796, %v6769
          %7027 = vst.msk [vmem:[%s223 + $0x730] sm:$0xff] %vm6796, %v6770
          %7028 = vst.msk [vmem:[%s223 + $0x738] sm:$0xff] %vm6796, %v6771
          %7029 = vst.msk [vmem:[%s223 + $0x740] sm:$0xff] %vm6796, %v6772
          %7030 = vst.msk [vmem:[%s223 + $0x748] sm:$0xff] %vm6796, %v6773
          %7031 = vst.msk [vmem:[%s223 + $0x750] sm:$0xff] %vm6796, %v6774
          %7032 = vst.msk [vmem:[%s223 + $0x758] sm:$0xff] %vm6796, %v6775
          %7033 = vst.msk [vmem:[%s223 + $0x760] sm:$0xff] %vm6796, %v6776
          %7034 = vst.msk [vmem:[%s223 + $0x768] sm:$0xff] %vm6796, %v6777
          %7035 = vst.msk [vmem:[%s223 + $0x770] sm:$0xff] %vm6796, %v6778
          %7036 = vst.msk [vmem:[%s223 + $0x778] sm:$0xff] %vm6796, %v6779
          %7037 = vst.msk [vmem:[%s223 + $0x780] sm:$0xff] %vm6796, %v6780
          %7038 = vst.msk [vmem:[%s223 + $0x788] sm:$0xff] %vm6796, %v6781
          %7039 = vst.msk [vmem:[%s223 + $0x790] sm:$0xff] %vm6796, %v6782
          %7040 = vst.msk [vmem:[%s223 + $0x798] sm:$0xff] %vm6796, %v6783
          %7041 = vst.msk [vmem:[%s223 + $0x7a0] sm:$0xff] %vm6796, %v6784
          %7042 = vst.msk [vmem:[%s223 + $0x7a8] sm:$0xff] %vm6796, %v6785
          %7043 = vst.msk [vmem:[%s223 + $0x7b0] sm:$0xff] %vm6796, %v6786
          %7044 = vst.msk [vmem:[%s223 + $0x7b8] sm:$0xff] %vm6796, %v6787
          %7045 = vst.msk [vmem:[%s223 + $0x7c0] sm:$0xff] %vm6796, %v6788
          %7046 = vst.msk [vmem:[%s223 + $0x7c8] sm:$0xff] %vm6796, %v6789
          %7047 = vst.msk [vmem:[%s223 + $0x7d0] sm:$0xff] %vm6796, %v6790
          %7048 = vst.msk [vmem:[%s223 + $0x7d8] sm:$0xff] %vm6796, %v6791
          %7049 = vst.msk [vmem:[%s223 + $0x7e0] sm:$0xff] %vm6796, %v6792
          %7050 = vst.msk [vmem:[%s223 + $0x7e8] sm:$0xff] %vm6796, %v6793
          %7051 = vst.msk [vmem:[%s223 + $0x7f0] sm:$0xff] %vm6796, %v6794
          %7052 = vst.msk [vmem:[%s223 + $0x7f8] sm:$0xff] %vm6796, %v6795
        $region52: #{tpu_custom_call.1} parent=35 // pred_fallthru
          _
        %s7053 = sand.u32 %s130, 1
        %s7054 = sand.u32 %s130, 1
        %s7055 = smul.addr %s7054, 2048
        %s7056 = scalar_lea.vmem [#allocation7], %s7055
        // Predicated region
        $region53: #{tpu_custom_call.1} parent=35 // pred_check
          %p7057 = pneg %p140
        $region54: #{tpu_custom_call.1} parent=35 // pred_check_branch
          %7059 = sbr.rel (%p7057) target = $region56
        $region55: #{tpu_custom_call.1} parent=35 // pred_region
          %s7060 = smul.u32 %s20, %s19
          %s7061 = smul.u32 256, %s7060
          %s7062 = ssub.s32 325, %s7061
          %p7063 = scmp.lt.s32.totalorder %s7062, 256
          %s7064 = scalar_select %p7063, %s7062, 256
          %s7065 = smul.u32 128, %s7064
          %p7066 = scmp.ne.s32.totalorder 0, %s7065
          %s7067 = smul.addr %s7061, 8
          %s7068 = scalar_lea.vmem %s4, %s7067
          // Predicated region
          $region57: #{tpu_custom_call.1} parent=55 // pred_check
            %p7069 = pneg %p7066
          $region58: #{tpu_custom_call.1} parent=55 // pred_check_branch
            %7071 = sbr.rel (%p7069) target = $region60
          $region59: #{tpu_custom_call.1} parent=55 // pred_region
            // Predicated region
            $region61: #{tpu_custom_call.1} parent=59 // pred_check
              _
            $region62: #{tpu_custom_call.1} parent=59 // pred_check_branch
              %7073 = sbr.rel (0) target = $region64
            $region63: #{tpu_custom_call.1} parent=59 // pred_region
              // Predicated region
              $region83: #{tpu_custom_call.1} parent=63 // pred_check
                _
              $region84: #{tpu_custom_call.1} parent=63 // pred_check_branch
                %7249 = sbr.rel (0) target = $region86
              $region85: #{tpu_custom_call.1} parent=63 // pred_region
                %s7250 = sshrl.u32 %s7064, 6
                // While loop
                $region87: #{tpu_custom_call.1} parent=85 // loop_pre_header
                  _
                $region88: #{tpu_custom_call.1} parent=85 // loop_header
                  %s7252 = sphi 0, %s7254
                  %p7253 = scmp.ge.s32.totalorder %s7252, %s7250
                  %s7257 = sphi 0, %s7390
                  %s7258 = sphi %s7056, %s7393
                  %s7259 = sphi %s7068, %s7394
                $region89: #{tpu_custom_call.1} parent=85 // loop_header_branch
                  %7256 = sbr.rel (%p7253) target = $region93
                $region90: #{tpu_custom_call.1} parent=85 // loop_body
                  %v7260 = vld [vmem:[%s7258] sm:$0xff]
                  %7261 = vst [vmem:[%s7259] sm:$0xff] %v7260
                  %v7262 = vld [vmem:[%s7258 + $0x8] sm:$0xff]
                  %7263 = vst [vmem:[%s7259 + $0x8] sm:$0xff] %v7262
                  %v7264 = vld [vmem:[%s7258 + $0x10] sm:$0xff]
                  %7265 = vst [vmem:[%s7259 + $0x10] sm:$0xff] %v7264
                  %v7266 = vld [vmem:[%s7258 + $0x18] sm:$0xff]
                  %7267 = vst [vmem:[%s7259 + $0x18] sm:$0xff] %v7266
                  %v7268 = vld [vmem:[%s7258 + $0x20] sm:$0xff]
                  %7269 = vst [vmem:[%s7259 + $0x20] sm:$0xff] %v7268
                  %v7270 = vld [vmem:[%s7258 + $0x28] sm:$0xff]
                  %7271 = vst [vmem:[%s7259 + $0x28] sm:$0xff] %v7270
                  %v7272 = vld [vmem:[%s7258 + $0x30] sm:$0xff]
                  %7273 = vst [vmem:[%s7259 + $0x30] sm:$0xff] %v7272
                  %v7274 = vld [vmem:[%s7258 + $0x38] sm:$0xff]
                  %7275 = vst [vmem:[%s7259 + $0x38] sm:$0xff] %v7274
                  %v7276 = vld [vmem:[%s7258 + $0x40] sm:$0xff]
                  %7277 = vst [vmem:[%s7259 + $0x40] sm:$0xff] %v7276
                  %v7278 = vld [vmem:[%s7258 + $0x48] sm:$0xff]
                  %7279 = vst [vmem:[%s7259 + $0x48] sm:$0xff] %v7278
                  %v7280 = vld [vmem:[%s7258 + $0x50] sm:$0xff]
                  %7281 = vst [vmem:[%s7259 + $0x50] sm:$0xff] %v7280
                  %v7282 = vld [vmem:[%s7258 + $0x58] sm:$0xff]
                  %7283 = vst [vmem:[%s7259 + $0x58] sm:$0xff] %v7282
                  %v7284 = vld [vmem:[%s7258 + $0x60] sm:$0xff]
                  %7285 = vst [vmem:[%s7259 + $0x60] sm:$0xff] %v7284
                  %v7286 = vld [vmem:[%s7258 + $0x68] sm:$0xff]
                  %7287 = vst [vmem:[%s7259 + $0x68] sm:$0xff] %v7286
                  %v7288 = vld [vmem:[%s7258 + $0x70] sm:$0xff]
                  %7289 = vst [vmem:[%s7259 + $0x70] sm:$0xff] %v7288
                  %v7290 = vld [vmem:[%s7258 + $0x78] sm:$0xff]
                  %7291 = vst [vmem:[%s7259 + $0x78] sm:$0xff] %v7290
                  %v7292 = vld [vmem:[%s7258 + $0x80] sm:$0xff]
                  %7293 = vst [vmem:[%s7259 + $0x80] sm:$0xff] %v7292
                  %v7294 = vld [vmem:[%s7258 + $0x88] sm:$0xff]
                  %7295 = vst [vmem:[%s7259 + $0x88] sm:$0xff] %v7294
                  %v7296 = vld [vmem:[%s7258 + $0x90] sm:$0xff]
                  %7297 = vst [vmem:[%s7259 + $0x90] sm:$0xff] %v7296
                  %v7298 = vld [vmem:[%s7258 + $0x98] sm:$0xff]
                  %7299 = vst [vmem:[%s7259 + $0x98] sm:$0xff] %v7298
                  %v7300 = vld [vmem:[%s7258 + $0xa0] sm:$0xff]
                  %7301 = vst [vmem:[%s7259 + $0xa0] sm:$0xff] %v7300
                  %v7302 = vld [vmem:[%s7258 + $0xa8] sm:$0xff]
                  %7303 = vst [vmem:[%s7259 + $0xa8] sm:$0xff] %v7302
                  %v7304 = vld [vmem:[%s7258 + $0xb0] sm:$0xff]
                  %7305 = vst [vmem:[%s7259 + $0xb0] sm:$0xff] %v7304
                  %v7306 = vld [vmem:[%s7258 + $0xb8] sm:$0xff]
                  %7307 = vst [vmem:[%s7259 + $0xb8] sm:$0xff] %v7306
                  %v7308 = vld [vmem:[%s7258 + $0xc0] sm:$0xff]
                  %7309 = vst [vmem:[%s7259 + $0xc0] sm:$0xff] %v7308
                  %v7310 = vld [vmem:[%s7258 + $0xc8] sm:$0xff]
                  %7311 = vst [vmem:[%s7259 + $0xc8] sm:$0xff] %v7310
                  %v7312 = vld [vmem:[%s7258 + $0xd0] sm:$0xff]
                  %7313 = vst [vmem:[%s7259 + $0xd0] sm:$0xff] %v7312
                  %v7314 = vld [vmem:[%s7258 + $0xd8] sm:$0xff]
                  %7315 = vst [vmem:[%s7259 + $0xd8] sm:$0xff] %v7314
                  %v7316 = vld [vmem:[%s7258 + $0xe0] sm:$0xff]
                  %7317 = vst [vmem:[%s7259 + $0xe0] sm:$0xff] %v7316
                  %v7318 = vld [vmem:[%s7258 + $0xe8] sm:$0xff]
                  %7319 = vst [vmem:[%s7259 + $0xe8] sm:$0xff] %v7318
                  %v7320 = vld [vmem:[%s7258 + $0xf0] sm:$0xff]
                  %7321 = vst [vmem:[%s7259 + $0xf0] sm:$0xff] %v7320
                  %v7322 = vld [vmem:[%s7258 + $0xf8] sm:$0xff]
                  %7323 = vst [vmem:[%s7259 + $0xf8] sm:$0xff] %v7322
                  %v7324 = vld [vmem:[%s7258 + $0x100] sm:$0xff]
                  %7325 = vst [vmem:[%s7259 + $0x100] sm:$0xff] %v7324
                  %v7326 = vld [vmem:[%s7258 + $0x108] sm:$0xff]
                  %7327 = vst [vmem:[%s7259 + $0x108] sm:$0xff] %v7326
                  %v7328 = vld [vmem:[%s7258 + $0x110] sm:$0xff]
                  %7329 = vst [vmem:[%s7259 + $0x110] sm:$0xff] %v7328
                  %v7330 = vld [vmem:[%s7258 + $0x118] sm:$0xff]
                  %7331 = vst [vmem:[%s7259 + $0x118] sm:$0xff] %v7330
                  %v7332 = vld [vmem:[%s7258 + $0x120] sm:$0xff]
                  %7333 = vst [vmem:[%s7259 + $0x120] sm:$0xff] %v7332
                  %v7334 = vld [vmem:[%s7258 + $0x128] sm:$0xff]
                  %7335 = vst [vmem:[%s7259 + $0x128] sm:$0xff] %v7334
                  %v7336 = vld [vmem:[%s7258 + $0x130] sm:$0xff]
                  %7337 = vst [vmem:[%s7259 + $0x130] sm:$0xff] %v7336
                  %v7338 = vld [vmem:[%s7258 + $0x138] sm:$0xff]
                  %7339 = vst [vmem:[%s7259 + $0x138] sm:$0xff] %v7338
                  %v7340 = vld [vmem:[%s7258 + $0x140] sm:$0xff]
                  %7341 = vst [vmem:[%s7259 + $0x140] sm:$0xff] %v7340
                  %v7342 = vld [vmem:[%s7258 + $0x148] sm:$0xff]
                  %7343 = vst [vmem:[%s7259 + $0x148] sm:$0xff] %v7342
                  %v7344 = vld [vmem:[%s7258 + $0x150] sm:$0xff]
                  %7345 = vst [vmem:[%s7259 + $0x150] sm:$0xff] %v7344
                  %v7346 = vld [vmem:[%s7258 + $0x158] sm:$0xff]
                  %7347 = vst [vmem:[%s7259 + $0x158] sm:$0xff] %v7346
                  %v7348 = vld [vmem:[%s7258 + $0x160] sm:$0xff]
                  %7349 = vst [vmem:[%s7259 + $0x160] sm:$0xff] %v7348
                  %v7350 = vld [vmem:[%s7258 + $0x168] sm:$0xff]
                  %7351 = vst [vmem:[%s7259 + $0x168] sm:$0xff] %v7350
                  %v7352 = vld [vmem:[%s7258 + $0x170] sm:$0xff]
                  %7353 = vst [vmem:[%s7259 + $0x170] sm:$0xff] %v7352
                  %v7354 = vld [vmem:[%s7258 + $0x178] sm:$0xff]
                  %7355 = vst [vmem:[%s7259 + $0x178] sm:$0xff] %v7354
                  %v7356 = vld [vmem:[%s7258 + $0x180] sm:$0xff]
                  %7357 = vst [vmem:[%s7259 + $0x180] sm:$0xff] %v7356
                  %v7358 = vld [vmem:[%s7258 + $0x188] sm:$0xff]
                  %7359 = vst [vmem:[%s7259 + $0x188] sm:$0xff] %v7358
                  %v7360 = vld [vmem:[%s7258 + $0x190] sm:$0xff]
                  %7361 = vst [vmem:[%s7259 + $0x190] sm:$0xff] %v7360
                  %v7362 = vld [vmem:[%s7258 + $0x198] sm:$0xff]
                  %7363 = vst [vmem:[%s7259 + $0x198] sm:$0xff] %v7362
                  %v7364 = vld [vmem:[%s7258 + $0x1a0] sm:$0xff]
                  %7365 = vst [vmem:[%s7259 + $0x1a0] sm:$0xff] %v7364
                  %v7366 = vld [vmem:[%s7258 + $0x1a8] sm:$0xff]
                  %7367 = vst [vmem:[%s7259 + $0x1a8] sm:$0xff] %v7366
                  %v7368 = vld [vmem:[%s7258 + $0x1b0] sm:$0xff]
                  %7369 = vst [vmem:[%s7259 + $0x1b0] sm:$0xff] %v7368
                  %v7370 = vld [vmem:[%s7258 + $0x1b8] sm:$0xff]
                  %7371 = vst [vmem:[%s7259 + $0x1b8] sm:$0xff] %v7370
                  %v7372 = vld [vmem:[%s7258 + $0x1c0] sm:$0xff]
                  %7373 = vst [vmem:[%s7259 + $0x1c0] sm:$0xff] %v7372
                  %v7374 = vld [vmem:[%s7258 + $0x1c8] sm:$0xff]
                  %7375 = vst [vmem:[%s7259 + $0x1c8] sm:$0xff] %v7374
                  %v7376 = vld [vmem:[%s7258 + $0x1d0] sm:$0xff]
                  %7377 = vst [vmem:[%s7259 + $0x1d0] sm:$0xff] %v7376
                  %v7378 = vld [vmem:[%s7258 + $0x1d8] sm:$0xff]
                  %7379 = vst [vmem:[%s7259 + $0x1d8] sm:$0xff] %v7378
                  %v7380 = vld [vmem:[%s7258 + $0x1e0] sm:$0xff]
                  %7381 = vst [vmem:[%s7259 + $0x1e0] sm:$0xff] %v7380
                  %v7382 = vld [vmem:[%s7258 + $0x1e8] sm:$0xff]
                  %7383 = vst [vmem:[%s7259 + $0x1e8] sm:$0xff] %v7382
                  %v7384 = vld [vmem:[%s7258 + $0x1f0] sm:$0xff]
                  %7385 = vst [vmem:[%s7259 + $0x1f0] sm:$0xff] %v7384
                  %v7386 = vld [vmem:[%s7258 + $0x1f8] sm:$0xff]
                  %7387 = vst [vmem:[%s7259 + $0x1f8] sm:$0xff] %v7386
                  %s7388 = sadd.s32 1, %s7257
                  %p7389 = scmp.ge.s32.totalorder %s7388, %s7250
                  %s7390 = scalar_select %p7389, 0, %s7388
                  %s7391 = smul.u32 %s7390, 512
                  %s7392 = smul.u32 %s7390, 512
                  %s7393 = scalar_lea.vmem %s7056, %s7391 [#allocation7]
                  %s7394 = scalar_lea.vmem %s7068, %s7392
                $region91: #{tpu_custom_call.1} parent=85 // loop_footer
                  %s7254 = sadd.s32 %s7252, 1
                $region92: #{tpu_custom_call.1} parent=85 // loop_footer_branch
                  %7251 = sbr.rel target = $region88
                $region93: #{tpu_custom_call.1} parent=85 // loop_exit
                  _
                %s7395 = sshrl.u32 %s7064, 6
                %s7396 = sand.u32 %s7064, 63
                %s7397 = smul.u32 %s7395, 64
                %s7398 = smul.u32 8, %s7397
                %s7399 = scalar_lea.vmem %s7056, %s7398 [#allocation7]
                %s7400 = smul.u32 8, %s7397
                %s7401 = scalar_lea.vmem %s7068, %s7400
                // While loop
                $region94: #{tpu_custom_call.1} parent=85 // loop_pre_header
                  _
                $region95: #{tpu_custom_call.1} parent=85 // loop_header
                  %s7403 = sphi 0, %s7405
                  %p7404 = scmp.ge.s32.totalorder %s7403, %s7396
                  %s7408 = sphi 0, %s7415
                  %s7409 = sphi %s7399, %s7418
                  %s7410 = sphi %s7401, %s7419
                $region96: #{tpu_custom_call.1} parent=85 // loop_header_branch
                  %7407 = sbr.rel (%p7404) target = $region100
                $region97: #{tpu_custom_call.1} parent=85 // loop_body
                  %v7411 = vld [vmem:[%s7409] sm:$0xff]
                  %7412 = vst [vmem:[%s7410] sm:$0xff] %v7411
                  %s7413 = sadd.s32 1, %s7408
                  %p7414 = scmp.ge.s32.totalorder %s7413, %s7396
                  %s7415 = scalar_select %p7414, 0, %s7413
                  %s7416 = smul.u32 %s7415, 8
                  %s7417 = smul.u32 %s7415, 8
                  %s7418 = scalar_lea.vmem %s7399, %s7416 [#allocation7]
                  %s7419 = scalar_lea.vmem %s7401, %s7417
                $region98: #{tpu_custom_call.1} parent=85 // loop_footer
                  %s7405 = sadd.s32 %s7403, 1
                $region99: #{tpu_custom_call.1} parent=85 // loop_footer_branch
                  %7402 = sbr.rel target = $region95
                $region100: #{tpu_custom_call.1} parent=85 // loop_exit
                  _
              $region86: #{tpu_custom_call.1} parent=63 // pred_fallthru
                _
              // Predicated region
              $region101: #{tpu_custom_call.1} parent=63 // pred_check
                _
              $region102: #{tpu_custom_call.1} parent=63 // pred_check_branch
                %7421 = sbr.rel target = $region104
              $region103: #{tpu_custom_call.1} parent=63 // pred_region
                _
              $region104: #{tpu_custom_call.1} parent=63 // pred_fallthru
                _
            $region64: #{tpu_custom_call.1} parent=59 // pred_fallthru
              _
            // Predicated region
            $region65: #{tpu_custom_call.1} parent=59 // pred_check
              _
            $region66: #{tpu_custom_call.1} parent=59 // pred_check_branch
              %7075 = sbr.rel target = $region68
            $region67: #{tpu_custom_call.1} parent=59 // pred_region
              %s7077 = ssub.s32 256, 1
              %s7078 = sshrl.u32 %s7064, 6
              // While loop
              $region69: #{tpu_custom_call.1} parent=67 // loop_pre_header
                _
              $region70: #{tpu_custom_call.1} parent=67 // loop_header
                %s7080 = sphi 0, %s7082
                %p7081 = scmp.ge.s32.totalorder %s7080, %s7078
                %s7085 = sphi 0, %s7218
                %s7086 = sphi %s7056, %s7221
                %s7087 = sphi %s7068, %s7222
              $region71: #{tpu_custom_call.1} parent=67 // loop_header_branch
                %7084 = sbr.rel (%p7081) target = $region75
              $region72: #{tpu_custom_call.1} parent=67 // loop_body
                %v7088 = vld [vmem:[%s7086] sm:%s7077]
                %7089 = vst [vmem:[%s7087] sm:%s7077] %v7088
                %v7090 = vld [vmem:[%s7086 + $0x8] sm:%s7077]
                %7091 = vst [vmem:[%s7087 + $0x8] sm:%s7077] %v7090
                %v7092 = vld [vmem:[%s7086 + $0x10] sm:%s7077]
                %7093 = vst [vmem:[%s7087 + $0x10] sm:%s7077] %v7092
                %v7094 = vld [vmem:[%s7086 + $0x18] sm:%s7077]
                %7095 = vst [vmem:[%s7087 + $0x18] sm:%s7077] %v7094
                %v7096 = vld [vmem:[%s7086 + $0x20] sm:%s7077]
                %7097 = vst [vmem:[%s7087 + $0x20] sm:%s7077] %v7096
                %v7098 = vld [vmem:[%s7086 + $0x28] sm:%s7077]
                %7099 = vst [vmem:[%s7087 + $0x28] sm:%s7077] %v7098
                %v7100 = vld [vmem:[%s7086 + $0x30] sm:%s7077]
                %7101 = vst [vmem:[%s7087 + $0x30] sm:%s7077] %v7100
                %v7102 = vld [vmem:[%s7086 + $0x38] sm:%s7077]
                %7103 = vst [vmem:[%s7087 + $0x38] sm:%s7077] %v7102
                %v7104 = vld [vmem:[%s7086 + $0x40] sm:%s7077]
                %7105 = vst [vmem:[%s7087 + $0x40] sm:%s7077] %v7104
                %v7106 = vld [vmem:[%s7086 + $0x48] sm:%s7077]
                %7107 = vst [vmem:[%s7087 + $0x48] sm:%s7077] %v7106
                %v7108 = vld [vmem:[%s7086 + $0x50] sm:%s7077]
                %7109 = vst [vmem:[%s7087 + $0x50] sm:%s7077] %v7108
                %v7110 = vld [vmem:[%s7086 + $0x58] sm:%s7077]
                %7111 = vst [vmem:[%s7087 + $0x58] sm:%s7077] %v7110
                %v7112 = vld [vmem:[%s7086 + $0x60] sm:%s7077]
                %7113 = vst [vmem:[%s7087 + $0x60] sm:%s7077] %v7112
                %v7114 = vld [vmem:[%s7086 + $0x68] sm:%s7077]
                %7115 = vst [vmem:[%s7087 + $0x68] sm:%s7077] %v7114
                %v7116 = vld [vmem:[%s7086 + $0x70] sm:%s7077]
                %7117 = vst [vmem:[%s7087 + $0x70] sm:%s7077] %v7116
                %v7118 = vld [vmem:[%s7086 + $0x78] sm:%s7077]
                %7119 = vst [vmem:[%s7087 + $0x78] sm:%s7077] %v7118
                %v7120 = vld [vmem:[%s7086 + $0x80] sm:%s7077]
                %7121 = vst [vmem:[%s7087 + $0x80] sm:%s7077] %v7120
                %v7122 = vld [vmem:[%s7086 + $0x88] sm:%s7077]
                %7123 = vst [vmem:[%s7087 + $0x88] sm:%s7077] %v7122
                %v7124 = vld [vmem:[%s7086 + $0x90] sm:%s7077]
                %7125 = vst [vmem:[%s7087 + $0x90] sm:%s7077] %v7124
                %v7126 = vld [vmem:[%s7086 + $0x98] sm:%s7077]
                %7127 = vst [vmem:[%s7087 + $0x98] sm:%s7077] %v7126
                %v7128 = vld [vmem:[%s7086 + $0xa0] sm:%s7077]
                %7129 = vst [vmem:[%s7087 + $0xa0] sm:%s7077] %v7128
                %v7130 = vld [vmem:[%s7086 + $0xa8] sm:%s7077]
                %7131 = vst [vmem:[%s7087 + $0xa8] sm:%s7077] %v7130
                %v7132 = vld [vmem:[%s7086 + $0xb0] sm:%s7077]
                %7133 = vst [vmem:[%s7087 + $0xb0] sm:%s7077] %v7132
                %v7134 = vld [vmem:[%s7086 + $0xb8] sm:%s7077]
                %7135 = vst [vmem:[%s7087 + $0xb8] sm:%s7077] %v7134
                %v7136 = vld [vmem:[%s7086 + $0xc0] sm:%s7077]
                %7137 = vst [vmem:[%s7087 + $0xc0] sm:%s7077] %v7136
                %v7138 = vld [vmem:[%s7086 + $0xc8] sm:%s7077]
                %7139 = vst [vmem:[%s7087 + $0xc8] sm:%s7077] %v7138
                %v7140 = vld [vmem:[%s7086 + $0xd0] sm:%s7077]
                %7141 = vst [vmem:[%s7087 + $0xd0] sm:%s7077] %v7140
                %v7142 = vld [vmem:[%s7086 + $0xd8] sm:%s7077]
                %7143 = vst [vmem:[%s7087 + $0xd8] sm:%s7077] %v7142
                %v7144 = vld [vmem:[%s7086 + $0xe0] sm:%s7077]
                %7145 = vst [vmem:[%s7087 + $0xe0] sm:%s7077] %v7144
                %v7146 = vld [vmem:[%s7086 + $0xe8] sm:%s7077]
                %7147 = vst [vmem:[%s7087 + $0xe8] sm:%s7077] %v7146
                %v7148 = vld [vmem:[%s7086 + $0xf0] sm:%s7077]
                %7149 = vst [vmem:[%s7087 + $0xf0] sm:%s7077] %v7148
                %v7150 = vld [vmem:[%s7086 + $0xf8] sm:%s7077]
                %7151 = vst [vmem:[%s7087 + $0xf8] sm:%s7077] %v7150
                %v7152 = vld [vmem:[%s7086 + $0x100] sm:%s7077]
                %7153 = vst [vmem:[%s7087 + $0x100] sm:%s7077] %v7152
                %v7154 = vld [vmem:[%s7086 + $0x108] sm:%s7077]
                %7155 = vst [vmem:[%s7087 + $0x108] sm:%s7077] %v7154
                %v7156 = vld [vmem:[%s7086 + $0x110] sm:%s7077]
                %7157 = vst [vmem:[%s7087 + $0x110] sm:%s7077] %v7156
                %v7158 = vld [vmem:[%s7086 + $0x118] sm:%s7077]
                %7159 = vst [vmem:[%s7087 + $0x118] sm:%s7077] %v7158
                %v7160 = vld [vmem:[%s7086 + $0x120] sm:%s7077]
                %7161 = vst [vmem:[%s7087 + $0x120] sm:%s7077] %v7160
                %v7162 = vld [vmem:[%s7086 + $0x128] sm:%s7077]
                %7163 = vst [vmem:[%s7087 + $0x128] sm:%s7077] %v7162
                %v7164 = vld [vmem:[%s7086 + $0x130] sm:%s7077]
                %7165 = vst [vmem:[%s7087 + $0x130] sm:%s7077] %v7164
                %v7166 = vld [vmem:[%s7086 + $0x138] sm:%s7077]
                %7167 = vst [vmem:[%s7087 + $0x138] sm:%s7077] %v7166
                %v7168 = vld [vmem:[%s7086 + $0x140] sm:%s7077]
                %7169 = vst [vmem:[%s7087 + $0x140] sm:%s7077] %v7168
                %v7170 = vld [vmem:[%s7086 + $0x148] sm:%s7077]
                %7171 = vst [vmem:[%s7087 + $0x148] sm:%s7077] %v7170
                %v7172 = vld [vmem:[%s7086 + $0x150] sm:%s7077]
                %7173 = vst [vmem:[%s7087 + $0x150] sm:%s7077] %v7172
                %v7174 = vld [vmem:[%s7086 + $0x158] sm:%s7077]
                %7175 = vst [vmem:[%s7087 + $0x158] sm:%s7077] %v7174
                %v7176 = vld [vmem:[%s7086 + $0x160] sm:%s7077]
                %7177 = vst [vmem:[%s7087 + $0x160] sm:%s7077] %v7176
                %v7178 = vld [vmem:[%s7086 + $0x168] sm:%s7077]
                %7179 = vst [vmem:[%s7087 + $0x168] sm:%s7077] %v7178
                %v7180 = vld [vmem:[%s7086 + $0x170] sm:%s7077]
                %7181 = vst [vmem:[%s7087 + $0x170] sm:%s7077] %v7180
                %v7182 = vld [vmem:[%s7086 + $0x178] sm:%s7077]
                %7183 = vst [vmem:[%s7087 + $0x178] sm:%s7077] %v7182
                %v7184 = vld [vmem:[%s7086 + $0x180] sm:%s7077]
                %7185 = vst [vmem:[%s7087 + $0x180] sm:%s7077] %v7184
                %v7186 = vld [vmem:[%s7086 + $0x188] sm:%s7077]
                %7187 = vst [vmem:[%s7087 + $0x188] sm:%s7077] %v7186
                %v7188 = vld [vmem:[%s7086 + $0x190] sm:%s7077]
                %7189 = vst [vmem:[%s7087 + $0x190] sm:%s7077] %v7188
                %v7190 = vld [vmem:[%s7086 + $0x198] sm:%s7077]
                %7191 = vst [vmem:[%s7087 + $0x198] sm:%s7077] %v7190
                %v7192 = vld [vmem:[%s7086 + $0x1a0] sm:%s7077]
                %7193 = vst [vmem:[%s7087 + $0x1a0] sm:%s7077] %v7192
                %v7194 = vld [vmem:[%s7086 + $0x1a8] sm:%s7077]
                %7195 = vst [vmem:[%s7087 + $0x1a8] sm:%s7077] %v7194
                %v7196 = vld [vmem:[%s7086 + $0x1b0] sm:%s7077]
                %7197 = vst [vmem:[%s7087 + $0x1b0] sm:%s7077] %v7196
                %v7198 = vld [vmem:[%s7086 + $0x1b8] sm:%s7077]
                %7199 = vst [vmem:[%s7087 + $0x1b8] sm:%s7077] %v7198
                %v7200 = vld [vmem:[%s7086 + $0x1c0] sm:%s7077]
                %7201 = vst [vmem:[%s7087 + $0x1c0] sm:%s7077] %v7200
                %v7202 = vld [vmem:[%s7086 + $0x1c8] sm:%s7077]
                %7203 = vst [vmem:[%s7087 + $0x1c8] sm:%s7077] %v7202
                %v7204 = vld [vmem:[%s7086 + $0x1d0] sm:%s7077]
                %7205 = vst [vmem:[%s7087 + $0x1d0] sm:%s7077] %v7204
                %v7206 = vld [vmem:[%s7086 + $0x1d8] sm:%s7077]
                %7207 = vst [vmem:[%s7087 + $0x1d8] sm:%s7077] %v7206
                %v7208 = vld [vmem:[%s7086 + $0x1e0] sm:%s7077]
                %7209 = vst [vmem:[%s7087 + $0x1e0] sm:%s7077] %v7208
                %v7210 = vld [vmem:[%s7086 + $0x1e8] sm:%s7077]
                %7211 = vst [vmem:[%s7087 + $0x1e8] sm:%s7077] %v7210
                %v7212 = vld [vmem:[%s7086 + $0x1f0] sm:%s7077]
                %7213 = vst [vmem:[%s7087 + $0x1f0] sm:%s7077] %v7212
                %v7214 = vld [vmem:[%s7086 + $0x1f8] sm:%s7077]
                %7215 = vst [vmem:[%s7087 + $0x1f8] sm:%s7077] %v7214
                %s7216 = sadd.s32 1, %s7085
                %p7217 = scmp.ge.s32.totalorder %s7216, %s7078
                %s7218 = scalar_select %p7217, 0, %s7216
                %s7219 = smul.u32 %s7218, 512
                %s7220 = smul.u32 %s7218, 512
                %s7221 = scalar_lea.vmem %s7056, %s7219 [#allocation7]
                %s7222 = scalar_lea.vmem %s7068, %s7220
              $region73: #{tpu_custom_call.1} parent=67 // loop_footer
                %s7082 = sadd.s32 %s7080, 1
              $region74: #{tpu_custom_call.1} parent=67 // loop_footer_branch
                %7079 = sbr.rel target = $region70
              $region75: #{tpu_custom_call.1} parent=67 // loop_exit
                _
              %s7223 = sshrl.u32 %s7064, 6
              %s7224 = sand.u32 %s7064, 63
              %s7225 = smul.u32 %s7223, 64
              %s7226 = smul.u32 8, %s7225
              %s7227 = scalar_lea.vmem %s7056, %s7226 [#allocation7]
              %s7228 = smul.u32 8, %s7225
              %s7229 = scalar_lea.vmem %s7068, %s7228
              // While loop
              $region76: #{tpu_custom_call.1} parent=67 // loop_pre_header
                _
              $region77: #{tpu_custom_call.1} parent=67 // loop_header
                %s7231 = sphi 0, %s7233
                %p7232 = scmp.ge.s32.totalorder %s7231, %s7224
                %s7236 = sphi 0, %s7243
                %s7237 = sphi %s7227, %s7246
                %s7238 = sphi %s7229, %s7247
              $region78: #{tpu_custom_call.1} parent=67 // loop_header_branch
                %7235 = sbr.rel (%p7232) target = $region82
              $region79: #{tpu_custom_call.1} parent=67 // loop_body
                %v7239 = vld [vmem:[%s7237] sm:%s7077]
                %7240 = vst [vmem:[%s7238] sm:%s7077] %v7239
                %s7241 = sadd.s32 1, %s7236
                %p7242 = scmp.ge.s32.totalorder %s7241, %s7224
                %s7243 = scalar_select %p7242, 0, %s7241
                %s7244 = smul.u32 %s7243, 8
                %s7245 = smul.u32 %s7243, 8
                %s7246 = scalar_lea.vmem %s7227, %s7244 [#allocation7]
                %s7247 = scalar_lea.vmem %s7229, %s7245
              $region80: #{tpu_custom_call.1} parent=67 // loop_footer
                %s7233 = sadd.s32 %s7231, 1
              $region81: #{tpu_custom_call.1} parent=67 // loop_footer_branch
                %7230 = sbr.rel target = $region77
              $region82: #{tpu_custom_call.1} parent=67 // loop_exit
                _
            $region68: #{tpu_custom_call.1} parent=59 // pred_fallthru
              _
          $region60: #{tpu_custom_call.1} parent=55 // pred_fallthru
            _
          %7422 = vnop
        $region56: #{tpu_custom_call.1} parent=35 // pred_fallthru
          _
      $region36: #{tpu_custom_call.1} parent=5 // pred_fallthru
        _
      %p7423 = scmp.le.s32.totalorder 2, %s10
      // Predicated region
      $region105: #{tpu_custom_call.1} parent=5 // pred_check
        %p7424 = pneg %p7423
      $region106: #{tpu_custom_call.1} parent=5 // pred_check_branch
        %7426 = sbr.rel (%p7424) target = $region108
      $region107: #{tpu_custom_call.1} parent=5 // pred_region
        %s7427 = ssub.s32 %s10, 2
        // Predicated region
        $region109: #{tpu_custom_call.1} parent=107 // pred_check
          %p7428 = pneg %p146
        $region110: #{tpu_custom_call.1} parent=107 // pred_check_branch
          %7430 = sbr.rel (%p7428) target = $region112
        $region111: #{tpu_custom_call.1} parent=107 // pred_region
          %s7431 = sand.u32 %s131, 1
          %s7432 = sand.u32 %s131, 1
          %s7433 = smul.addr %s7432, 2048
          %s7434 = scalar_lea.vmem [#allocation7], %s7433
        $region112: #{tpu_custom_call.1} parent=107 // pred_fallthru
          _
      $region108: #{tpu_custom_call.1} parent=5 // pred_fallthru
        _
    $region6: #{tpu_custom_call.1} parent=1 // loop_footer
      %s14 = sadd.s32 1, %s10
    $region7: #{tpu_custom_call.1} parent=1 // loop_footer_branch
      %9 = sbr.rel target = $region3
    $region8: #{tpu_custom_call.1} parent=1 // loop_exit
      _

</llo_original>
